<compile_context>
chip_gen: v5e
topology: v5e:2x2
jax: 0.10.0
libtpu: 0.0.40
codegen_flags: <defaults>
</compile_context>

<pallas_src>
import jax
import jax.numpy as jnp
from jax.experimental import pallas as pl
from jax.experimental.pallas import tpu as pltpu


_BN_EPS = 1e-5


# (C_in, C_out, kernel, stride) -- mirrors the nn.Sequential in __init__.
def layer_cfgs(c_in):
    return [(c_in, 32, 8, 4), (32, 64, 4, 2), (64, 128, 3, 1), (128, 64, 1, 1)]


# ---------------------------------------------------------------------------
# In-kernel fused layer: Conv2d (banded matmuls) + BatchNorm2d(train) + ReLU
# ---------------------------------------------------------------------------
def _conv_bn_relu_block(src_ref, w_ref, g_ref, b_ref, *, n, k, s, oh, ow, co):
    """src_ref: (H*n, W*C_in) bf16, rows=(h, n), lanes=(w, c).
    w_ref:   (k, W*C_in, ow*co) bf16 banded weights (one matrix per kernel row).
    Returns the (oh*n, ow*co) f32 post-ReLU activation in the same layout."""
    # ---- convolution: sum over kernel rows of slab @ banded-weight ----------
    blocks = []
    for r in range(oh):
        acc = jnp.zeros((n, ow * co), jnp.float32)
        for i in range(k):
            h = r * s + i
            slab = src_ref[h * n:(h + 1) * n, :]          # contiguous VMEM read
            acc = acc + jnp.dot(slab, w_ref[i],
                                preferred_element_type=jnp.float32)
        blocks.append(acc)
    y = blocks[0] if oh == 1 else jnp.concatenate(blocks, axis=0)

    # ---- BatchNorm2d, training mode (biased batch statistics), f32 ---------
    cnt = n * oh * ow
    row_sum = jnp.sum(y, axis=0, keepdims=True)           # (1, ow*co)
    row_sq = jnp.sum(y * y, axis=0, keepdims=True)
    ch_sum, ch_sq = row_sum[:, :co], row_sq[:, :co]
    for j in range(1, ow):                                 # fold the ow lane blocks
        ch_sum = ch_sum + row_sum[:, j * co:(j + 1) * co]
        ch_sq = ch_sq + row_sq[:, j * co:(j + 1) * co]
    mean = ch_sum * (1.0 / cnt)
    var = ch_sq * (1.0 / cnt) - mean * mean
    scale = g_ref[...] * jax.lax.rsqrt(var + _BN_EPS)      # (1, co)
    shift = b_ref[...] - mean * scale
    if ow > 1:                                             # broadcast back over lanes
        scale = jnp.concatenate([scale] * ow, axis=1)
        shift = jnp.concatenate([shift] * ow, axis=1)

    # ---- folded BN affine + ReLU: one FMA + max per element ----------------
    return jnp.maximum(y * scale + shift, 0.0)


def _make_kernel(n, cfgs, dims):
    n_layers = len(cfgs)

    def kernel(*refs):
        src = refs[0]                                   # (H*n, W*C_in) bf16 input
        w_refs = refs[1:1 + n_layers]                   # banded weights
        gb_refs = refs[1 + n_layers:1 + 3 * n_layers]   # g1,b1,g2,b2,...
        o_ref = refs[1 + 3 * n_layers]                  # (ohL*n, owL*coL) f32
        scratch = refs[2 + 3 * n_layers:]               # VMEM activation buffers

        for li, ((_ci, co, k, s), (_h, _w, oh, ow)) in enumerate(zip(cfgs, dims)):
            act = _conv_bn_relu_block(
                src, w_refs[li], gb_refs[2 * li], gb_refs[2 * li + 1],
                n=n, k=k, s=s, oh=oh, ow=ow, co=co)
            if li < n_layers - 1:
                scratch[li][...] = act.astype(scratch[li].dtype)  # stays in VMEM
                src = scratch[li]
            else:
                o_ref[...] = act

    return kernel


# ---------------------------------------------------------------------------
# Host-side glue: banded weights, layout, pallas_call
# ---------------------------------------------------------------------------
def _banded_weight(w_oihw, w_in, ow, stride, dtype=jnp.bfloat16):
    """band[i, w*Cin + c, j*Cout + co] = w[co, c, i, w - j*stride] (else 0)."""
    co, ci, kh, kw = w_oihw.shape
    wrow = jnp.transpose(w_oihw, (2, 3, 1, 0)).reshape(kh, kw * ci, co)
    wrow = wrow.astype(dtype)
    band = jnp.zeros((kh, w_in * ci, ow * co), dtype)
    for j in range(ow):
        band = band.at[:, j * stride * ci:(j * stride + kw) * ci,
                       j * co:(j + 1) * co].set(wrow)
    return band


def custom_cnn_forward(x_nchw, params):
    n, c_in, h, w = x_nchw.shape
    cfgs = layer_cfgs(c_in)

    dims, hh, ww = [], h, w
    for (_ci, _co, k, s) in cfgs:                    # per-layer (Hin, Win, OH, OW)
        oh, ow = (hh - k) // s + 1, (ww - k) // s + 1
        dims.append((hh, ww, oh, ow))
        hh, ww = oh, ow

    # NCHW -> rows=(h, n), lanes=(w, c), bf16 MXU operands.
    x2d = jnp.transpose(x_nchw, (2, 0, 3, 1)).reshape(h * n, w * c_in)
    x2d = x2d.astype(jnp.bfloat16)

    bands, gammas_betas = [], []
    for (wt, _bias, gamma, beta), (_ci, co, _k, s), (_hh, win, _oh, ow) in zip(
            params, cfgs, dims):
        bands.append(_banded_weight(wt, win, ow, s))
        gammas_betas += [gamma.reshape(1, co).astype(jnp.float32),
                         beta.reshape(1, co).astype(jnp.float32)]

    oh_f, ow_f = dims[-1][2], dims[-1][3]
    co_f = cfgs[-1][1]
    vmem = pl.BlockSpec(memory_space=pltpu.MemorySpace.VMEM)
    n_in = 1 + 3 * len(cfgs)

    out2d = pl.pallas_call(
        _make_kernel(n, cfgs, dims),
        out_shape=jax.ShapeDtypeStruct((oh_f * n, ow_f * co_f), jnp.float32),
        in_specs=[vmem] * n_in,
        out_specs=vmem,
        scratch_shapes=[
            pltpu.VMEM((dims[li][2] * n, dims[li][3] * cfgs[li][1]), jnp.bfloat16)
            for li in range(len(cfgs) - 1)
        ],
    )(x2d, *bands, *gammas_betas)

    # nn.Flatten of the NCHW conv output: (oh, n, ow, c) -> (n, c*oh*ow).
    out = out2d.reshape(oh_f, n, ow_f, co_f)
    return jnp.transpose(out, (1, 3, 0, 2)).reshape(n, co_f * oh_f * ow_f)


# ---------------------------------------------------------------------------
# Parameter init + pure-JAX reference (module semantics, bf16 conv operands)
# ---------------------------------------------------------------------------
def init_params(key, c_in):
    params = []
    for (ci, co, k, _s) in layer_cfgs(c_in):
        key, k1, k2, k3, k4 = jax.random.split(key, 5)
        wt = 0.05 * jax.random.normal(k1, (co, ci, k, k), jnp.float32)   # OIHW
        bias = 0.01 * jax.random.normal(k2, (co,), jnp.float32)
        gamma = 1.0 + 0.1 * jax.random.normal(k3, (co,), jnp.float32)
        beta = 0.1 * jax.random.normal(k4, (co,), jnp.float32)
        params.append((wt, bias, gamma, beta))
    return params


def reference_forward(x, params, c_in):
    act = x
    for (wt, bias, gamma, beta), (_ci, _co, _k, s) in zip(params, layer_cfgs(c_in)):
        y = jax.lax.conv_general_dilated(
            act.astype(jnp.bfloat16), wt.astype(jnp.bfloat16), (s, s), "VALID",
            dimension_numbers=("NCHW", "OIHW", "NCHW"),
            preferred_element_type=jnp.float32)
        y = y + bias[None, :, None, None]
        mean = jnp.mean(y, axis=(0, 2, 3), keepdims=True)
        var = jnp.mean(jnp.square(y - mean), axis=(0, 2, 3), keepdims=True)
        y = (y - mean) * jax.lax.rsqrt(var + _BN_EPS)
        y = y * gamma[None, :, None, None] + beta[None, :, None, None]
        act = jnp.maximum(y, 0.0)
    return act.reshape(act.shape[0], -1)


if __name__ == "__main__":
    key = jax.random.PRNGKey(0)
    kx, kp = jax.random.split(key)

    # Smallest spatial size that survives the conv stack: 36 -> 8 -> 3 -> 1 -> 1.
    N, C_IN, H, W = 8, 4, 36, 36
    x = jax.random.uniform(kx, (N, C_IN, H, W), jnp.float32)
    params = init_params(kp, C_IN)

    out = jax.block_until_ready(custom_cnn_forward(x, params))
    ref = jax.block_until_ready(reference_forward(x, params, C_IN))

    assert out.shape == (N, 64), out.shape            # features_dim = 64*1*1
    assert jnp.allclose(out, ref, atol=5e-3, rtol=5e-3), float(
        jnp.max(jnp.abs(out - ref)))
    print("KERNEL_OK")
</pallas_src>

<mosaic_0001>
module attributes {stable_mosaic.version = 11 : i64} {
  func.func @kernel(%arg0: memref<288x144xbf16, #tpu.memory_space<vmem>>, %arg1: memref<8x144x256xbf16, #tpu.memory_space<vmem>>, %arg2: memref<4x256x192xbf16, #tpu.memory_space<vmem>>, %arg3: memref<3x192x128xbf16, #tpu.memory_space<vmem>>, %arg4: memref<1x128x64xbf16, #tpu.memory_space<vmem>>, %arg5: memref<1x32xf32, #tpu.memory_space<vmem>>, %arg6: memref<1x32xf32, #tpu.memory_space<vmem>>, %arg7: memref<1x64xf32, #tpu.memory_space<vmem>>, %arg8: memref<1x64xf32, #tpu.memory_space<vmem>>, %arg9: memref<1x128xf32, #tpu.memory_space<vmem>>, %arg10: memref<1x128xf32, #tpu.memory_space<vmem>>, %arg11: memref<1x64xf32, #tpu.memory_space<vmem>>, %arg12: memref<1x64xf32, #tpu.memory_space<vmem>>, %arg13: memref<8x64xf32, #tpu.memory_space<vmem>>, %arg14: memref<64x256xbf16, #tpu.memory_space<vmem>>, %arg15: memref<24x192xbf16, #tpu.memory_space<vmem>>, %arg16: memref<8x128xbf16, #tpu.memory_space<vmem>>) attributes {dimension_semantics = [], scalar_prefetch = 0 : i64, scratch_operands = 3 : i64, tpu.core_type = #tpu.core_type<tc>} {
    %cst = arith.constant 0.000000e+00 : f32
    %0 = vector.broadcast %cst : f32 to vector<8x256xf32>
    %c0 = arith.constant 0 : index
    %c0_0 = arith.constant 0 : index
    %1 = vector.load %arg0[%c0, %c0_0] : memref<288x144xbf16, #tpu.memory_space<vmem>>, vector<8x144xbf16>
    %c0_1 = arith.constant 0 : index
    %c0_2 = arith.constant 0 : index
    %c0_3 = arith.constant 0 : index
    %2 = vector.load %arg1[%c0_1, %c0_2, %c0_3] : memref<8x144x256xbf16, #tpu.memory_space<vmem>>, vector<1x144x256xbf16>
    %3 = vector.shape_cast %2 : vector<1x144x256xbf16> to vector<144x256xbf16>
    %cst_4 = arith.constant dense<0.000000e+00> : vector<8x256xf32>
    %4 = tpu.matmul %1, %3, %cst_4 {dimension_numbers = #tpu.dot_dimension_numbers<[1], [0], [0], [1], [0, 0, 1, 1], [], []>} : vector<8x144xbf16>, vector<144x256xbf16>, vector<8x256xf32> -> vector<8x256xf32>
    %5 = arith.addf %0, %4 : vector<8x256xf32>
    %c8 = arith.constant 8 : index
    %c0_5 = arith.constant 0 : index
    %6 = vector.load %arg0[%c8, %c0_5] : memref<288x144xbf16, #tpu.memory_space<vmem>>, vector<8x144xbf16>
    %c1 = arith.constant 1 : index
    %c0_6 = arith.constant 0 : index
    %c0_7 = arith.constant 0 : index
    %7 = vector.load %arg1[%c1, %c0_6, %c0_7] : memref<8x144x256xbf16, #tpu.memory_space<vmem>>, vector<1x144x256xbf16>
    %8 = vector.shape_cast %7 : vector<1x144x256xbf16> to vector<144x256xbf16>
    %cst_8 = arith.constant dense<0.000000e+00> : vector<8x256xf32>
    %9 = tpu.matmul %6, %8, %cst_8 {dimension_numbers = #tpu.dot_dimension_numbers<[1], [0], [0], [1], [0, 0, 1, 1], [], []>} : vector<8x144xbf16>, vector<144x256xbf16>, vector<8x256xf32> -> vector<8x256xf32>
    %10 = arith.addf %5, %9 : vector<8x256xf32>
    %c16 = arith.constant 16 : index
    %c0_9 = arith.constant 0 : index
    %11 = vector.load %arg0[%c16, %c0_9] : memref<288x144xbf16, #tpu.memory_space<vmem>>, vector<8x144xbf16>
    %c2 = arith.constant 2 : index
    %c0_10 = arith.constant 0 : index
    %c0_11 = arith.constant 0 : index
    %12 = vector.load %arg1[%c2, %c0_10, %c0_11] : memref<8x144x256xbf16, #tpu.memory_space<vmem>>, vector<1x144x256xbf16>
    %13 = vector.shape_cast %12 : vector<1x144x256xbf16> to vector<144x256xbf16>
    %cst_12 = arith.constant dense<0.000000e+00> : vector<8x256xf32>
    %14 = tpu.matmul %11, %13, %cst_12 {dimension_numbers = #tpu.dot_dimension_numbers<[1], [0], [0], [1], [0, 0, 1, 1], [], []>} : vector<8x144xbf16>, vector<144x256xbf16>, vector<8x256xf32> -> vector<8x256xf32>
    %15 = arith.addf %10, %14 : vector<8x256xf32>
    %c24 = arith.constant 24 : index
    %c0_13 = arith.constant 0 : index
    %16 = vector.load %arg0[%c24, %c0_13] : memref<288x144xbf16, #tpu.memory_space<vmem>>, vector<8x144xbf16>
    %c3 = arith.constant 3 : index
    %c0_14 = arith.constant 0 : index
    %c0_15 = arith.constant 0 : index
    %17 = vector.load %arg1[%c3, %c0_14, %c0_15] : memref<8x144x256xbf16, #tpu.memory_space<vmem>>, vector<1x144x256xbf16>
    %18 = vector.shape_cast %17 : vector<1x144x256xbf16> to vector<144x256xbf16>
    %cst_16 = arith.constant dense<0.000000e+00> : vector<8x256xf32>
    %19 = tpu.matmul %16, %18, %cst_16 {dimension_numbers = #tpu.dot_dimension_numbers<[1], [0], [0], [1], [0, 0, 1, 1], [], []>} : vector<8x144xbf16>, vector<144x256xbf16>, vector<8x256xf32> -> vector<8x256xf32>
    %20 = arith.addf %15, %19 : vector<8x256xf32>
    %c32 = arith.constant 32 : index
    %c0_17 = arith.constant 0 : index
    %21 = vector.load %arg0[%c32, %c0_17] : memref<288x144xbf16, #tpu.memory_space<vmem>>, vector<8x144xbf16>
    %c4 = arith.constant 4 : index
    %c0_18 = arith.constant 0 : index
    %c0_19 = arith.constant 0 : index
    %22 = vector.load %arg1[%c4, %c0_18, %c0_19] : memref<8x144x256xbf16, #tpu.memory_space<vmem>>, vector<1x144x256xbf16>
    %23 = vector.shape_cast %22 : vector<1x144x256xbf16> to vector<144x256xbf16>
    %cst_20 = arith.constant dense<0.000000e+00> : vector<8x256xf32>
    %24 = tpu.matmul %21, %23, %cst_20 {dimension_numbers = #tpu.dot_dimension_numbers<[1], [0], [0], [1], [0, 0, 1, 1], [], []>} : vector<8x144xbf16>, vector<144x256xbf16>, vector<8x256xf32> -> vector<8x256xf32>
    %25 = arith.addf %20, %24 : vector<8x256xf32>
    %c40 = arith.constant 40 : index
    %c0_21 = arith.constant 0 : index
    %26 = vector.load %arg0[%c40, %c0_21] : memref<288x144xbf16, #tpu.memory_space<vmem>>, vector<8x144xbf16>
    %c5 = arith.constant 5 : index
    %c0_22 = arith.constant 0 : index
    %c0_23 = arith.constant 0 : index
    %27 = vector.load %arg1[%c5, %c0_22, %c0_23] : memref<8x144x256xbf16, #tpu.memory_space<vmem>>, vector<1x144x256xbf16>
    %28 = vector.shape_cast %27 : vector<1x144x256xbf16> to vector<144x256xbf16>
    %cst_24 = arith.constant dense<0.000000e+00> : vector<8x256xf32>
    %29 = tpu.matmul %26, %28, %cst_24 {dimension_numbers = #tpu.dot_dimension_numbers<[1], [0], [0], [1], [0, 0, 1, 1], [], []>} : vector<8x144xbf16>, vector<144x256xbf16>, vector<8x256xf32> -> vector<8x256xf32>
    %30 = arith.addf %25, %29 : vector<8x256xf32>
    %c48 = arith.constant 48 : index
    %c0_25 = arith.constant 0 : index
    %31 = vector.load %arg0[%c48, %c0_25] : memref<288x144xbf16, #tpu.memory_space<vmem>>, vector<8x144xbf16>
    %c6 = arith.constant 6 : index
    %c0_26 = arith.constant 0 : index
    %c0_27 = arith.constant 0 : index
    %32 = vector.load %arg1[%c6, %c0_26, %c0_27] : memref<8x144x256xbf16, #tpu.memory_space<vmem>>, vector<1x144x256xbf16>
    %33 = vector.shape_cast %32 : vector<1x144x256xbf16> to vector<144x256xbf16>
    %cst_28 = arith.constant dense<0.000000e+00> : vector<8x256xf32>
    %34 = tpu.matmul %31, %33, %cst_28 {dimension_numbers = #tpu.dot_dimension_numbers<[1], [0], [0], [1], [0, 0, 1, 1], [], []>} : vector<8x144xbf16>, vector<144x256xbf16>, vector<8x256xf32> -> vector<8x256xf32>
    %35 = arith.addf %30, %34 : vector<8x256xf32>
    %c56 = arith.constant 56 : index
    %c0_29 = arith.constant 0 : index
    %36 = vector.load %arg0[%c56, %c0_29] : memref<288x144xbf16, #tpu.memory_space<vmem>>, vector<8x144xbf16>
    %c7 = arith.constant 7 : index
    %c0_30 = arith.constant 0 : index
    %c0_31 = arith.constant 0 : index
    %37 = vector.load %arg1[%c7, %c0_30, %c0_31] : memref<8x144x256xbf16, #tpu.memory_space<vmem>>, vector<1x144x256xbf16>
    %38 = vector.shape_cast %37 : vector<1x144x256xbf16> to vector<144x256xbf16>
    %cst_32 = arith.constant dense<0.000000e+00> : vector<8x256xf32>
    %39 = tpu.matmul %36, %38, %cst_32 {dimension_numbers = #tpu.dot_dimension_numbers<[1], [0], [0], [1], [0, 0, 1, 1], [], []>} : vector<8x144xbf16>, vector<144x256xbf16>, vector<8x256xf32> -> vector<8x256xf32>
    %40 = arith.addf %35, %39 : vector<8x256xf32>
    %cst_33 = arith.constant 0.000000e+00 : f32
    %41 = vector.broadcast %cst_33 : f32 to vector<8x256xf32>
    %c32_34 = arith.constant 32 : index
    %c0_35 = arith.constant 0 : index
    %42 = vector.load %arg0[%c32_34, %c0_35] : memref<288x144xbf16, #tpu.memory_space<vmem>>, vector<8x144xbf16>
    %c0_36 = arith.constant 0 : index
    %c0_37 = arith.constant 0 : index
    %c0_38 = arith.constant 0 : index
    %43 = vector.load %arg1[%c0_36, %c0_37, %c0_38] : memref<8x144x256xbf16, #tpu.memory_space<vmem>>, vector<1x144x256xbf16>
    %44 = vector.shape_cast %43 : vector<1x144x256xbf16> to vector<144x256xbf16>
    %cst_39 = arith.constant dense<0.000000e+00> : vector<8x256xf32>
    %45 = tpu.matmul %42, %44, %cst_39 {dimension_numbers = #tpu.dot_dimension_numbers<[1], [0], [0], [1], [0, 0, 1, 1], [], []>} : vector<8x144xbf16>, vector<144x256xbf16>, vector<8x256xf32> -> vector<8x256xf32>
    %46 = arith.addf %41, %45 : vector<8x256xf32>
    %c40_40 = arith.constant 40 : index
    %c0_41 = arith.constant 0 : index
    %47 = vector.load %arg0[%c40_40, %c0_41] : memref<288x144xbf16, #tpu.memory_space<vmem>>, vector<8x144xbf16>
    %c1_42 = arith.constant 1 : index
    %c0_43 = arith.constant 0 : index
    %c0_44 = arith.constant 0 : index
    %48 = vector.load %arg1[%c1_42, %c0_43, %c0_44] : memref<8x144x256xbf16, #tpu.memory_space<vmem>>, vector<1x144x256xbf16>
    %49 = vector.shape_cast %48 : vector<1x144x256xbf16> to vector<144x256xbf16>
    %cst_45 = arith.constant dense<0.000000e+00> : vector<8x256xf32>
    %50 = tpu.matmul %47, %49, %cst_45 {dimension_numbers = #tpu.dot_dimension_numbers<[1], [0], [0], [1], [0, 0, 1, 1], [], []>} : vector<8x144xbf16>, vector<144x256xbf16>, vector<8x256xf32> -> vector<8x256xf32>
    %51 = arith.addf %46, %50 : vector<8x256xf32>
    %c48_46 = arith.constant 48 : index
    %c0_47 = arith.constant 0 : index
    %52 = vector.load %arg0[%c48_46, %c0_47] : memref<288x144xbf16, #tpu.memory_space<vmem>>, vector<8x144xbf16>
    %c2_48 = arith.constant 2 : index
    %c0_49 = arith.constant 0 : index
    %c0_50 = arith.constant 0 : index
    %53 = vector.load %arg1[%c2_48, %c0_49, %c0_50] : memref<8x144x256xbf16, #tpu.memory_space<vmem>>, vector<1x144x256xbf16>
    %54 = vector.shape_cast %53 : vector<1x144x256xbf16> to vector<144x256xbf16>
    %cst_51 = arith.constant dense<0.000000e+00> : vector<8x256xf32>
    %55 = tpu.matmul %52, %54, %cst_51 {dimension_numbers = #tpu.dot_dimension_numbers<[1], [0], [0], [1], [0, 0, 1, 1], [], []>} : vector<8x144xbf16>, vector<144x256xbf16>, vector<8x256xf32> -> vector<8x256xf32>
    %56 = arith.addf %51, %55 : vector<8x256xf32>
    %c56_52 = arith.constant 56 : index
    %c0_53 = arith.constant 0 : index
    %57 = vector.load %arg0[%c56_52, %c0_53] : memref<288x144xbf16, #tpu.memory_space<vmem>>, vector<8x144xbf16>
    %c3_54 = arith.constant 3 : index
    %c0_55 = arith.constant 0 : index
    %c0_56 = arith.constant 0 : index
    %58 = vector.load %arg1[%c3_54, %c0_55, %c0_56] : memref<8x144x256xbf16, #tpu.memory_space<vmem>>, vector<1x144x256xbf16>
    %59 = vector.shape_cast %58 : vector<1x144x256xbf16> to vector<144x256xbf16>
    %cst_57 = arith.constant dense<0.000000e+00> : vector<8x256xf32>
    %60 = tpu.matmul %57, %59, %cst_57 {dimension_numbers = #tpu.dot_dimension_numbers<[1], [0], [0], [1], [0, 0, 1, 1], [], []>} : vector<8x144xbf16>, vector<144x256xbf16>, vector<8x256xf32> -> vector<8x256xf32>
    %61 = arith.addf %56, %60 : vector<8x256xf32>
    %c64 = arith.constant 64 : index
    %c0_58 = arith.constant 0 : index
    %62 = vector.load %arg0[%c64, %c0_58] : memref<288x144xbf16, #tpu.memory_space<vmem>>, vector<8x144xbf16>
    %c4_59 = arith.constant 4 : index
    %c0_60 = arith.constant 0 : index
    %c0_61 = arith.constant 0 : index
    %63 = vector.load %arg1[%c4_59, %c0_60, %c0_61] : memref<8x144x256xbf16, #tpu.memory_space<vmem>>, vector<1x144x256xbf16>
    %64 = vector.shape_cast %63 : vector<1x144x256xbf16> to vector<144x256xbf16>
    %cst_62 = arith.constant dense<0.000000e+00> : vector<8x256xf32>
    %65 = tpu.matmul %62, %64, %cst_62 {dimension_numbers = #tpu.dot_dimension_numbers<[1], [0], [0], [1], [0, 0, 1, 1], [], []>} : vector<8x144xbf16>, vector<144x256xbf16>, vector<8x256xf32> -> vector<8x256xf32>
    %66 = arith.addf %61, %65 : vector<8x256xf32>
    %c72 = arith.constant 72 : index
    %c0_63 = arith.constant 0 : index
    %67 = vector.load %arg0[%c72, %c0_63] : memref<288x144xbf16, #tpu.memory_space<vmem>>, vector<8x144xbf16>
    %c5_64 = arith.constant 5 : index
    %c0_65 = arith.constant 0 : index
    %c0_66 = arith.constant 0 : index
    %68 = vector.load %arg1[%c5_64, %c0_65, %c0_66] : memref<8x144x256xbf16, #tpu.memory_space<vmem>>, vector<1x144x256xbf16>
    %69 = vector.shape_cast %68 : vector<1x144x256xbf16> to vector<144x256xbf16>
    %cst_67 = arith.constant dense<0.000000e+00> : vector<8x256xf32>
    %70 = tpu.matmul %67, %69, %cst_67 {dimension_numbers = #tpu.dot_dimension_numbers<[1], [0], [0], [1], [0, 0, 1, 1], [], []>} : vector<8x144xbf16>, vector<144x256xbf16>, vector<8x256xf32> -> vector<8x256xf32>
    %71 = arith.addf %66, %70 : vector<8x256xf32>
    %c80 = arith.constant 80 : index
    %c0_68 = arith.constant 0 : index
    %72 = vector.load %arg0[%c80, %c0_68] : memref<288x144xbf16, #tpu.memory_space<vmem>>, vector<8x144xbf16>
    %c6_69 = arith.constant 6 : index
    %c0_70 = arith.constant 0 : index
    %c0_71 = arith.constant 0 : index
    %73 = vector.load %arg1[%c6_69, %c0_70, %c0_71] : memref<8x144x256xbf16, #tpu.memory_space<vmem>>, vector<1x144x256xbf16>
    %74 = vector.shape_cast %73 : vector<1x144x256xbf16> to vector<144x256xbf16>
    %cst_72 = arith.constant dense<0.000000e+00> : vector<8x256xf32>
    %75 = tpu.matmul %72, %74, %cst_72 {dimension_numbers = #tpu.dot_dimension_numbers<[1], [0], [0], [1], [0, 0, 1, 1], [], []>} : vector<8x144xbf16>, vector<144x256xbf16>, vector<8x256xf32> -> vector<8x256xf32>
    %76 = arith.addf %71, %75 : vector<8x256xf32>
    %c88 = arith.constant 88 : index
    %c0_73 = arith.constant 0 : index
    %77 = vector.load %arg0[%c88, %c0_73] : memref<288x144xbf16, #tpu.memory_space<vmem>>, vector<8x144xbf16>
    %c7_74 = arith.constant 7 : index
    %c0_75 = arith.constant 0 : index
    %c0_76 = arith.constant 0 : index
    %78 = vector.load %arg1[%c7_74, %c0_75, %c0_76] : memref<8x144x256xbf16, #tpu.memory_space<vmem>>, vector<1x144x256xbf16>
    %79 = vector.shape_cast %78 : vector<1x144x256xbf16> to vector<144x256xbf16>
    %cst_77 = arith.constant dense<0.000000e+00> : vector<8x256xf32>
    %80 = tpu.matmul %77, %79, %cst_77 {dimension_numbers = #tpu.dot_dimension_numbers<[1], [0], [0], [1], [0, 0, 1, 1], [], []>} : vector<8x144xbf16>, vector<144x256xbf16>, vector<8x256xf32> -> vector<8x256xf32>
    %81 = arith.addf %76, %80 : vector<8x256xf32>
    %cst_78 = arith.constant 0.000000e+00 : f32
    %82 = vector.broadcast %cst_78 : f32 to vector<8x256xf32>
    %c64_79 = arith.constant 64 : index
    %c0_80 = arith.constant 0 : index
    %83 = vector.load %arg0[%c64_79, %c0_80] : memref<288x144xbf16, #tpu.memory_space<vmem>>, vector<8x144xbf16>
    %c0_81 = arith.constant 0 : index
    %c0_82 = arith.constant 0 : index
    %c0_83 = arith.constant 0 : index
    %84 = vector.load %arg1[%c0_81, %c0_82, %c0_83] : memref<8x144x256xbf16, #tpu.memory_space<vmem>>, vector<1x144x256xbf16>
    %85 = vector.shape_cast %84 : vector<1x144x256xbf16> to vector<144x256xbf16>
    %cst_84 = arith.constant dense<0.000000e+00> : vector<8x256xf32>
    %86 = tpu.matmul %83, %85, %cst_84 {dimension_numbers = #tpu.dot_dimension_numbers<[1], [0], [0], [1], [0, 0, 1, 1], [], []>} : vector<8x144xbf16>, vector<144x256xbf16>, vector<8x256xf32> -> vector<8x256xf32>
    %87 = arith.addf %82, %86 : vector<8x256xf32>
    %c72_85 = arith.constant 72 : index
    %c0_86 = arith.constant 0 : index
    %88 = vector.load %arg0[%c72_85, %c0_86] : memref<288x144xbf16, #tpu.memory_space<vmem>>, vector<8x144xbf16>
    %c1_87 = arith.constant 1 : index
    %c0_88 = arith.constant 0 : index
    %c0_89 = arith.constant 0 : index
    %89 = vector.load %arg1[%c1_87, %c0_88, %c0_89] : memref<8x144x256xbf16, #tpu.memory_space<vmem>>, vector<1x144x256xbf16>
    %90 = vector.shape_cast %89 : vector<1x144x256xbf16> to vector<144x256xbf16>
    %cst_90 = arith.constant dense<0.000000e+00> : vector<8x256xf32>
    %91 = tpu.matmul %88, %90, %cst_90 {dimension_numbers = #tpu.dot_dimension_numbers<[1], [0], [0], [1], [0, 0, 1, 1], [], []>} : vector<8x144xbf16>, vector<144x256xbf16>, vector<8x256xf32> -> vector<8x256xf32>
    %92 = arith.addf %87, %91 : vector<8x256xf32>
    %c80_91 = arith.constant 80 : index
    %c0_92 = arith.constant 0 : index
    %93 = vector.load %arg0[%c80_91, %c0_92] : memref<288x144xbf16, #tpu.memory_space<vmem>>, vector<8x144xbf16>
    %c2_93 = arith.constant 2 : index
    %c0_94 = arith.constant 0 : index
    %c0_95 = arith.constant 0 : index
    %94 = vector.load %arg1[%c2_93, %c0_94, %c0_95] : memref<8x144x256xbf16, #tpu.memory_space<vmem>>, vector<1x144x256xbf16>
    %95 = vector.shape_cast %94 : vector<1x144x256xbf16> to vector<144x256xbf16>
    %cst_96 = arith.constant dense<0.000000e+00> : vector<8x256xf32>
    %96 = tpu.matmul %93, %95, %cst_96 {dimension_numbers = #tpu.dot_dimension_numbers<[1], [0], [0], [1], [0, 0, 1, 1], [], []>} : vector<8x144xbf16>, vector<144x256xbf16>, vector<8x256xf32> -> vector<8x256xf32>
    %97 = arith.addf %92, %96 : vector<8x256xf32>
    %c88_97 = arith.constant 88 : index
    %c0_98 = arith.constant 0 : index
    %98 = vector.load %arg0[%c88_97, %c0_98] : memref<288x144xbf16, #tpu.memory_space<vmem>>, vector<8x144xbf16>
    %c3_99 = arith.constant 3 : index
    %c0_100 = arith.constant 0 : index
    %c0_101 = arith.constant 0 : index
    %99 = vector.load %arg1[%c3_99, %c0_100, %c0_101] : memref<8x144x256xbf16, #tpu.memory_space<vmem>>, vector<1x144x256xbf16>
    %100 = vector.shape_cast %99 : vector<1x144x256xbf16> to vector<144x256xbf16>
    %cst_102 = arith.constant dense<0.000000e+00> : vector<8x256xf32>
    %101 = tpu.matmul %98, %100, %cst_102 {dimension_numbers = #tpu.dot_dimension_numbers<[1], [0], [0], [1], [0, 0, 1, 1], [], []>} : vector<8x144xbf16>, vector<144x256xbf16>, vector<8x256xf32> -> vector<8x256xf32>
    %102 = arith.addf %97, %101 : vector<8x256xf32>
    %c96 = arith.constant 96 : index
    %c0_103 = arith.constant 0 : index
    %103 = vector.load %arg0[%c96, %c0_103] : memref<288x144xbf16, #tpu.memory_space<vmem>>, vector<8x144xbf16>
    %c4_104 = arith.constant 4 : index
    %c0_105 = arith.constant 0 : index
    %c0_106 = arith.constant 0 : index
    %104 = vector.load %arg1[%c4_104, %c0_105, %c0_106] : memref<8x144x256xbf16, #tpu.memory_space<vmem>>, vector<1x144x256xbf16>
    %105 = vector.shape_cast %104 : vector<1x144x256xbf16> to vector<144x256xbf16>
    %cst_107 = arith.constant dense<0.000000e+00> : vector<8x256xf32>
    %106 = tpu.matmul %103, %105, %cst_107 {dimension_numbers = #tpu.dot_dimension_numbers<[1], [0], [0], [1], [0, 0, 1, 1], [], []>} : vector<8x144xbf16>, vector<144x256xbf16>, vector<8x256xf32> -> vector<8x256xf32>
    %107 = arith.addf %102, %106 : vector<8x256xf32>
    %c104 = arith.constant 104 : index
    %c0_108 = arith.constant 0 : index
    %108 = vector.load %arg0[%c104, %c0_108] : memref<288x144xbf16, #tpu.memory_space<vmem>>, vector<8x144xbf16>
    %c5_109 = arith.constant 5 : index
    %c0_110 = arith.constant 0 : index
    %c0_111 = arith.constant 0 : index
    %109 = vector.load %arg1[%c5_109, %c0_110, %c0_111] : memref<8x144x256xbf16, #tpu.memory_space<vmem>>, vector<1x144x256xbf16>
    %110 = vector.shape_cast %109 : vector<1x144x256xbf16> to vector<144x256xbf16>
    %cst_112 = arith.constant dense<0.000000e+00> : vector<8x256xf32>
    %111 = tpu.matmul %108, %110, %cst_112 {dimension_numbers = #tpu.dot_dimension_numbers<[1], [0], [0], [1], [0, 0, 1, 1], [], []>} : vector<8x144xbf16>, vector<144x256xbf16>, vector<8x256xf32> -> vector<8x256xf32>
    %112 = arith.addf %107, %111 : vector<8x256xf32>
    %c112 = arith.constant 112 : index
    %c0_113 = arith.constant 0 : index
    %113 = vector.load %arg0[%c112, %c0_113] : memref<288x144xbf16, #tpu.memory_space<vmem>>, vector<8x144xbf16>
    %c6_114 = arith.constant 6 : index
    %c0_115 = arith.constant 0 : index
    %c0_116 = arith.constant 0 : index
    %114 = vector.load %arg1[%c6_114, %c0_115, %c0_116] : memref<8x144x256xbf16, #tpu.memory_space<vmem>>, vector<1x144x256xbf16>
    %115 = vector.shape_cast %114 : vector<1x144x256xbf16> to vector<144x256xbf16>
    %cst_117 = arith.constant dense<0.000000e+00> : vector<8x256xf32>
    %116 = tpu.matmul %113, %115, %cst_117 {dimension_numbers = #tpu.dot_dimension_numbers<[1], [0], [0], [1], [0, 0, 1, 1], [], []>} : vector<8x144xbf16>, vector<144x256xbf16>, vector<8x256xf32> -> vector<8x256xf32>
    %117 = arith.addf %112, %116 : vector<8x256xf32>
    %c120 = arith.constant 120 : index
    %c0_118 = arith.constant 0 : index
    %118 = vector.load %arg0[%c120, %c0_118] : memref<288x144xbf16, #tpu.memory_space<vmem>>, vector<8x144xbf16>
    %c7_119 = arith.constant 7 : index
    %c0_120 = arith.constant 0 : index
    %c0_121 = arith.constant 0 : index
    %119 = vector.load %arg1[%c7_119, %c0_120, %c0_121] : memref<8x144x256xbf16, #tpu.memory_space<vmem>>, vector<1x144x256xbf16>
    %120 = vector.shape_cast %119 : vector<1x144x256xbf16> to vector<144x256xbf16>
    %cst_122 = arith.constant dense<0.000000e+00> : vector<8x256xf32>
    %121 = tpu.matmul %118, %120, %cst_122 {dimension_numbers = #tpu.dot_dimension_numbers<[1], [0], [0], [1], [0, 0, 1, 1], [], []>} : vector<8x144xbf16>, vector<144x256xbf16>, vector<8x256xf32> -> vector<8x256xf32>
    %122 = arith.addf %117, %121 : vector<8x256xf32>
    %cst_123 = arith.constant 0.000000e+00 : f32
    %123 = vector.broadcast %cst_123 : f32 to vector<8x256xf32>
    %c96_124 = arith.constant 96 : index
    %c0_125 = arith.constant 0 : index
    %124 = vector.load %arg0[%c96_124, %c0_125] : memref<288x144xbf16, #tpu.memory_space<vmem>>, vector<8x144xbf16>
    %c0_126 = arith.constant 0 : index
    %c0_127 = arith.constant 0 : index
    %c0_128 = arith.constant 0 : index
    %125 = vector.load %arg1[%c0_126, %c0_127, %c0_128] : memref<8x144x256xbf16, #tpu.memory_space<vmem>>, vector<1x144x256xbf16>
    %126 = vector.shape_cast %125 : vector<1x144x256xbf16> to vector<144x256xbf16>
    %cst_129 = arith.constant dense<0.000000e+00> : vector<8x256xf32>
    %127 = tpu.matmul %124, %126, %cst_129 {dimension_numbers = #tpu.dot_dimension_numbers<[1], [0], [0], [1], [0, 0, 1, 1], [], []>} : vector<8x144xbf16>, vector<144x256xbf16>, vector<8x256xf32> -> vector<8x256xf32>
    %128 = arith.addf %123, %127 : vector<8x256xf32>
    %c104_130 = arith.constant 104 : index
    %c0_131 = arith.constant 0 : index
    %129 = vector.load %arg0[%c104_130, %c0_131] : memref<288x144xbf16, #tpu.memory_space<vmem>>, vector<8x144xbf16>
    %c1_132 = arith.constant 1 : index
    %c0_133 = arith.constant 0 : index
    %c0_134 = arith.constant 0 : index
    %130 = vector.load %arg1[%c1_132, %c0_133, %c0_134] : memref<8x144x256xbf16, #tpu.memory_space<vmem>>, vector<1x144x256xbf16>
    %131 = vector.shape_cast %130 : vector<1x144x256xbf16> to vector<144x256xbf16>
    %cst_135 = arith.constant dense<0.000000e+00> : vector<8x256xf32>
    %132 = tpu.matmul %129, %131, %cst_135 {dimension_numbers = #tpu.dot_dimension_numbers<[1], [0], [0], [1], [0, 0, 1, 1], [], []>} : vector<8x144xbf16>, vector<144x256xbf16>, vector<8x256xf32> -> vector<8x256xf32>
    %133 = arith.addf %128, %132 : vector<8x256xf32>
    %c112_136 = arith.constant 112 : index
    %c0_137 = arith.constant 0 : index
    %134 = vector.load %arg0[%c112_136, %c0_137] : memref<288x144xbf16, #tpu.memory_space<vmem>>, vector<8x144xbf16>
    %c2_138 = arith.constant 2 : index
    %c0_139 = arith.constant 0 : index
    %c0_140 = arith.constant 0 : index
    %135 = vector.load %arg1[%c2_138, %c0_139, %c0_140] : memref<8x144x256xbf16, #tpu.memory_space<vmem>>, vector<1x144x256xbf16>
    %136 = vector.shape_cast %135 : vector<1x144x256xbf16> to vector<144x256xbf16>
    %cst_141 = arith.constant dense<0.000000e+00> : vector<8x256xf32>
    %137 = tpu.matmul %134, %136, %cst_141 {dimension_numbers = #tpu.dot_dimension_numbers<[1], [0], [0], [1], [0, 0, 1, 1], [], []>} : vector<8x144xbf16>, vector<144x256xbf16>, vector<8x256xf32> -> vector<8x256xf32>
    %138 = arith.addf %133, %137 : vector<8x256xf32>
    %c120_142 = arith.constant 120 : index
    %c0_143 = arith.constant 0 : index
    %139 = vector.load %arg0[%c120_142, %c0_143] : memref<288x144xbf16, #tpu.memory_space<vmem>>, vector<8x144xbf16>
    %c3_144 = arith.constant 3 : index
    %c0_145 = arith.constant 0 : index
    %c0_146 = arith.constant 0 : index
    %140 = vector.load %arg1[%c3_144, %c0_145, %c0_146] : memref<8x144x256xbf16, #tpu.memory_space<vmem>>, vector<1x144x256xbf16>
    %141 = vector.shape_cast %140 : vector<1x144x256xbf16> to vector<144x256xbf16>
    %cst_147 = arith.constant dense<0.000000e+00> : vector<8x256xf32>
    %142 = tpu.matmul %139, %141, %cst_147 {dimension_numbers = #tpu.dot_dimension_numbers<[1], [0], [0], [1], [0, 0, 1, 1], [], []>} : vector<8x144xbf16>, vector<144x256xbf16>, vector<8x256xf32> -> vector<8x256xf32>
    %143 = arith.addf %138, %142 : vector<8x256xf32>
    %c128 = arith.constant 128 : index
    %c0_148 = arith.constant 0 : index
    %144 = vector.load %arg0[%c128, %c0_148] : memref<288x144xbf16, #tpu.memory_space<vmem>>, vector<8x144xbf16>
    %c4_149 = arith.constant 4 : index
    %c0_150 = arith.constant 0 : index
    %c0_151 = arith.constant 0 : index
    %145 = vector.load %arg1[%c4_149, %c0_150, %c0_151] : memref<8x144x256xbf16, #tpu.memory_space<vmem>>, vector<1x144x256xbf16>
    %146 = vector.shape_cast %145 : vector<1x144x256xbf16> to vector<144x256xbf16>
    %cst_152 = arith.constant dense<0.000000e+00> : vector<8x256xf32>
    %147 = tpu.matmul %144, %146, %cst_152 {dimension_numbers = #tpu.dot_dimension_numbers<[1], [0], [0], [1], [0, 0, 1, 1], [], []>} : vector<8x144xbf16>, vector<144x256xbf16>, vector<8x256xf32> -> vector<8x256xf32>
    %148 = arith.addf %143, %147 : vector<8x256xf32>
    %c136 = arith.constant 136 : index
    %c0_153 = arith.constant 0 : index
    %149 = vector.load %arg0[%c136, %c0_153] : memref<288x144xbf16, #tpu.memory_space<vmem>>, vector<8x144xbf16>
    %c5_154 = arith.constant 5 : index
    %c0_155 = arith.constant 0 : index
    %c0_156 = arith.constant 0 : index
    %150 = vector.load %arg1[%c5_154, %c0_155, %c0_156] : memref<8x144x256xbf16, #tpu.memory_space<vmem>>, vector<1x144x256xbf16>
    %151 = vector.shape_cast %150 : vector<1x144x256xbf16> to vector<144x256xbf16>
    %cst_157 = arith.constant dense<0.000000e+00> : vector<8x256xf32>
    %152 = tpu.matmul %149, %151, %cst_157 {dimension_numbers = #tpu.dot_dimension_numbers<[1], [0], [0], [1], [0, 0, 1, 1], [], []>} : vector<8x144xbf16>, vector<144x256xbf16>, vector<8x256xf32> -> vector<8x256xf32>
    %153 = arith.addf %148, %152 : vector<8x256xf32>
    %c144 = arith.constant 144 : index
    %c0_158 = arith.constant 0 : index
    %154 = vector.load %arg0[%c144, %c0_158] : memref<288x144xbf16, #tpu.memory_space<vmem>>, vector<8x144xbf16>
    %c6_159 = arith.constant 6 : index
    %c0_160 = arith.constant 0 : index
    %c0_161 = arith.constant 0 : index
    %155 = vector.load %arg1[%c6_159, %c0_160, %c0_161] : memref<8x144x256xbf16, #tpu.memory_space<vmem>>, vector<1x144x256xbf16>
    %156 = vector.shape_cast %155 : vector<1x144x256xbf16> to vector<144x256xbf16>
    %cst_162 = arith.constant dense<0.000000e+00> : vector<8x256xf32>
    %157 = tpu.matmul %154, %156, %cst_162 {dimension_numbers = #tpu.dot_dimension_numbers<[1], [0], [0], [1], [0, 0, 1, 1], [], []>} : vector<8x144xbf16>, vector<144x256xbf16>, vector<8x256xf32> -> vector<8x256xf32>
    %158 = arith.addf %153, %157 : vector<8x256xf32>
    %c152 = arith.constant 152 : index
    %c0_163 = arith.constant 0 : index
    %159 = vector.load %arg0[%c152, %c0_163] : memref<288x144xbf16, #tpu.memory_space<vmem>>, vector<8x144xbf16>
    %c7_164 = arith.constant 7 : index
    %c0_165 = arith.constant 0 : index
    %c0_166 = arith.constant 0 : index
    %160 = vector.load %arg1[%c7_164, %c0_165, %c0_166] : memref<8x144x256xbf16, #tpu.memory_space<vmem>>, vector<1x144x256xbf16>
    %161 = vector.shape_cast %160 : vector<1x144x256xbf16> to vector<144x256xbf16>
    %cst_167 = arith.constant dense<0.000000e+00> : vector<8x256xf32>
    %162 = tpu.matmul %159, %161, %cst_167 {dimension_numbers = #tpu.dot_dimension_numbers<[1], [0], [0], [1], [0, 0, 1, 1], [], []>} : vector<8x144xbf16>, vector<144x256xbf16>, vector<8x256xf32> -> vector<8x256xf32>
    %163 = arith.addf %158, %162 : vector<8x256xf32>
    %cst_168 = arith.constant 0.000000e+00 : f32
    %164 = vector.broadcast %cst_168 : f32 to vector<8x256xf32>
    %c128_169 = arith.constant 128 : index
    %c0_170 = arith.constant 0 : index
    %165 = vector.load %arg0[%c128_169, %c0_170] : memref<288x144xbf16, #tpu.memory_space<vmem>>, vector<8x144xbf16>
    %c0_171 = arith.constant 0 : index
    %c0_172 = arith.constant 0 : index
    %c0_173 = arith.constant 0 : index
    %166 = vector.load %arg1[%c0_171, %c0_172, %c0_173] : memref<8x144x256xbf16, #tpu.memory_space<vmem>>, vector<1x144x256xbf16>
    %167 = vector.shape_cast %166 : vector<1x144x256xbf16> to vector<144x256xbf16>
    %cst_174 = arith.constant dense<0.000000e+00> : vector<8x256xf32>
    %168 = tpu.matmul %165, %167, %cst_174 {dimension_numbers = #tpu.dot_dimension_numbers<[1], [0], [0], [1], [0, 0, 1, 1], [], []>} : vector<8x144xbf16>, vector<144x256xbf16>, vector<8x256xf32> -> vector<8x256xf32>
    %169 = arith.addf %164, %168 : vector<8x256xf32>
    %c136_175 = arith.constant 136 : index
    %c0_176 = arith.constant 0 : index
    %170 = vector.load %arg0[%c136_175, %c0_176] : memref<288x144xbf16, #tpu.memory_space<vmem>>, vector<8x144xbf16>
    %c1_177 = arith.constant 1 : index
    %c0_178 = arith.constant 0 : index
    %c0_179 = arith.constant 0 : index
    %171 = vector.load %arg1[%c1_177, %c0_178, %c0_179] : memref<8x144x256xbf16, #tpu.memory_space<vmem>>, vector<1x144x256xbf16>
    %172 = vector.shape_cast %171 : vector<1x144x256xbf16> to vector<144x256xbf16>
    %cst_180 = arith.constant dense<0.000000e+00> : vector<8x256xf32>
    %173 = tpu.matmul %170, %172, %cst_180 {dimension_numbers = #tpu.dot_dimension_numbers<[1], [0], [0], [1], [0, 0, 1, 1], [], []>} : vector<8x144xbf16>, vector<144x256xbf16>, vector<8x256xf32> -> vector<8x256xf32>
    %174 = arith.addf %169, %173 : vector<8x256xf32>
    %c144_181 = arith.constant 144 : index
    %c0_182 = arith.constant 0 : index
    %175 = vector.load %arg0[%c144_181, %c0_182] : memref<288x144xbf16, #tpu.memory_space<vmem>>, vector<8x144xbf16>
    %c2_183 = arith.constant 2 : index
    %c0_184 = arith.constant 0 : index
    %c0_185 = arith.constant 0 : index
    %176 = vector.load %arg1[%c2_183, %c0_184, %c0_185] : memref<8x144x256xbf16, #tpu.memory_space<vmem>>, vector<1x144x256xbf16>
    %177 = vector.shape_cast %176 : vector<1x144x256xbf16> to vector<144x256xbf16>
    %cst_186 = arith.constant dense<0.000000e+00> : vector<8x256xf32>
    %178 = tpu.matmul %175, %177, %cst_186 {dimension_numbers = #tpu.dot_dimension_numbers<[1], [0], [0], [1], [0, 0, 1, 1], [], []>} : vector<8x144xbf16>, vector<144x256xbf16>, vector<8x256xf32> -> vector<8x256xf32>
    %179 = arith.addf %174, %178 : vector<8x256xf32>
    %c152_187 = arith.constant 152 : index
    %c0_188 = arith.constant 0 : index
    %180 = vector.load %arg0[%c152_187, %c0_188] : memref<288x144xbf16, #tpu.memory_space<vmem>>, vector<8x144xbf16>
    %c3_189 = arith.constant 3 : index
    %c0_190 = arith.constant 0 : index
    %c0_191 = arith.constant 0 : index
    %181 = vector.load %arg1[%c3_189, %c0_190, %c0_191] : memref<8x144x256xbf16, #tpu.memory_space<vmem>>, vector<1x144x256xbf16>
    %182 = vector.shape_cast %181 : vector<1x144x256xbf16> to vector<144x256xbf16>
    %cst_192 = arith.constant dense<0.000000e+00> : vector<8x256xf32>
    %183 = tpu.matmul %180, %182, %cst_192 {dimension_numbers = #tpu.dot_dimension_numbers<[1], [0], [0], [1], [0, 0, 1, 1], [], []>} : vector<8x144xbf16>, vector<144x256xbf16>, vector<8x256xf32> -> vector<8x256xf32>
    %184 = arith.addf %179, %183 : vector<8x256xf32>
    %c160 = arith.constant 160 : index
    %c0_193 = arith.constant 0 : index
    %185 = vector.load %arg0[%c160, %c0_193] : memref<288x144xbf16, #tpu.memory_space<vmem>>, vector<8x144xbf16>
    %c4_194 = arith.constant 4 : index
    %c0_195 = arith.constant 0 : index
    %c0_196 = arith.constant 0 : index
    %186 = vector.load %arg1[%c4_194, %c0_195, %c0_196] : memref<8x144x256xbf16, #tpu.memory_space<vmem>>, vector<1x144x256xbf16>
    %187 = vector.shape_cast %186 : vector<1x144x256xbf16> to vector<144x256xbf16>
    %cst_197 = arith.constant dense<0.000000e+00> : vector<8x256xf32>
    %188 = tpu.matmul %185, %187, %cst_197 {dimension_numbers = #tpu.dot_dimension_numbers<[1], [0], [0], [1], [0, 0, 1, 1], [], []>} : vector<8x144xbf16>, vector<144x256xbf16>, vector<8x256xf32> -> vector<8x256xf32>
    %189 = arith.addf %184, %188 : vector<8x256xf32>
    %c168 = arith.constant 168 : index
    %c0_198 = arith.constant 0 : index
    %190 = vector.load %arg0[%c168, %c0_198] : memref<288x144xbf16, #tpu.memory_space<vmem>>, vector<8x144xbf16>
    %c5_199 = arith.constant 5 : index
    %c0_200 = arith.constant 0 : index
    %c0_201 = arith.constant 0 : index
    %191 = vector.load %arg1[%c5_199, %c0_200, %c0_201] : memref<8x144x256xbf16, #tpu.memory_space<vmem>>, vector<1x144x256xbf16>
    %192 = vector.shape_cast %191 : vector<1x144x256xbf16> to vector<144x256xbf16>
    %cst_202 = arith.constant dense<0.000000e+00> : vector<8x256xf32>
    %193 = tpu.matmul %190, %192, %cst_202 {dimension_numbers = #tpu.dot_dimension_numbers<[1], [0], [0], [1], [0, 0, 1, 1], [], []>} : vector<8x144xbf16>, vector<144x256xbf16>, vector<8x256xf32> -> vector<8x256xf32>
    %194 = arith.addf %189, %193 : vector<8x256xf32>
    %c176 = arith.constant 176 : index
    %c0_203 = arith.constant 0 : index
    %195 = vector.load %arg0[%c176, %c0_203] : memref<288x144xbf16, #tpu.memory_space<vmem>>, vector<8x144xbf16>
    %c6_204 = arith.constant 6 : index
    %c0_205 = arith.constant 0 : index
    %c0_206 = arith.constant 0 : index
    %196 = vector.load %arg1[%c6_204, %c0_205, %c0_206] : memref<8x144x256xbf16, #tpu.memory_space<vmem>>, vector<1x144x256xbf16>
    %197 = vector.shape_cast %196 : vector<1x144x256xbf16> to vector<144x256xbf16>
    %cst_207 = arith.constant dense<0.000000e+00> : vector<8x256xf32>
    %198 = tpu.matmul %195, %197, %cst_207 {dimension_numbers = #tpu.dot_dimension_numbers<[1], [0], [0], [1], [0, 0, 1, 1], [], []>} : vector<8x144xbf16>, vector<144x256xbf16>, vector<8x256xf32> -> vector<8x256xf32>
    %199 = arith.addf %194, %198 : vector<8x256xf32>
    %c184 = arith.constant 184 : index
    %c0_208 = arith.constant 0 : index
    %200 = vector.load %arg0[%c184, %c0_208] : memref<288x144xbf16, #tpu.memory_space<vmem>>, vector<8x144xbf16>
    %c7_209 = arith.constant 7 : index
    %c0_210 = arith.constant 0 : index
    %c0_211 = arith.constant 0 : index
    %201 = vector.load %arg1[%c7_209, %c0_210, %c0_211] : memref<8x144x256xbf16, #tpu.memory_space<vmem>>, vector<1x144x256xbf16>
    %202 = vector.shape_cast %201 : vector<1x144x256xbf16> to vector<144x256xbf16>
    %cst_212 = arith.constant dense<0.000000e+00> : vector<8x256xf32>
    %203 = tpu.matmul %200, %202, %cst_212 {dimension_numbers = #tpu.dot_dimension_numbers<[1], [0], [0], [1], [0, 0, 1, 1], [], []>} : vector<8x144xbf16>, vector<144x256xbf16>, vector<8x256xf32> -> vector<8x256xf32>
    %204 = arith.addf %199, %203 : vector<8x256xf32>
    %cst_213 = arith.constant 0.000000e+00 : f32
    %205 = vector.broadcast %cst_213 : f32 to vector<8x256xf32>
    %c160_214 = arith.constant 160 : index
    %c0_215 = arith.constant 0 : index
    %206 = vector.load %arg0[%c160_214, %c0_215] : memref<288x144xbf16, #tpu.memory_space<vmem>>, vector<8x144xbf16>
    %c0_216 = arith.constant 0 : index
    %c0_217 = arith.constant 0 : index
    %c0_218 = arith.constant 0 : index
    %207 = vector.load %arg1[%c0_216, %c0_217, %c0_218] : memref<8x144x256xbf16, #tpu.memory_space<vmem>>, vector<1x144x256xbf16>
    %208 = vector.shape_cast %207 : vector<1x144x256xbf16> to vector<144x256xbf16>
    %cst_219 = arith.constant dense<0.000000e+00> : vector<8x256xf32>
    %209 = tpu.matmul %206, %208, %cst_219 {dimension_numbers = #tpu.dot_dimension_numbers<[1], [0], [0], [1], [0, 0, 1, 1], [], []>} : vector<8x144xbf16>, vector<144x256xbf16>, vector<8x256xf32> -> vector<8x256xf32>
    %210 = arith.addf %205, %209 : vector<8x256xf32>
    %c168_220 = arith.constant 168 : index
    %c0_221 = arith.constant 0 : index
    %211 = vector.load %arg0[%c168_220, %c0_221] : memref<288x144xbf16, #tpu.memory_space<vmem>>, vector<8x144xbf16>
    %c1_222 = arith.constant 1 : index
    %c0_223 = arith.constant 0 : index
    %c0_224 = arith.constant 0 : index
    %212 = vector.load %arg1[%c1_222, %c0_223, %c0_224] : memref<8x144x256xbf16, #tpu.memory_space<vmem>>, vector<1x144x256xbf16>
    %213 = vector.shape_cast %212 : vector<1x144x256xbf16> to vector<144x256xbf16>
    %cst_225 = arith.constant dense<0.000000e+00> : vector<8x256xf32>
    %214 = tpu.matmul %211, %213, %cst_225 {dimension_numbers = #tpu.dot_dimension_numbers<[1], [0], [0], [1], [0, 0, 1, 1], [], []>} : vector<8x144xbf16>, vector<144x256xbf16>, vector<8x256xf32> -> vector<8x256xf32>
    %215 = arith.addf %210, %214 : vector<8x256xf32>
    %c176_226 = arith.constant 176 : index
    %c0_227 = arith.constant 0 : index
    %216 = vector.load %arg0[%c176_226, %c0_227] : memref<288x144xbf16, #tpu.memory_space<vmem>>, vector<8x144xbf16>
    %c2_228 = arith.constant 2 : index
    %c0_229 = arith.constant 0 : index
    %c0_230 = arith.constant 0 : index
    %217 = vector.load %arg1[%c2_228, %c0_229, %c0_230] : memref<8x144x256xbf16, #tpu.memory_space<vmem>>, vector<1x144x256xbf16>
    %218 = vector.shape_cast %217 : vector<1x144x256xbf16> to vector<144x256xbf16>
    %cst_231 = arith.constant dense<0.000000e+00> : vector<8x256xf32>
    %219 = tpu.matmul %216, %218, %cst_231 {dimension_numbers = #tpu.dot_dimension_numbers<[1], [0], [0], [1], [0, 0, 1, 1], [], []>} : vector<8x144xbf16>, vector<144x256xbf16>, vector<8x256xf32> -> vector<8x256xf32>
    %220 = arith.addf %215, %219 : vector<8x256xf32>
    %c184_232 = arith.constant 184 : index
    %c0_233 = arith.constant 0 : index
    %221 = vector.load %arg0[%c184_232, %c0_233] : memref<288x144xbf16, #tpu.memory_space<vmem>>, vector<8x144xbf16>
    %c3_234 = arith.constant 3 : index
    %c0_235 = arith.constant 0 : index
    %c0_236 = arith.constant 0 : index
    %222 = vector.load %arg1[%c3_234, %c0_235, %c0_236] : memref<8x144x256xbf16, #tpu.memory_space<vmem>>, vector<1x144x256xbf16>
    %223 = vector.shape_cast %222 : vector<1x144x256xbf16> to vector<144x256xbf16>
    %cst_237 = arith.constant dense<0.000000e+00> : vector<8x256xf32>
    %224 = tpu.matmul %221, %223, %cst_237 {dimension_numbers = #tpu.dot_dimension_numbers<[1], [0], [0], [1], [0, 0, 1, 1], [], []>} : vector<8x144xbf16>, vector<144x256xbf16>, vector<8x256xf32> -> vector<8x256xf32>
    %225 = arith.addf %220, %224 : vector<8x256xf32>
    %c192 = arith.constant 192 : index
    %c0_238 = arith.constant 0 : index
    %226 = vector.load %arg0[%c192, %c0_238] : memref<288x144xbf16, #tpu.memory_space<vmem>>, vector<8x144xbf16>
    %c4_239 = arith.constant 4 : index
    %c0_240 = arith.constant 0 : index
    %c0_241 = arith.constant 0 : index
    %227 = vector.load %arg1[%c4_239, %c0_240, %c0_241] : memref<8x144x256xbf16, #tpu.memory_space<vmem>>, vector<1x144x256xbf16>
    %228 = vector.shape_cast %227 : vector<1x144x256xbf16> to vector<144x256xbf16>
    %cst_242 = arith.constant dense<0.000000e+00> : vector<8x256xf32>
    %229 = tpu.matmul %226, %228, %cst_242 {dimension_numbers = #tpu.dot_dimension_numbers<[1], [0], [0], [1], [0, 0, 1, 1], [], []>} : vector<8x144xbf16>, vector<144x256xbf16>, vector<8x256xf32> -> vector<8x256xf32>
    %230 = arith.addf %225, %229 : vector<8x256xf32>
    %c200 = arith.constant 200 : index
    %c0_243 = arith.constant 0 : index
    %231 = vector.load %arg0[%c200, %c0_243] : memref<288x144xbf16, #tpu.memory_space<vmem>>, vector<8x144xbf16>
    %c5_244 = arith.constant 5 : index
    %c0_245 = arith.constant 0 : index
    %c0_246 = arith.constant 0 : index
    %232 = vector.load %arg1[%c5_244, %c0_245, %c0_246] : memref<8x144x256xbf16, #tpu.memory_space<vmem>>, vector<1x144x256xbf16>
    %233 = vector.shape_cast %232 : vector<1x144x256xbf16> to vector<144x256xbf16>
    %cst_247 = arith.constant dense<0.000000e+00> : vector<8x256xf32>
    %234 = tpu.matmul %231, %233, %cst_247 {dimension_numbers = #tpu.dot_dimension_numbers<[1], [0], [0], [1], [0, 0, 1, 1], [], []>} : vector<8x144xbf16>, vector<144x256xbf16>, vector<8x256xf32> -> vector<8x256xf32>
    %235 = arith.addf %230, %234 : vector<8x256xf32>
    %c208 = arith.constant 208 : index
    %c0_248 = arith.constant 0 : index
    %236 = vector.load %arg0[%c208, %c0_248] : memref<288x144xbf16, #tpu.memory_space<vmem>>, vector<8x144xbf16>
    %c6_249 = arith.constant 6 : index
    %c0_250 = arith.constant 0 : index
    %c0_251 = arith.constant 0 : index
    %237 = vector.load %arg1[%c6_249, %c0_250, %c0_251] : memref<8x144x256xbf16, #tpu.memory_space<vmem>>, vector<1x144x256xbf16>
    %238 = vector.shape_cast %237 : vector<1x144x256xbf16> to vector<144x256xbf16>
    %cst_252 = arith.constant dense<0.000000e+00> : vector<8x256xf32>
    %239 = tpu.matmul %236, %238, %cst_252 {dimension_numbers = #tpu.dot_dimension_numbers<[1], [0], [0], [1], [0, 0, 1, 1], [], []>} : vector<8x144xbf16>, vector<144x256xbf16>, vector<8x256xf32> -> vector<8x256xf32>
    %240 = arith.addf %235, %239 : vector<8x256xf32>
    %c216 = arith.constant 216 : index
    %c0_253 = arith.constant 0 : index
    %241 = vector.load %arg0[%c216, %c0_253] : memref<288x144xbf16, #tpu.memory_space<vmem>>, vector<8x144xbf16>
    %c7_254 = arith.constant 7 : index
    %c0_255 = arith.constant 0 : index
    %c0_256 = arith.constant 0 : index
    %242 = vector.load %arg1[%c7_254, %c0_255, %c0_256] : memref<8x144x256xbf16, #tpu.memory_space<vmem>>, vector<1x144x256xbf16>
    %243 = vector.shape_cast %242 : vector<1x144x256xbf16> to vector<144x256xbf16>
    %cst_257 = arith.constant dense<0.000000e+00> : vector<8x256xf32>
    %244 = tpu.matmul %241, %243, %cst_257 {dimension_numbers = #tpu.dot_dimension_numbers<[1], [0], [0], [1], [0, 0, 1, 1], [], []>} : vector<8x144xbf16>, vector<144x256xbf16>, vector<8x256xf32> -> vector<8x256xf32>
    %245 = arith.addf %240, %244 : vector<8x256xf32>
    %cst_258 = arith.constant 0.000000e+00 : f32
    %246 = vector.broadcast %cst_258 : f32 to vector<8x256xf32>
    %c192_259 = arith.constant 192 : index
    %c0_260 = arith.constant 0 : index
    %247 = vector.load %arg0[%c192_259, %c0_260] : memref<288x144xbf16, #tpu.memory_space<vmem>>, vector<8x144xbf16>
    %c0_261 = arith.constant 0 : index
    %c0_262 = arith.constant 0 : index
    %c0_263 = arith.constant 0 : index
    %248 = vector.load %arg1[%c0_261, %c0_262, %c0_263] : memref<8x144x256xbf16, #tpu.memory_space<vmem>>, vector<1x144x256xbf16>
    %249 = vector.shape_cast %248 : vector<1x144x256xbf16> to vector<144x256xbf16>
    %cst_264 = arith.constant dense<0.000000e+00> : vector<8x256xf32>
    %250 = tpu.matmul %247, %249, %cst_264 {dimension_numbers = #tpu.dot_dimension_numbers<[1], [0], [0], [1], [0, 0, 1, 1], [], []>} : vector<8x144xbf16>, vector<144x256xbf16>, vector<8x256xf32> -> vector<8x256xf32>
    %251 = arith.addf %246, %250 : vector<8x256xf32>
    %c200_265 = arith.constant 200 : index
    %c0_266 = arith.constant 0 : index
    %252 = vector.load %arg0[%c200_265, %c0_266] : memref<288x144xbf16, #tpu.memory_space<vmem>>, vector<8x144xbf16>
    %c1_267 = arith.constant 1 : index
    %c0_268 = arith.constant 0 : index
    %c0_269 = arith.constant 0 : index
    %253 = vector.load %arg1[%c1_267, %c0_268, %c0_269] : memref<8x144x256xbf16, #tpu.memory_space<vmem>>, vector<1x144x256xbf16>
    %254 = vector.shape_cast %253 : vector<1x144x256xbf16> to vector<144x256xbf16>
    %cst_270 = arith.constant dense<0.000000e+00> : vector<8x256xf32>
    %255 = tpu.matmul %252, %254, %cst_270 {dimension_numbers = #tpu.dot_dimension_numbers<[1], [0], [0], [1], [0, 0, 1, 1], [], []>} : vector<8x144xbf16>, vector<144x256xbf16>, vector<8x256xf32> -> vector<8x256xf32>
    %256 = arith.addf %251, %255 : vector<8x256xf32>
    %c208_271 = arith.constant 208 : index
    %c0_272 = arith.constant 0 : index
    %257 = vector.load %arg0[%c208_271, %c0_272] : memref<288x144xbf16, #tpu.memory_space<vmem>>, vector<8x144xbf16>
    %c2_273 = arith.constant 2 : index
    %c0_274 = arith.constant 0 : index
    %c0_275 = arith.constant 0 : index
    %258 = vector.load %arg1[%c2_273, %c0_274, %c0_275] : memref<8x144x256xbf16, #tpu.memory_space<vmem>>, vector<1x144x256xbf16>
    %259 = vector.shape_cast %258 : vector<1x144x256xbf16> to vector<144x256xbf16>
    %cst_276 = arith.constant dense<0.000000e+00> : vector<8x256xf32>
    %260 = tpu.matmul %257, %259, %cst_276 {dimension_numbers = #tpu.dot_dimension_numbers<[1], [0], [0], [1], [0, 0, 1, 1], [], []>} : vector<8x144xbf16>, vector<144x256xbf16>, vector<8x256xf32> -> vector<8x256xf32>
    %261 = arith.addf %256, %260 : vector<8x256xf32>
    %c216_277 = arith.constant 216 : index
    %c0_278 = arith.constant 0 : index
    %262 = vector.load %arg0[%c216_277, %c0_278] : memref<288x144xbf16, #tpu.memory_space<vmem>>, vector<8x144xbf16>
    %c3_279 = arith.constant 3 : index
    %c0_280 = arith.constant 0 : index
    %c0_281 = arith.constant 0 : index
    %263 = vector.load %arg1[%c3_279, %c0_280, %c0_281] : memref<8x144x256xbf16, #tpu.memory_space<vmem>>, vector<1x144x256xbf16>
    %264 = vector.shape_cast %263 : vector<1x144x256xbf16> to vector<144x256xbf16>
    %cst_282 = arith.constant dense<0.000000e+00> : vector<8x256xf32>
    %265 = tpu.matmul %262, %264, %cst_282 {dimension_numbers = #tpu.dot_dimension_numbers<[1], [0], [0], [1], [0, 0, 1, 1], [], []>} : vector<8x144xbf16>, vector<144x256xbf16>, vector<8x256xf32> -> vector<8x256xf32>
    %266 = arith.addf %261, %265 : vector<8x256xf32>
    %c224 = arith.constant 224 : index
    %c0_283 = arith.constant 0 : index
    %267 = vector.load %arg0[%c224, %c0_283] : memref<288x144xbf16, #tpu.memory_space<vmem>>, vector<8x144xbf16>
    %c4_284 = arith.constant 4 : index
    %c0_285 = arith.constant 0 : index
    %c0_286 = arith.constant 0 : index
    %268 = vector.load %arg1[%c4_284, %c0_285, %c0_286] : memref<8x144x256xbf16, #tpu.memory_space<vmem>>, vector<1x144x256xbf16>
    %269 = vector.shape_cast %268 : vector<1x144x256xbf16> to vector<144x256xbf16>
    %cst_287 = arith.constant dense<0.000000e+00> : vector<8x256xf32>
    %270 = tpu.matmul %267, %269, %cst_287 {dimension_numbers = #tpu.dot_dimension_numbers<[1], [0], [0], [1], [0, 0, 1, 1], [], []>} : vector<8x144xbf16>, vector<144x256xbf16>, vector<8x256xf32> -> vector<8x256xf32>
    %271 = arith.addf %266, %270 : vector<8x256xf32>
    %c232 = arith.constant 232 : index
    %c0_288 = arith.constant 0 : index
    %272 = vector.load %arg0[%c232, %c0_288] : memref<288x144xbf16, #tpu.memory_space<vmem>>, vector<8x144xbf16>
    %c5_289 = arith.constant 5 : index
    %c0_290 = arith.constant 0 : index
    %c0_291 = arith.constant 0 : index
    %273 = vector.load %arg1[%c5_289, %c0_290, %c0_291] : memref<8x144x256xbf16, #tpu.memory_space<vmem>>, vector<1x144x256xbf16>
    %274 = vector.shape_cast %273 : vector<1x144x256xbf16> to vector<144x256xbf16>
    %cst_292 = arith.constant dense<0.000000e+00> : vector<8x256xf32>
    %275 = tpu.matmul %272, %274, %cst_292 {dimension_numbers = #tpu.dot_dimension_numbers<[1], [0], [0], [1], [0, 0, 1, 1], [], []>} : vector<8x144xbf16>, vector<144x256xbf16>, vector<8x256xf32> -> vector<8x256xf32>
    %276 = arith.addf %271, %275 : vector<8x256xf32>
    %c240 = arith.constant 240 : index
    %c0_293 = arith.constant 0 : index
    %277 = vector.load %arg0[%c240, %c0_293] : memref<288x144xbf16, #tpu.memory_space<vmem>>, vector<8x144xbf16>
    %c6_294 = arith.constant 6 : index
    %c0_295 = arith.constant 0 : index
    %c0_296 = arith.constant 0 : index
    %278 = vector.load %arg1[%c6_294, %c0_295, %c0_296] : memref<8x144x256xbf16, #tpu.memory_space<vmem>>, vector<1x144x256xbf16>
    %279 = vector.shape_cast %278 : vector<1x144x256xbf16> to vector<144x256xbf16>
    %cst_297 = arith.constant dense<0.000000e+00> : vector<8x256xf32>
    %280 = tpu.matmul %277, %279, %cst_297 {dimension_numbers = #tpu.dot_dimension_numbers<[1], [0], [0], [1], [0, 0, 1, 1], [], []>} : vector<8x144xbf16>, vector<144x256xbf16>, vector<8x256xf32> -> vector<8x256xf32>
    %281 = arith.addf %276, %280 : vector<8x256xf32>
    %c248 = arith.constant 248 : index
    %c0_298 = arith.constant 0 : index
    %282 = vector.load %arg0[%c248, %c0_298] : memref<288x144xbf16, #tpu.memory_space<vmem>>, vector<8x144xbf16>
    %c7_299 = arith.constant 7 : index
    %c0_300 = arith.constant 0 : index
    %c0_301 = arith.constant 0 : index
    %283 = vector.load %arg1[%c7_299, %c0_300, %c0_301] : memref<8x144x256xbf16, #tpu.memory_space<vmem>>, vector<1x144x256xbf16>
    %284 = vector.shape_cast %283 : vector<1x144x256xbf16> to vector<144x256xbf16>
    %cst_302 = arith.constant dense<0.000000e+00> : vector<8x256xf32>
    %285 = tpu.matmul %282, %284, %cst_302 {dimension_numbers = #tpu.dot_dimension_numbers<[1], [0], [0], [1], [0, 0, 1, 1], [], []>} : vector<8x144xbf16>, vector<144x256xbf16>, vector<8x256xf32> -> vector<8x256xf32>
    %286 = arith.addf %281, %285 : vector<8x256xf32>
    %cst_303 = arith.constant 0.000000e+00 : f32
    %287 = vector.broadcast %cst_303 : f32 to vector<8x256xf32>
    %c224_304 = arith.constant 224 : index
    %c0_305 = arith.constant 0 : index
    %288 = vector.load %arg0[%c224_304, %c0_305] : memref<288x144xbf16, #tpu.memory_space<vmem>>, vector<8x144xbf16>
    %c0_306 = arith.constant 0 : index
    %c0_307 = arith.constant 0 : index
    %c0_308 = arith.constant 0 : index
    %289 = vector.load %arg1[%c0_306, %c0_307, %c0_308] : memref<8x144x256xbf16, #tpu.memory_space<vmem>>, vector<1x144x256xbf16>
    %290 = vector.shape_cast %289 : vector<1x144x256xbf16> to vector<144x256xbf16>
    %cst_309 = arith.constant dense<0.000000e+00> : vector<8x256xf32>
    %291 = tpu.matmul %288, %290, %cst_309 {dimension_numbers = #tpu.dot_dimension_numbers<[1], [0], [0], [1], [0, 0, 1, 1], [], []>} : vector<8x144xbf16>, vector<144x256xbf16>, vector<8x256xf32> -> vector<8x256xf32>
    %292 = arith.addf %287, %291 : vector<8x256xf32>
    %c232_310 = arith.constant 232 : index
    %c0_311 = arith.constant 0 : index
    %293 = vector.load %arg0[%c232_310, %c0_311] : memref<288x144xbf16, #tpu.memory_space<vmem>>, vector<8x144xbf16>
    %c1_312 = arith.constant 1 : index
    %c0_313 = arith.constant 0 : index
    %c0_314 = arith.constant 0 : index
    %294 = vector.load %arg1[%c1_312, %c0_313, %c0_314] : memref<8x144x256xbf16, #tpu.memory_space<vmem>>, vector<1x144x256xbf16>
    %295 = vector.shape_cast %294 : vector<1x144x256xbf16> to vector<144x256xbf16>
    %cst_315 = arith.constant dense<0.000000e+00> : vector<8x256xf32>
    %296 = tpu.matmul %293, %295, %cst_315 {dimension_numbers = #tpu.dot_dimension_numbers<[1], [0], [0], [1], [0, 0, 1, 1], [], []>} : vector<8x144xbf16>, vector<144x256xbf16>, vector<8x256xf32> -> vector<8x256xf32>
    %297 = arith.addf %292, %296 : vector<8x256xf32>
    %c240_316 = arith.constant 240 : index
    %c0_317 = arith.constant 0 : index
    %298 = vector.load %arg0[%c240_316, %c0_317] : memref<288x144xbf16, #tpu.memory_space<vmem>>, vector<8x144xbf16>
    %c2_318 = arith.constant 2 : index
    %c0_319 = arith.constant 0 : index
    %c0_320 = arith.constant 0 : index
    %299 = vector.load %arg1[%c2_318, %c0_319, %c0_320] : memref<8x144x256xbf16, #tpu.memory_space<vmem>>, vector<1x144x256xbf16>
    %300 = vector.shape_cast %299 : vector<1x144x256xbf16> to vector<144x256xbf16>
    %cst_321 = arith.constant dense<0.000000e+00> : vector<8x256xf32>
    %301 = tpu.matmul %298, %300, %cst_321 {dimension_numbers = #tpu.dot_dimension_numbers<[1], [0], [0], [1], [0, 0, 1, 1], [], []>} : vector<8x144xbf16>, vector<144x256xbf16>, vector<8x256xf32> -> vector<8x256xf32>
    %302 = arith.addf %297, %301 : vector<8x256xf32>
    %c248_322 = arith.constant 248 : index
    %c0_323 = arith.constant 0 : index
    %303 = vector.load %arg0[%c248_322, %c0_323] : memref<288x144xbf16, #tpu.memory_space<vmem>>, vector<8x144xbf16>
    %c3_324 = arith.constant 3 : index
    %c0_325 = arith.constant 0 : index
    %c0_326 = arith.constant 0 : index
    %304 = vector.load %arg1[%c3_324, %c0_325, %c0_326] : memref<8x144x256xbf16, #tpu.memory_space<vmem>>, vector<1x144x256xbf16>
    %305 = vector.shape_cast %304 : vector<1x144x256xbf16> to vector<144x256xbf16>
    %cst_327 = arith.constant dense<0.000000e+00> : vector<8x256xf32>
    %306 = tpu.matmul %303, %305, %cst_327 {dimension_numbers = #tpu.dot_dimension_numbers<[1], [0], [0], [1], [0, 0, 1, 1], [], []>} : vector<8x144xbf16>, vector<144x256xbf16>, vector<8x256xf32> -> vector<8x256xf32>
    %307 = arith.addf %302, %306 : vector<8x256xf32>
    %c256 = arith.constant 256 : index
    %c0_328 = arith.constant 0 : index
    %308 = vector.load %arg0[%c256, %c0_328] : memref<288x144xbf16, #tpu.memory_space<vmem>>, vector<8x144xbf16>
    %c4_329 = arith.constant 4 : index
    %c0_330 = arith.constant 0 : index
    %c0_331 = arith.constant 0 : index
    %309 = vector.load %arg1[%c4_329, %c0_330, %c0_331] : memref<8x144x256xbf16, #tpu.memory_space<vmem>>, vector<1x144x256xbf16>
    %310 = vector.shape_cast %309 : vector<1x144x256xbf16> to vector<144x256xbf16>
    %cst_332 = arith.constant dense<0.000000e+00> : vector<8x256xf32>
    %311 = tpu.matmul %308, %310, %cst_332 {dimension_numbers = #tpu.dot_dimension_numbers<[1], [0], [0], [1], [0, 0, 1, 1], [], []>} : vector<8x144xbf16>, vector<144x256xbf16>, vector<8x256xf32> -> vector<8x256xf32>
    %312 = arith.addf %307, %311 : vector<8x256xf32>
    %c264 = arith.constant 264 : index
    %c0_333 = arith.constant 0 : index
    %313 = vector.load %arg0[%c264, %c0_333] : memref<288x144xbf16, #tpu.memory_space<vmem>>, vector<8x144xbf16>
    %c5_334 = arith.constant 5 : index
    %c0_335 = arith.constant 0 : index
    %c0_336 = arith.constant 0 : index
    %314 = vector.load %arg1[%c5_334, %c0_335, %c0_336] : memref<8x144x256xbf16, #tpu.memory_space<vmem>>, vector<1x144x256xbf16>
    %315 = vector.shape_cast %314 : vector<1x144x256xbf16> to vector<144x256xbf16>
    %cst_337 = arith.constant dense<0.000000e+00> : vector<8x256xf32>
    %316 = tpu.matmul %313, %315, %cst_337 {dimension_numbers = #tpu.dot_dimension_numbers<[1], [0], [0], [1], [0, 0, 1, 1], [], []>} : vector<8x144xbf16>, vector<144x256xbf16>, vector<8x256xf32> -> vector<8x256xf32>
    %317 = arith.addf %312, %316 : vector<8x256xf32>
    %c272 = arith.constant 272 : index
    %c0_338 = arith.constant 0 : index
    %318 = vector.load %arg0[%c272, %c0_338] : memref<288x144xbf16, #tpu.memory_space<vmem>>, vector<8x144xbf16>
    %c6_339 = arith.constant 6 : index
    %c0_340 = arith.constant 0 : index
    %c0_341 = arith.constant 0 : index
    %319 = vector.load %arg1[%c6_339, %c0_340, %c0_341] : memref<8x144x256xbf16, #tpu.memory_space<vmem>>, vector<1x144x256xbf16>
    %320 = vector.shape_cast %319 : vector<1x144x256xbf16> to vector<144x256xbf16>
    %cst_342 = arith.constant dense<0.000000e+00> : vector<8x256xf32>
    %321 = tpu.matmul %318, %320, %cst_342 {dimension_numbers = #tpu.dot_dimension_numbers<[1], [0], [0], [1], [0, 0, 1, 1], [], []>} : vector<8x144xbf16>, vector<144x256xbf16>, vector<8x256xf32> -> vector<8x256xf32>
    %322 = arith.addf %317, %321 : vector<8x256xf32>
    %c280 = arith.constant 280 : index
    %c0_343 = arith.constant 0 : index
    %323 = vector.load %arg0[%c280, %c0_343] : memref<288x144xbf16, #tpu.memory_space<vmem>>, vector<8x144xbf16>
    %c7_344 = arith.constant 7 : index
    %c0_345 = arith.constant 0 : index
    %c0_346 = arith.constant 0 : index
    %324 = vector.load %arg1[%c7_344, %c0_345, %c0_346] : memref<8x144x256xbf16, #tpu.memory_space<vmem>>, vector<1x144x256xbf16>
    %325 = vector.shape_cast %324 : vector<1x144x256xbf16> to vector<144x256xbf16>
    %cst_347 = arith.constant dense<0.000000e+00> : vector<8x256xf32>
    %326 = tpu.matmul %323, %325, %cst_347 {dimension_numbers = #tpu.dot_dimension_numbers<[1], [0], [0], [1], [0, 0, 1, 1], [], []>} : vector<8x144xbf16>, vector<144x256xbf16>, vector<8x256xf32> -> vector<8x256xf32>
    %327 = arith.addf %322, %326 : vector<8x256xf32>
    %328 = tpu.concatenate %40, %81, %122, %163, %204, %245, %286, %327 in 0 : vector<8x256xf32>, vector<8x256xf32>, vector<8x256xf32>, vector<8x256xf32>, vector<8x256xf32>, vector<8x256xf32>, vector<8x256xf32>, vector<8x256xf32> -> vector<64x256xf32>
    %cst_348 = arith.constant dense<0.000000e+00> : vector<256xf32>
    %329 = vector.multi_reduction <add>, %328, %cst_348 [0] : vector<64x256xf32> to vector<256xf32>
    %330 = vector.shape_cast %329 : vector<256xf32> to vector<1x256xf32>
    %331 = arith.mulf %328, %328 : vector<64x256xf32>
    %cst_349 = arith.constant dense<0.000000e+00> : vector<256xf32>
    %332 = vector.multi_reduction <add>, %331, %cst_349 [0] : vector<64x256xf32> to vector<256xf32>
    %333 = vector.shape_cast %332 : vector<256xf32> to vector<1x256xf32>
    %334 = vector.extract_strided_slice %330 {offsets = [0, 0], sizes = [1, 32], strides = [1, 1]} : vector<1x256xf32> to vector<1x32xf32>
    %335 = vector.extract_strided_slice %333 {offsets = [0, 0], sizes = [1, 32], strides = [1, 1]} : vector<1x256xf32> to vector<1x32xf32>
    %336 = vector.extract_strided_slice %330 {offsets = [0, 32], sizes = [1, 32], strides = [1, 1]} : vector<1x256xf32> to vector<1x32xf32>
    %337 = arith.addf %334, %336 : vector<1x32xf32>
    %338 = vector.extract_strided_slice %333 {offsets = [0, 32], sizes = [1, 32], strides = [1, 1]} : vector<1x256xf32> to vector<1x32xf32>
    %339 = arith.addf %335, %338 : vector<1x32xf32>
    %340 = vector.extract_strided_slice %330 {offsets = [0, 64], sizes = [1, 32], strides = [1, 1]} : vector<1x256xf32> to vector<1x32xf32>
    %341 = arith.addf %337, %340 : vector<1x32xf32>
    %342 = vector.extract_strided_slice %333 {offsets = [0, 64], sizes = [1, 32], strides = [1, 1]} : vector<1x256xf32> to vector<1x32xf32>
    %343 = arith.addf %339, %342 : vector<1x32xf32>
    %344 = vector.extract_strided_slice %330 {offsets = [0, 96], sizes = [1, 32], strides = [1, 1]} : vector<1x256xf32> to vector<1x32xf32>
    %345 = arith.addf %341, %344 : vector<1x32xf32>
    %346 = vector.extract_strided_slice %333 {offsets = [0, 96], sizes = [1, 32], strides = [1, 1]} : vector<1x256xf32> to vector<1x32xf32>
    %347 = arith.addf %343, %346 : vector<1x32xf32>
    %348 = vector.extract_strided_slice %330 {offsets = [0, 128], sizes = [1, 32], strides = [1, 1]} : vector<1x256xf32> to vector<1x32xf32>
    %349 = arith.addf %345, %348 : vector<1x32xf32>
    %350 = vector.extract_strided_slice %333 {offsets = [0, 128], sizes = [1, 32], strides = [1, 1]} : vector<1x256xf32> to vector<1x32xf32>
    %351 = arith.addf %347, %350 : vector<1x32xf32>
    %352 = vector.extract_strided_slice %330 {offsets = [0, 160], sizes = [1, 32], strides = [1, 1]} : vector<1x256xf32> to vector<1x32xf32>
    %353 = arith.addf %349, %352 : vector<1x32xf32>
    %354 = vector.extract_strided_slice %333 {offsets = [0, 160], sizes = [1, 32], strides = [1, 1]} : vector<1x256xf32> to vector<1x32xf32>
    %355 = arith.addf %351, %354 : vector<1x32xf32>
    %356 = vector.extract_strided_slice %330 {offsets = [0, 192], sizes = [1, 32], strides = [1, 1]} : vector<1x256xf32> to vector<1x32xf32>
    %357 = arith.addf %353, %356 : vector<1x32xf32>
    %358 = vector.extract_strided_slice %333 {offsets = [0, 192], sizes = [1, 32], strides = [1, 1]} : vector<1x256xf32> to vector<1x32xf32>
    %359 = arith.addf %355, %358 : vector<1x32xf32>
    %360 = vector.extract_strided_slice %330 {offsets = [0, 224], sizes = [1, 32], strides = [1, 1]} : vector<1x256xf32> to vector<1x32xf32>
    %361 = arith.addf %357, %360 : vector<1x32xf32>
    %362 = vector.extract_strided_slice %333 {offsets = [0, 224], sizes = [1, 32], strides = [1, 1]} : vector<1x256xf32> to vector<1x32xf32>
    %363 = arith.addf %359, %362 : vector<1x32xf32>
    %cst_350 = arith.constant 0.001953125 : f32
    %364 = vector.broadcast %cst_350 : f32 to vector<1x32xf32>
    %365 = arith.mulf %361, %364 : vector<1x32xf32>
    %cst_351 = arith.constant 0.001953125 : f32
    %366 = vector.broadcast %cst_351 : f32 to vector<1x32xf32>
    %367 = arith.mulf %363, %366 : vector<1x32xf32>
    %368 = arith.mulf %365, %365 : vector<1x32xf32>
    %369 = arith.subf %367, %368 : vector<1x32xf32>
    %c0_352 = arith.constant 0 : index
    %c0_353 = arith.constant 0 : index
    %370 = vector.load %arg5[%c0_352, %c0_353] : memref<1x32xf32, #tpu.memory_space<vmem>>, vector<1x32xf32>
    %cst_354 = arith.constant 9.99999974E-6 : f32
    %371 = vector.broadcast %cst_354 : f32 to vector<1x32xf32>
    %372 = arith.addf %369, %371 : vector<1x32xf32>
    %373 = math.rsqrt %372 : vector<1x32xf32>
    %374 = arith.mulf %370, %373 : vector<1x32xf32>
    %c0_355 = arith.constant 0 : index
    %c0_356 = arith.constant 0 : index
    %375 = vector.load %arg6[%c0_355, %c0_356] : memref<1x32xf32, #tpu.memory_space<vmem>>, vector<1x32xf32>
    %376 = arith.mulf %365, %374 : vector<1x32xf32>
    %377 = arith.subf %375, %376 : vector<1x32xf32>
    %378 = tpu.concatenate %374, %374, %374, %374, %374, %374, %374, %374 in 1 : vector<1x32xf32>, vector<1x32xf32>, vector<1x32xf32>, vector<1x32xf32>, vector<1x32xf32>, vector<1x32xf32>, vector<1x32xf32>, vector<1x32xf32> -> vector<1x256xf32>
    %379 = tpu.concatenate %377, %377, %377, %377, %377, %377, %377, %377 in 1 : vector<1x32xf32>, vector<1x32xf32>, vector<1x32xf32>, vector<1x32xf32>, vector<1x32xf32>, vector<1x32xf32>, vector<1x32xf32>, vector<1x32xf32> -> vector<1x256xf32>
    %380 = vector.broadcast %378 : vector<1x256xf32> to vector<64x256xf32>
    %381 = arith.mulf %328, %380 : vector<64x256xf32>
    %382 = vector.broadcast %379 : vector<1x256xf32> to vector<64x256xf32>
    %383 = arith.addf %381, %382 : vector<64x256xf32>
    %cst_357 = arith.constant 0.000000e+00 : f32
    %384 = vector.broadcast %cst_357 : f32 to vector<64x256xf32>
    %385 = arith.maximumf %383, %384 : vector<64x256xf32>
    %386 = arith.truncf %385 : vector<64x256xf32> to vector<64x256xbf16>
    %c0_358 = arith.constant 0 : index
    %c0_359 = arith.constant 0 : index
    %387 = vector.load %arg14[%c0_358, %c0_359] : memref<64x256xbf16, #tpu.memory_space<vmem>>, vector<64x256xbf16>
    tpu.vector_store %arg14[%c0_358, %c0_359], %386 {strides = array<i32>} : memref<64x256xbf16, #tpu.memory_space<vmem>>, vector<64x256xbf16>,
    %cst_360 = arith.constant 0.000000e+00 : f32
    %388 = vector.broadcast %cst_360 : f32 to vector<8x192xf32>
    %c0_361 = arith.constant 0 : index
    %c0_362 = arith.constant 0 : index
    %389 = vector.load %arg14[%c0_361, %c0_362] : memref<64x256xbf16, #tpu.memory_space<vmem>>, vector<8x256xbf16>
    %c0_363 = arith.constant 0 : index
    %c0_364 = arith.constant 0 : index
    %c0_365 = arith.constant 0 : index
    %390 = vector.load %arg2[%c0_363, %c0_364, %c0_365] : memref<4x256x192xbf16, #tpu.memory_space<vmem>>, vector<1x256x192xbf16>
    %391 = vector.shape_cast %390 : vector<1x256x192xbf16> to vector<256x192xbf16>
    %cst_366 = arith.constant dense<0.000000e+00> : vector<8x192xf32>
    %392 = tpu.matmul %389, %391, %cst_366 {dimension_numbers = #tpu.dot_dimension_numbers<[1], [0], [0], [1], [0, 0, 1, 1], [], []>} : vector<8x256xbf16>, vector<256x192xbf16>, vector<8x192xf32> -> vector<8x192xf32>
    %393 = arith.addf %388, %392 : vector<8x192xf32>
    %c8_367 = arith.constant 8 : index
    %c0_368 = arith.constant 0 : index
    %394 = vector.load %arg14[%c8_367, %c0_368] : memref<64x256xbf16, #tpu.memory_space<vmem>>, vector<8x256xbf16>
    %c1_369 = arith.constant 1 : index
    %c0_370 = arith.constant 0 : index
    %c0_371 = arith.constant 0 : index
    %395 = vector.load %arg2[%c1_369, %c0_370, %c0_371] : memref<4x256x192xbf16, #tpu.memory_space<vmem>>, vector<1x256x192xbf16>
    %396 = vector.shape_cast %395 : vector<1x256x192xbf16> to vector<256x192xbf16>
    %cst_372 = arith.constant dense<0.000000e+00> : vector<8x192xf32>
    %397 = tpu.matmul %394, %396, %cst_372 {dimension_numbers = #tpu.dot_dimension_numbers<[1], [0], [0], [1], [0, 0, 1, 1], [], []>} : vector<8x256xbf16>, vector<256x192xbf16>, vector<8x192xf32> -> vector<8x192xf32>
    %398 = arith.addf %393, %397 : vector<8x192xf32>
    %c16_373 = arith.constant 16 : index
    %c0_374 = arith.constant 0 : index
    %399 = vector.load %arg14[%c16_373, %c0_374] : memref<64x256xbf16, #tpu.memory_space<vmem>>, vector<8x256xbf16>
    %c2_375 = arith.constant 2 : index
    %c0_376 = arith.constant 0 : index
    %c0_377 = arith.constant 0 : index
    %400 = vector.load %arg2[%c2_375, %c0_376, %c0_377] : memref<4x256x192xbf16, #tpu.memory_space<vmem>>, vector<1x256x192xbf16>
    %401 = vector.shape_cast %400 : vector<1x256x192xbf16> to vector<256x192xbf16>
    %cst_378 = arith.constant dense<0.000000e+00> : vector<8x192xf32>
    %402 = tpu.matmul %399, %401, %cst_378 {dimension_numbers = #tpu.dot_dimension_numbers<[1], [0], [0], [1], [0, 0, 1, 1], [], []>} : vector<8x256xbf16>, vector<256x192xbf16>, vector<8x192xf32> -> vector<8x192xf32>
    %403 = arith.addf %398, %402 : vector<8x192xf32>
    %c24_379 = arith.constant 24 : index
    %c0_380 = arith.constant 0 : index
    %404 = vector.load %arg14[%c24_379, %c0_380] : memref<64x256xbf16, #tpu.memory_space<vmem>>, vector<8x256xbf16>
    %c3_381 = arith.constant 3 : index
    %c0_382 = arith.constant 0 : index
    %c0_383 = arith.constant 0 : index
    %405 = vector.load %arg2[%c3_381, %c0_382, %c0_383] : memref<4x256x192xbf16, #tpu.memory_space<vmem>>, vector<1x256x192xbf16>
    %406 = vector.shape_cast %405 : vector<1x256x192xbf16> to vector<256x192xbf16>
    %cst_384 = arith.constant dense<0.000000e+00> : vector<8x192xf32>
    %407 = tpu.matmul %404, %406, %cst_384 {dimension_numbers = #tpu.dot_dimension_numbers<[1], [0], [0], [1], [0, 0, 1, 1], [], []>} : vector<8x256xbf16>, vector<256x192xbf16>, vector<8x192xf32> -> vector<8x192xf32>
    %408 = arith.addf %403, %407 : vector<8x192xf32>
    %cst_385 = arith.constant 0.000000e+00 : f32
    %409 = vector.broadcast %cst_385 : f32 to vector<8x192xf32>
    %c16_386 = arith.constant 16 : index
    %c0_387 = arith.constant 0 : index
    %410 = vector.load %arg14[%c16_386, %c0_387] : memref<64x256xbf16, #tpu.memory_space<vmem>>, vector<8x256xbf16>
    %c0_388 = arith.constant 0 : index
    %c0_389 = arith.constant 0 : index
    %c0_390 = arith.constant 0 : index
    %411 = vector.load %arg2[%c0_388, %c0_389, %c0_390] : memref<4x256x192xbf16, #tpu.memory_space<vmem>>, vector<1x256x192xbf16>
    %412 = vector.shape_cast %411 : vector<1x256x192xbf16> to vector<256x192xbf16>
    %cst_391 = arith.constant dense<0.000000e+00> : vector<8x192xf32>
    %413 = tpu.matmul %410, %412, %cst_391 {dimension_numbers = #tpu.dot_dimension_numbers<[1], [0], [0], [1], [0, 0, 1, 1], [], []>} : vector<8x256xbf16>, vector<256x192xbf16>, vector<8x192xf32> -> vector<8x192xf32>
    %414 = arith.addf %409, %413 : vector<8x192xf32>
    %c24_392 = arith.constant 24 : index
    %c0_393 = arith.constant 0 : index
    %415 = vector.load %arg14[%c24_392, %c0_393] : memref<64x256xbf16, #tpu.memory_space<vmem>>, vector<8x256xbf16>
    %c1_394 = arith.constant 1 : index
    %c0_395 = arith.constant 0 : index
    %c0_396 = arith.constant 0 : index
    %416 = vector.load %arg2[%c1_394, %c0_395, %c0_396] : memref<4x256x192xbf16, #tpu.memory_space<vmem>>, vector<1x256x192xbf16>
    %417 = vector.shape_cast %416 : vector<1x256x192xbf16> to vector<256x192xbf16>
    %cst_397 = arith.constant dense<0.000000e+00> : vector<8x192xf32>
    %418 = tpu.matmul %415, %417, %cst_397 {dimension_numbers = #tpu.dot_dimension_numbers<[1], [0], [0], [1], [0, 0, 1, 1], [], []>} : vector<8x256xbf16>, vector<256x192xbf16>, vector<8x192xf32> -> vector<8x192xf32>
    %419 = arith.addf %414, %418 : vector<8x192xf32>
    %c32_398 = arith.constant 32 : index
    %c0_399 = arith.constant 0 : index
    %420 = vector.load %arg14[%c32_398, %c0_399] : memref<64x256xbf16, #tpu.memory_space<vmem>>, vector<8x256xbf16>
    %c2_400 = arith.constant 2 : index
    %c0_401 = arith.constant 0 : index
    %c0_402 = arith.constant 0 : index
    %421 = vector.load %arg2[%c2_400, %c0_401, %c0_402] : memref<4x256x192xbf16, #tpu.memory_space<vmem>>, vector<1x256x192xbf16>
    %422 = vector.shape_cast %421 : vector<1x256x192xbf16> to vector<256x192xbf16>
    %cst_403 = arith.constant dense<0.000000e+00> : vector<8x192xf32>
    %423 = tpu.matmul %420, %422, %cst_403 {dimension_numbers = #tpu.dot_dimension_numbers<[1], [0], [0], [1], [0, 0, 1, 1], [], []>} : vector<8x256xbf16>, vector<256x192xbf16>, vector<8x192xf32> -> vector<8x192xf32>
    %424 = arith.addf %419, %423 : vector<8x192xf32>
    %c40_404 = arith.constant 40 : index
    %c0_405 = arith.constant 0 : index
    %425 = vector.load %arg14[%c40_404, %c0_405] : memref<64x256xbf16, #tpu.memory_space<vmem>>, vector<8x256xbf16>
    %c3_406 = arith.constant 3 : index
    %c0_407 = arith.constant 0 : index
    %c0_408 = arith.constant 0 : index
    %426 = vector.load %arg2[%c3_406, %c0_407, %c0_408] : memref<4x256x192xbf16, #tpu.memory_space<vmem>>, vector<1x256x192xbf16>
    %427 = vector.shape_cast %426 : vector<1x256x192xbf16> to vector<256x192xbf16>
    %cst_409 = arith.constant dense<0.000000e+00> : vector<8x192xf32>
    %428 = tpu.matmul %425, %427, %cst_409 {dimension_numbers = #tpu.dot_dimension_numbers<[1], [0], [0], [1], [0, 0, 1, 1], [], []>} : vector<8x256xbf16>, vector<256x192xbf16>, vector<8x192xf32> -> vector<8x192xf32>
    %429 = arith.addf %424, %428 : vector<8x192xf32>
    %cst_410 = arith.constant 0.000000e+00 : f32
    %430 = vector.broadcast %cst_410 : f32 to vector<8x192xf32>
    %c32_411 = arith.constant 32 : index
    %c0_412 = arith.constant 0 : index
    %431 = vector.load %arg14[%c32_411, %c0_412] : memref<64x256xbf16, #tpu.memory_space<vmem>>, vector<8x256xbf16>
    %c0_413 = arith.constant 0 : index
    %c0_414 = arith.constant 0 : index
    %c0_415 = arith.constant 0 : index
    %432 = vector.load %arg2[%c0_413, %c0_414, %c0_415] : memref<4x256x192xbf16, #tpu.memory_space<vmem>>, vector<1x256x192xbf16>
    %433 = vector.shape_cast %432 : vector<1x256x192xbf16> to vector<256x192xbf16>
    %cst_416 = arith.constant dense<0.000000e+00> : vector<8x192xf32>
    %434 = tpu.matmul %431, %433, %cst_416 {dimension_numbers = #tpu.dot_dimension_numbers<[1], [0], [0], [1], [0, 0, 1, 1], [], []>} : vector<8x256xbf16>, vector<256x192xbf16>, vector<8x192xf32> -> vector<8x192xf32>
    %435 = arith.addf %430, %434 : vector<8x192xf32>
    %c40_417 = arith.constant 40 : index
    %c0_418 = arith.constant 0 : index
    %436 = vector.load %arg14[%c40_417, %c0_418] : memref<64x256xbf16, #tpu.memory_space<vmem>>, vector<8x256xbf16>
    %c1_419 = arith.constant 1 : index
    %c0_420 = arith.constant 0 : index
    %c0_421 = arith.constant 0 : index
    %437 = vector.load %arg2[%c1_419, %c0_420, %c0_421] : memref<4x256x192xbf16, #tpu.memory_space<vmem>>, vector<1x256x192xbf16>
    %438 = vector.shape_cast %437 : vector<1x256x192xbf16> to vector<256x192xbf16>
    %cst_422 = arith.constant dense<0.000000e+00> : vector<8x192xf32>
    %439 = tpu.matmul %436, %438, %cst_422 {dimension_numbers = #tpu.dot_dimension_numbers<[1], [0], [0], [1], [0, 0, 1, 1], [], []>} : vector<8x256xbf16>, vector<256x192xbf16>, vector<8x192xf32> -> vector<8x192xf32>
    %440 = arith.addf %435, %439 : vector<8x192xf32>
    %c48_423 = arith.constant 48 : index
    %c0_424 = arith.constant 0 : index
    %441 = vector.load %arg14[%c48_423, %c0_424] : memref<64x256xbf16, #tpu.memory_space<vmem>>, vector<8x256xbf16>
    %c2_425 = arith.constant 2 : index
    %c0_426 = arith.constant 0 : index
    %c0_427 = arith.constant 0 : index
    %442 = vector.load %arg2[%c2_425, %c0_426, %c0_427] : memref<4x256x192xbf16, #tpu.memory_space<vmem>>, vector<1x256x192xbf16>
    %443 = vector.shape_cast %442 : vector<1x256x192xbf16> to vector<256x192xbf16>
    %cst_428 = arith.constant dense<0.000000e+00> : vector<8x192xf32>
    %444 = tpu.matmul %441, %443, %cst_428 {dimension_numbers = #tpu.dot_dimension_numbers<[1], [0], [0], [1], [0, 0, 1, 1], [], []>} : vector<8x256xbf16>, vector<256x192xbf16>, vector<8x192xf32> -> vector<8x192xf32>
    %445 = arith.addf %440, %444 : vector<8x192xf32>
    %c56_429 = arith.constant 56 : index
    %c0_430 = arith.constant 0 : index
    %446 = vector.load %arg14[%c56_429, %c0_430] : memref<64x256xbf16, #tpu.memory_space<vmem>>, vector<8x256xbf16>
    %c3_431 = arith.constant 3 : index
    %c0_432 = arith.constant 0 : index
    %c0_433 = arith.constant 0 : index
    %447 = vector.load %arg2[%c3_431, %c0_432, %c0_433] : memref<4x256x192xbf16, #tpu.memory_space<vmem>>, vector<1x256x192xbf16>
    %448 = vector.shape_cast %447 : vector<1x256x192xbf16> to vector<256x192xbf16>
    %cst_434 = arith.constant dense<0.000000e+00> : vector<8x192xf32>
    %449 = tpu.matmul %446, %448, %cst_434 {dimension_numbers = #tpu.dot_dimension_numbers<[1], [0], [0], [1], [0, 0, 1, 1], [], []>} : vector<8x256xbf16>, vector<256x192xbf16>, vector<8x192xf32> -> vector<8x192xf32>
    %450 = arith.addf %445, %449 : vector<8x192xf32>
    %451 = tpu.concatenate %408, %429, %450 in 0 : vector<8x192xf32>, vector<8x192xf32>, vector<8x192xf32> -> vector<24x192xf32>
    %cst_435 = arith.constant dense<0.000000e+00> : vector<192xf32>
    %452 = vector.multi_reduction <add>, %451, %cst_435 [0] : vector<24x192xf32> to vector<192xf32>
    %453 = vector.shape_cast %452 : vector<192xf32> to vector<1x192xf32>
    %454 = arith.mulf %451, %451 : vector<24x192xf32>
    %cst_436 = arith.constant dense<0.000000e+00> : vector<192xf32>
    %455 = vector.multi_reduction <add>, %454, %cst_436 [0] : vector<24x192xf32> to vector<192xf32>
    %456 = vector.shape_cast %455 : vector<192xf32> to vector<1x192xf32>
    %457 = vector.extract_strided_slice %453 {offsets = [0, 0], sizes = [1, 64], strides = [1, 1]} : vector<1x192xf32> to vector<1x64xf32>
    %458 = vector.extract_strided_slice %456 {offsets = [0, 0], sizes = [1, 64], strides = [1, 1]} : vector<1x192xf32> to vector<1x64xf32>
    %459 = vector.extract_strided_slice %453 {offsets = [0, 64], sizes = [1, 64], strides = [1, 1]} : vector<1x192xf32> to vector<1x64xf32>
    %460 = arith.addf %457, %459 : vector<1x64xf32>
    %461 = vector.extract_strided_slice %456 {offsets = [0, 64], sizes = [1, 64], strides = [1, 1]} : vector<1x192xf32> to vector<1x64xf32>
    %462 = arith.addf %458, %461 : vector<1x64xf32>
    %463 = vector.extract_strided_slice %453 {offsets = [0, 128], sizes = [1, 64], strides = [1, 1]} : vector<1x192xf32> to vector<1x64xf32>
    %464 = arith.addf %460, %463 : vector<1x64xf32>
    %465 = vector.extract_strided_slice %456 {offsets = [0, 128], sizes = [1, 64], strides = [1, 1]} : vector<1x192xf32> to vector<1x64xf32>
    %466 = arith.addf %462, %465 : vector<1x64xf32>
    %cst_437 = arith.constant 0.013888889 : f32
    %467 = vector.broadcast %cst_437 : f32 to vector<1x64xf32>
    %468 = arith.mulf %464, %467 : vector<1x64xf32>
    %cst_438 = arith.constant 0.013888889 : f32
    %469 = vector.broadcast %cst_438 : f32 to vector<1x64xf32>
    %470 = arith.mulf %466, %469 : vector<1x64xf32>
    %471 = arith.mulf %468, %468 : vector<1x64xf32>
    %472 = arith.subf %470, %471 : vector<1x64xf32>
    %c0_439 = arith.constant 0 : index
    %c0_440 = arith.constant 0 : index
    %473 = vector.load %arg7[%c0_439, %c0_440] : memref<1x64xf32, #tpu.memory_space<vmem>>, vector<1x64xf32>
    %cst_441 = arith.constant 9.99999974E-6 : f32
    %474 = vector.broadcast %cst_441 : f32 to vector<1x64xf32>
    %475 = arith.addf %472, %474 : vector<1x64xf32>
    %476 = math.rsqrt %475 : vector<1x64xf32>
    %477 = arith.mulf %473, %476 : vector<1x64xf32>
    %c0_442 = arith.constant 0 : index
    %c0_443 = arith.constant 0 : index
    %478 = vector.load %arg8[%c0_442, %c0_443] : memref<1x64xf32, #tpu.memory_space<vmem>>, vector<1x64xf32>
    %479 = arith.mulf %468, %477 : vector<1x64xf32>
    %480 = arith.subf %478, %479 : vector<1x64xf32>
    %481 = tpu.concatenate %477, %477, %477 in 1 : vector<1x64xf32>, vector<1x64xf32>, vector<1x64xf32> -> vector<1x192xf32>
    %482 = tpu.concatenate %480, %480, %480 in 1 : vector<1x64xf32>, vector<1x64xf32>, vector<1x64xf32> -> vector<1x192xf32>
    %483 = vector.broadcast %481 : vector<1x192xf32> to vector<24x192xf32>
    %484 = arith.mulf %451, %483 : vector<24x192xf32>
    %485 = vector.broadcast %482 : vector<1x192xf32> to vector<24x192xf32>
    %486 = arith.addf %484, %485 : vector<24x192xf32>
    %cst_444 = arith.constant 0.000000e+00 : f32
    %487 = vector.broadcast %cst_444 : f32 to vector<24x192xf32>
    %488 = arith.maximumf %486, %487 : vector<24x192xf32>
    %489 = arith.truncf %488 : vector<24x192xf32> to vector<24x192xbf16>
    %c0_445 = arith.constant 0 : index
    %c0_446 = arith.constant 0 : index
    %490 = vector.load %arg15[%c0_445, %c0_446] : memref<24x192xbf16, #tpu.memory_space<vmem>>, vector<24x192xbf16>
    tpu.vector_store %arg15[%c0_445, %c0_446], %489 {strides = array<i32>} : memref<24x192xbf16, #tpu.memory_space<vmem>>, vector<24x192xbf16>,
    %cst_447 = arith.constant 0.000000e+00 : f32
    %491 = vector.broadcast %cst_447 : f32 to vector<8x128xf32>
    %c0_448 = arith.constant 0 : index
    %c0_449 = arith.constant 0 : index
    %492 = vector.load %arg15[%c0_448, %c0_449] : memref<24x192xbf16, #tpu.memory_space<vmem>>, vector<8x192xbf16>
    %c0_450 = arith.constant 0 : index
    %c0_451 = arith.constant 0 : index
    %c0_452 = arith.constant 0 : index
    %493 = vector.load %arg3[%c0_450, %c0_451, %c0_452] : memref<3x192x128xbf16, #tpu.memory_space<vmem>>, vector<1x192x128xbf16>
    %494 = vector.shape_cast %493 : vector<1x192x128xbf16> to vector<192x128xbf16>
    %cst_453 = arith.constant dense<0.000000e+00> : vector<8x128xf32>
    %495 = tpu.matmul %492, %494, %cst_453 {dimension_numbers = #tpu.dot_dimension_numbers<[1], [0], [0], [1], [0, 0, 1, 1], [], []>} : vector<8x192xbf16>, vector<192x128xbf16>, vector<8x128xf32> -> vector<8x128xf32>
    %496 = arith.addf %491, %495 : vector<8x128xf32>
    %c8_454 = arith.constant 8 : index
    %c0_455 = arith.constant 0 : index
    %497 = vector.load %arg15[%c8_454, %c0_455] : memref<24x192xbf16, #tpu.memory_space<vmem>>, vector<8x192xbf16>
    %c1_456 = arith.constant 1 : index
    %c0_457 = arith.constant 0 : index
    %c0_458 = arith.constant 0 : index
    %498 = vector.load %arg3[%c1_456, %c0_457, %c0_458] : memref<3x192x128xbf16, #tpu.memory_space<vmem>>, vector<1x192x128xbf16>
    %499 = vector.shape_cast %498 : vector<1x192x128xbf16> to vector<192x128xbf16>
    %cst_459 = arith.constant dense<0.000000e+00> : vector<8x128xf32>
    %500 = tpu.matmul %497, %499, %cst_459 {dimension_numbers = #tpu.dot_dimension_numbers<[1], [0], [0], [1], [0, 0, 1, 1], [], []>} : vector<8x192xbf16>, vector<192x128xbf16>, vector<8x128xf32> -> vector<8x128xf32>
    %501 = arith.addf %496, %500 : vector<8x128xf32>
    %c16_460 = arith.constant 16 : index
    %c0_461 = arith.constant 0 : index
    %502 = vector.load %arg15[%c16_460, %c0_461] : memref<24x192xbf16, #tpu.memory_space<vmem>>, vector<8x192xbf16>
    %c2_462 = arith.constant 2 : index
    %c0_463 = arith.constant 0 : index
    %c0_464 = arith.constant 0 : index
    %503 = vector.load %arg3[%c2_462, %c0_463, %c0_464] : memref<3x192x128xbf16, #tpu.memory_space<vmem>>, vector<1x192x128xbf16>
    %504 = vector.shape_cast %503 : vector<1x192x128xbf16> to vector<192x128xbf16>
    %cst_465 = arith.constant dense<0.000000e+00> : vector<8x128xf32>
    %505 = tpu.matmul %502, %504, %cst_465 {dimension_numbers = #tpu.dot_dimension_numbers<[1], [0], [0], [1], [0, 0, 1, 1], [], []>} : vector<8x192xbf16>, vector<192x128xbf16>, vector<8x128xf32> -> vector<8x128xf32>
    %506 = arith.addf %501, %505 : vector<8x128xf32>
    %cst_466 = arith.constant dense<0.000000e+00> : vector<128xf32>
    %507 = vector.multi_reduction <add>, %506, %cst_466 [0] : vector<8x128xf32> to vector<128xf32>
    %508 = vector.shape_cast %507 : vector<128xf32> to vector<1x128xf32>
    %509 = arith.mulf %506, %506 : vector<8x128xf32>
    %cst_467 = arith.constant dense<0.000000e+00> : vector<128xf32>
    %510 = vector.multi_reduction <add>, %509, %cst_467 [0] : vector<8x128xf32> to vector<128xf32>
    %511 = vector.shape_cast %510 : vector<128xf32> to vector<1x128xf32>
    %cst_468 = arith.constant 1.250000e-01 : f32
    %512 = vector.broadcast %cst_468 : f32 to vector<1x128xf32>
    %513 = arith.mulf %508, %512 : vector<1x128xf32>
    %cst_469 = arith.constant 1.250000e-01 : f32
    %514 = vector.broadcast %cst_469 : f32 to vector<1x128xf32>
    %515 = arith.mulf %511, %514 : vector<1x128xf32>
    %516 = arith.mulf %513, %513 : vector<1x128xf32>
    %517 = arith.subf %515, %516 : vector<1x128xf32>
    %c0_470 = arith.constant 0 : index
    %c0_471 = arith.constant 0 : index
    %518 = vector.load %arg9[%c0_470, %c0_471] : memref<1x128xf32, #tpu.memory_space<vmem>>, vector<1x128xf32>
    %cst_472 = arith.constant 9.99999974E-6 : f32
    %519 = vector.broadcast %cst_472 : f32 to vector<1x128xf32>
    %520 = arith.addf %517, %519 : vector<1x128xf32>
    %521 = math.rsqrt %520 : vector<1x128xf32>
    %522 = arith.mulf %518, %521 : vector<1x128xf32>
    %c0_473 = arith.constant 0 : index
    %c0_474 = arith.constant 0 : index
    %523 = vector.load %arg10[%c0_473, %c0_474] : memref<1x128xf32, #tpu.memory_space<vmem>>, vector<1x128xf32>
    %524 = arith.mulf %513, %522 : vector<1x128xf32>
    %525 = arith.subf %523, %524 : vector<1x128xf32>
    %526 = vector.broadcast %522 : vector<1x128xf32> to vector<8x128xf32>
    %527 = arith.mulf %506, %526 : vector<8x128xf32>
    %528 = vector.broadcast %525 : vector<1x128xf32> to vector<8x128xf32>
    %529 = arith.addf %527, %528 : vector<8x128xf32>
    %cst_475 = arith.constant 0.000000e+00 : f32
    %530 = vector.broadcast %cst_475 : f32 to vector<8x128xf32>
    %531 = arith.maximumf %529, %530 : vector<8x128xf32>
    %532 = arith.truncf %531 : vector<8x128xf32> to vector<8x128xbf16>
    %c0_476 = arith.constant 0 : index
    %c0_477 = arith.constant 0 : index
    %533 = vector.load %arg16[%c0_476, %c0_477] : memref<8x128xbf16, #tpu.memory_space<vmem>>, vector<8x128xbf16>
    tpu.vector_store %arg16[%c0_476, %c0_477], %532 {strides = array<i32>} : memref<8x128xbf16, #tpu.memory_space<vmem>>, vector<8x128xbf16>,
    %cst_478 = arith.constant 0.000000e+00 : f32
    %534 = vector.broadcast %cst_478 : f32 to vector<8x64xf32>
    %c0_479 = arith.constant 0 : index
    %c0_480 = arith.constant 0 : index
    %535 = vector.load %arg16[%c0_479, %c0_480] : memref<8x128xbf16, #tpu.memory_space<vmem>>, vector<8x128xbf16>
    %c0_481 = arith.constant 0 : index
    %c0_482 = arith.constant 0 : index
    %c0_483 = arith.constant 0 : index
    %536 = vector.load %arg4[%c0_481, %c0_482, %c0_483] : memref<1x128x64xbf16, #tpu.memory_space<vmem>>, vector<1x128x64xbf16>
    %537 = vector.shape_cast %536 : vector<1x128x64xbf16> to vector<128x64xbf16>
    %cst_484 = arith.constant dense<0.000000e+00> : vector<8x64xf32>
    %538 = tpu.matmul %535, %537, %cst_484 {dimension_numbers = #tpu.dot_dimension_numbers<[1], [0], [0], [1], [0, 0, 1, 1], [], []>} : vector<8x128xbf16>, vector<128x64xbf16>, vector<8x64xf32> -> vector<8x64xf32>
    %539 = arith.addf %534, %538 : vector<8x64xf32>
    %cst_485 = arith.constant dense<0.000000e+00> : vector<64xf32>
    %540 = vector.multi_reduction <add>, %539, %cst_485 [0] : vector<8x64xf32> to vector<64xf32>
    %541 = vector.shape_cast %540 : vector<64xf32> to vector<1x64xf32>
    %542 = arith.mulf %539, %539 : vector<8x64xf32>
    %cst_486 = arith.constant dense<0.000000e+00> : vector<64xf32>
    %543 = vector.multi_reduction <add>, %542, %cst_486 [0] : vector<8x64xf32> to vector<64xf32>
    %544 = vector.shape_cast %543 : vector<64xf32> to vector<1x64xf32>
    %cst_487 = arith.constant 1.250000e-01 : f32
    %545 = vector.broadcast %cst_487 : f32 to vector<1x64xf32>
    %546 = arith.mulf %541, %545 : vector<1x64xf32>
    %cst_488 = arith.constant 1.250000e-01 : f32
    %547 = vector.broadcast %cst_488 : f32 to vector<1x64xf32>
    %548 = arith.mulf %544, %547 : vector<1x64xf32>
    %549 = arith.mulf %546, %546 : vector<1x64xf32>
    %550 = arith.subf %548, %549 : vector<1x64xf32>
    %c0_489 = arith.constant 0 : index
    %c0_490 = arith.constant 0 : index
    %551 = vector.load %arg11[%c0_489, %c0_490] : memref<1x64xf32, #tpu.memory_space<vmem>>, vector<1x64xf32>
    %cst_491 = arith.constant 9.99999974E-6 : f32
    %552 = vector.broadcast %cst_491 : f32 to vector<1x64xf32>
    %553 = arith.addf %550, %552 : vector<1x64xf32>
    %554 = math.rsqrt %553 : vector<1x64xf32>
    %555 = arith.mulf %551, %554 : vector<1x64xf32>
    %c0_492 = arith.constant 0 : index
    %c0_493 = arith.constant 0 : index
    %556 = vector.load %arg12[%c0_492, %c0_493] : memref<1x64xf32, #tpu.memory_space<vmem>>, vector<1x64xf32>
    %557 = arith.mulf %546, %555 : vector<1x64xf32>
    %558 = arith.subf %556, %557 : vector<1x64xf32>
    %559 = vector.broadcast %555 : vector<1x64xf32> to vector<8x64xf32>
    %560 = arith.mulf %539, %559 : vector<8x64xf32>
    %561 = vector.broadcast %558 : vector<1x64xf32> to vector<8x64xf32>
    %562 = arith.addf %560, %561 : vector<8x64xf32>
    %cst_494 = arith.constant 0.000000e+00 : f32
    %563 = vector.broadcast %cst_494 : f32 to vector<8x64xf32>
    %564 = arith.maximumf %562, %563 : vector<8x64xf32>
    %c0_495 = arith.constant 0 : index
    %c0_496 = arith.constant 0 : index
    %565 = vector.load %arg13[%c0_495, %c0_496] : memref<8x64xf32, #tpu.memory_space<vmem>>, vector<8x64xf32>
    tpu.vector_store %arg13[%c0_495, %c0_496], %564 {strides = array<i32>} : memref<8x64xf32, #tpu.memory_space<vmem>>, vector<8x64xf32>,
    return
  }
}

</mosaic_0001>

<llo_original>
// kernel: tpu_custom_call.1
$region0: #{tpu_custom_call.1}
  #allocation0 [shape = 'u32[]', space=smem, size = 0x4, offset = 0x4, fixed_abs, tag = 'smem constant byte address 0x4 - core index']
  #allocation1 [shape = 'u32[72,128]{1,0:T(1,128)}', space=vmem, size = 0x9000, scoped, tag = 'internal scratch']
  #allocation2 [shape = 'bf16[64,256]{1,0:T(8,128)(2,1)}', space=vmem, size = 0x8000, scoped, tag = 'scratch operand']
  #allocation3 [shape = 'bf16[24,192]{1,0:T(8,128)(2,1)}', space=vmem, size = 0x3000, scoped, tag = 'scratch operand']
  #allocation4 [shape = 'bf16[8,128]{1,0:T(8,128)(2,1)}', space=vmem, size = 0x800, scoped, tag = 'scratch operand']
  %s0 = inlined_call_operand.vmem [shape: bf16[288,144], index: 0, kind: input, shape index: {}]
  %s1 = inlined_call_operand.vmem [shape: bf16[8,144,256], index: 1, kind: input, shape index: {}]
  %s2 = inlined_call_operand.vmem [shape: bf16[4,256,192], index: 2, kind: input, shape index: {}]
  %s3 = inlined_call_operand.vmem [shape: bf16[3,192,128], index: 3, kind: input, shape index: {}]
  %s4 = inlined_call_operand.vmem [shape: bf16[1,128,64], index: 4, kind: input, shape index: {}]
  %s5 = inlined_call_operand.vmem [shape: f32[1,32], index: 5, kind: input, shape index: {}]
  %s6 = inlined_call_operand.vmem [shape: f32[1,32], index: 6, kind: input, shape index: {}]
  %s7 = inlined_call_operand.vmem [shape: f32[1,64], index: 7, kind: input, shape index: {}]
  %s8 = inlined_call_operand.vmem [shape: f32[1,64], index: 8, kind: input, shape index: {}]
  %s9 = inlined_call_operand.vmem [shape: f32[1,128], index: 9, kind: input, shape index: {}]
  %s10 = inlined_call_operand.vmem [shape: f32[1,128], index: 10, kind: input, shape index: {}]
  %s11 = inlined_call_operand.vmem [shape: f32[1,64], index: 11, kind: input, shape index: {}]
  %s12 = inlined_call_operand.vmem [shape: f32[1,64], index: 12, kind: input, shape index: {}]
  %s13 = inlined_call_operand.hbm [shape: f32[8,64], index: 13, kind: output, shape index: {}]
  %s14 = sld [smem:[#allocation0]]
  $region62: #{tpu_custom_call.1} parent=0
    _
  %s16 = ssub.s32 1, %s14
  %s17 = scalar_select 0, %s16, %s14
  $region1: #{tpu_custom_call.1} parent=0
    #allocation5 [shape = 'u8[4096]{0}', space=vmem, size = 0x1000, scoped, tag = 'output window, operand 0, single buffered']
    #allocation6 [shape = 's32[1]{0}', space=sflag, size = 0x4, scoped, tag = 'scoped memory for tpu_custom_call.1']
    %18 = vsyncpa [#allocation6], 0
    // Predicated region
    $region2: #{tpu_custom_call.1} parent=1 // pred_check
      _
    $region3: #{tpu_custom_call.1} parent=1 // pred_check_branch
      %20 = sbr.rel (0) target = $region5
    $region4: #{tpu_custom_call.1} parent=1 // pred_region
      _
    $region5: #{tpu_custom_call.1} parent=1 // pred_fallthru
      _
    // Predicated region
    $region6: #{tpu_custom_call.1} parent=1 // pred_check
      _
    $region7: #{tpu_custom_call.1} parent=1 // pred_check_branch
      %22 = sbr.rel (0) target = $region9
    $region8: #{tpu_custom_call.1} parent=1 // pred_region
      _
    $region9: #{tpu_custom_call.1} parent=1 // pred_fallthru
      _
    // Predicated region
    $region10: #{tpu_custom_call.1} parent=1 // pred_check
      _
    $region11: #{tpu_custom_call.1} parent=1 // pred_check_branch
      %24 = sbr.rel (0) target = $region13
    $region12: #{tpu_custom_call.1} parent=1 // pred_region
      _
    $region13: #{tpu_custom_call.1} parent=1 // pred_fallthru
      _
    // Predicated region
    $region14: #{tpu_custom_call.1} parent=1 // pred_check
      _
    $region15: #{tpu_custom_call.1} parent=1 // pred_check_branch
      %26 = sbr.rel (0) target = $region17
    $region16: #{tpu_custom_call.1} parent=1 // pred_region
      _
    $region17: #{tpu_custom_call.1} parent=1 // pred_fallthru
      _
    // Predicated region
    $region18: #{tpu_custom_call.1} parent=1 // pred_check
      _
    $region19: #{tpu_custom_call.1} parent=1 // pred_check_branch
      %28 = sbr.rel (0) target = $region21
    $region20: #{tpu_custom_call.1} parent=1 // pred_region
      _
    $region21: #{tpu_custom_call.1} parent=1 // pred_fallthru
      _
    // Predicated region
    $region22: #{tpu_custom_call.1} parent=1 // pred_check
      _
    $region23: #{tpu_custom_call.1} parent=1 // pred_check_branch
      %30 = sbr.rel (0) target = $region25
    $region24: #{tpu_custom_call.1} parent=1 // pred_region
      _
    $region25: #{tpu_custom_call.1} parent=1 // pred_fallthru
      _
    // Predicated region
    $region26: #{tpu_custom_call.1} parent=1 // pred_check
      _
    $region27: #{tpu_custom_call.1} parent=1 // pred_check_branch
      %32 = sbr.rel (0) target = $region29
    $region28: #{tpu_custom_call.1} parent=1 // pred_region
      _
    $region29: #{tpu_custom_call.1} parent=1 // pred_fallthru
      _
    // Predicated region
    $region30: #{tpu_custom_call.1} parent=1 // pred_check
      _
    $region31: #{tpu_custom_call.1} parent=1 // pred_check_branch
      %34 = sbr.rel (0) target = $region33
    $region32: #{tpu_custom_call.1} parent=1 // pred_region
      _
    $region33: #{tpu_custom_call.1} parent=1 // pred_fallthru
      _
    // Predicated region
    $region34: #{tpu_custom_call.1} parent=1 // pred_check
      _
    $region35: #{tpu_custom_call.1} parent=1 // pred_check_branch
      %36 = sbr.rel (0) target = $region37
    $region36: #{tpu_custom_call.1} parent=1 // pred_region
      _
    $region37: #{tpu_custom_call.1} parent=1 // pred_fallthru
      _
    // Predicated region
    $region38: #{tpu_custom_call.1} parent=1 // pred_check
      _
    $region39: #{tpu_custom_call.1} parent=1 // pred_check_branch
      %38 = sbr.rel (0) target = $region41
    $region40: #{tpu_custom_call.1} parent=1 // pred_region
      _
    $region41: #{tpu_custom_call.1} parent=1 // pred_fallthru
      _
    // Predicated region
    $region42: #{tpu_custom_call.1} parent=1 // pred_check
      _
    $region43: #{tpu_custom_call.1} parent=1 // pred_check_branch
      %40 = sbr.rel (0) target = $region45
    $region44: #{tpu_custom_call.1} parent=1 // pred_region
      _
    $region45: #{tpu_custom_call.1} parent=1 // pred_fallthru
      _
    // Predicated region
    $region46: #{tpu_custom_call.1} parent=1 // pred_check
      _
    $region47: #{tpu_custom_call.1} parent=1 // pred_check_branch
      %42 = sbr.rel (0) target = $region49
    $region48: #{tpu_custom_call.1} parent=1 // pred_region
      _
    $region49: #{tpu_custom_call.1} parent=1 // pred_fallthru
      _
    // Predicated region
    $region50: #{tpu_custom_call.1} parent=1 // pred_check
      _
    $region51: #{tpu_custom_call.1} parent=1 // pred_check_branch
      %44 = sbr.rel (0) target = $region53
    $region52: #{tpu_custom_call.1} parent=1 // pred_region
      _
    $region53: #{tpu_custom_call.1} parent=1 // pred_fallthru
      _
    %v46 = vld [vmem:[%s0] sm:$0xff]
    %v47 = vld [vmem:[%s1] sm:$0xff]
    %v48 = vld [vmem:[%s1 + $0x8] sm:$0xff]
    %v49 = vld [vmem:[%s1 + $0x10] sm:$0xff]
    %v50 = vld [vmem:[%s1 + $0x18] sm:$0xff]
    %v51 = vld [vmem:[%s1 + $0x20] sm:$0xff]
    %v52 = vld [vmem:[%s1 + $0x28] sm:$0xff]
    %v53 = vld [vmem:[%s1 + $0x30] sm:$0xff]
    %v54 = vld [vmem:[%s1 + $0x38] sm:$0xff]
    %v55 = vld [vmem:[%s1 + $0x40] sm:$0xff]
    %v56 = vld [vmem:[%s1 + $0x48] sm:$0xff]
    %v57 = vld [vmem:[%s1 + $0x50] sm:$0xff]
    %v58 = vld [vmem:[%s1 + $0x58] sm:$0xff]
    %v59 = vld [vmem:[%s1 + $0x60] sm:$0xff]
    %v60 = vld [vmem:[%s1 + $0x68] sm:$0xff]
    %v61 = vld [vmem:[%s1 + $0x70] sm:$0xff]
    %v62 = vld [vmem:[%s1 + $0x78] sm:$0xff]
    %v63 = vld [vmem:[%s1 + $0x80] sm:$0xff]
    %v64 = vld [vmem:[%s1 + $0x88] sm:$0xff]
    %v65 = vld [vmem:[%s0 + $0x8] sm:$0xff]
    %s66 = scalar_lea.vmem %s1, 144
    %v67 = vld [vmem:[%s66] sm:$0xff]
    %v68 = vld [vmem:[%s66 + $0x8] sm:$0xff]
    %v69 = vld [vmem:[%s66 + $0x10] sm:$0xff]
    %v70 = vld [vmem:[%s66 + $0x18] sm:$0xff]
    %v71 = vld [vmem:[%s66 + $0x20] sm:$0xff]
    %v72 = vld [vmem:[%s66 + $0x28] sm:$0xff]
    %v73 = vld [vmem:[%s66 + $0x30] sm:$0xff]
    %v74 = vld [vmem:[%s66 + $0x38] sm:$0xff]
    %v75 = vld [vmem:[%s66 + $0x40] sm:$0xff]
    %v76 = vld [vmem:[%s66 + $0x48] sm:$0xff]
    %v77 = vld [vmem:[%s66 + $0x50] sm:$0xff]
    %v78 = vld [vmem:[%s66 + $0x58] sm:$0xff]
    %v79 = vld [vmem:[%s66 + $0x60] sm:$0xff]
    %v80 = vld [vmem:[%s66 + $0x68] sm:$0xff]
    %v81 = vld [vmem:[%s66 + $0x70] sm:$0xff]
    %v82 = vld [vmem:[%s66 + $0x78] sm:$0xff]
    %v83 = vld [vmem:[%s66 + $0x80] sm:$0xff]
    %v84 = vld [vmem:[%s66 + $0x88] sm:$0xff]
    %v86 = vunpack.c.l.b16 %v65
    %v87 = vunpack.c.h.b16 %v65
    %v88 = vpack.c.b16 %v86, %v86
    %v89 = vpack.c.b16 %v87, %v87
    %v109 = vunpack.c.l.b16 %v67
    %v110 = vunpack.c.h.b16 %v67
    %v111 = vunpack.c.l.b16 %v68
    %v112 = vunpack.c.h.b16 %v68
    %v113 = vunpack.c.l.b16 %v69
    %v114 = vunpack.c.h.b16 %v69
    %v115 = vunpack.c.l.b16 %v70
    %v116 = vunpack.c.h.b16 %v70
    %v117 = vunpack.c.l.b16 %v71
    %v118 = vunpack.c.h.b16 %v71
    %v119 = vunpack.c.l.b16 %v72
    %v120 = vunpack.c.h.b16 %v72
    %v121 = vunpack.c.l.b16 %v73
    %v122 = vunpack.c.h.b16 %v73
    %v123 = vunpack.c.l.b16 %v74
    %v124 = vunpack.c.h.b16 %v74
    %v125 = vunpack.c.l.b16 %v75
    %v126 = vunpack.c.h.b16 %v75
    %v127 = vunpack.c.l.b16 %v76
    %v128 = vunpack.c.h.b16 %v76
    %v129 = vunpack.c.l.b16 %v77
    %v130 = vunpack.c.h.b16 %v77
    %v131 = vunpack.c.l.b16 %v78
    %v132 = vunpack.c.h.b16 %v78
    %v133 = vunpack.c.l.b16 %v79
    %v134 = vunpack.c.h.b16 %v79
    %v135 = vunpack.c.l.b16 %v80
    %v136 = vunpack.c.h.b16 %v80
    %v137 = vunpack.c.l.b16 %v81
    %v138 = vunpack.c.h.b16 %v81
    %v139 = vunpack.c.l.b16 %v82
    %v140 = vunpack.c.h.b16 %v82
    %v141 = vunpack.c.l.b16 %v83
    %v142 = vunpack.c.h.b16 %v83
    %v143 = vunpack.c.l.b16 %v84
    %v144 = vunpack.c.h.b16 %v84
    %v145 = vpack.c.b16 %v111, %v109
    %v146 = vpack.c.b16 %v112, %v110
    %v147 = vpack.c.b16 %v115, %v113
    %v148 = vpack.c.b16 %v116, %v114
    %v149 = vpack.c.b16 %v119, %v117
    %v150 = vpack.c.b16 %v120, %v118
    %v151 = vpack.c.b16 %v123, %v121
    %v152 = vpack.c.b16 %v124, %v122
    %v153 = vpack.c.b16 %v127, %v125
    %v154 = vpack.c.b16 %v128, %v126
    %v155 = vpack.c.b16 %v131, %v129
    %v156 = vpack.c.b16 %v132, %v130
    %v157 = vpack.c.b16 %v135, %v133
    %v158 = vpack.c.b16 %v136, %v134
    %v159 = vpack.c.b16 %v139, %v137
    %v160 = vpack.c.b16 %v140, %v138
    %v161 = vpack.c.b16 %v143, %v141
    %v162 = vpack.c.b16 %v144, %v142
    %vm181 = vcmask 130048
    %v183 = vsel %vm181, %v89, 0
    %185 = vmatpush.bf16.msra.mxu0 %v159
    %186 = vmatpush.bf16.msra.mxu0 %v157
    %187 = vmatpush.bf16.msra.mxu0 %v155
    %188 = vmatpush.bf16.msra.mxu0 %v153
    %189 = vmatpush.bf16.msra.mxu0 %v151
    %190 = vmatpush.bf16.msra.mxu0 %v149
    %191 = vmatpush.bf16.msra.mxu0 %v147
    %192 = vmatpush.bf16.msra.mxu0 %v145
    %193 = vmatmul.bf16.gmra.mxu0 %v88
    %v194 = vpop.f32.mrf.mxu0
    %v195 = vadd.f32 0.0, %v194
    %v196 = vpop.f32.mrf.mxu0
    %197 = vdwg.mxu0
    %198 = vmatpush.bf16.msra.mxu0 0
    %199 = vmatpush.bf16.msra.mxu0 0
    %200 = vmatpush.bf16.msra.mxu0 0
    %201 = vmatpush.bf16.msra.mxu0 0
    %202 = vmatpush.bf16.msra.mxu0 0
    %203 = vmatpush.bf16.msra.mxu0 0
    %204 = vmatpush.bf16.msra.mxu0 0
    %205 = vmatpush.bf16.msra.mxu0 %v161
    %206 = vmatmul.bf16.gmra.mxu0 %v183
    %v207 = vpop.f32.mrf.mxu0
    %v208 = vadd.f32 %v195, %v207
    %v209 = vpop.f32.mrf.mxu0
    %210 = vdwg.mxu0
    %211 = vmatpush.bf16.msra.mxu0 %v160
    %212 = vmatpush.bf16.msra.mxu0 %v158
    %213 = vmatpush.bf16.msra.mxu0 %v156
    %214 = vmatpush.bf16.msra.mxu0 %v154
    %215 = vmatpush.bf16.msra.mxu0 %v152
    %216 = vmatpush.bf16.msra.mxu0 %v150
    %217 = vmatpush.bf16.msra.mxu0 %v148
    %218 = vmatpush.bf16.msra.mxu0 %v146
    %219 = vmatmul.bf16.gmra.mxu0 %v88
    %v220 = vpop.f32.mrf.mxu0
    %v221 = vadd.f32 0.0, %v220
    %v222 = vpop.f32.mrf.mxu0
    %223 = vdwg.mxu0
    %224 = vmatpush.bf16.msra.mxu0 0
    %225 = vmatpush.bf16.msra.mxu0 0
    %226 = vmatpush.bf16.msra.mxu0 0
    %227 = vmatpush.bf16.msra.mxu0 0
    %228 = vmatpush.bf16.msra.mxu0 0
    %229 = vmatpush.bf16.msra.mxu0 0
    %230 = vmatpush.bf16.msra.mxu0 0
    %231 = vmatpush.bf16.msra.mxu0 %v162
    %232 = vmatmul.bf16.gmra.mxu0 %v183
    %v233 = vpop.f32.mrf.mxu0
    %v234 = vadd.f32 %v221, %v233
    %v235 = vpop.f32.mrf.mxu0
    %236 = vdwg.mxu0
    %v238 = vunpack.c.l.b16 %v46
    %v239 = vunpack.c.h.b16 %v46
    %v240 = vpack.c.b16 %v238, %v238
    %v241 = vpack.c.b16 %v239, %v239
    %v261 = vunpack.c.l.b16 %v47
    %v262 = vunpack.c.h.b16 %v47
    %v263 = vunpack.c.l.b16 %v48
    %v264 = vunpack.c.h.b16 %v48
    %v265 = vunpack.c.l.b16 %v49
    %v266 = vunpack.c.h.b16 %v49
    %v267 = vunpack.c.l.b16 %v50
    %v268 = vunpack.c.h.b16 %v50
    %v269 = vunpack.c.l.b16 %v51
    %v270 = vunpack.c.h.b16 %v51
    %v271 = vunpack.c.l.b16 %v52
    %v272 = vunpack.c.h.b16 %v52
    %v273 = vunpack.c.l.b16 %v53
    %v274 = vunpack.c.h.b16 %v53
    %v275 = vunpack.c.l.b16 %v54
    %v276 = vunpack.c.h.b16 %v54
    %v277 = vunpack.c.l.b16 %v55
    %v278 = vunpack.c.h.b16 %v55
    %v279 = vunpack.c.l.b16 %v56
    %v280 = vunpack.c.h.b16 %v56
    %v281 = vunpack.c.l.b16 %v57
    %v282 = vunpack.c.h.b16 %v57
    %v283 = vunpack.c.l.b16 %v58
    %v284 = vunpack.c.h.b16 %v58
    %v285 = vunpack.c.l.b16 %v59
    %v286 = vunpack.c.h.b16 %v59
    %v287 = vunpack.c.l.b16 %v60
    %v288 = vunpack.c.h.b16 %v60
    %v289 = vunpack.c.l.b16 %v61
    %v290 = vunpack.c.h.b16 %v61
    %v291 = vunpack.c.l.b16 %v62
    %v292 = vunpack.c.h.b16 %v62
    %v293 = vunpack.c.l.b16 %v63
    %v294 = vunpack.c.h.b16 %v63
    %v295 = vunpack.c.l.b16 %v64
    %v296 = vunpack.c.h.b16 %v64
    %v297 = vpack.c.b16 %v263, %v261
    %v298 = vpack.c.b16 %v264, %v262
    %v299 = vpack.c.b16 %v267, %v265
    %v300 = vpack.c.b16 %v268, %v266
    %v301 = vpack.c.b16 %v271, %v269
    %v302 = vpack.c.b16 %v272, %v270
    %v303 = vpack.c.b16 %v275, %v273
    %v304 = vpack.c.b16 %v276, %v274
    %v305 = vpack.c.b16 %v279, %v277
    %v306 = vpack.c.b16 %v280, %v278
    %v307 = vpack.c.b16 %v283, %v281
    %v308 = vpack.c.b16 %v284, %v282
    %v309 = vpack.c.b16 %v287, %v285
    %v310 = vpack.c.b16 %v288, %v286
    %v311 = vpack.c.b16 %v291, %v289
    %v312 = vpack.c.b16 %v292, %v290
    %v313 = vpack.c.b16 %v295, %v293
    %v314 = vpack.c.b16 %v296, %v294
    %v334 = vsel %vm181, %v241, 0
    %336 = vmatpush.bf16.msra.mxu0 %v311
    %337 = vmatpush.bf16.msra.mxu0 %v309
    %338 = vmatpush.bf16.msra.mxu0 %v307
    %339 = vmatpush.bf16.msra.mxu0 %v305
    %340 = vmatpush.bf16.msra.mxu0 %v303
    %341 = vmatpush.bf16.msra.mxu0 %v301
    %342 = vmatpush.bf16.msra.mxu0 %v299
    %343 = vmatpush.bf16.msra.mxu0 %v297
    %344 = vmatmul.bf16.gmra.mxu0 %v240
    %v345 = vpop.f32.mrf.mxu0
    %v346 = vadd.f32 %v208, %v345
    %v347 = vpop.f32.mrf.mxu0
    %348 = vdwg.mxu0
    %349 = vmatpush.bf16.msra.mxu0 0
    %350 = vmatpush.bf16.msra.mxu0 0
    %351 = vmatpush.bf16.msra.mxu0 0
    %352 = vmatpush.bf16.msra.mxu0 0
    %353 = vmatpush.bf16.msra.mxu0 0
    %354 = vmatpush.bf16.msra.mxu0 0
    %355 = vmatpush.bf16.msra.mxu0 0
    %356 = vmatpush.bf16.msra.mxu0 %v313
    %357 = vmatmul.bf16.gmra.mxu0 %v334
    %v358 = vpop.f32.mrf.mxu0
    %v359 = vadd.f32 %v346, %v358
    %v360 = vpop.f32.mrf.mxu0
    %361 = vdwg.mxu0
    %362 = vmatpush.bf16.msra.mxu0 %v312
    %363 = vmatpush.bf16.msra.mxu0 %v310
    %364 = vmatpush.bf16.msra.mxu0 %v308
    %365 = vmatpush.bf16.msra.mxu0 %v306
    %366 = vmatpush.bf16.msra.mxu0 %v304
    %367 = vmatpush.bf16.msra.mxu0 %v302
    %368 = vmatpush.bf16.msra.mxu0 %v300
    %369 = vmatpush.bf16.msra.mxu0 %v298
    %370 = vmatmul.bf16.gmra.mxu0 %v240
    %v371 = vpop.f32.mrf.mxu0
    %v372 = vadd.f32 %v234, %v371
    %v373 = vpop.f32.mrf.mxu0
    %374 = vdwg.mxu0
    %375 = vmatpush.bf16.msra.mxu0 0
    %376 = vmatpush.bf16.msra.mxu0 0
    %377 = vmatpush.bf16.msra.mxu0 0
    %378 = vmatpush.bf16.msra.mxu0 0
    %379 = vmatpush.bf16.msra.mxu0 0
    %380 = vmatpush.bf16.msra.mxu0 0
    %381 = vmatpush.bf16.msra.mxu0 0
    %382 = vmatpush.bf16.msra.mxu0 %v314
    %383 = vmatmul.bf16.gmra.mxu0 %v334
    %v384 = vpop.f32.mrf.mxu0
    %v385 = vadd.f32 %v372, %v384
    %v386 = vpop.f32.mrf.mxu0
    %387 = vdwg.mxu0
    %v388 = vld [vmem:[%s0 + $0x10] sm:$0xff]
    %s389 = scalar_lea.vmem %s1, 288
    %v390 = vld [vmem:[%s389] sm:$0xff]
    %v391 = vld [vmem:[%s389 + $0x8] sm:$0xff]
    %v392 = vld [vmem:[%s389 + $0x10] sm:$0xff]
    %v393 = vld [vmem:[%s389 + $0x18] sm:$0xff]
    %v394 = vld [vmem:[%s389 + $0x20] sm:$0xff]
    %v395 = vld [vmem:[%s389 + $0x28] sm:$0xff]
    %v396 = vld [vmem:[%s389 + $0x30] sm:$0xff]
    %v397 = vld [vmem:[%s389 + $0x38] sm:$0xff]
    %v398 = vld [vmem:[%s389 + $0x40] sm:$0xff]
    %v399 = vld [vmem:[%s389 + $0x48] sm:$0xff]
    %v400 = vld [vmem:[%s389 + $0x50] sm:$0xff]
    %v401 = vld [vmem:[%s389 + $0x58] sm:$0xff]
    %v402 = vld [vmem:[%s389 + $0x60] sm:$0xff]
    %v403 = vld [vmem:[%s389 + $0x68] sm:$0xff]
    %v404 = vld [vmem:[%s389 + $0x70] sm:$0xff]
    %v405 = vld [vmem:[%s389 + $0x78] sm:$0xff]
    %v406 = vld [vmem:[%s389 + $0x80] sm:$0xff]
    %v407 = vld [vmem:[%s389 + $0x88] sm:$0xff]
    %v409 = vunpack.c.l.b16 %v388
    %v410 = vunpack.c.h.b16 %v388
    %v411 = vpack.c.b16 %v409, %v409
    %v412 = vpack.c.b16 %v410, %v410
    %v432 = vunpack.c.l.b16 %v390
    %v433 = vunpack.c.h.b16 %v390
    %v434 = vunpack.c.l.b16 %v391
    %v435 = vunpack.c.h.b16 %v391
    %v436 = vunpack.c.l.b16 %v392
    %v437 = vunpack.c.h.b16 %v392
    %v438 = vunpack.c.l.b16 %v393
    %v439 = vunpack.c.h.b16 %v393
    %v440 = vunpack.c.l.b16 %v394
    %v441 = vunpack.c.h.b16 %v394
    %v442 = vunpack.c.l.b16 %v395
    %v443 = vunpack.c.h.b16 %v395
    %v444 = vunpack.c.l.b16 %v396
    %v445 = vunpack.c.h.b16 %v396
    %v446 = vunpack.c.l.b16 %v397
    %v447 = vunpack.c.h.b16 %v397
    %v448 = vunpack.c.l.b16 %v398
    %v449 = vunpack.c.h.b16 %v398
    %v450 = vunpack.c.l.b16 %v399
    %v451 = vunpack.c.h.b16 %v399
    %v452 = vunpack.c.l.b16 %v400
    %v453 = vunpack.c.h.b16 %v400
    %v454 = vunpack.c.l.b16 %v401
    %v455 = vunpack.c.h.b16 %v401
    %v456 = vunpack.c.l.b16 %v402
    %v457 = vunpack.c.h.b16 %v402
    %v458 = vunpack.c.l.b16 %v403
    %v459 = vunpack.c.h.b16 %v403
    %v460 = vunpack.c.l.b16 %v404
    %v461 = vunpack.c.h.b16 %v404
    %v462 = vunpack.c.l.b16 %v405
    %v463 = vunpack.c.h.b16 %v405
    %v464 = vunpack.c.l.b16 %v406
    %v465 = vunpack.c.h.b16 %v406
    %v466 = vunpack.c.l.b16 %v407
    %v467 = vunpack.c.h.b16 %v407
    %v468 = vpack.c.b16 %v434, %v432
    %v469 = vpack.c.b16 %v435, %v433
    %v470 = vpack.c.b16 %v438, %v436
    %v471 = vpack.c.b16 %v439, %v437
    %v472 = vpack.c.b16 %v442, %v440
    %v473 = vpack.c.b16 %v443, %v441
    %v474 = vpack.c.b16 %v446, %v444
    %v475 = vpack.c.b16 %v447, %v445
    %v476 = vpack.c.b16 %v450, %v448
    %v477 = vpack.c.b16 %v451, %v449
    %v478 = vpack.c.b16 %v454, %v452
    %v479 = vpack.c.b16 %v455, %v453
    %v480 = vpack.c.b16 %v458, %v456
    %v481 = vpack.c.b16 %v459, %v457
    %v482 = vpack.c.b16 %v462, %v460
    %v483 = vpack.c.b16 %v463, %v461
    %v484 = vpack.c.b16 %v466, %v464
    %v485 = vpack.c.b16 %v467, %v465
    %v505 = vsel %vm181, %v412, 0
    %507 = vmatpush.bf16.msra.mxu0 %v482
    %508 = vmatpush.bf16.msra.mxu0 %v480
    %509 = vmatpush.bf16.msra.mxu0 %v478
    %510 = vmatpush.bf16.msra.mxu0 %v476
    %511 = vmatpush.bf16.msra.mxu0 %v474
    %512 = vmatpush.bf16.msra.mxu0 %v472
    %513 = vmatpush.bf16.msra.mxu0 %v470
    %514 = vmatpush.bf16.msra.mxu0 %v468
    %515 = vmatmul.bf16.gmra.mxu0 %v411
    %v516 = vpop.f32.mrf.mxu0
    %v517 = vadd.f32 0.0, %v516
    %v518 = vpop.f32.mrf.mxu0
    %519 = vdwg.mxu0
    %520 = vmatpush.bf16.msra.mxu0 0
    %521 = vmatpush.bf16.msra.mxu0 0
    %522 = vmatpush.bf16.msra.mxu0 0
    %523 = vmatpush.bf16.msra.mxu0 0
    %524 = vmatpush.bf16.msra.mxu0 0
    %525 = vmatpush.bf16.msra.mxu0 0
    %526 = vmatpush.bf16.msra.mxu0 0
    %527 = vmatpush.bf16.msra.mxu0 %v484
    %528 = vmatmul.bf16.gmra.mxu0 %v505
    %v529 = vpop.f32.mrf.mxu0
    %v530 = vadd.f32 %v517, %v529
    %v531 = vpop.f32.mrf.mxu0
    %532 = vdwg.mxu0
    %533 = vmatpush.bf16.msra.mxu0 %v483
    %534 = vmatpush.bf16.msra.mxu0 %v481
    %535 = vmatpush.bf16.msra.mxu0 %v479
    %536 = vmatpush.bf16.msra.mxu0 %v477
    %537 = vmatpush.bf16.msra.mxu0 %v475
    %538 = vmatpush.bf16.msra.mxu0 %v473
    %539 = vmatpush.bf16.msra.mxu0 %v471
    %540 = vmatpush.bf16.msra.mxu0 %v469
    %541 = vmatmul.bf16.gmra.mxu0 %v411
    %v542 = vpop.f32.mrf.mxu0
    %v543 = vadd.f32 0.0, %v542
    %v544 = vpop.f32.mrf.mxu0
    %545 = vdwg.mxu0
    %546 = vmatpush.bf16.msra.mxu0 0
    %547 = vmatpush.bf16.msra.mxu0 0
    %548 = vmatpush.bf16.msra.mxu0 0
    %549 = vmatpush.bf16.msra.mxu0 0
    %550 = vmatpush.bf16.msra.mxu0 0
    %551 = vmatpush.bf16.msra.mxu0 0
    %552 = vmatpush.bf16.msra.mxu0 0
    %553 = vmatpush.bf16.msra.mxu0 %v485
    %554 = vmatmul.bf16.gmra.mxu0 %v505
    %v555 = vpop.f32.mrf.mxu0
    %v556 = vadd.f32 %v543, %v555
    %v557 = vpop.f32.mrf.mxu0
    %558 = vdwg.mxu0
    %v559 = vadd.f32 %v359, %v530
    %v560 = vadd.f32 %v385, %v556
    %v561 = vld [vmem:[%s0 + $0x18] sm:$0xff]
    %s562 = scalar_lea.vmem %s1, 432
    %v563 = vld [vmem:[%s562] sm:$0xff]
    %v564 = vld [vmem:[%s562 + $0x8] sm:$0xff]
    %v565 = vld [vmem:[%s562 + $0x10] sm:$0xff]
    %v566 = vld [vmem:[%s562 + $0x18] sm:$0xff]
    %v567 = vld [vmem:[%s562 + $0x20] sm:$0xff]
    %v568 = vld [vmem:[%s562 + $0x28] sm:$0xff]
    %v569 = vld [vmem:[%s562 + $0x30] sm:$0xff]
    %v570 = vld [vmem:[%s562 + $0x38] sm:$0xff]
    %v571 = vld [vmem:[%s562 + $0x40] sm:$0xff]
    %v572 = vld [vmem:[%s562 + $0x48] sm:$0xff]
    %v573 = vld [vmem:[%s562 + $0x50] sm:$0xff]
    %v574 = vld [vmem:[%s562 + $0x58] sm:$0xff]
    %v575 = vld [vmem:[%s562 + $0x60] sm:$0xff]
    %v576 = vld [vmem:[%s562 + $0x68] sm:$0xff]
    %v577 = vld [vmem:[%s562 + $0x70] sm:$0xff]
    %v578 = vld [vmem:[%s562 + $0x78] sm:$0xff]
    %v579 = vld [vmem:[%s562 + $0x80] sm:$0xff]
    %v580 = vld [vmem:[%s562 + $0x88] sm:$0xff]
    %v582 = vunpack.c.l.b16 %v561
    %v583 = vunpack.c.h.b16 %v561
    %v584 = vpack.c.b16 %v582, %v582
    %v585 = vpack.c.b16 %v583, %v583
    %v605 = vunpack.c.l.b16 %v563
    %v606 = vunpack.c.h.b16 %v563
    %v607 = vunpack.c.l.b16 %v564
    %v608 = vunpack.c.h.b16 %v564
    %v609 = vunpack.c.l.b16 %v565
    %v610 = vunpack.c.h.b16 %v565
    %v611 = vunpack.c.l.b16 %v566
    %v612 = vunpack.c.h.b16 %v566
    %v613 = vunpack.c.l.b16 %v567
    %v614 = vunpack.c.h.b16 %v567
    %v615 = vunpack.c.l.b16 %v568
    %v616 = vunpack.c.h.b16 %v568
    %v617 = vunpack.c.l.b16 %v569
    %v618 = vunpack.c.h.b16 %v569
    %v619 = vunpack.c.l.b16 %v570
    %v620 = vunpack.c.h.b16 %v570
    %v621 = vunpack.c.l.b16 %v571
    %v622 = vunpack.c.h.b16 %v571
    %v623 = vunpack.c.l.b16 %v572
    %v624 = vunpack.c.h.b16 %v572
    %v625 = vunpack.c.l.b16 %v573
    %v626 = vunpack.c.h.b16 %v573
    %v627 = vunpack.c.l.b16 %v574
    %v628 = vunpack.c.h.b16 %v574
    %v629 = vunpack.c.l.b16 %v575
    %v630 = vunpack.c.h.b16 %v575
    %v631 = vunpack.c.l.b16 %v576
    %v632 = vunpack.c.h.b16 %v576
    %v633 = vunpack.c.l.b16 %v577
    %v634 = vunpack.c.h.b16 %v577
    %v635 = vunpack.c.l.b16 %v578
    %v636 = vunpack.c.h.b16 %v578
    %v637 = vunpack.c.l.b16 %v579
    %v638 = vunpack.c.h.b16 %v579
    %v639 = vunpack.c.l.b16 %v580
    %v640 = vunpack.c.h.b16 %v580
    %v641 = vpack.c.b16 %v607, %v605
    %v642 = vpack.c.b16 %v608, %v606
    %v643 = vpack.c.b16 %v611, %v609
    %v644 = vpack.c.b16 %v612, %v610
    %v645 = vpack.c.b16 %v615, %v613
    %v646 = vpack.c.b16 %v616, %v614
    %v647 = vpack.c.b16 %v619, %v617
    %v648 = vpack.c.b16 %v620, %v618
    %v649 = vpack.c.b16 %v623, %v621
    %v650 = vpack.c.b16 %v624, %v622
    %v651 = vpack.c.b16 %v627, %v625
    %v652 = vpack.c.b16 %v628, %v626
    %v653 = vpack.c.b16 %v631, %v629
    %v654 = vpack.c.b16 %v632, %v630
    %v655 = vpack.c.b16 %v635, %v633
    %v656 = vpack.c.b16 %v636, %v634
    %v657 = vpack.c.b16 %v639, %v637
    %v658 = vpack.c.b16 %v640, %v638
    %v678 = vsel %vm181, %v585, 0
    %680 = vmatpush.bf16.msra.mxu0 %v655
    %681 = vmatpush.bf16.msra.mxu0 %v653
    %682 = vmatpush.bf16.msra.mxu0 %v651
    %683 = vmatpush.bf16.msra.mxu0 %v649
    %684 = vmatpush.bf16.msra.mxu0 %v647
    %685 = vmatpush.bf16.msra.mxu0 %v645
    %686 = vmatpush.bf16.msra.mxu0 %v643
    %687 = vmatpush.bf16.msra.mxu0 %v641
    %688 = vmatmul.bf16.gmra.mxu0 %v584
    %v689 = vpop.f32.mrf.mxu0
    %v690 = vadd.f32 0.0, %v689
    %v691 = vpop.f32.mrf.mxu0
    %692 = vdwg.mxu0
    %693 = vmatpush.bf16.msra.mxu0 0
    %694 = vmatpush.bf16.msra.mxu0 0
    %695 = vmatpush.bf16.msra.mxu0 0
    %696 = vmatpush.bf16.msra.mxu0 0
    %697 = vmatpush.bf16.msra.mxu0 0
    %698 = vmatpush.bf16.msra.mxu0 0
    %699 = vmatpush.bf16.msra.mxu0 0
    %700 = vmatpush.bf16.msra.mxu0 %v657
    %701 = vmatmul.bf16.gmra.mxu0 %v678
    %v702 = vpop.f32.mrf.mxu0
    %v703 = vadd.f32 %v690, %v702
    %v704 = vpop.f32.mrf.mxu0
    %705 = vdwg.mxu0
    %706 = vmatpush.bf16.msra.mxu0 %v656
    %707 = vmatpush.bf16.msra.mxu0 %v654
    %708 = vmatpush.bf16.msra.mxu0 %v652
    %709 = vmatpush.bf16.msra.mxu0 %v650
    %710 = vmatpush.bf16.msra.mxu0 %v648
    %711 = vmatpush.bf16.msra.mxu0 %v646
    %712 = vmatpush.bf16.msra.mxu0 %v644
    %713 = vmatpush.bf16.msra.mxu0 %v642
    %714 = vmatmul.bf16.gmra.mxu0 %v584
    %v715 = vpop.f32.mrf.mxu0
    %v716 = vadd.f32 0.0, %v715
    %v717 = vpop.f32.mrf.mxu0
    %718 = vdwg.mxu0
    %719 = vmatpush.bf16.msra.mxu0 0
    %720 = vmatpush.bf16.msra.mxu0 0
    %721 = vmatpush.bf16.msra.mxu0 0
    %722 = vmatpush.bf16.msra.mxu0 0
    %723 = vmatpush.bf16.msra.mxu0 0
    %724 = vmatpush.bf16.msra.mxu0 0
    %725 = vmatpush.bf16.msra.mxu0 0
    %726 = vmatpush.bf16.msra.mxu0 %v658
    %727 = vmatmul.bf16.gmra.mxu0 %v678
    %v728 = vpop.f32.mrf.mxu0
    %v729 = vadd.f32 %v716, %v728
    %v730 = vpop.f32.mrf.mxu0
    %731 = vdwg.mxu0
    %v732 = vadd.f32 %v559, %v703
    %v733 = vadd.f32 %v560, %v729
    %v734 = vld [vmem:[%s0 + $0x20] sm:$0xff]
    %s735 = scalar_lea.vmem %s1, 576
    %v736 = vld [vmem:[%s735] sm:$0xff]
    %v737 = vld [vmem:[%s735 + $0x8] sm:$0xff]
    %v738 = vld [vmem:[%s735 + $0x10] sm:$0xff]
    %v739 = vld [vmem:[%s735 + $0x18] sm:$0xff]
    %v740 = vld [vmem:[%s735 + $0x20] sm:$0xff]
    %v741 = vld [vmem:[%s735 + $0x28] sm:$0xff]
    %v742 = vld [vmem:[%s735 + $0x30] sm:$0xff]
    %v743 = vld [vmem:[%s735 + $0x38] sm:$0xff]
    %v744 = vld [vmem:[%s735 + $0x40] sm:$0xff]
    %v745 = vld [vmem:[%s735 + $0x48] sm:$0xff]
    %v746 = vld [vmem:[%s735 + $0x50] sm:$0xff]
    %v747 = vld [vmem:[%s735 + $0x58] sm:$0xff]
    %v748 = vld [vmem:[%s735 + $0x60] sm:$0xff]
    %v749 = vld [vmem:[%s735 + $0x68] sm:$0xff]
    %v750 = vld [vmem:[%s735 + $0x70] sm:$0xff]
    %v751 = vld [vmem:[%s735 + $0x78] sm:$0xff]
    %v752 = vld [vmem:[%s735 + $0x80] sm:$0xff]
    %v753 = vld [vmem:[%s735 + $0x88] sm:$0xff]
    %v755 = vunpack.c.l.b16 %v734
    %v756 = vunpack.c.h.b16 %v734
    %v757 = vpack.c.b16 %v755, %v755
    %v758 = vpack.c.b16 %v756, %v756
    %v778 = vunpack.c.l.b16 %v736
    %v779 = vunpack.c.h.b16 %v736
    %v780 = vunpack.c.l.b16 %v737
    %v781 = vunpack.c.h.b16 %v737
    %v782 = vunpack.c.l.b16 %v738
    %v783 = vunpack.c.h.b16 %v738
    %v784 = vunpack.c.l.b16 %v739
    %v785 = vunpack.c.h.b16 %v739
    %v786 = vunpack.c.l.b16 %v740
    %v787 = vunpack.c.h.b16 %v740
    %v788 = vunpack.c.l.b16 %v741
    %v789 = vunpack.c.h.b16 %v741
    %v790 = vunpack.c.l.b16 %v742
    %v791 = vunpack.c.h.b16 %v742
    %v792 = vunpack.c.l.b16 %v743
    %v793 = vunpack.c.h.b16 %v743
    %v794 = vunpack.c.l.b16 %v744
    %v795 = vunpack.c.h.b16 %v744
    %v796 = vunpack.c.l.b16 %v745
    %v797 = vunpack.c.h.b16 %v745
    %v798 = vunpack.c.l.b16 %v746
    %v799 = vunpack.c.h.b16 %v746
    %v800 = vunpack.c.l.b16 %v747
    %v801 = vunpack.c.h.b16 %v747
    %v802 = vunpack.c.l.b16 %v748
    %v803 = vunpack.c.h.b16 %v748
    %v804 = vunpack.c.l.b16 %v749
    %v805 = vunpack.c.h.b16 %v749
    %v806 = vunpack.c.l.b16 %v750
    %v807 = vunpack.c.h.b16 %v750
    %v808 = vunpack.c.l.b16 %v751
    %v809 = vunpack.c.h.b16 %v751
    %v810 = vunpack.c.l.b16 %v752
    %v811 = vunpack.c.h.b16 %v752
    %v812 = vunpack.c.l.b16 %v753
    %v813 = vunpack.c.h.b16 %v753
    %v814 = vpack.c.b16 %v780, %v778
    %v815 = vpack.c.b16 %v781, %v779
    %v816 = vpack.c.b16 %v784, %v782
    %v817 = vpack.c.b16 %v785, %v783
    %v818 = vpack.c.b16 %v788, %v786
    %v819 = vpack.c.b16 %v789, %v787
    %v820 = vpack.c.b16 %v792, %v790
    %v821 = vpack.c.b16 %v793, %v791
    %v822 = vpack.c.b16 %v796, %v794
    %v823 = vpack.c.b16 %v797, %v795
    %v824 = vpack.c.b16 %v800, %v798
    %v825 = vpack.c.b16 %v801, %v799
    %v826 = vpack.c.b16 %v804, %v802
    %v827 = vpack.c.b16 %v805, %v803
    %v828 = vpack.c.b16 %v808, %v806
    %v829 = vpack.c.b16 %v809, %v807
    %v830 = vpack.c.b16 %v812, %v810
    %v831 = vpack.c.b16 %v813, %v811
    %v851 = vsel %vm181, %v758, 0
    %853 = vmatpush.bf16.msra.mxu0 %v828
    %854 = vmatpush.bf16.msra.mxu0 %v826
    %855 = vmatpush.bf16.msra.mxu0 %v824
    %856 = vmatpush.bf16.msra.mxu0 %v822
    %857 = vmatpush.bf16.msra.mxu0 %v820
    %858 = vmatpush.bf16.msra.mxu0 %v818
    %859 = vmatpush.bf16.msra.mxu0 %v816
    %860 = vmatpush.bf16.msra.mxu0 %v814
    %861 = vmatmul.bf16.gmra.mxu0 %v757
    %v862 = vpop.f32.mrf.mxu0
    %v863 = vadd.f32 0.0, %v862
    %v864 = vpop.f32.mrf.mxu0
    %865 = vdwg.mxu0
    %866 = vmatpush.bf16.msra.mxu0 0
    %867 = vmatpush.bf16.msra.mxu0 0
    %868 = vmatpush.bf16.msra.mxu0 0
    %869 = vmatpush.bf16.msra.mxu0 0
    %870 = vmatpush.bf16.msra.mxu0 0
    %871 = vmatpush.bf16.msra.mxu0 0
    %872 = vmatpush.bf16.msra.mxu0 0
    %873 = vmatpush.bf16.msra.mxu0 %v830
    %874 = vmatmul.bf16.gmra.mxu0 %v851
    %v875 = vpop.f32.mrf.mxu0
    %v876 = vadd.f32 %v863, %v875
    %v877 = vpop.f32.mrf.mxu0
    %878 = vdwg.mxu0
    %879 = vmatpush.bf16.msra.mxu0 %v829
    %880 = vmatpush.bf16.msra.mxu0 %v827
    %881 = vmatpush.bf16.msra.mxu0 %v825
    %882 = vmatpush.bf16.msra.mxu0 %v823
    %883 = vmatpush.bf16.msra.mxu0 %v821
    %884 = vmatpush.bf16.msra.mxu0 %v819
    %885 = vmatpush.bf16.msra.mxu0 %v817
    %886 = vmatpush.bf16.msra.mxu0 %v815
    %887 = vmatmul.bf16.gmra.mxu0 %v757
    %v888 = vpop.f32.mrf.mxu0
    %v889 = vadd.f32 0.0, %v888
    %v890 = vpop.f32.mrf.mxu0
    %891 = vdwg.mxu0
    %892 = vmatpush.bf16.msra.mxu0 0
    %893 = vmatpush.bf16.msra.mxu0 0
    %894 = vmatpush.bf16.msra.mxu0 0
    %895 = vmatpush.bf16.msra.mxu0 0
    %896 = vmatpush.bf16.msra.mxu0 0
    %897 = vmatpush.bf16.msra.mxu0 0
    %898 = vmatpush.bf16.msra.mxu0 0
    %899 = vmatpush.bf16.msra.mxu0 %v831
    %900 = vmatmul.bf16.gmra.mxu0 %v851
    %v901 = vpop.f32.mrf.mxu0
    %v902 = vadd.f32 %v889, %v901
    %v903 = vpop.f32.mrf.mxu0
    %904 = vdwg.mxu0
    %v905 = vadd.f32 %v732, %v876
    %v906 = vadd.f32 %v733, %v902
    %v907 = vld [vmem:[%s0 + $0x28] sm:$0xff]
    %s908 = scalar_lea.vmem %s1, 720
    %v909 = vld [vmem:[%s908] sm:$0xff]
    %v910 = vld [vmem:[%s908 + $0x8] sm:$0xff]
    %v911 = vld [vmem:[%s908 + $0x10] sm:$0xff]
    %v912 = vld [vmem:[%s908 + $0x18] sm:$0xff]
    %v913 = vld [vmem:[%s908 + $0x20] sm:$0xff]
    %v914 = vld [vmem:[%s908 + $0x28] sm:$0xff]
    %v915 = vld [vmem:[%s908 + $0x30] sm:$0xff]
    %v916 = vld [vmem:[%s908 + $0x38] sm:$0xff]
    %v917 = vld [vmem:[%s908 + $0x40] sm:$0xff]
    %v918 = vld [vmem:[%s908 + $0x48] sm:$0xff]
    %v919 = vld [vmem:[%s908 + $0x50] sm:$0xff]
    %v920 = vld [vmem:[%s908 + $0x58] sm:$0xff]
    %v921 = vld [vmem:[%s908 + $0x60] sm:$0xff]
    %v922 = vld [vmem:[%s908 + $0x68] sm:$0xff]
    %v923 = vld [vmem:[%s908 + $0x70] sm:$0xff]
    %v924 = vld [vmem:[%s908 + $0x78] sm:$0xff]
    %v925 = vld [vmem:[%s908 + $0x80] sm:$0xff]
    %v926 = vld [vmem:[%s908 + $0x88] sm:$0xff]
    %v928 = vunpack.c.l.b16 %v907
    %v929 = vunpack.c.h.b16 %v907
    %v930 = vpack.c.b16 %v928, %v928
    %v931 = vpack.c.b16 %v929, %v929
    %v951 = vunpack.c.l.b16 %v909
    %v952 = vunpack.c.h.b16 %v909
    %v953 = vunpack.c.l.b16 %v910
    %v954 = vunpack.c.h.b16 %v910
    %v955 = vunpack.c.l.b16 %v911
    %v956 = vunpack.c.h.b16 %v911
    %v957 = vunpack.c.l.b16 %v912
    %v958 = vunpack.c.h.b16 %v912
    %v959 = vunpack.c.l.b16 %v913
    %v960 = vunpack.c.h.b16 %v913
    %v961 = vunpack.c.l.b16 %v914
    %v962 = vunpack.c.h.b16 %v914
    %v963 = vunpack.c.l.b16 %v915
    %v964 = vunpack.c.h.b16 %v915
    %v965 = vunpack.c.l.b16 %v916
    %v966 = vunpack.c.h.b16 %v916
    %v967 = vunpack.c.l.b16 %v917
    %v968 = vunpack.c.h.b16 %v917
    %v969 = vunpack.c.l.b16 %v918
    %v970 = vunpack.c.h.b16 %v918
    %v971 = vunpack.c.l.b16 %v919
    %v972 = vunpack.c.h.b16 %v919
    %v973 = vunpack.c.l.b16 %v920
    %v974 = vunpack.c.h.b16 %v920
    %v975 = vunpack.c.l.b16 %v921
    %v976 = vunpack.c.h.b16 %v921
    %v977 = vunpack.c.l.b16 %v922
    %v978 = vunpack.c.h.b16 %v922
    %v979 = vunpack.c.l.b16 %v923
    %v980 = vunpack.c.h.b16 %v923
    %v981 = vunpack.c.l.b16 %v924
    %v982 = vunpack.c.h.b16 %v924
    %v983 = vunpack.c.l.b16 %v925
    %v984 = vunpack.c.h.b16 %v925
    %v985 = vunpack.c.l.b16 %v926
    %v986 = vunpack.c.h.b16 %v926
    %v987 = vpack.c.b16 %v953, %v951
    %v988 = vpack.c.b16 %v954, %v952
    %v989 = vpack.c.b16 %v957, %v955
    %v990 = vpack.c.b16 %v958, %v956
    %v991 = vpack.c.b16 %v961, %v959
    %v992 = vpack.c.b16 %v962, %v960
    %v993 = vpack.c.b16 %v965, %v963
    %v994 = vpack.c.b16 %v966, %v964
    %v995 = vpack.c.b16 %v969, %v967
    %v996 = vpack.c.b16 %v970, %v968
    %v997 = vpack.c.b16 %v973, %v971
    %v998 = vpack.c.b16 %v974, %v972
    %v999 = vpack.c.b16 %v977, %v975
    %v1000 = vpack.c.b16 %v978, %v976
    %v1001 = vpack.c.b16 %v981, %v979
    %v1002 = vpack.c.b16 %v982, %v980
    %v1003 = vpack.c.b16 %v985, %v983
    %v1004 = vpack.c.b16 %v986, %v984
    %v1024 = vsel %vm181, %v931, 0
    %1026 = vmatpush.bf16.msra.mxu0 %v1001
    %1027 = vmatpush.bf16.msra.mxu0 %v999
    %1028 = vmatpush.bf16.msra.mxu0 %v997
    %1029 = vmatpush.bf16.msra.mxu0 %v995
    %1030 = vmatpush.bf16.msra.mxu0 %v993
    %1031 = vmatpush.bf16.msra.mxu0 %v991
    %1032 = vmatpush.bf16.msra.mxu0 %v989
    %1033 = vmatpush.bf16.msra.mxu0 %v987
    %1034 = vmatmul.bf16.gmra.mxu0 %v930
    %v1035 = vpop.f32.mrf.mxu0
    %v1036 = vadd.f32 0.0, %v1035
    %v1037 = vpop.f32.mrf.mxu0
    %1038 = vdwg.mxu0
    %1039 = vmatpush.bf16.msra.mxu0 0
    %1040 = vmatpush.bf16.msra.mxu0 0
    %1041 = vmatpush.bf16.msra.mxu0 0
    %1042 = vmatpush.bf16.msra.mxu0 0
    %1043 = vmatpush.bf16.msra.mxu0 0
    %1044 = vmatpush.bf16.msra.mxu0 0
    %1045 = vmatpush.bf16.msra.mxu0 0
    %1046 = vmatpush.bf16.msra.mxu0 %v1003
    %1047 = vmatmul.bf16.gmra.mxu0 %v1024
    %v1048 = vpop.f32.mrf.mxu0
    %v1049 = vadd.f32 %v1036, %v1048
    %v1050 = vpop.f32.mrf.mxu0
    %1051 = vdwg.mxu0
    %1052 = vmatpush.bf16.msra.mxu0 %v1002
    %1053 = vmatpush.bf16.msra.mxu0 %v1000
    %1054 = vmatpush.bf16.msra.mxu0 %v998
    %1055 = vmatpush.bf16.msra.mxu0 %v996
    %1056 = vmatpush.bf16.msra.mxu0 %v994
    %1057 = vmatpush.bf16.msra.mxu0 %v992
    %1058 = vmatpush.bf16.msra.mxu0 %v990
    %1059 = vmatpush.bf16.msra.mxu0 %v988
    %1060 = vmatmul.bf16.gmra.mxu0 %v930
    %v1061 = vpop.f32.mrf.mxu0
    %v1062 = vadd.f32 0.0, %v1061
    %v1063 = vpop.f32.mrf.mxu0
    %1064 = vdwg.mxu0
    %1065 = vmatpush.bf16.msra.mxu0 0
    %1066 = vmatpush.bf16.msra.mxu0 0
    %1067 = vmatpush.bf16.msra.mxu0 0
    %1068 = vmatpush.bf16.msra.mxu0 0
    %1069 = vmatpush.bf16.msra.mxu0 0
    %1070 = vmatpush.bf16.msra.mxu0 0
    %1071 = vmatpush.bf16.msra.mxu0 0
    %1072 = vmatpush.bf16.msra.mxu0 %v1004
    %1073 = vmatmul.bf16.gmra.mxu0 %v1024
    %v1074 = vpop.f32.mrf.mxu0
    %v1075 = vadd.f32 %v1062, %v1074
    %v1076 = vpop.f32.mrf.mxu0
    %1077 = vdwg.mxu0
    %v1078 = vadd.f32 %v905, %v1049
    %v1079 = vadd.f32 %v906, %v1075
    %v1080 = vld [vmem:[%s0 + $0x30] sm:$0xff]
    %s1081 = scalar_lea.vmem %s1, 864
    %v1082 = vld [vmem:[%s1081] sm:$0xff]
    %v1083 = vld [vmem:[%s1081 + $0x8] sm:$0xff]
    %v1084 = vld [vmem:[%s1081 + $0x10] sm:$0xff]
    %v1085 = vld [vmem:[%s1081 + $0x18] sm:$0xff]
    %v1086 = vld [vmem:[%s1081 + $0x20] sm:$0xff]
    %v1087 = vld [vmem:[%s1081 + $0x28] sm:$0xff]
    %v1088 = vld [vmem:[%s1081 + $0x30] sm:$0xff]
    %v1089 = vld [vmem:[%s1081 + $0x38] sm:$0xff]
    %v1090 = vld [vmem:[%s1081 + $0x40] sm:$0xff]
    %v1091 = vld [vmem:[%s1081 + $0x48] sm:$0xff]
    %v1092 = vld [vmem:[%s1081 + $0x50] sm:$0xff]
    %v1093 = vld [vmem:[%s1081 + $0x58] sm:$0xff]
    %v1094 = vld [vmem:[%s1081 + $0x60] sm:$0xff]
    %v1095 = vld [vmem:[%s1081 + $0x68] sm:$0xff]
    %v1096 = vld [vmem:[%s1081 + $0x70] sm:$0xff]
    %v1097 = vld [vmem:[%s1081 + $0x78] sm:$0xff]
    %v1098 = vld [vmem:[%s1081 + $0x80] sm:$0xff]
    %v1099 = vld [vmem:[%s1081 + $0x88] sm:$0xff]
    %v1101 = vunpack.c.l.b16 %v1080
    %v1102 = vunpack.c.h.b16 %v1080
    %v1103 = vpack.c.b16 %v1101, %v1101
    %v1104 = vpack.c.b16 %v1102, %v1102
    %v1124 = vunpack.c.l.b16 %v1082
    %v1125 = vunpack.c.h.b16 %v1082
    %v1126 = vunpack.c.l.b16 %v1083
    %v1127 = vunpack.c.h.b16 %v1083
    %v1128 = vunpack.c.l.b16 %v1084
    %v1129 = vunpack.c.h.b16 %v1084
    %v1130 = vunpack.c.l.b16 %v1085
    %v1131 = vunpack.c.h.b16 %v1085
    %v1132 = vunpack.c.l.b16 %v1086
    %v1133 = vunpack.c.h.b16 %v1086
    %v1134 = vunpack.c.l.b16 %v1087
    %v1135 = vunpack.c.h.b16 %v1087
    %v1136 = vunpack.c.l.b16 %v1088
    %v1137 = vunpack.c.h.b16 %v1088
    %v1138 = vunpack.c.l.b16 %v1089
    %v1139 = vunpack.c.h.b16 %v1089
    %v1140 = vunpack.c.l.b16 %v1090
    %v1141 = vunpack.c.h.b16 %v1090
    %v1142 = vunpack.c.l.b16 %v1091
    %v1143 = vunpack.c.h.b16 %v1091
    %v1144 = vunpack.c.l.b16 %v1092
    %v1145 = vunpack.c.h.b16 %v1092
    %v1146 = vunpack.c.l.b16 %v1093
    %v1147 = vunpack.c.h.b16 %v1093
    %v1148 = vunpack.c.l.b16 %v1094
    %v1149 = vunpack.c.h.b16 %v1094
    %v1150 = vunpack.c.l.b16 %v1095
    %v1151 = vunpack.c.h.b16 %v1095
    %v1152 = vunpack.c.l.b16 %v1096
    %v1153 = vunpack.c.h.b16 %v1096
    %v1154 = vunpack.c.l.b16 %v1097
    %v1155 = vunpack.c.h.b16 %v1097
    %v1156 = vunpack.c.l.b16 %v1098
    %v1157 = vunpack.c.h.b16 %v1098
    %v1158 = vunpack.c.l.b16 %v1099
    %v1159 = vunpack.c.h.b16 %v1099
    %v1160 = vpack.c.b16 %v1126, %v1124
    %v1161 = vpack.c.b16 %v1127, %v1125
    %v1162 = vpack.c.b16 %v1130, %v1128
    %v1163 = vpack.c.b16 %v1131, %v1129
    %v1164 = vpack.c.b16 %v1134, %v1132
    %v1165 = vpack.c.b16 %v1135, %v1133
    %v1166 = vpack.c.b16 %v1138, %v1136
    %v1167 = vpack.c.b16 %v1139, %v1137
    %v1168 = vpack.c.b16 %v1142, %v1140
    %v1169 = vpack.c.b16 %v1143, %v1141
    %v1170 = vpack.c.b16 %v1146, %v1144
    %v1171 = vpack.c.b16 %v1147, %v1145
    %v1172 = vpack.c.b16 %v1150, %v1148
    %v1173 = vpack.c.b16 %v1151, %v1149
    %v1174 = vpack.c.b16 %v1154, %v1152
    %v1175 = vpack.c.b16 %v1155, %v1153
    %v1176 = vpack.c.b16 %v1158, %v1156
    %v1177 = vpack.c.b16 %v1159, %v1157
    %v1197 = vsel %vm181, %v1104, 0
    %1199 = vmatpush.bf16.msra.mxu0 %v1174
    %1200 = vmatpush.bf16.msra.mxu0 %v1172
    %1201 = vmatpush.bf16.msra.mxu0 %v1170
    %1202 = vmatpush.bf16.msra.mxu0 %v1168
    %1203 = vmatpush.bf16.msra.mxu0 %v1166
    %1204 = vmatpush.bf16.msra.mxu0 %v1164
    %1205 = vmatpush.bf16.msra.mxu0 %v1162
    %1206 = vmatpush.bf16.msra.mxu0 %v1160
    %1207 = vmatmul.bf16.gmra.mxu0 %v1103
    %v1208 = vpop.f32.mrf.mxu0
    %v1209 = vadd.f32 0.0, %v1208
    %v1210 = vpop.f32.mrf.mxu0
    %1211 = vdwg.mxu0
    %1212 = vmatpush.bf16.msra.mxu0 0
    %1213 = vmatpush.bf16.msra.mxu0 0
    %1214 = vmatpush.bf16.msra.mxu0 0
    %1215 = vmatpush.bf16.msra.mxu0 0
    %1216 = vmatpush.bf16.msra.mxu0 0
    %1217 = vmatpush.bf16.msra.mxu0 0
    %1218 = vmatpush.bf16.msra.mxu0 0
    %1219 = vmatpush.bf16.msra.mxu0 %v1176
    %1220 = vmatmul.bf16.gmra.mxu0 %v1197
    %v1221 = vpop.f32.mrf.mxu0
    %v1222 = vadd.f32 %v1209, %v1221
    %v1223 = vpop.f32.mrf.mxu0
    %1224 = vdwg.mxu0
    %1225 = vmatpush.bf16.msra.mxu0 %v1175
    %1226 = vmatpush.bf16.msra.mxu0 %v1173
    %1227 = vmatpush.bf16.msra.mxu0 %v1171
    %1228 = vmatpush.bf16.msra.mxu0 %v1169
    %1229 = vmatpush.bf16.msra.mxu0 %v1167
    %1230 = vmatpush.bf16.msra.mxu0 %v1165
    %1231 = vmatpush.bf16.msra.mxu0 %v1163
    %1232 = vmatpush.bf16.msra.mxu0 %v1161
    %1233 = vmatmul.bf16.gmra.mxu0 %v1103
    %v1234 = vpop.f32.mrf.mxu0
    %v1235 = vadd.f32 0.0, %v1234
    %v1236 = vpop.f32.mrf.mxu0
    %1237 = vdwg.mxu0
    %1238 = vmatpush.bf16.msra.mxu0 0
    %1239 = vmatpush.bf16.msra.mxu0 0
    %1240 = vmatpush.bf16.msra.mxu0 0
    %1241 = vmatpush.bf16.msra.mxu0 0
    %1242 = vmatpush.bf16.msra.mxu0 0
    %1243 = vmatpush.bf16.msra.mxu0 0
    %1244 = vmatpush.bf16.msra.mxu0 0
    %1245 = vmatpush.bf16.msra.mxu0 %v1177
    %1246 = vmatmul.bf16.gmra.mxu0 %v1197
    %v1247 = vpop.f32.mrf.mxu0
    %v1248 = vadd.f32 %v1235, %v1247
    %v1249 = vpop.f32.mrf.mxu0
    %1250 = vdwg.mxu0
    %v1251 = vadd.f32 %v1078, %v1222
    %v1252 = vadd.f32 %v1079, %v1248
    %v1253 = vld [vmem:[%s0 + $0x38] sm:$0xff]
    %s1254 = scalar_lea.vmem %s1, 1008
    %v1255 = vld [vmem:[%s1254] sm:$0xff]
    %v1256 = vld [vmem:[%s1254 + $0x8] sm:$0xff]
    %v1257 = vld [vmem:[%s1254 + $0x10] sm:$0xff]
    %v1258 = vld [vmem:[%s1254 + $0x18] sm:$0xff]
    %v1259 = vld [vmem:[%s1254 + $0x20] sm:$0xff]
    %v1260 = vld [vmem:[%s1254 + $0x28] sm:$0xff]
    %v1261 = vld [vmem:[%s1254 + $0x30] sm:$0xff]
    %v1262 = vld [vmem:[%s1254 + $0x38] sm:$0xff]
    %v1263 = vld [vmem:[%s1254 + $0x40] sm:$0xff]
    %v1264 = vld [vmem:[%s1254 + $0x48] sm:$0xff]
    %v1265 = vld [vmem:[%s1254 + $0x50] sm:$0xff]
    %v1266 = vld [vmem:[%s1254 + $0x58] sm:$0xff]
    %v1267 = vld [vmem:[%s1254 + $0x60] sm:$0xff]
    %v1268 = vld [vmem:[%s1254 + $0x68] sm:$0xff]
    %v1269 = vld [vmem:[%s1254 + $0x70] sm:$0xff]
    %v1270 = vld [vmem:[%s1254 + $0x78] sm:$0xff]
    %v1271 = vld [vmem:[%s1254 + $0x80] sm:$0xff]
    %v1272 = vld [vmem:[%s1254 + $0x88] sm:$0xff]
    %v1274 = vunpack.c.l.b16 %v1253
    %v1275 = vunpack.c.h.b16 %v1253
    %v1276 = vpack.c.b16 %v1274, %v1274
    %v1277 = vpack.c.b16 %v1275, %v1275
    %v1297 = vunpack.c.l.b16 %v1255
    %v1298 = vunpack.c.h.b16 %v1255
    %v1299 = vunpack.c.l.b16 %v1256
    %v1300 = vunpack.c.h.b16 %v1256
    %v1301 = vunpack.c.l.b16 %v1257
    %v1302 = vunpack.c.h.b16 %v1257
    %v1303 = vunpack.c.l.b16 %v1258
    %v1304 = vunpack.c.h.b16 %v1258
    %v1305 = vunpack.c.l.b16 %v1259
    %v1306 = vunpack.c.h.b16 %v1259
    %v1307 = vunpack.c.l.b16 %v1260
    %v1308 = vunpack.c.h.b16 %v1260
    %v1309 = vunpack.c.l.b16 %v1261
    %v1310 = vunpack.c.h.b16 %v1261
    %v1311 = vunpack.c.l.b16 %v1262
    %v1312 = vunpack.c.h.b16 %v1262
    %v1313 = vunpack.c.l.b16 %v1263
    %v1314 = vunpack.c.h.b16 %v1263
    %v1315 = vunpack.c.l.b16 %v1264
    %v1316 = vunpack.c.h.b16 %v1264
    %v1317 = vunpack.c.l.b16 %v1265
    %v1318 = vunpack.c.h.b16 %v1265
    %v1319 = vunpack.c.l.b16 %v1266
    %v1320 = vunpack.c.h.b16 %v1266
    %v1321 = vunpack.c.l.b16 %v1267
    %v1322 = vunpack.c.h.b16 %v1267
    %v1323 = vunpack.c.l.b16 %v1268
    %v1324 = vunpack.c.h.b16 %v1268
    %v1325 = vunpack.c.l.b16 %v1269
    %v1326 = vunpack.c.h.b16 %v1269
    %v1327 = vunpack.c.l.b16 %v1270
    %v1328 = vunpack.c.h.b16 %v1270
    %v1329 = vunpack.c.l.b16 %v1271
    %v1330 = vunpack.c.h.b16 %v1271
    %v1331 = vunpack.c.l.b16 %v1272
    %v1332 = vunpack.c.h.b16 %v1272
    %v1333 = vpack.c.b16 %v1299, %v1297
    %v1334 = vpack.c.b16 %v1300, %v1298
    %v1335 = vpack.c.b16 %v1303, %v1301
    %v1336 = vpack.c.b16 %v1304, %v1302
    %v1337 = vpack.c.b16 %v1307, %v1305
    %v1338 = vpack.c.b16 %v1308, %v1306
    %v1339 = vpack.c.b16 %v1311, %v1309
    %v1340 = vpack.c.b16 %v1312, %v1310
    %v1341 = vpack.c.b16 %v1315, %v1313
    %v1342 = vpack.c.b16 %v1316, %v1314
    %v1343 = vpack.c.b16 %v1319, %v1317
    %v1344 = vpack.c.b16 %v1320, %v1318
    %v1345 = vpack.c.b16 %v1323, %v1321
    %v1346 = vpack.c.b16 %v1324, %v1322
    %v1347 = vpack.c.b16 %v1327, %v1325
    %v1348 = vpack.c.b16 %v1328, %v1326
    %v1349 = vpack.c.b16 %v1331, %v1329
    %v1350 = vpack.c.b16 %v1332, %v1330
    %v1370 = vsel %vm181, %v1277, 0
    %1372 = vmatpush.bf16.msra.mxu0 %v1347
    %1373 = vmatpush.bf16.msra.mxu0 %v1345
    %1374 = vmatpush.bf16.msra.mxu0 %v1343
    %1375 = vmatpush.bf16.msra.mxu0 %v1341
    %1376 = vmatpush.bf16.msra.mxu0 %v1339
    %1377 = vmatpush.bf16.msra.mxu0 %v1337
    %1378 = vmatpush.bf16.msra.mxu0 %v1335
    %1379 = vmatpush.bf16.msra.mxu0 %v1333
    %1380 = vmatmul.bf16.gmra.mxu0 %v1276
    %v1381 = vpop.f32.mrf.mxu0
    %v1382 = vadd.f32 0.0, %v1381
    %v1383 = vpop.f32.mrf.mxu0
    %1384 = vdwg.mxu0
    %1385 = vmatpush.bf16.msra.mxu0 0
    %1386 = vmatpush.bf16.msra.mxu0 0
    %1387 = vmatpush.bf16.msra.mxu0 0
    %1388 = vmatpush.bf16.msra.mxu0 0
    %1389 = vmatpush.bf16.msra.mxu0 0
    %1390 = vmatpush.bf16.msra.mxu0 0
    %1391 = vmatpush.bf16.msra.mxu0 0
    %1392 = vmatpush.bf16.msra.mxu0 %v1349
    %1393 = vmatmul.bf16.gmra.mxu0 %v1370
    %v1394 = vpop.f32.mrf.mxu0
    %v1395 = vadd.f32 %v1382, %v1394
    %v1396 = vpop.f32.mrf.mxu0
    %1397 = vdwg.mxu0
    %1398 = vmatpush.bf16.msra.mxu0 %v1348
    %1399 = vmatpush.bf16.msra.mxu0 %v1346
    %1400 = vmatpush.bf16.msra.mxu0 %v1344
    %1401 = vmatpush.bf16.msra.mxu0 %v1342
    %1402 = vmatpush.bf16.msra.mxu0 %v1340
    %1403 = vmatpush.bf16.msra.mxu0 %v1338
    %1404 = vmatpush.bf16.msra.mxu0 %v1336
    %1405 = vmatpush.bf16.msra.mxu0 %v1334
    %1406 = vmatmul.bf16.gmra.mxu0 %v1276
    %v1407 = vpop.f32.mrf.mxu0
    %v1408 = vadd.f32 0.0, %v1407
    %v1409 = vpop.f32.mrf.mxu0
    %1410 = vdwg.mxu0
    %1411 = vmatpush.bf16.msra.mxu0 0
    %1412 = vmatpush.bf16.msra.mxu0 0
    %1413 = vmatpush.bf16.msra.mxu0 0
    %1414 = vmatpush.bf16.msra.mxu0 0
    %1415 = vmatpush.bf16.msra.mxu0 0
    %1416 = vmatpush.bf16.msra.mxu0 0
    %1417 = vmatpush.bf16.msra.mxu0 0
    %1418 = vmatpush.bf16.msra.mxu0 %v1350
    %1419 = vmatmul.bf16.gmra.mxu0 %v1370
    %v1420 = vpop.f32.mrf.mxu0
    %v1421 = vadd.f32 %v1408, %v1420
    %v1422 = vpop.f32.mrf.mxu0
    %1423 = vdwg.mxu0
    %v1424 = vadd.f32 %v1251, %v1395
    %v1425 = vadd.f32 %v1252, %v1421
    %1426 = vmatpush.bf16.msra.mxu0 %v159
    %1427 = vmatpush.bf16.msra.mxu0 %v157
    %1428 = vmatpush.bf16.msra.mxu0 %v155
    %1429 = vmatpush.bf16.msra.mxu0 %v153
    %1430 = vmatpush.bf16.msra.mxu0 %v151
    %1431 = vmatpush.bf16.msra.mxu0 %v149
    %1432 = vmatpush.bf16.msra.mxu0 %v147
    %1433 = vmatpush.bf16.msra.mxu0 %v145
    %1434 = vmatmul.bf16.gmra.mxu0 %v930
    %v1435 = vpop.f32.mrf.mxu0
    %v1436 = vadd.f32 0.0, %v1435
    %v1437 = vpop.f32.mrf.mxu0
    %1438 = vdwg.mxu0
    %1439 = vmatpush.bf16.msra.mxu0 0
    %1440 = vmatpush.bf16.msra.mxu0 0
    %1441 = vmatpush.bf16.msra.mxu0 0
    %1442 = vmatpush.bf16.msra.mxu0 0
    %1443 = vmatpush.bf16.msra.mxu0 0
    %1444 = vmatpush.bf16.msra.mxu0 0
    %1445 = vmatpush.bf16.msra.mxu0 0
    %1446 = vmatpush.bf16.msra.mxu0 %v161
    %1447 = vmatmul.bf16.gmra.mxu0 %v1024
    %v1448 = vpop.f32.mrf.mxu0
    %v1449 = vadd.f32 %v1436, %v1448
    %v1450 = vpop.f32.mrf.mxu0
    %1451 = vdwg.mxu0
    %1452 = vmatpush.bf16.msra.mxu0 %v160
    %1453 = vmatpush.bf16.msra.mxu0 %v158
    %1454 = vmatpush.bf16.msra.mxu0 %v156
    %1455 = vmatpush.bf16.msra.mxu0 %v154
    %1456 = vmatpush.bf16.msra.mxu0 %v152
    %1457 = vmatpush.bf16.msra.mxu0 %v150
    %1458 = vmatpush.bf16.msra.mxu0 %v148
    %1459 = vmatpush.bf16.msra.mxu0 %v146
    %1460 = vmatmul.bf16.gmra.mxu0 %v930
    %v1461 = vpop.f32.mrf.mxu0
    %v1462 = vadd.f32 0.0, %v1461
    %v1463 = vpop.f32.mrf.mxu0
    %1464 = vdwg.mxu0
    %1465 = vmatpush.bf16.msra.mxu0 0
    %1466 = vmatpush.bf16.msra.mxu0 0
    %1467 = vmatpush.bf16.msra.mxu0 0
    %1468 = vmatpush.bf16.msra.mxu0 0
    %1469 = vmatpush.bf16.msra.mxu0 0
    %1470 = vmatpush.bf16.msra.mxu0 0
    %1471 = vmatpush.bf16.msra.mxu0 0
    %1472 = vmatpush.bf16.msra.mxu0 %v162
    %1473 = vmatmul.bf16.gmra.mxu0 %v1024
    %v1474 = vpop.f32.mrf.mxu0
    %v1475 = vadd.f32 %v1462, %v1474
    %v1476 = vpop.f32.mrf.mxu0
    %1477 = vdwg.mxu0
    %1478 = vmatpush.bf16.msra.mxu0 %v311
    %1479 = vmatpush.bf16.msra.mxu0 %v309
    %1480 = vmatpush.bf16.msra.mxu0 %v307
    %1481 = vmatpush.bf16.msra.mxu0 %v305
    %1482 = vmatpush.bf16.msra.mxu0 %v303
    %1483 = vmatpush.bf16.msra.mxu0 %v301
    %1484 = vmatpush.bf16.msra.mxu0 %v299
    %1485 = vmatpush.bf16.msra.mxu0 %v297
    %1486 = vmatmul.bf16.gmra.mxu0 %v757
    %v1487 = vpop.f32.mrf.mxu0
    %v1488 = vadd.f32 %v1449, %v1487
    %v1489 = vpop.f32.mrf.mxu0
    %1490 = vdwg.mxu0
    %1491 = vmatpush.bf16.msra.mxu0 0
    %1492 = vmatpush.bf16.msra.mxu0 0
    %1493 = vmatpush.bf16.msra.mxu0 0
    %1494 = vmatpush.bf16.msra.mxu0 0
    %1495 = vmatpush.bf16.msra.mxu0 0
    %1496 = vmatpush.bf16.msra.mxu0 0
    %1497 = vmatpush.bf16.msra.mxu0 0
    %1498 = vmatpush.bf16.msra.mxu0 %v313
    %1499 = vmatmul.bf16.gmra.mxu0 %v851
    %v1500 = vpop.f32.mrf.mxu0
    %v1501 = vadd.f32 %v1488, %v1500
    %v1502 = vpop.f32.mrf.mxu0
    %1503 = vdwg.mxu0
    %1504 = vmatpush.bf16.msra.mxu0 %v312
    %1505 = vmatpush.bf16.msra.mxu0 %v310
    %1506 = vmatpush.bf16.msra.mxu0 %v308
    %1507 = vmatpush.bf16.msra.mxu0 %v306
    %1508 = vmatpush.bf16.msra.mxu0 %v304
    %1509 = vmatpush.bf16.msra.mxu0 %v302
    %1510 = vmatpush.bf16.msra.mxu0 %v300
    %1511 = vmatpush.bf16.msra.mxu0 %v298
    %1512 = vmatmul.bf16.gmra.mxu0 %v757
    %v1513 = vpop.f32.mrf.mxu0
    %v1514 = vadd.f32 %v1475, %v1513
    %v1515 = vpop.f32.mrf.mxu0
    %1516 = vdwg.mxu0
    %1517 = vmatpush.bf16.msra.mxu0 0
    %1518 = vmatpush.bf16.msra.mxu0 0
    %1519 = vmatpush.bf16.msra.mxu0 0
    %1520 = vmatpush.bf16.msra.mxu0 0
    %1521 = vmatpush.bf16.msra.mxu0 0
    %1522 = vmatpush.bf16.msra.mxu0 0
    %1523 = vmatpush.bf16.msra.mxu0 0
    %1524 = vmatpush.bf16.msra.mxu0 %v314
    %1525 = vmatmul.bf16.gmra.mxu0 %v851
    %v1526 = vpop.f32.mrf.mxu0
    %v1527 = vadd.f32 %v1514, %v1526
    %v1528 = vpop.f32.mrf.mxu0
    %1529 = vdwg.mxu0
    %1530 = vmatpush.bf16.msra.mxu0 %v482
    %1531 = vmatpush.bf16.msra.mxu0 %v480
    %1532 = vmatpush.bf16.msra.mxu0 %v478
    %1533 = vmatpush.bf16.msra.mxu0 %v476
    %1534 = vmatpush.bf16.msra.mxu0 %v474
    %1535 = vmatpush.bf16.msra.mxu0 %v472
    %1536 = vmatpush.bf16.msra.mxu0 %v470
    %1537 = vmatpush.bf16.msra.mxu0 %v468
    %1538 = vmatmul.bf16.gmra.mxu0 %v1103
    %v1539 = vpop.f32.mrf.mxu0
    %v1540 = vadd.f32 0.0, %v1539
    %v1541 = vpop.f32.mrf.mxu0
    %1542 = vdwg.mxu0
    %1543 = vmatpush.bf16.msra.mxu0 0
    %1544 = vmatpush.bf16.msra.mxu0 0
    %1545 = vmatpush.bf16.msra.mxu0 0
    %1546 = vmatpush.bf16.msra.mxu0 0
    %1547 = vmatpush.bf16.msra.mxu0 0
    %1548 = vmatpush.bf16.msra.mxu0 0
    %1549 = vmatpush.bf16.msra.mxu0 0
    %1550 = vmatpush.bf16.msra.mxu0 %v484
    %1551 = vmatmul.bf16.gmra.mxu0 %v1197
    %v1552 = vpop.f32.mrf.mxu0
    %v1553 = vadd.f32 %v1540, %v1552
    %v1554 = vpop.f32.mrf.mxu0
    %1555 = vdwg.mxu0
    %1556 = vmatpush.bf16.msra.mxu0 %v483
    %1557 = vmatpush.bf16.msra.mxu0 %v481
    %1558 = vmatpush.bf16.msra.mxu0 %v479
    %1559 = vmatpush.bf16.msra.mxu0 %v477
    %1560 = vmatpush.bf16.msra.mxu0 %v475
    %1561 = vmatpush.bf16.msra.mxu0 %v473
    %1562 = vmatpush.bf16.msra.mxu0 %v471
    %1563 = vmatpush.bf16.msra.mxu0 %v469
    %1564 = vmatmul.bf16.gmra.mxu0 %v1103
    %v1565 = vpop.f32.mrf.mxu0
    %v1566 = vadd.f32 0.0, %v1565
    %v1567 = vpop.f32.mrf.mxu0
    %1568 = vdwg.mxu0
    %1569 = vmatpush.bf16.msra.mxu0 0
    %1570 = vmatpush.bf16.msra.mxu0 0
    %1571 = vmatpush.bf16.msra.mxu0 0
    %1572 = vmatpush.bf16.msra.mxu0 0
    %1573 = vmatpush.bf16.msra.mxu0 0
    %1574 = vmatpush.bf16.msra.mxu0 0
    %1575 = vmatpush.bf16.msra.mxu0 0
    %1576 = vmatpush.bf16.msra.mxu0 %v485
    %1577 = vmatmul.bf16.gmra.mxu0 %v1197
    %v1578 = vpop.f32.mrf.mxu0
    %v1579 = vadd.f32 %v1566, %v1578
    %v1580 = vpop.f32.mrf.mxu0
    %1581 = vdwg.mxu0
    %v1582 = vadd.f32 %v1501, %v1553
    %v1583 = vadd.f32 %v1527, %v1579
    %1584 = vmatpush.bf16.msra.mxu0 %v655
    %1585 = vmatpush.bf16.msra.mxu0 %v653
    %1586 = vmatpush.bf16.msra.mxu0 %v651
    %1587 = vmatpush.bf16.msra.mxu0 %v649
    %1588 = vmatpush.bf16.msra.mxu0 %v647
    %1589 = vmatpush.bf16.msra.mxu0 %v645
    %1590 = vmatpush.bf16.msra.mxu0 %v643
    %1591 = vmatpush.bf16.msra.mxu0 %v641
    %1592 = vmatmul.bf16.gmra.mxu0 %v1276
    %v1593 = vpop.f32.mrf.mxu0
    %v1594 = vadd.f32 0.0, %v1593
    %v1595 = vpop.f32.mrf.mxu0
    %1596 = vdwg.mxu0
    %1597 = vmatpush.bf16.msra.mxu0 0
    %1598 = vmatpush.bf16.msra.mxu0 0
    %1599 = vmatpush.bf16.msra.mxu0 0
    %1600 = vmatpush.bf16.msra.mxu0 0
    %1601 = vmatpush.bf16.msra.mxu0 0
    %1602 = vmatpush.bf16.msra.mxu0 0
    %1603 = vmatpush.bf16.msra.mxu0 0
    %1604 = vmatpush.bf16.msra.mxu0 %v657
    %1605 = vmatmul.bf16.gmra.mxu0 %v1370
    %v1606 = vpop.f32.mrf.mxu0
    %v1607 = vadd.f32 %v1594, %v1606
    %v1608 = vpop.f32.mrf.mxu0
    %1609 = vdwg.mxu0
    %1610 = vmatpush.bf16.msra.mxu0 %v656
    %1611 = vmatpush.bf16.msra.mxu0 %v654
    %1612 = vmatpush.bf16.msra.mxu0 %v652
    %1613 = vmatpush.bf16.msra.mxu0 %v650
    %1614 = vmatpush.bf16.msra.mxu0 %v648
    %1615 = vmatpush.bf16.msra.mxu0 %v646
    %1616 = vmatpush.bf16.msra.mxu0 %v644
    %1617 = vmatpush.bf16.msra.mxu0 %v642
    %1618 = vmatmul.bf16.gmra.mxu0 %v1276
    %v1619 = vpop.f32.mrf.mxu0
    %v1620 = vadd.f32 0.0, %v1619
    %v1621 = vpop.f32.mrf.mxu0
    %1622 = vdwg.mxu0
    %1623 = vmatpush.bf16.msra.mxu0 0
    %1624 = vmatpush.bf16.msra.mxu0 0
    %1625 = vmatpush.bf16.msra.mxu0 0
    %1626 = vmatpush.bf16.msra.mxu0 0
    %1627 = vmatpush.bf16.msra.mxu0 0
    %1628 = vmatpush.bf16.msra.mxu0 0
    %1629 = vmatpush.bf16.msra.mxu0 0
    %1630 = vmatpush.bf16.msra.mxu0 %v658
    %1631 = vmatmul.bf16.gmra.mxu0 %v1370
    %v1632 = vpop.f32.mrf.mxu0
    %v1633 = vadd.f32 %v1620, %v1632
    %v1634 = vpop.f32.mrf.mxu0
    %1635 = vdwg.mxu0
    %v1636 = vadd.f32 %v1582, %v1607
    %v1637 = vadd.f32 %v1583, %v1633
    %v1638 = vld [vmem:[%s0 + $0x40] sm:$0xff]
    %v1640 = vunpack.c.l.b16 %v1638
    %v1641 = vunpack.c.h.b16 %v1638
    %v1642 = vpack.c.b16 %v1640, %v1640
    %v1643 = vpack.c.b16 %v1641, %v1641
    %v1646 = vsel %vm181, %v1643, 0
    %1648 = vmatpush.bf16.msra.mxu0 %v828
    %1649 = vmatpush.bf16.msra.mxu0 %v826
    %1650 = vmatpush.bf16.msra.mxu0 %v824
    %1651 = vmatpush.bf16.msra.mxu0 %v822
    %1652 = vmatpush.bf16.msra.mxu0 %v820
    %1653 = vmatpush.bf16.msra.mxu0 %v818
    %1654 = vmatpush.bf16.msra.mxu0 %v816
    %1655 = vmatpush.bf16.msra.mxu0 %v814
    %1656 = vmatmul.bf16.gmra.mxu0 %v1642
    %v1657 = vpop.f32.mrf.mxu0
    %v1658 = vadd.f32 0.0, %v1657
    %v1659 = vpop.f32.mrf.mxu0
    %1660 = vdwg.mxu0
    %1661 = vmatpush.bf16.msra.mxu0 0
    %1662 = vmatpush.bf16.msra.mxu0 0
    %1663 = vmatpush.bf16.msra.mxu0 0
    %1664 = vmatpush.bf16.msra.mxu0 0
    %1665 = vmatpush.bf16.msra.mxu0 0
    %1666 = vmatpush.bf16.msra.mxu0 0
    %1667 = vmatpush.bf16.msra.mxu0 0
    %1668 = vmatpush.bf16.msra.mxu0 %v830
    %1669 = vmatmul.bf16.gmra.mxu0 %v1646
    %v1670 = vpop.f32.mrf.mxu0
    %v1671 = vadd.f32 %v1658, %v1670
    %v1672 = vpop.f32.mrf.mxu0
    %1673 = vdwg.mxu0
    %1674 = vmatpush.bf16.msra.mxu0 %v829
    %1675 = vmatpush.bf16.msra.mxu0 %v827
    %1676 = vmatpush.bf16.msra.mxu0 %v825
    %1677 = vmatpush.bf16.msra.mxu0 %v823
    %1678 = vmatpush.bf16.msra.mxu0 %v821
    %1679 = vmatpush.bf16.msra.mxu0 %v819
    %1680 = vmatpush.bf16.msra.mxu0 %v817
    %1681 = vmatpush.bf16.msra.mxu0 %v815
    %1682 = vmatmul.bf16.gmra.mxu0 %v1642
    %v1683 = vpop.f32.mrf.mxu0
    %v1684 = vadd.f32 0.0, %v1683
    %v1685 = vpop.f32.mrf.mxu0
    %1686 = vdwg.mxu0
    %1687 = vmatpush.bf16.msra.mxu0 0
    %1688 = vmatpush.bf16.msra.mxu0 0
    %1689 = vmatpush.bf16.msra.mxu0 0
    %1690 = vmatpush.bf16.msra.mxu0 0
    %1691 = vmatpush.bf16.msra.mxu0 0
    %1692 = vmatpush.bf16.msra.mxu0 0
    %1693 = vmatpush.bf16.msra.mxu0 0
    %1694 = vmatpush.bf16.msra.mxu0 %v831
    %1695 = vmatmul.bf16.gmra.mxu0 %v1646
    %v1696 = vpop.f32.mrf.mxu0
    %v1697 = vadd.f32 %v1684, %v1696
    %v1698 = vpop.f32.mrf.mxu0
    %1699 = vdwg.mxu0
    %v1700 = vadd.f32 %v1636, %v1671
    %v1701 = vadd.f32 %v1637, %v1697
    %v1702 = vld [vmem:[%s0 + $0x48] sm:$0xff]
    %v1704 = vunpack.c.l.b16 %v1702
    %v1705 = vunpack.c.h.b16 %v1702
    %v1706 = vpack.c.b16 %v1704, %v1704
    %v1707 = vpack.c.b16 %v1705, %v1705
    %v1710 = vsel %vm181, %v1707, 0
    %1712 = vmatpush.bf16.msra.mxu0 %v1001
    %1713 = vmatpush.bf16.msra.mxu0 %v999
    %1714 = vmatpush.bf16.msra.mxu0 %v997
    %1715 = vmatpush.bf16.msra.mxu0 %v995
    %1716 = vmatpush.bf16.msra.mxu0 %v993
    %1717 = vmatpush.bf16.msra.mxu0 %v991
    %1718 = vmatpush.bf16.msra.mxu0 %v989
    %1719 = vmatpush.bf16.msra.mxu0 %v987
    %1720 = vmatmul.bf16.gmra.mxu0 %v1706
    %v1721 = vpop.f32.mrf.mxu0
    %v1722 = vadd.f32 0.0, %v1721
    %v1723 = vpop.f32.mrf.mxu0
    %1724 = vdwg.mxu0
    %1725 = vmatpush.bf16.msra.mxu0 0
    %1726 = vmatpush.bf16.msra.mxu0 0
    %1727 = vmatpush.bf16.msra.mxu0 0
    %1728 = vmatpush.bf16.msra.mxu0 0
    %1729 = vmatpush.bf16.msra.mxu0 0
    %1730 = vmatpush.bf16.msra.mxu0 0
    %1731 = vmatpush.bf16.msra.mxu0 0
    %1732 = vmatpush.bf16.msra.mxu0 %v1003
    %1733 = vmatmul.bf16.gmra.mxu0 %v1710
    %v1734 = vpop.f32.mrf.mxu0
    %v1735 = vadd.f32 %v1722, %v1734
    %v1736 = vpop.f32.mrf.mxu0
    %1737 = vdwg.mxu0
    %1738 = vmatpush.bf16.msra.mxu0 %v1002
    %1739 = vmatpush.bf16.msra.mxu0 %v1000
    %1740 = vmatpush.bf16.msra.mxu0 %v998
    %1741 = vmatpush.bf16.msra.mxu0 %v996
    %1742 = vmatpush.bf16.msra.mxu0 %v994
    %1743 = vmatpush.bf16.msra.mxu0 %v992
    %1744 = vmatpush.bf16.msra.mxu0 %v990
    %1745 = vmatpush.bf16.msra.mxu0 %v988
    %1746 = vmatmul.bf16.gmra.mxu0 %v1706
    %v1747 = vpop.f32.mrf.mxu0
    %v1748 = vadd.f32 0.0, %v1747
    %v1749 = vpop.f32.mrf.mxu0
    %1750 = vdwg.mxu0
    %1751 = vmatpush.bf16.msra.mxu0 0
    %1752 = vmatpush.bf16.msra.mxu0 0
    %1753 = vmatpush.bf16.msra.mxu0 0
    %1754 = vmatpush.bf16.msra.mxu0 0
    %1755 = vmatpush.bf16.msra.mxu0 0
    %1756 = vmatpush.bf16.msra.mxu0 0
    %1757 = vmatpush.bf16.msra.mxu0 0
    %1758 = vmatpush.bf16.msra.mxu0 %v1004
    %1759 = vmatmul.bf16.gmra.mxu0 %v1710
    %v1760 = vpop.f32.mrf.mxu0
    %v1761 = vadd.f32 %v1748, %v1760
    %v1762 = vpop.f32.mrf.mxu0
    %1763 = vdwg.mxu0
    %v1764 = vadd.f32 %v1700, %v1735
    %v1765 = vadd.f32 %v1701, %v1761
    %v1766 = vld [vmem:[%s0 + $0x50] sm:$0xff]
    %v1768 = vunpack.c.l.b16 %v1766
    %v1769 = vunpack.c.h.b16 %v1766
    %v1770 = vpack.c.b16 %v1768, %v1768
    %v1771 = vpack.c.b16 %v1769, %v1769
    %v1774 = vsel %vm181, %v1771, 0
    %1776 = vmatpush.bf16.msra.mxu0 %v1174
    %1777 = vmatpush.bf16.msra.mxu0 %v1172
    %1778 = vmatpush.bf16.msra.mxu0 %v1170
    %1779 = vmatpush.bf16.msra.mxu0 %v1168
    %1780 = vmatpush.bf16.msra.mxu0 %v1166
    %1781 = vmatpush.bf16.msra.mxu0 %v1164
    %1782 = vmatpush.bf16.msra.mxu0 %v1162
    %1783 = vmatpush.bf16.msra.mxu0 %v1160
    %1784 = vmatmul.bf16.gmra.mxu0 %v1770
    %v1785 = vpop.f32.mrf.mxu0
    %v1786 = vadd.f32 0.0, %v1785
    %v1787 = vpop.f32.mrf.mxu0
    %1788 = vdwg.mxu0
    %1789 = vmatpush.bf16.msra.mxu0 0
    %1790 = vmatpush.bf16.msra.mxu0 0
    %1791 = vmatpush.bf16.msra.mxu0 0
    %1792 = vmatpush.bf16.msra.mxu0 0
    %1793 = vmatpush.bf16.msra.mxu0 0
    %1794 = vmatpush.bf16.msra.mxu0 0
    %1795 = vmatpush.bf16.msra.mxu0 0
    %1796 = vmatpush.bf16.msra.mxu0 %v1176
    %1797 = vmatmul.bf16.gmra.mxu0 %v1774
    %v1798 = vpop.f32.mrf.mxu0
    %v1799 = vadd.f32 %v1786, %v1798
    %v1800 = vpop.f32.mrf.mxu0
    %1801 = vdwg.mxu0
    %1802 = vmatpush.bf16.msra.mxu0 %v1175
    %1803 = vmatpush.bf16.msra.mxu0 %v1173
    %1804 = vmatpush.bf16.msra.mxu0 %v1171
    %1805 = vmatpush.bf16.msra.mxu0 %v1169
    %1806 = vmatpush.bf16.msra.mxu0 %v1167
    %1807 = vmatpush.bf16.msra.mxu0 %v1165
    %1808 = vmatpush.bf16.msra.mxu0 %v1163
    %1809 = vmatpush.bf16.msra.mxu0 %v1161
    %1810 = vmatmul.bf16.gmra.mxu0 %v1770
    %v1811 = vpop.f32.mrf.mxu0
    %v1812 = vadd.f32 0.0, %v1811
    %v1813 = vpop.f32.mrf.mxu0
    %1814 = vdwg.mxu0
    %1815 = vmatpush.bf16.msra.mxu0 0
    %1816 = vmatpush.bf16.msra.mxu0 0
    %1817 = vmatpush.bf16.msra.mxu0 0
    %1818 = vmatpush.bf16.msra.mxu0 0
    %1819 = vmatpush.bf16.msra.mxu0 0
    %1820 = vmatpush.bf16.msra.mxu0 0
    %1821 = vmatpush.bf16.msra.mxu0 0
    %1822 = vmatpush.bf16.msra.mxu0 %v1177
    %1823 = vmatmul.bf16.gmra.mxu0 %v1774
    %v1824 = vpop.f32.mrf.mxu0
    %v1825 = vadd.f32 %v1812, %v1824
    %v1826 = vpop.f32.mrf.mxu0
    %1827 = vdwg.mxu0
    %v1828 = vadd.f32 %v1764, %v1799
    %v1829 = vadd.f32 %v1765, %v1825
    %v1830 = vld [vmem:[%s0 + $0x58] sm:$0xff]
    %v1832 = vunpack.c.l.b16 %v1830
    %v1833 = vunpack.c.h.b16 %v1830
    %v1834 = vpack.c.b16 %v1832, %v1832
    %v1835 = vpack.c.b16 %v1833, %v1833
    %v1838 = vsel %vm181, %v1835, 0
    %1840 = vmatpush.bf16.msra.mxu0 %v1347
    %1841 = vmatpush.bf16.msra.mxu0 %v1345
    %1842 = vmatpush.bf16.msra.mxu0 %v1343
    %1843 = vmatpush.bf16.msra.mxu0 %v1341
    %1844 = vmatpush.bf16.msra.mxu0 %v1339
    %1845 = vmatpush.bf16.msra.mxu0 %v1337
    %1846 = vmatpush.bf16.msra.mxu0 %v1335
    %1847 = vmatpush.bf16.msra.mxu0 %v1333
    %1848 = vmatmul.bf16.gmra.mxu0 %v1834
    %v1849 = vpop.f32.mrf.mxu0
    %v1850 = vadd.f32 0.0, %v1849
    %v1851 = vpop.f32.mrf.mxu0
    %1852 = vdwg.mxu0
    %1853 = vmatpush.bf16.msra.mxu0 0
    %1854 = vmatpush.bf16.msra.mxu0 0
    %1855 = vmatpush.bf16.msra.mxu0 0
    %1856 = vmatpush.bf16.msra.mxu0 0
    %1857 = vmatpush.bf16.msra.mxu0 0
    %1858 = vmatpush.bf16.msra.mxu0 0
    %1859 = vmatpush.bf16.msra.mxu0 0
    %1860 = vmatpush.bf16.msra.mxu0 %v1349
    %1861 = vmatmul.bf16.gmra.mxu0 %v1838
    %v1862 = vpop.f32.mrf.mxu0
    %v1863 = vadd.f32 %v1850, %v1862
    %v1864 = vpop.f32.mrf.mxu0
    %1865 = vdwg.mxu0
    %1866 = vmatpush.bf16.msra.mxu0 %v1348
    %1867 = vmatpush.bf16.msra.mxu0 %v1346
    %1868 = vmatpush.bf16.msra.mxu0 %v1344
    %1869 = vmatpush.bf16.msra.mxu0 %v1342
    %1870 = vmatpush.bf16.msra.mxu0 %v1340
    %1871 = vmatpush.bf16.msra.mxu0 %v1338
    %1872 = vmatpush.bf16.msra.mxu0 %v1336
    %1873 = vmatpush.bf16.msra.mxu0 %v1334
    %1874 = vmatmul.bf16.gmra.mxu0 %v1834
    %v1875 = vpop.f32.mrf.mxu0
    %v1876 = vadd.f32 0.0, %v1875
    %v1877 = vpop.f32.mrf.mxu0
    %1878 = vdwg.mxu0
    %1879 = vmatpush.bf16.msra.mxu0 0
    %1880 = vmatpush.bf16.msra.mxu0 0
    %1881 = vmatpush.bf16.msra.mxu0 0
    %1882 = vmatpush.bf16.msra.mxu0 0
    %1883 = vmatpush.bf16.msra.mxu0 0
    %1884 = vmatpush.bf16.msra.mxu0 0
    %1885 = vmatpush.bf16.msra.mxu0 0
    %1886 = vmatpush.bf16.msra.mxu0 %v1350
    %1887 = vmatmul.bf16.gmra.mxu0 %v1838
    %v1888 = vpop.f32.mrf.mxu0
    %v1889 = vadd.f32 %v1876, %v1888
    %v1890 = vpop.f32.mrf.mxu0
    %1891 = vdwg.mxu0
    %v1892 = vadd.f32 %v1828, %v1863
    %v1893 = vadd.f32 %v1829, %v1889
    %1894 = vmatpush.bf16.msra.mxu0 %v159
    %1895 = vmatpush.bf16.msra.mxu0 %v157
    %1896 = vmatpush.bf16.msra.mxu0 %v155
    %1897 = vmatpush.bf16.msra.mxu0 %v153
    %1898 = vmatpush.bf16.msra.mxu0 %v151
    %1899 = vmatpush.bf16.msra.mxu0 %v149
    %1900 = vmatpush.bf16.msra.mxu0 %v147
    %1901 = vmatpush.bf16.msra.mxu0 %v145
    %1902 = vmatmul.bf16.gmra.mxu0 %v1706
    %v1903 = vpop.f32.mrf.mxu0
    %v1904 = vadd.f32 0.0, %v1903
    %v1905 = vpop.f32.mrf.mxu0
    %1906 = vdwg.mxu0
    %1907 = vmatpush.bf16.msra.mxu0 0
    %1908 = vmatpush.bf16.msra.mxu0 0
    %1909 = vmatpush.bf16.msra.mxu0 0
    %1910 = vmatpush.bf16.msra.mxu0 0
    %1911 = vmatpush.bf16.msra.mxu0 0
    %1912 = vmatpush.bf16.msra.mxu0 0
    %1913 = vmatpush.bf16.msra.mxu0 0
    %1914 = vmatpush.bf16.msra.mxu0 %v161
    %1915 = vmatmul.bf16.gmra.mxu0 %v1710
    %v1916 = vpop.f32.mrf.mxu0
    %v1917 = vadd.f32 %v1904, %v1916
    %v1918 = vpop.f32.mrf.mxu0
    %1919 = vdwg.mxu0
    %1920 = vmatpush.bf16.msra.mxu0 %v160
    %1921 = vmatpush.bf16.msra.mxu0 %v158
    %1922 = vmatpush.bf16.msra.mxu0 %v156
    %1923 = vmatpush.bf16.msra.mxu0 %v154
    %1924 = vmatpush.bf16.msra.mxu0 %v152
    %1925 = vmatpush.bf16.msra.mxu0 %v150
    %1926 = vmatpush.bf16.msra.mxu0 %v148
    %1927 = vmatpush.bf16.msra.mxu0 %v146
    %1928 = vmatmul.bf16.gmra.mxu0 %v1706
    %v1929 = vpop.f32.mrf.mxu0
    %v1930 = vadd.f32 0.0, %v1929
    %v1931 = vpop.f32.mrf.mxu0
    %1932 = vdwg.mxu0
    %1933 = vmatpush.bf16.msra.mxu0 0
    %1934 = vmatpush.bf16.msra.mxu0 0
    %1935 = vmatpush.bf16.msra.mxu0 0
    %1936 = vmatpush.bf16.msra.mxu0 0
    %1937 = vmatpush.bf16.msra.mxu0 0
    %1938 = vmatpush.bf16.msra.mxu0 0
    %1939 = vmatpush.bf16.msra.mxu0 0
    %1940 = vmatpush.bf16.msra.mxu0 %v162
    %1941 = vmatmul.bf16.gmra.mxu0 %v1710
    %v1942 = vpop.f32.mrf.mxu0
    %v1943 = vadd.f32 %v1930, %v1942
    %v1944 = vpop.f32.mrf.mxu0
    %1945 = vdwg.mxu0
    %1946 = vmatpush.bf16.msra.mxu0 %v311
    %1947 = vmatpush.bf16.msra.mxu0 %v309
    %1948 = vmatpush.bf16.msra.mxu0 %v307
    %1949 = vmatpush.bf16.msra.mxu0 %v305
    %1950 = vmatpush.bf16.msra.mxu0 %v303
    %1951 = vmatpush.bf16.msra.mxu0 %v301
    %1952 = vmatpush.bf16.msra.mxu0 %v299
    %1953 = vmatpush.bf16.msra.mxu0 %v297
    %1954 = vmatmul.bf16.gmra.mxu0 %v1642
    %v1955 = vpop.f32.mrf.mxu0
    %v1956 = vadd.f32 %v1917, %v1955
    %v1957 = vpop.f32.mrf.mxu0
    %1958 = vdwg.mxu0
    %1959 = vmatpush.bf16.msra.mxu0 0
    %1960 = vmatpush.bf16.msra.mxu0 0
    %1961 = vmatpush.bf16.msra.mxu0 0
    %1962 = vmatpush.bf16.msra.mxu0 0
    %1963 = vmatpush.bf16.msra.mxu0 0
    %1964 = vmatpush.bf16.msra.mxu0 0
    %1965 = vmatpush.bf16.msra.mxu0 0
    %1966 = vmatpush.bf16.msra.mxu0 %v313
    %1967 = vmatmul.bf16.gmra.mxu0 %v1646
    %v1968 = vpop.f32.mrf.mxu0
    %v1969 = vadd.f32 %v1956, %v1968
    %v1970 = vpop.f32.mrf.mxu0
    %1971 = vdwg.mxu0
    %1972 = vmatpush.bf16.msra.mxu0 %v312
    %1973 = vmatpush.bf16.msra.mxu0 %v310
    %1974 = vmatpush.bf16.msra.mxu0 %v308
    %1975 = vmatpush.bf16.msra.mxu0 %v306
    %1976 = vmatpush.bf16.msra.mxu0 %v304
    %1977 = vmatpush.bf16.msra.mxu0 %v302
    %1978 = vmatpush.bf16.msra.mxu0 %v300
    %1979 = vmatpush.bf16.msra.mxu0 %v298
    %1980 = vmatmul.bf16.gmra.mxu0 %v1642
    %v1981 = vpop.f32.mrf.mxu0
    %v1982 = vadd.f32 %v1943, %v1981
    %v1983 = vpop.f32.mrf.mxu0
    %1984 = vdwg.mxu0
    %1985 = vmatpush.bf16.msra.mxu0 0
    %1986 = vmatpush.bf16.msra.mxu0 0
    %1987 = vmatpush.bf16.msra.mxu0 0
    %1988 = vmatpush.bf16.msra.mxu0 0
    %1989 = vmatpush.bf16.msra.mxu0 0
    %1990 = vmatpush.bf16.msra.mxu0 0
    %1991 = vmatpush.bf16.msra.mxu0 0
    %1992 = vmatpush.bf16.msra.mxu0 %v314
    %1993 = vmatmul.bf16.gmra.mxu0 %v1646
    %v1994 = vpop.f32.mrf.mxu0
    %v1995 = vadd.f32 %v1982, %v1994
    %v1996 = vpop.f32.mrf.mxu0
    %1997 = vdwg.mxu0
    %1998 = vmatpush.bf16.msra.mxu0 %v482
    %1999 = vmatpush.bf16.msra.mxu0 %v480
    %2000 = vmatpush.bf16.msra.mxu0 %v478
    %2001 = vmatpush.bf16.msra.mxu0 %v476
    %2002 = vmatpush.bf16.msra.mxu0 %v474
    %2003 = vmatpush.bf16.msra.mxu0 %v472
    %2004 = vmatpush.bf16.msra.mxu0 %v470
    %2005 = vmatpush.bf16.msra.mxu0 %v468
    %2006 = vmatmul.bf16.gmra.mxu0 %v1770
    %v2007 = vpop.f32.mrf.mxu0
    %v2008 = vadd.f32 0.0, %v2007
    %v2009 = vpop.f32.mrf.mxu0
    %2010 = vdwg.mxu0
    %2011 = vmatpush.bf16.msra.mxu0 0
    %2012 = vmatpush.bf16.msra.mxu0 0
    %2013 = vmatpush.bf16.msra.mxu0 0
    %2014 = vmatpush.bf16.msra.mxu0 0
    %2015 = vmatpush.bf16.msra.mxu0 0
    %2016 = vmatpush.bf16.msra.mxu0 0
    %2017 = vmatpush.bf16.msra.mxu0 0
    %2018 = vmatpush.bf16.msra.mxu0 %v484
    %2019 = vmatmul.bf16.gmra.mxu0 %v1774
    %v2020 = vpop.f32.mrf.mxu0
    %v2021 = vadd.f32 %v2008, %v2020
    %v2022 = vpop.f32.mrf.mxu0
    %2023 = vdwg.mxu0
    %2024 = vmatpush.bf16.msra.mxu0 %v483
    %2025 = vmatpush.bf16.msra.mxu0 %v481
    %2026 = vmatpush.bf16.msra.mxu0 %v479
    %2027 = vmatpush.bf16.msra.mxu0 %v477
    %2028 = vmatpush.bf16.msra.mxu0 %v475
    %2029 = vmatpush.bf16.msra.mxu0 %v473
    %2030 = vmatpush.bf16.msra.mxu0 %v471
    %2031 = vmatpush.bf16.msra.mxu0 %v469
    %2032 = vmatmul.bf16.gmra.mxu0 %v1770
    %v2033 = vpop.f32.mrf.mxu0
    %v2034 = vadd.f32 0.0, %v2033
    %v2035 = vpop.f32.mrf.mxu0
    %2036 = vdwg.mxu0
    %2037 = vmatpush.bf16.msra.mxu0 0
    %2038 = vmatpush.bf16.msra.mxu0 0
    %2039 = vmatpush.bf16.msra.mxu0 0
    %2040 = vmatpush.bf16.msra.mxu0 0
    %2041 = vmatpush.bf16.msra.mxu0 0
    %2042 = vmatpush.bf16.msra.mxu0 0
    %2043 = vmatpush.bf16.msra.mxu0 0
    %2044 = vmatpush.bf16.msra.mxu0 %v485
    %2045 = vmatmul.bf16.gmra.mxu0 %v1774
    %v2046 = vpop.f32.mrf.mxu0
    %v2047 = vadd.f32 %v2034, %v2046
    %v2048 = vpop.f32.mrf.mxu0
    %2049 = vdwg.mxu0
    %v2050 = vadd.f32 %v1969, %v2021
    %v2051 = vadd.f32 %v1995, %v2047
    %2052 = vmatpush.bf16.msra.mxu0 %v655
    %2053 = vmatpush.bf16.msra.mxu0 %v653
    %2054 = vmatpush.bf16.msra.mxu0 %v651
    %2055 = vmatpush.bf16.msra.mxu0 %v649
    %2056 = vmatpush.bf16.msra.mxu0 %v647
    %2057 = vmatpush.bf16.msra.mxu0 %v645
    %2058 = vmatpush.bf16.msra.mxu0 %v643
    %2059 = vmatpush.bf16.msra.mxu0 %v641
    %2060 = vmatmul.bf16.gmra.mxu0 %v1834
    %v2061 = vpop.f32.mrf.mxu0
    %v2062 = vadd.f32 0.0, %v2061
    %v2063 = vpop.f32.mrf.mxu0
    %2064 = vdwg.mxu0
    %2065 = vmatpush.bf16.msra.mxu0 0
    %2066 = vmatpush.bf16.msra.mxu0 0
    %2067 = vmatpush.bf16.msra.mxu0 0
    %2068 = vmatpush.bf16.msra.mxu0 0
    %2069 = vmatpush.bf16.msra.mxu0 0
    %2070 = vmatpush.bf16.msra.mxu0 0
    %2071 = vmatpush.bf16.msra.mxu0 0
    %2072 = vmatpush.bf16.msra.mxu0 %v657
    %2073 = vmatmul.bf16.gmra.mxu0 %v1838
    %v2074 = vpop.f32.mrf.mxu0
    %v2075 = vadd.f32 %v2062, %v2074
    %v2076 = vpop.f32.mrf.mxu0
    %2077 = vdwg.mxu0
    %2078 = vmatpush.bf16.msra.mxu0 %v656
    %2079 = vmatpush.bf16.msra.mxu0 %v654
    %2080 = vmatpush.bf16.msra.mxu0 %v652
    %2081 = vmatpush.bf16.msra.mxu0 %v650
    %2082 = vmatpush.bf16.msra.mxu0 %v648
    %2083 = vmatpush.bf16.msra.mxu0 %v646
    %2084 = vmatpush.bf16.msra.mxu0 %v644
    %2085 = vmatpush.bf16.msra.mxu0 %v642
    %2086 = vmatmul.bf16.gmra.mxu0 %v1834
    %v2087 = vpop.f32.mrf.mxu0
    %v2088 = vadd.f32 0.0, %v2087
    %v2089 = vpop.f32.mrf.mxu0
    %2090 = vdwg.mxu0
    %2091 = vmatpush.bf16.msra.mxu0 0
    %2092 = vmatpush.bf16.msra.mxu0 0
    %2093 = vmatpush.bf16.msra.mxu0 0
    %2094 = vmatpush.bf16.msra.mxu0 0
    %2095 = vmatpush.bf16.msra.mxu0 0
    %2096 = vmatpush.bf16.msra.mxu0 0
    %2097 = vmatpush.bf16.msra.mxu0 0
    %2098 = vmatpush.bf16.msra.mxu0 %v658
    %2099 = vmatmul.bf16.gmra.mxu0 %v1838
    %v2100 = vpop.f32.mrf.mxu0
    %v2101 = vadd.f32 %v2088, %v2100
    %v2102 = vpop.f32.mrf.mxu0
    %2103 = vdwg.mxu0
    %v2104 = vadd.f32 %v2050, %v2075
    %v2105 = vadd.f32 %v2051, %v2101
    %v2106 = vld [vmem:[%s0 + $0x60] sm:$0xff]
    %v2108 = vunpack.c.l.b16 %v2106
    %v2109 = vunpack.c.h.b16 %v2106
    %v2110 = vpack.c.b16 %v2108, %v2108
    %v2111 = vpack.c.b16 %v2109, %v2109
    %v2114 = vsel %vm181, %v2111, 0
    %2116 = vmatpush.bf16.msra.mxu0 %v828
    %2117 = vmatpush.bf16.msra.mxu0 %v826
    %2118 = vmatpush.bf16.msra.mxu0 %v824
    %2119 = vmatpush.bf16.msra.mxu0 %v822
    %2120 = vmatpush.bf16.msra.mxu0 %v820
    %2121 = vmatpush.bf16.msra.mxu0 %v818
    %2122 = vmatpush.bf16.msra.mxu0 %v816
    %2123 = vmatpush.bf16.msra.mxu0 %v814
    %2124 = vmatmul.bf16.gmra.mxu0 %v2110
    %v2125 = vpop.f32.mrf.mxu0
    %v2126 = vadd.f32 0.0, %v2125
    %v2127 = vpop.f32.mrf.mxu0
    %2128 = vdwg.mxu0
    %2129 = vmatpush.bf16.msra.mxu0 0
    %2130 = vmatpush.bf16.msra.mxu0 0
    %2131 = vmatpush.bf16.msra.mxu0 0
    %2132 = vmatpush.bf16.msra.mxu0 0
    %2133 = vmatpush.bf16.msra.mxu0 0
    %2134 = vmatpush.bf16.msra.mxu0 0
    %2135 = vmatpush.bf16.msra.mxu0 0
    %2136 = vmatpush.bf16.msra.mxu0 %v830
    %2137 = vmatmul.bf16.gmra.mxu0 %v2114
    %v2138 = vpop.f32.mrf.mxu0
    %v2139 = vadd.f32 %v2126, %v2138
    %v2140 = vpop.f32.mrf.mxu0
    %2141 = vdwg.mxu0
    %2142 = vmatpush.bf16.msra.mxu0 %v829
    %2143 = vmatpush.bf16.msra.mxu0 %v827
    %2144 = vmatpush.bf16.msra.mxu0 %v825
    %2145 = vmatpush.bf16.msra.mxu0 %v823
    %2146 = vmatpush.bf16.msra.mxu0 %v821
    %2147 = vmatpush.bf16.msra.mxu0 %v819
    %2148 = vmatpush.bf16.msra.mxu0 %v817
    %2149 = vmatpush.bf16.msra.mxu0 %v815
    %2150 = vmatmul.bf16.gmra.mxu0 %v2110
    %v2151 = vpop.f32.mrf.mxu0
    %v2152 = vadd.f32 0.0, %v2151
    %v2153 = vpop.f32.mrf.mxu0
    %2154 = vdwg.mxu0
    %2155 = vmatpush.bf16.msra.mxu0 0
    %2156 = vmatpush.bf16.msra.mxu0 0
    %2157 = vmatpush.bf16.msra.mxu0 0
    %2158 = vmatpush.bf16.msra.mxu0 0
    %2159 = vmatpush.bf16.msra.mxu0 0
    %2160 = vmatpush.bf16.msra.mxu0 0
    %2161 = vmatpush.bf16.msra.mxu0 0
    %2162 = vmatpush.bf16.msra.mxu0 %v831
    %2163 = vmatmul.bf16.gmra.mxu0 %v2114
    %v2164 = vpop.f32.mrf.mxu0
    %v2165 = vadd.f32 %v2152, %v2164
    %v2166 = vpop.f32.mrf.mxu0
    %2167 = vdwg.mxu0
    %v2168 = vadd.f32 %v2104, %v2139
    %v2169 = vadd.f32 %v2105, %v2165
    %v2170 = vld [vmem:[%s0 + $0x68] sm:$0xff]
    %v2172 = vunpack.c.l.b16 %v2170
    %v2173 = vunpack.c.h.b16 %v2170
    %v2174 = vpack.c.b16 %v2172, %v2172
    %v2175 = vpack.c.b16 %v2173, %v2173
    %v2178 = vsel %vm181, %v2175, 0
    %2180 = vmatpush.bf16.msra.mxu0 %v1001
    %2181 = vmatpush.bf16.msra.mxu0 %v999
    %2182 = vmatpush.bf16.msra.mxu0 %v997
    %2183 = vmatpush.bf16.msra.mxu0 %v995
    %2184 = vmatpush.bf16.msra.mxu0 %v993
    %2185 = vmatpush.bf16.msra.mxu0 %v991
    %2186 = vmatpush.bf16.msra.mxu0 %v989
    %2187 = vmatpush.bf16.msra.mxu0 %v987
    %2188 = vmatmul.bf16.gmra.mxu0 %v2174
    %v2189 = vpop.f32.mrf.mxu0
    %v2190 = vadd.f32 0.0, %v2189
    %v2191 = vpop.f32.mrf.mxu0
    %2192 = vdwg.mxu0
    %2193 = vmatpush.bf16.msra.mxu0 0
    %2194 = vmatpush.bf16.msra.mxu0 0
    %2195 = vmatpush.bf16.msra.mxu0 0
    %2196 = vmatpush.bf16.msra.mxu0 0
    %2197 = vmatpush.bf16.msra.mxu0 0
    %2198 = vmatpush.bf16.msra.mxu0 0
    %2199 = vmatpush.bf16.msra.mxu0 0
    %2200 = vmatpush.bf16.msra.mxu0 %v1003
    %2201 = vmatmul.bf16.gmra.mxu0 %v2178
    %v2202 = vpop.f32.mrf.mxu0
    %v2203 = vadd.f32 %v2190, %v2202
    %v2204 = vpop.f32.mrf.mxu0
    %2205 = vdwg.mxu0
    %2206 = vmatpush.bf16.msra.mxu0 %v1002
    %2207 = vmatpush.bf16.msra.mxu0 %v1000
    %2208 = vmatpush.bf16.msra.mxu0 %v998
    %2209 = vmatpush.bf16.msra.mxu0 %v996
    %2210 = vmatpush.bf16.msra.mxu0 %v994
    %2211 = vmatpush.bf16.msra.mxu0 %v992
    %2212 = vmatpush.bf16.msra.mxu0 %v990
    %2213 = vmatpush.bf16.msra.mxu0 %v988
    %2214 = vmatmul.bf16.gmra.mxu0 %v2174
    %v2215 = vpop.f32.mrf.mxu0
    %v2216 = vadd.f32 0.0, %v2215
    %v2217 = vpop.f32.mrf.mxu0
    %2218 = vdwg.mxu0
    %2219 = vmatpush.bf16.msra.mxu0 0
    %2220 = vmatpush.bf16.msra.mxu0 0
    %2221 = vmatpush.bf16.msra.mxu0 0
    %2222 = vmatpush.bf16.msra.mxu0 0
    %2223 = vmatpush.bf16.msra.mxu0 0
    %2224 = vmatpush.bf16.msra.mxu0 0
    %2225 = vmatpush.bf16.msra.mxu0 0
    %2226 = vmatpush.bf16.msra.mxu0 %v1004
    %2227 = vmatmul.bf16.gmra.mxu0 %v2178
    %v2228 = vpop.f32.mrf.mxu0
    %v2229 = vadd.f32 %v2216, %v2228
    %v2230 = vpop.f32.mrf.mxu0
    %2231 = vdwg.mxu0
    %v2232 = vadd.f32 %v2168, %v2203
    %v2233 = vadd.f32 %v2169, %v2229
    %v2234 = vld [vmem:[%s0 + $0x70] sm:$0xff]
    %v2236 = vunpack.c.l.b16 %v2234
    %v2237 = vunpack.c.h.b16 %v2234
    %v2238 = vpack.c.b16 %v2236, %v2236
    %v2239 = vpack.c.b16 %v2237, %v2237
    %v2242 = vsel %vm181, %v2239, 0
    %2244 = vmatpush.bf16.msra.mxu0 %v1174
    %2245 = vmatpush.bf16.msra.mxu0 %v1172
    %2246 = vmatpush.bf16.msra.mxu0 %v1170
    %2247 = vmatpush.bf16.msra.mxu0 %v1168
    %2248 = vmatpush.bf16.msra.mxu0 %v1166
    %2249 = vmatpush.bf16.msra.mxu0 %v1164
    %2250 = vmatpush.bf16.msra.mxu0 %v1162
    %2251 = vmatpush.bf16.msra.mxu0 %v1160
    %2252 = vmatmul.bf16.gmra.mxu0 %v2238
    %v2253 = vpop.f32.mrf.mxu0
    %v2254 = vadd.f32 0.0, %v2253
    %v2255 = vpop.f32.mrf.mxu0
    %2256 = vdwg.mxu0
    %2257 = vmatpush.bf16.msra.mxu0 0
    %2258 = vmatpush.bf16.msra.mxu0 0
    %2259 = vmatpush.bf16.msra.mxu0 0
    %2260 = vmatpush.bf16.msra.mxu0 0
    %2261 = vmatpush.bf16.msra.mxu0 0
    %2262 = vmatpush.bf16.msra.mxu0 0
    %2263 = vmatpush.bf16.msra.mxu0 0
    %2264 = vmatpush.bf16.msra.mxu0 %v1176
    %2265 = vmatmul.bf16.gmra.mxu0 %v2242
    %v2266 = vpop.f32.mrf.mxu0
    %v2267 = vadd.f32 %v2254, %v2266
    %v2268 = vpop.f32.mrf.mxu0
    %2269 = vdwg.mxu0
    %2270 = vmatpush.bf16.msra.mxu0 %v1175
    %2271 = vmatpush.bf16.msra.mxu0 %v1173
    %2272 = vmatpush.bf16.msra.mxu0 %v1171
    %2273 = vmatpush.bf16.msra.mxu0 %v1169
    %2274 = vmatpush.bf16.msra.mxu0 %v1167
    %2275 = vmatpush.bf16.msra.mxu0 %v1165
    %2276 = vmatpush.bf16.msra.mxu0 %v1163
    %2277 = vmatpush.bf16.msra.mxu0 %v1161
    %2278 = vmatmul.bf16.gmra.mxu0 %v2238
    %v2279 = vpop.f32.mrf.mxu0
    %v2280 = vadd.f32 0.0, %v2279
    %v2281 = vpop.f32.mrf.mxu0
    %2282 = vdwg.mxu0
    %2283 = vmatpush.bf16.msra.mxu0 0
    %2284 = vmatpush.bf16.msra.mxu0 0
    %2285 = vmatpush.bf16.msra.mxu0 0
    %2286 = vmatpush.bf16.msra.mxu0 0
    %2287 = vmatpush.bf16.msra.mxu0 0
    %2288 = vmatpush.bf16.msra.mxu0 0
    %2289 = vmatpush.bf16.msra.mxu0 0
    %2290 = vmatpush.bf16.msra.mxu0 %v1177
    %2291 = vmatmul.bf16.gmra.mxu0 %v2242
    %v2292 = vpop.f32.mrf.mxu0
    %v2293 = vadd.f32 %v2280, %v2292
    %v2294 = vpop.f32.mrf.mxu0
    %2295 = vdwg.mxu0
    %v2296 = vadd.f32 %v2232, %v2267
    %v2297 = vadd.f32 %v2233, %v2293
    %v2298 = vld [vmem:[%s0 + $0x78] sm:$0xff]
    %v2300 = vunpack.c.l.b16 %v2298
    %v2301 = vunpack.c.h.b16 %v2298
    %v2302 = vpack.c.b16 %v2300, %v2300
    %v2303 = vpack.c.b16 %v2301, %v2301
    %v2306 = vsel %vm181, %v2303, 0
    %2308 = vmatpush.bf16.msra.mxu0 %v1347
    %2309 = vmatpush.bf16.msra.mxu0 %v1345
    %2310 = vmatpush.bf16.msra.mxu0 %v1343
    %2311 = vmatpush.bf16.msra.mxu0 %v1341
    %2312 = vmatpush.bf16.msra.mxu0 %v1339
    %2313 = vmatpush.bf16.msra.mxu0 %v1337
    %2314 = vmatpush.bf16.msra.mxu0 %v1335
    %2315 = vmatpush.bf16.msra.mxu0 %v1333
    %2316 = vmatmul.bf16.gmra.mxu0 %v2302
    %v2317 = vpop.f32.mrf.mxu0
    %v2318 = vadd.f32 0.0, %v2317
    %v2319 = vpop.f32.mrf.mxu0
    %2320 = vdwg.mxu0
    %2321 = vmatpush.bf16.msra.mxu0 0
    %2322 = vmatpush.bf16.msra.mxu0 0
    %2323 = vmatpush.bf16.msra.mxu0 0
    %2324 = vmatpush.bf16.msra.mxu0 0
    %2325 = vmatpush.bf16.msra.mxu0 0
    %2326 = vmatpush.bf16.msra.mxu0 0
    %2327 = vmatpush.bf16.msra.mxu0 0
    %2328 = vmatpush.bf16.msra.mxu0 %v1349
    %2329 = vmatmul.bf16.gmra.mxu0 %v2306
    %v2330 = vpop.f32.mrf.mxu0
    %v2331 = vadd.f32 %v2318, %v2330
    %v2332 = vpop.f32.mrf.mxu0
    %2333 = vdwg.mxu0
    %2334 = vmatpush.bf16.msra.mxu0 %v1348
    %2335 = vmatpush.bf16.msra.mxu0 %v1346
    %2336 = vmatpush.bf16.msra.mxu0 %v1344
    %2337 = vmatpush.bf16.msra.mxu0 %v1342
    %2338 = vmatpush.bf16.msra.mxu0 %v1340
    %2339 = vmatpush.bf16.msra.mxu0 %v1338
    %2340 = vmatpush.bf16.msra.mxu0 %v1336
    %2341 = vmatpush.bf16.msra.mxu0 %v1334
    %2342 = vmatmul.bf16.gmra.mxu0 %v2302
    %v2343 = vpop.f32.mrf.mxu0
    %v2344 = vadd.f32 0.0, %v2343
    %v2345 = vpop.f32.mrf.mxu0
    %2346 = vdwg.mxu0
    %2347 = vmatpush.bf16.msra.mxu0 0
    %2348 = vmatpush.bf16.msra.mxu0 0
    %2349 = vmatpush.bf16.msra.mxu0 0
    %2350 = vmatpush.bf16.msra.mxu0 0
    %2351 = vmatpush.bf16.msra.mxu0 0
    %2352 = vmatpush.bf16.msra.mxu0 0
    %2353 = vmatpush.bf16.msra.mxu0 0
    %2354 = vmatpush.bf16.msra.mxu0 %v1350
    %2355 = vmatmul.bf16.gmra.mxu0 %v2306
    %v2356 = vpop.f32.mrf.mxu0
    %v2357 = vadd.f32 %v2344, %v2356
    %v2358 = vpop.f32.mrf.mxu0
    %2359 = vdwg.mxu0
    %v2360 = vadd.f32 %v2296, %v2331
    %v2361 = vadd.f32 %v2297, %v2357
    %2362 = vmatpush.bf16.msra.mxu0 %v159
    %2363 = vmatpush.bf16.msra.mxu0 %v157
    %2364 = vmatpush.bf16.msra.mxu0 %v155
    %2365 = vmatpush.bf16.msra.mxu0 %v153
    %2366 = vmatpush.bf16.msra.mxu0 %v151
    %2367 = vmatpush.bf16.msra.mxu0 %v149
    %2368 = vmatpush.bf16.msra.mxu0 %v147
    %2369 = vmatpush.bf16.msra.mxu0 %v145
    %2370 = vmatmul.bf16.gmra.mxu0 %v2174
    %v2371 = vpop.f32.mrf.mxu0
    %v2372 = vadd.f32 0.0, %v2371
    %v2373 = vpop.f32.mrf.mxu0
    %2374 = vdwg.mxu0
    %2375 = vmatpush.bf16.msra.mxu0 0
    %2376 = vmatpush.bf16.msra.mxu0 0
    %2377 = vmatpush.bf16.msra.mxu0 0
    %2378 = vmatpush.bf16.msra.mxu0 0
    %2379 = vmatpush.bf16.msra.mxu0 0
    %2380 = vmatpush.bf16.msra.mxu0 0
    %2381 = vmatpush.bf16.msra.mxu0 0
    %2382 = vmatpush.bf16.msra.mxu0 %v161
    %2383 = vmatmul.bf16.gmra.mxu0 %v2178
    %v2384 = vpop.f32.mrf.mxu0
    %v2385 = vadd.f32 %v2372, %v2384
    %v2386 = vpop.f32.mrf.mxu0
    %2387 = vdwg.mxu0
    %2388 = vmatpush.bf16.msra.mxu0 %v160
    %2389 = vmatpush.bf16.msra.mxu0 %v158
    %2390 = vmatpush.bf16.msra.mxu0 %v156
    %2391 = vmatpush.bf16.msra.mxu0 %v154
    %2392 = vmatpush.bf16.msra.mxu0 %v152
    %2393 = vmatpush.bf16.msra.mxu0 %v150
    %2394 = vmatpush.bf16.msra.mxu0 %v148
    %2395 = vmatpush.bf16.msra.mxu0 %v146
    %2396 = vmatmul.bf16.gmra.mxu0 %v2174
    %v2397 = vpop.f32.mrf.mxu0
    %v2398 = vadd.f32 0.0, %v2397
    %v2399 = vpop.f32.mrf.mxu0
    %2400 = vdwg.mxu0
    %2401 = vmatpush.bf16.msra.mxu0 0
    %2402 = vmatpush.bf16.msra.mxu0 0
    %2403 = vmatpush.bf16.msra.mxu0 0
    %2404 = vmatpush.bf16.msra.mxu0 0
    %2405 = vmatpush.bf16.msra.mxu0 0
    %2406 = vmatpush.bf16.msra.mxu0 0
    %2407 = vmatpush.bf16.msra.mxu0 0
    %2408 = vmatpush.bf16.msra.mxu0 %v162
    %2409 = vmatmul.bf16.gmra.mxu0 %v2178
    %v2410 = vpop.f32.mrf.mxu0
    %v2411 = vadd.f32 %v2398, %v2410
    %v2412 = vpop.f32.mrf.mxu0
    %2413 = vdwg.mxu0
    %2414 = vmatpush.bf16.msra.mxu0 %v311
    %2415 = vmatpush.bf16.msra.mxu0 %v309
    %2416 = vmatpush.bf16.msra.mxu0 %v307
    %2417 = vmatpush.bf16.msra.mxu0 %v305
    %2418 = vmatpush.bf16.msra.mxu0 %v303
    %2419 = vmatpush.bf16.msra.mxu0 %v301
    %2420 = vmatpush.bf16.msra.mxu0 %v299
    %2421 = vmatpush.bf16.msra.mxu0 %v297
    %2422 = vmatmul.bf16.gmra.mxu0 %v2110
    %v2423 = vpop.f32.mrf.mxu0
    %v2424 = vadd.f32 %v2385, %v2423
    %v2425 = vpop.f32.mrf.mxu0
    %2426 = vdwg.mxu0
    %2427 = vmatpush.bf16.msra.mxu0 0
    %2428 = vmatpush.bf16.msra.mxu0 0
    %2429 = vmatpush.bf16.msra.mxu0 0
    %2430 = vmatpush.bf16.msra.mxu0 0
    %2431 = vmatpush.bf16.msra.mxu0 0
    %2432 = vmatpush.bf16.msra.mxu0 0
    %2433 = vmatpush.bf16.msra.mxu0 0
    %2434 = vmatpush.bf16.msra.mxu0 %v313
    %2435 = vmatmul.bf16.gmra.mxu0 %v2114
    %v2436 = vpop.f32.mrf.mxu0
    %v2437 = vadd.f32 %v2424, %v2436
    %v2438 = vpop.f32.mrf.mxu0
    %2439 = vdwg.mxu0
    %2440 = vmatpush.bf16.msra.mxu0 %v312
    %2441 = vmatpush.bf16.msra.mxu0 %v310
    %2442 = vmatpush.bf16.msra.mxu0 %v308
    %2443 = vmatpush.bf16.msra.mxu0 %v306
    %2444 = vmatpush.bf16.msra.mxu0 %v304
    %2445 = vmatpush.bf16.msra.mxu0 %v302
    %2446 = vmatpush.bf16.msra.mxu0 %v300
    %2447 = vmatpush.bf16.msra.mxu0 %v298
    %2448 = vmatmul.bf16.gmra.mxu0 %v2110
    %v2449 = vpop.f32.mrf.mxu0
    %v2450 = vadd.f32 %v2411, %v2449
    %v2451 = vpop.f32.mrf.mxu0
    %2452 = vdwg.mxu0
    %2453 = vmatpush.bf16.msra.mxu0 0
    %2454 = vmatpush.bf16.msra.mxu0 0
    %2455 = vmatpush.bf16.msra.mxu0 0
    %2456 = vmatpush.bf16.msra.mxu0 0
    %2457 = vmatpush.bf16.msra.mxu0 0
    %2458 = vmatpush.bf16.msra.mxu0 0
    %2459 = vmatpush.bf16.msra.mxu0 0
    %2460 = vmatpush.bf16.msra.mxu0 %v314
    %2461 = vmatmul.bf16.gmra.mxu0 %v2114
    %v2462 = vpop.f32.mrf.mxu0
    %v2463 = vadd.f32 %v2450, %v2462
    %v2464 = vpop.f32.mrf.mxu0
    %2465 = vdwg.mxu0
    %2466 = vmatpush.bf16.msra.mxu0 %v482
    %2467 = vmatpush.bf16.msra.mxu0 %v480
    %2468 = vmatpush.bf16.msra.mxu0 %v478
    %2469 = vmatpush.bf16.msra.mxu0 %v476
    %2470 = vmatpush.bf16.msra.mxu0 %v474
    %2471 = vmatpush.bf16.msra.mxu0 %v472
    %2472 = vmatpush.bf16.msra.mxu0 %v470
    %2473 = vmatpush.bf16.msra.mxu0 %v468
    %2474 = vmatmul.bf16.gmra.mxu0 %v2238
    %v2475 = vpop.f32.mrf.mxu0
    %v2476 = vadd.f32 0.0, %v2475
    %v2477 = vpop.f32.mrf.mxu0
    %2478 = vdwg.mxu0
    %2479 = vmatpush.bf16.msra.mxu0 0
    %2480 = vmatpush.bf16.msra.mxu0 0
    %2481 = vmatpush.bf16.msra.mxu0 0
    %2482 = vmatpush.bf16.msra.mxu0 0
    %2483 = vmatpush.bf16.msra.mxu0 0
    %2484 = vmatpush.bf16.msra.mxu0 0
    %2485 = vmatpush.bf16.msra.mxu0 0
    %2486 = vmatpush.bf16.msra.mxu0 %v484
    %2487 = vmatmul.bf16.gmra.mxu0 %v2242
    %v2488 = vpop.f32.mrf.mxu0
    %v2489 = vadd.f32 %v2476, %v2488
    %v2490 = vpop.f32.mrf.mxu0
    %2491 = vdwg.mxu0
    %2492 = vmatpush.bf16.msra.mxu0 %v483
    %2493 = vmatpush.bf16.msra.mxu0 %v481
    %2494 = vmatpush.bf16.msra.mxu0 %v479
    %2495 = vmatpush.bf16.msra.mxu0 %v477
    %2496 = vmatpush.bf16.msra.mxu0 %v475
    %2497 = vmatpush.bf16.msra.mxu0 %v473
    %2498 = vmatpush.bf16.msra.mxu0 %v471
    %2499 = vmatpush.bf16.msra.mxu0 %v469
    %2500 = vmatmul.bf16.gmra.mxu0 %v2238
    %v2501 = vpop.f32.mrf.mxu0
    %v2502 = vadd.f32 0.0, %v2501
    %v2503 = vpop.f32.mrf.mxu0
    %2504 = vdwg.mxu0
    %2505 = vmatpush.bf16.msra.mxu0 0
    %2506 = vmatpush.bf16.msra.mxu0 0
    %2507 = vmatpush.bf16.msra.mxu0 0
    %2508 = vmatpush.bf16.msra.mxu0 0
    %2509 = vmatpush.bf16.msra.mxu0 0
    %2510 = vmatpush.bf16.msra.mxu0 0
    %2511 = vmatpush.bf16.msra.mxu0 0
    %2512 = vmatpush.bf16.msra.mxu0 %v485
    %2513 = vmatmul.bf16.gmra.mxu0 %v2242
    %v2514 = vpop.f32.mrf.mxu0
    %v2515 = vadd.f32 %v2502, %v2514
    %v2516 = vpop.f32.mrf.mxu0
    %2517 = vdwg.mxu0
    %v2518 = vadd.f32 %v2437, %v2489
    %v2519 = vadd.f32 %v2463, %v2515
    %2520 = vmatpush.bf16.msra.mxu0 %v655
    %2521 = vmatpush.bf16.msra.mxu0 %v653
    %2522 = vmatpush.bf16.msra.mxu0 %v651
    %2523 = vmatpush.bf16.msra.mxu0 %v649
    %2524 = vmatpush.bf16.msra.mxu0 %v647
    %2525 = vmatpush.bf16.msra.mxu0 %v645
    %2526 = vmatpush.bf16.msra.mxu0 %v643
    %2527 = vmatpush.bf16.msra.mxu0 %v641
    %2528 = vmatmul.bf16.gmra.mxu0 %v2302
    %v2529 = vpop.f32.mrf.mxu0
    %v2530 = vadd.f32 0.0, %v2529
    %v2531 = vpop.f32.mrf.mxu0
    %2532 = vdwg.mxu0
    %2533 = vmatpush.bf16.msra.mxu0 0
    %2534 = vmatpush.bf16.msra.mxu0 0
    %2535 = vmatpush.bf16.msra.mxu0 0
    %2536 = vmatpush.bf16.msra.mxu0 0
    %2537 = vmatpush.bf16.msra.mxu0 0
    %2538 = vmatpush.bf16.msra.mxu0 0
    %2539 = vmatpush.bf16.msra.mxu0 0
    %2540 = vmatpush.bf16.msra.mxu0 %v657
    %2541 = vmatmul.bf16.gmra.mxu0 %v2306
    %v2542 = vpop.f32.mrf.mxu0
    %v2543 = vadd.f32 %v2530, %v2542
    %v2544 = vpop.f32.mrf.mxu0
    %2545 = vdwg.mxu0
    %2546 = vmatpush.bf16.msra.mxu0 %v656
    %2547 = vmatpush.bf16.msra.mxu0 %v654
    %2548 = vmatpush.bf16.msra.mxu0 %v652
    %2549 = vmatpush.bf16.msra.mxu0 %v650
    %2550 = vmatpush.bf16.msra.mxu0 %v648
    %2551 = vmatpush.bf16.msra.mxu0 %v646
    %2552 = vmatpush.bf16.msra.mxu0 %v644
    %2553 = vmatpush.bf16.msra.mxu0 %v642
    %2554 = vmatmul.bf16.gmra.mxu0 %v2302
    %v2555 = vpop.f32.mrf.mxu0
    %v2556 = vadd.f32 0.0, %v2555
    %v2557 = vpop.f32.mrf.mxu0
    %2558 = vdwg.mxu0
    %2559 = vmatpush.bf16.msra.mxu0 0
    %2560 = vmatpush.bf16.msra.mxu0 0
    %2561 = vmatpush.bf16.msra.mxu0 0
    %2562 = vmatpush.bf16.msra.mxu0 0
    %2563 = vmatpush.bf16.msra.mxu0 0
    %2564 = vmatpush.bf16.msra.mxu0 0
    %2565 = vmatpush.bf16.msra.mxu0 0
    %2566 = vmatpush.bf16.msra.mxu0 %v658
    %2567 = vmatmul.bf16.gmra.mxu0 %v2306
    %v2568 = vpop.f32.mrf.mxu0
    %v2569 = vadd.f32 %v2556, %v2568
    %v2570 = vpop.f32.mrf.mxu0
    %2571 = vdwg.mxu0
    %v2572 = vadd.f32 %v2518, %v2543
    %v2573 = vadd.f32 %v2519, %v2569
    %v2574 = vld [vmem:[%s0 + $0x80] sm:$0xff]
    %v2576 = vunpack.c.l.b16 %v2574
    %v2577 = vunpack.c.h.b16 %v2574
    %v2578 = vpack.c.b16 %v2576, %v2576
    %v2579 = vpack.c.b16 %v2577, %v2577
    %v2582 = vsel %vm181, %v2579, 0
    %2584 = vmatpush.bf16.msra.mxu0 %v828
    %2585 = vmatpush.bf16.msra.mxu0 %v826
    %2586 = vmatpush.bf16.msra.mxu0 %v824
    %2587 = vmatpush.bf16.msra.mxu0 %v822
    %2588 = vmatpush.bf16.msra.mxu0 %v820
    %2589 = vmatpush.bf16.msra.mxu0 %v818
    %2590 = vmatpush.bf16.msra.mxu0 %v816
    %2591 = vmatpush.bf16.msra.mxu0 %v814
    %2592 = vmatmul.bf16.gmra.mxu0 %v2578
    %v2593 = vpop.f32.mrf.mxu0
    %v2594 = vadd.f32 0.0, %v2593
    %v2595 = vpop.f32.mrf.mxu0
    %2596 = vdwg.mxu0
    %2597 = vmatpush.bf16.msra.mxu0 0
    %2598 = vmatpush.bf16.msra.mxu0 0
    %2599 = vmatpush.bf16.msra.mxu0 0
    %2600 = vmatpush.bf16.msra.mxu0 0
    %2601 = vmatpush.bf16.msra.mxu0 0
    %2602 = vmatpush.bf16.msra.mxu0 0
    %2603 = vmatpush.bf16.msra.mxu0 0
    %2604 = vmatpush.bf16.msra.mxu0 %v830
    %2605 = vmatmul.bf16.gmra.mxu0 %v2582
    %v2606 = vpop.f32.mrf.mxu0
    %v2607 = vadd.f32 %v2594, %v2606
    %v2608 = vpop.f32.mrf.mxu0
    %2609 = vdwg.mxu0
    %2610 = vmatpush.bf16.msra.mxu0 %v829
    %2611 = vmatpush.bf16.msra.mxu0 %v827
    %2612 = vmatpush.bf16.msra.mxu0 %v825
    %2613 = vmatpush.bf16.msra.mxu0 %v823
    %2614 = vmatpush.bf16.msra.mxu0 %v821
    %2615 = vmatpush.bf16.msra.mxu0 %v819
    %2616 = vmatpush.bf16.msra.mxu0 %v817
    %2617 = vmatpush.bf16.msra.mxu0 %v815
    %2618 = vmatmul.bf16.gmra.mxu0 %v2578
    %v2619 = vpop.f32.mrf.mxu0
    %v2620 = vadd.f32 0.0, %v2619
    %v2621 = vpop.f32.mrf.mxu0
    %2622 = vdwg.mxu0
    %2623 = vmatpush.bf16.msra.mxu0 0
    %2624 = vmatpush.bf16.msra.mxu0 0
    %2625 = vmatpush.bf16.msra.mxu0 0
    %2626 = vmatpush.bf16.msra.mxu0 0
    %2627 = vmatpush.bf16.msra.mxu0 0
    %2628 = vmatpush.bf16.msra.mxu0 0
    %2629 = vmatpush.bf16.msra.mxu0 0
    %2630 = vmatpush.bf16.msra.mxu0 %v831
    %2631 = vmatmul.bf16.gmra.mxu0 %v2582
    %v2632 = vpop.f32.mrf.mxu0
    %v2633 = vadd.f32 %v2620, %v2632
    %v2634 = vpop.f32.mrf.mxu0
    %2635 = vdwg.mxu0
    %v2636 = vadd.f32 %v2572, %v2607
    %v2637 = vadd.f32 %v2573, %v2633
    %v2638 = vld [vmem:[%s0 + $0x88] sm:$0xff]
    %v2640 = vunpack.c.l.b16 %v2638
    %v2641 = vunpack.c.h.b16 %v2638
    %v2642 = vpack.c.b16 %v2640, %v2640
    %v2643 = vpack.c.b16 %v2641, %v2641
    %v2646 = vsel %vm181, %v2643, 0
    %2648 = vmatpush.bf16.msra.mxu0 %v1001
    %2649 = vmatpush.bf16.msra.mxu0 %v999
    %2650 = vmatpush.bf16.msra.mxu0 %v997
    %2651 = vmatpush.bf16.msra.mxu0 %v995
    %2652 = vmatpush.bf16.msra.mxu0 %v993
    %2653 = vmatpush.bf16.msra.mxu0 %v991
    %2654 = vmatpush.bf16.msra.mxu0 %v989
    %2655 = vmatpush.bf16.msra.mxu0 %v987
    %2656 = vmatmul.bf16.gmra.mxu0 %v2642
    %v2657 = vpop.f32.mrf.mxu0
    %v2658 = vadd.f32 0.0, %v2657
    %v2659 = vpop.f32.mrf.mxu0
    %2660 = vdwg.mxu0
    %2661 = vmatpush.bf16.msra.mxu0 0
    %2662 = vmatpush.bf16.msra.mxu0 0
    %2663 = vmatpush.bf16.msra.mxu0 0
    %2664 = vmatpush.bf16.msra.mxu0 0
    %2665 = vmatpush.bf16.msra.mxu0 0
    %2666 = vmatpush.bf16.msra.mxu0 0
    %2667 = vmatpush.bf16.msra.mxu0 0
    %2668 = vmatpush.bf16.msra.mxu0 %v1003
    %2669 = vmatmul.bf16.gmra.mxu0 %v2646
    %v2670 = vpop.f32.mrf.mxu0
    %v2671 = vadd.f32 %v2658, %v2670
    %v2672 = vpop.f32.mrf.mxu0
    %2673 = vdwg.mxu0
    %2674 = vmatpush.bf16.msra.mxu0 %v1002
    %2675 = vmatpush.bf16.msra.mxu0 %v1000
    %2676 = vmatpush.bf16.msra.mxu0 %v998
    %2677 = vmatpush.bf16.msra.mxu0 %v996
    %2678 = vmatpush.bf16.msra.mxu0 %v994
    %2679 = vmatpush.bf16.msra.mxu0 %v992
    %2680 = vmatpush.bf16.msra.mxu0 %v990
    %2681 = vmatpush.bf16.msra.mxu0 %v988
    %2682 = vmatmul.bf16.gmra.mxu0 %v2642
    %v2683 = vpop.f32.mrf.mxu0
    %v2684 = vadd.f32 0.0, %v2683
    %v2685 = vpop.f32.mrf.mxu0
    %2686 = vdwg.mxu0
    %2687 = vmatpush.bf16.msra.mxu0 0
    %2688 = vmatpush.bf16.msra.mxu0 0
    %2689 = vmatpush.bf16.msra.mxu0 0
    %2690 = vmatpush.bf16.msra.mxu0 0
    %2691 = vmatpush.bf16.msra.mxu0 0
    %2692 = vmatpush.bf16.msra.mxu0 0
    %2693 = vmatpush.bf16.msra.mxu0 0
    %2694 = vmatpush.bf16.msra.mxu0 %v1004
    %2695 = vmatmul.bf16.gmra.mxu0 %v2646
    %v2696 = vpop.f32.mrf.mxu0
    %v2697 = vadd.f32 %v2684, %v2696
    %v2698 = vpop.f32.mrf.mxu0
    %2699 = vdwg.mxu0
    %v2700 = vadd.f32 %v2636, %v2671
    %v2701 = vadd.f32 %v2637, %v2697
    %v2702 = vld [vmem:[%s0 + $0x90] sm:$0xff]
    %v2704 = vunpack.c.l.b16 %v2702
    %v2705 = vunpack.c.h.b16 %v2702
    %v2706 = vpack.c.b16 %v2704, %v2704
    %v2707 = vpack.c.b16 %v2705, %v2705
    %v2710 = vsel %vm181, %v2707, 0
    %2712 = vmatpush.bf16.msra.mxu0 %v1174
    %2713 = vmatpush.bf16.msra.mxu0 %v1172
    %2714 = vmatpush.bf16.msra.mxu0 %v1170
    %2715 = vmatpush.bf16.msra.mxu0 %v1168
    %2716 = vmatpush.bf16.msra.mxu0 %v1166
    %2717 = vmatpush.bf16.msra.mxu0 %v1164
    %2718 = vmatpush.bf16.msra.mxu0 %v1162
    %2719 = vmatpush.bf16.msra.mxu0 %v1160
    %2720 = vmatmul.bf16.gmra.mxu0 %v2706
    %v2721 = vpop.f32.mrf.mxu0
    %v2722 = vadd.f32 0.0, %v2721
    %v2723 = vpop.f32.mrf.mxu0
    %2724 = vdwg.mxu0
    %2725 = vmatpush.bf16.msra.mxu0 0
    %2726 = vmatpush.bf16.msra.mxu0 0
    %2727 = vmatpush.bf16.msra.mxu0 0
    %2728 = vmatpush.bf16.msra.mxu0 0
    %2729 = vmatpush.bf16.msra.mxu0 0
    %2730 = vmatpush.bf16.msra.mxu0 0
    %2731 = vmatpush.bf16.msra.mxu0 0
    %2732 = vmatpush.bf16.msra.mxu0 %v1176
    %2733 = vmatmul.bf16.gmra.mxu0 %v2710
    %v2734 = vpop.f32.mrf.mxu0
    %v2735 = vadd.f32 %v2722, %v2734
    %v2736 = vpop.f32.mrf.mxu0
    %2737 = vdwg.mxu0
    %2738 = vmatpush.bf16.msra.mxu0 %v1175
    %2739 = vmatpush.bf16.msra.mxu0 %v1173
    %2740 = vmatpush.bf16.msra.mxu0 %v1171
    %2741 = vmatpush.bf16.msra.mxu0 %v1169
    %2742 = vmatpush.bf16.msra.mxu0 %v1167
    %2743 = vmatpush.bf16.msra.mxu0 %v1165
    %2744 = vmatpush.bf16.msra.mxu0 %v1163
    %2745 = vmatpush.bf16.msra.mxu0 %v1161
    %2746 = vmatmul.bf16.gmra.mxu0 %v2706
    %v2747 = vpop.f32.mrf.mxu0
    %v2748 = vadd.f32 0.0, %v2747
    %v2749 = vpop.f32.mrf.mxu0
    %2750 = vdwg.mxu0
    %2751 = vmatpush.bf16.msra.mxu0 0
    %2752 = vmatpush.bf16.msra.mxu0 0
    %2753 = vmatpush.bf16.msra.mxu0 0
    %2754 = vmatpush.bf16.msra.mxu0 0
    %2755 = vmatpush.bf16.msra.mxu0 0
    %2756 = vmatpush.bf16.msra.mxu0 0
    %2757 = vmatpush.bf16.msra.mxu0 0
    %2758 = vmatpush.bf16.msra.mxu0 %v1177
    %2759 = vmatmul.bf16.gmra.mxu0 %v2710
    %v2760 = vpop.f32.mrf.mxu0
    %v2761 = vadd.f32 %v2748, %v2760
    %v2762 = vpop.f32.mrf.mxu0
    %2763 = vdwg.mxu0
    %v2764 = vadd.f32 %v2700, %v2735
    %v2765 = vadd.f32 %v2701, %v2761
    %v2766 = vld [vmem:[%s0 + $0x98] sm:$0xff]
    %v2768 = vunpack.c.l.b16 %v2766
    %v2769 = vunpack.c.h.b16 %v2766
    %v2770 = vpack.c.b16 %v2768, %v2768
    %v2771 = vpack.c.b16 %v2769, %v2769
    %v2774 = vsel %vm181, %v2771, 0
    %2776 = vmatpush.bf16.msra.mxu0 %v1347
    %2777 = vmatpush.bf16.msra.mxu0 %v1345
    %2778 = vmatpush.bf16.msra.mxu0 %v1343
    %2779 = vmatpush.bf16.msra.mxu0 %v1341
    %2780 = vmatpush.bf16.msra.mxu0 %v1339
    %2781 = vmatpush.bf16.msra.mxu0 %v1337
    %2782 = vmatpush.bf16.msra.mxu0 %v1335
    %2783 = vmatpush.bf16.msra.mxu0 %v1333
    %2784 = vmatmul.bf16.gmra.mxu0 %v2770
    %v2785 = vpop.f32.mrf.mxu0
    %v2786 = vadd.f32 0.0, %v2785
    %v2787 = vpop.f32.mrf.mxu0
    %2788 = vdwg.mxu0
    %2789 = vmatpush.bf16.msra.mxu0 0
    %2790 = vmatpush.bf16.msra.mxu0 0
    %2791 = vmatpush.bf16.msra.mxu0 0
    %2792 = vmatpush.bf16.msra.mxu0 0
    %2793 = vmatpush.bf16.msra.mxu0 0
    %2794 = vmatpush.bf16.msra.mxu0 0
    %2795 = vmatpush.bf16.msra.mxu0 0
    %2796 = vmatpush.bf16.msra.mxu0 %v1349
    %2797 = vmatmul.bf16.gmra.mxu0 %v2774
    %v2798 = vpop.f32.mrf.mxu0
    %v2799 = vadd.f32 %v2786, %v2798
    %v2800 = vpop.f32.mrf.mxu0
    %2801 = vdwg.mxu0
    %2802 = vmatpush.bf16.msra.mxu0 %v1348
    %2803 = vmatpush.bf16.msra.mxu0 %v1346
    %2804 = vmatpush.bf16.msra.mxu0 %v1344
    %2805 = vmatpush.bf16.msra.mxu0 %v1342
    %2806 = vmatpush.bf16.msra.mxu0 %v1340
    %2807 = vmatpush.bf16.msra.mxu0 %v1338
    %2808 = vmatpush.bf16.msra.mxu0 %v1336
    %2809 = vmatpush.bf16.msra.mxu0 %v1334
    %2810 = vmatmul.bf16.gmra.mxu0 %v2770
    %v2811 = vpop.f32.mrf.mxu0
    %v2812 = vadd.f32 0.0, %v2811
    %v2813 = vpop.f32.mrf.mxu0
    %2814 = vdwg.mxu0
    %2815 = vmatpush.bf16.msra.mxu0 0
    %2816 = vmatpush.bf16.msra.mxu0 0
    %2817 = vmatpush.bf16.msra.mxu0 0
    %2818 = vmatpush.bf16.msra.mxu0 0
    %2819 = vmatpush.bf16.msra.mxu0 0
    %2820 = vmatpush.bf16.msra.mxu0 0
    %2821 = vmatpush.bf16.msra.mxu0 0
    %2822 = vmatpush.bf16.msra.mxu0 %v1350
    %2823 = vmatmul.bf16.gmra.mxu0 %v2774
    %v2824 = vpop.f32.mrf.mxu0
    %v2825 = vadd.f32 %v2812, %v2824
    %v2826 = vpop.f32.mrf.mxu0
    %2827 = vdwg.mxu0
    %v2828 = vadd.f32 %v2764, %v2799
    %v2829 = vadd.f32 %v2765, %v2825
    %2830 = vmatpush.bf16.msra.mxu0 %v159
    %2831 = vmatpush.bf16.msra.mxu0 %v157
    %2832 = vmatpush.bf16.msra.mxu0 %v155
    %2833 = vmatpush.bf16.msra.mxu0 %v153
    %2834 = vmatpush.bf16.msra.mxu0 %v151
    %2835 = vmatpush.bf16.msra.mxu0 %v149
    %2836 = vmatpush.bf16.msra.mxu0 %v147
    %2837 = vmatpush.bf16.msra.mxu0 %v145
    %2838 = vmatmul.bf16.gmra.mxu0 %v2642
    %v2839 = vpop.f32.mrf.mxu0
    %v2840 = vadd.f32 0.0, %v2839
    %v2841 = vpop.f32.mrf.mxu0
    %2842 = vdwg.mxu0
    %2843 = vmatpush.bf16.msra.mxu0 0
    %2844 = vmatpush.bf16.msra.mxu0 0
    %2845 = vmatpush.bf16.msra.mxu0 0
    %2846 = vmatpush.bf16.msra.mxu0 0
    %2847 = vmatpush.bf16.msra.mxu0 0
    %2848 = vmatpush.bf16.msra.mxu0 0
    %2849 = vmatpush.bf16.msra.mxu0 0
    %2850 = vmatpush.bf16.msra.mxu0 %v161
    %2851 = vmatmul.bf16.gmra.mxu0 %v2646
    %v2852 = vpop.f32.mrf.mxu0
    %v2853 = vadd.f32 %v2840, %v2852
    %v2854 = vpop.f32.mrf.mxu0
    %2855 = vdwg.mxu0
    %2856 = vmatpush.bf16.msra.mxu0 %v160
    %2857 = vmatpush.bf16.msra.mxu0 %v158
    %2858 = vmatpush.bf16.msra.mxu0 %v156
    %2859 = vmatpush.bf16.msra.mxu0 %v154
    %2860 = vmatpush.bf16.msra.mxu0 %v152
    %2861 = vmatpush.bf16.msra.mxu0 %v150
    %2862 = vmatpush.bf16.msra.mxu0 %v148
    %2863 = vmatpush.bf16.msra.mxu0 %v146
    %2864 = vmatmul.bf16.gmra.mxu0 %v2642
    %v2865 = vpop.f32.mrf.mxu0
    %v2866 = vadd.f32 0.0, %v2865
    %v2867 = vpop.f32.mrf.mxu0
    %2868 = vdwg.mxu0
    %2869 = vmatpush.bf16.msra.mxu0 0
    %2870 = vmatpush.bf16.msra.mxu0 0
    %2871 = vmatpush.bf16.msra.mxu0 0
    %2872 = vmatpush.bf16.msra.mxu0 0
    %2873 = vmatpush.bf16.msra.mxu0 0
    %2874 = vmatpush.bf16.msra.mxu0 0
    %2875 = vmatpush.bf16.msra.mxu0 0
    %2876 = vmatpush.bf16.msra.mxu0 %v162
    %2877 = vmatmul.bf16.gmra.mxu0 %v2646
    %v2878 = vpop.f32.mrf.mxu0
    %v2879 = vadd.f32 %v2866, %v2878
    %v2880 = vpop.f32.mrf.mxu0
    %2881 = vdwg.mxu0
    %2882 = vmatpush.bf16.msra.mxu0 %v311
    %2883 = vmatpush.bf16.msra.mxu0 %v309
    %2884 = vmatpush.bf16.msra.mxu0 %v307
    %2885 = vmatpush.bf16.msra.mxu0 %v305
    %2886 = vmatpush.bf16.msra.mxu0 %v303
    %2887 = vmatpush.bf16.msra.mxu0 %v301
    %2888 = vmatpush.bf16.msra.mxu0 %v299
    %2889 = vmatpush.bf16.msra.mxu0 %v297
    %2890 = vmatmul.bf16.gmra.mxu0 %v2578
    %v2891 = vpop.f32.mrf.mxu0
    %v2892 = vadd.f32 %v2853, %v2891
    %v2893 = vpop.f32.mrf.mxu0
    %2894 = vdwg.mxu0
    %2895 = vmatpush.bf16.msra.mxu0 0
    %2896 = vmatpush.bf16.msra.mxu0 0
    %2897 = vmatpush.bf16.msra.mxu0 0
    %2898 = vmatpush.bf16.msra.mxu0 0
    %2899 = vmatpush.bf16.msra.mxu0 0
    %2900 = vmatpush.bf16.msra.mxu0 0
    %2901 = vmatpush.bf16.msra.mxu0 0
    %2902 = vmatpush.bf16.msra.mxu0 %v313
    %2903 = vmatmul.bf16.gmra.mxu0 %v2582
    %v2904 = vpop.f32.mrf.mxu0
    %v2905 = vadd.f32 %v2892, %v2904
    %v2906 = vpop.f32.mrf.mxu0
    %2907 = vdwg.mxu0
    %2908 = vmatpush.bf16.msra.mxu0 %v312
    %2909 = vmatpush.bf16.msra.mxu0 %v310
    %2910 = vmatpush.bf16.msra.mxu0 %v308
    %2911 = vmatpush.bf16.msra.mxu0 %v306
    %2912 = vmatpush.bf16.msra.mxu0 %v304
    %2913 = vmatpush.bf16.msra.mxu0 %v302
    %2914 = vmatpush.bf16.msra.mxu0 %v300
    %2915 = vmatpush.bf16.msra.mxu0 %v298
    %2916 = vmatmul.bf16.gmra.mxu0 %v2578
    %v2917 = vpop.f32.mrf.mxu0
    %v2918 = vadd.f32 %v2879, %v2917
    %v2919 = vpop.f32.mrf.mxu0
    %2920 = vdwg.mxu0
    %2921 = vmatpush.bf16.msra.mxu0 0
    %2922 = vmatpush.bf16.msra.mxu0 0
    %2923 = vmatpush.bf16.msra.mxu0 0
    %2924 = vmatpush.bf16.msra.mxu0 0
    %2925 = vmatpush.bf16.msra.mxu0 0
    %2926 = vmatpush.bf16.msra.mxu0 0
    %2927 = vmatpush.bf16.msra.mxu0 0
    %2928 = vmatpush.bf16.msra.mxu0 %v314
    %2929 = vmatmul.bf16.gmra.mxu0 %v2582
    %v2930 = vpop.f32.mrf.mxu0
    %v2931 = vadd.f32 %v2918, %v2930
    %v2932 = vpop.f32.mrf.mxu0
    %2933 = vdwg.mxu0
    %2934 = vmatpush.bf16.msra.mxu0 %v482
    %2935 = vmatpush.bf16.msra.mxu0 %v480
    %2936 = vmatpush.bf16.msra.mxu0 %v478
    %2937 = vmatpush.bf16.msra.mxu0 %v476
    %2938 = vmatpush.bf16.msra.mxu0 %v474
    %2939 = vmatpush.bf16.msra.mxu0 %v472
    %2940 = vmatpush.bf16.msra.mxu0 %v470
    %2941 = vmatpush.bf16.msra.mxu0 %v468
    %2942 = vmatmul.bf16.gmra.mxu0 %v2706
    %v2943 = vpop.f32.mrf.mxu0
    %v2944 = vadd.f32 0.0, %v2943
    %v2945 = vpop.f32.mrf.mxu0
    %2946 = vdwg.mxu0
    %2947 = vmatpush.bf16.msra.mxu0 0
    %2948 = vmatpush.bf16.msra.mxu0 0
    %2949 = vmatpush.bf16.msra.mxu0 0
    %2950 = vmatpush.bf16.msra.mxu0 0
    %2951 = vmatpush.bf16.msra.mxu0 0
    %2952 = vmatpush.bf16.msra.mxu0 0
    %2953 = vmatpush.bf16.msra.mxu0 0
    %2954 = vmatpush.bf16.msra.mxu0 %v484
    %2955 = vmatmul.bf16.gmra.mxu0 %v2710
    %v2956 = vpop.f32.mrf.mxu0
    %v2957 = vadd.f32 %v2944, %v2956
    %v2958 = vpop.f32.mrf.mxu0
    %2959 = vdwg.mxu0
    %2960 = vmatpush.bf16.msra.mxu0 %v483
    %2961 = vmatpush.bf16.msra.mxu0 %v481
    %2962 = vmatpush.bf16.msra.mxu0 %v479
    %2963 = vmatpush.bf16.msra.mxu0 %v477
    %2964 = vmatpush.bf16.msra.mxu0 %v475
    %2965 = vmatpush.bf16.msra.mxu0 %v473
    %2966 = vmatpush.bf16.msra.mxu0 %v471
    %2967 = vmatpush.bf16.msra.mxu0 %v469
    %2968 = vmatmul.bf16.gmra.mxu0 %v2706
    %v2969 = vpop.f32.mrf.mxu0
    %v2970 = vadd.f32 0.0, %v2969
    %v2971 = vpop.f32.mrf.mxu0
    %2972 = vdwg.mxu0
    %2973 = vmatpush.bf16.msra.mxu0 0
    %2974 = vmatpush.bf16.msra.mxu0 0
    %2975 = vmatpush.bf16.msra.mxu0 0
    %2976 = vmatpush.bf16.msra.mxu0 0
    %2977 = vmatpush.bf16.msra.mxu0 0
    %2978 = vmatpush.bf16.msra.mxu0 0
    %2979 = vmatpush.bf16.msra.mxu0 0
    %2980 = vmatpush.bf16.msra.mxu0 %v485
    %2981 = vmatmul.bf16.gmra.mxu0 %v2710
    %v2982 = vpop.f32.mrf.mxu0
    %v2983 = vadd.f32 %v2970, %v2982
    %v2984 = vpop.f32.mrf.mxu0
    %2985 = vdwg.mxu0
    %v2986 = vadd.f32 %v2905, %v2957
    %v2987 = vadd.f32 %v2931, %v2983
    %2988 = vmatpush.bf16.msra.mxu0 %v655
    %2989 = vmatpush.bf16.msra.mxu0 %v653
    %2990 = vmatpush.bf16.msra.mxu0 %v651
    %2991 = vmatpush.bf16.msra.mxu0 %v649
    %2992 = vmatpush.bf16.msra.mxu0 %v647
    %2993 = vmatpush.bf16.msra.mxu0 %v645
    %2994 = vmatpush.bf16.msra.mxu0 %v643
    %2995 = vmatpush.bf16.msra.mxu0 %v641
    %2996 = vmatmul.bf16.gmra.mxu0 %v2770
    %v2997 = vpop.f32.mrf.mxu0
    %v2998 = vadd.f32 0.0, %v2997
    %v2999 = vpop.f32.mrf.mxu0
    %3000 = vdwg.mxu0
    %3001 = vmatpush.bf16.msra.mxu0 0
    %3002 = vmatpush.bf16.msra.mxu0 0
    %3003 = vmatpush.bf16.msra.mxu0 0
    %3004 = vmatpush.bf16.msra.mxu0 0
    %3005 = vmatpush.bf16.msra.mxu0 0
    %3006 = vmatpush.bf16.msra.mxu0 0
    %3007 = vmatpush.bf16.msra.mxu0 0
    %3008 = vmatpush.bf16.msra.mxu0 %v657
    %3009 = vmatmul.bf16.gmra.mxu0 %v2774
    %v3010 = vpop.f32.mrf.mxu0
    %v3011 = vadd.f32 %v2998, %v3010
    %v3012 = vpop.f32.mrf.mxu0
    %3013 = vdwg.mxu0
    %3014 = vmatpush.bf16.msra.mxu0 %v656
    %3015 = vmatpush.bf16.msra.mxu0 %v654
    %3016 = vmatpush.bf16.msra.mxu0 %v652
    %3017 = vmatpush.bf16.msra.mxu0 %v650
    %3018 = vmatpush.bf16.msra.mxu0 %v648
    %3019 = vmatpush.bf16.msra.mxu0 %v646
    %3020 = vmatpush.bf16.msra.mxu0 %v644
    %3021 = vmatpush.bf16.msra.mxu0 %v642
    %3022 = vmatmul.bf16.gmra.mxu0 %v2770
    %v3023 = vpop.f32.mrf.mxu0
    %v3024 = vadd.f32 0.0, %v3023
    %v3025 = vpop.f32.mrf.mxu0
    %3026 = vdwg.mxu0
    %3027 = vmatpush.bf16.msra.mxu0 0
    %3028 = vmatpush.bf16.msra.mxu0 0
    %3029 = vmatpush.bf16.msra.mxu0 0
    %3030 = vmatpush.bf16.msra.mxu0 0
    %3031 = vmatpush.bf16.msra.mxu0 0
    %3032 = vmatpush.bf16.msra.mxu0 0
    %3033 = vmatpush.bf16.msra.mxu0 0
    %3034 = vmatpush.bf16.msra.mxu0 %v658
    %3035 = vmatmul.bf16.gmra.mxu0 %v2774
    %v3036 = vpop.f32.mrf.mxu0
    %v3037 = vadd.f32 %v3024, %v3036
    %v3038 = vpop.f32.mrf.mxu0
    %3039 = vdwg.mxu0
    %v3040 = vadd.f32 %v2986, %v3011
    %v3041 = vadd.f32 %v2987, %v3037
    %v3042 = vld [vmem:[%s0 + $0xa0] sm:$0xff]
    %v3044 = vunpack.c.l.b16 %v3042
    %v3045 = vunpack.c.h.b16 %v3042
    %v3046 = vpack.c.b16 %v3044, %v3044
    %v3047 = vpack.c.b16 %v3045, %v3045
    %v3050 = vsel %vm181, %v3047, 0
    %3052 = vmatpush.bf16.msra.mxu0 %v828
    %3053 = vmatpush.bf16.msra.mxu0 %v826
    %3054 = vmatpush.bf16.msra.mxu0 %v824
    %3055 = vmatpush.bf16.msra.mxu0 %v822
    %3056 = vmatpush.bf16.msra.mxu0 %v820
    %3057 = vmatpush.bf16.msra.mxu0 %v818
    %3058 = vmatpush.bf16.msra.mxu0 %v816
    %3059 = vmatpush.bf16.msra.mxu0 %v814
    %3060 = vmatmul.bf16.gmra.mxu0 %v3046
    %v3061 = vpop.f32.mrf.mxu0
    %v3062 = vadd.f32 0.0, %v3061
    %v3063 = vpop.f32.mrf.mxu0
    %3064 = vdwg.mxu0
    %3065 = vmatpush.bf16.msra.mxu0 0
    %3066 = vmatpush.bf16.msra.mxu0 0
    %3067 = vmatpush.bf16.msra.mxu0 0
    %3068 = vmatpush.bf16.msra.mxu0 0
    %3069 = vmatpush.bf16.msra.mxu0 0
    %3070 = vmatpush.bf16.msra.mxu0 0
    %3071 = vmatpush.bf16.msra.mxu0 0
    %3072 = vmatpush.bf16.msra.mxu0 %v830
    %3073 = vmatmul.bf16.gmra.mxu0 %v3050
    %v3074 = vpop.f32.mrf.mxu0
    %v3075 = vadd.f32 %v3062, %v3074
    %v3076 = vpop.f32.mrf.mxu0
    %3077 = vdwg.mxu0
    %3078 = vmatpush.bf16.msra.mxu0 %v829
    %3079 = vmatpush.bf16.msra.mxu0 %v827
    %3080 = vmatpush.bf16.msra.mxu0 %v825
    %3081 = vmatpush.bf16.msra.mxu0 %v823
    %3082 = vmatpush.bf16.msra.mxu0 %v821
    %3083 = vmatpush.bf16.msra.mxu0 %v819
    %3084 = vmatpush.bf16.msra.mxu0 %v817
    %3085 = vmatpush.bf16.msra.mxu0 %v815
    %3086 = vmatmul.bf16.gmra.mxu0 %v3046
    %v3087 = vpop.f32.mrf.mxu0
    %v3088 = vadd.f32 0.0, %v3087
    %v3089 = vpop.f32.mrf.mxu0
    %3090 = vdwg.mxu0
    %3091 = vmatpush.bf16.msra.mxu0 0
    %3092 = vmatpush.bf16.msra.mxu0 0
    %3093 = vmatpush.bf16.msra.mxu0 0
    %3094 = vmatpush.bf16.msra.mxu0 0
    %3095 = vmatpush.bf16.msra.mxu0 0
    %3096 = vmatpush.bf16.msra.mxu0 0
    %3097 = vmatpush.bf16.msra.mxu0 0
    %3098 = vmatpush.bf16.msra.mxu0 %v831
    %3099 = vmatmul.bf16.gmra.mxu0 %v3050
    %v3100 = vpop.f32.mrf.mxu0
    %v3101 = vadd.f32 %v3088, %v3100
    %v3102 = vpop.f32.mrf.mxu0
    %3103 = vdwg.mxu0
    %v3104 = vadd.f32 %v3040, %v3075
    %v3105 = vadd.f32 %v3041, %v3101
    %v3106 = vld [vmem:[%s0 + $0xa8] sm:$0xff]
    %v3108 = vunpack.c.l.b16 %v3106
    %v3109 = vunpack.c.h.b16 %v3106
    %v3110 = vpack.c.b16 %v3108, %v3108
    %v3111 = vpack.c.b16 %v3109, %v3109
    %v3114 = vsel %vm181, %v3111, 0
    %3116 = vmatpush.bf16.msra.mxu0 %v1001
    %3117 = vmatpush.bf16.msra.mxu0 %v999
    %3118 = vmatpush.bf16.msra.mxu0 %v997
    %3119 = vmatpush.bf16.msra.mxu0 %v995
    %3120 = vmatpush.bf16.msra.mxu0 %v993
    %3121 = vmatpush.bf16.msra.mxu0 %v991
    %3122 = vmatpush.bf16.msra.mxu0 %v989
    %3123 = vmatpush.bf16.msra.mxu0 %v987
    %3124 = vmatmul.bf16.gmra.mxu0 %v3110
    %v3125 = vpop.f32.mrf.mxu0
    %v3126 = vadd.f32 0.0, %v3125
    %v3127 = vpop.f32.mrf.mxu0
    %3128 = vdwg.mxu0
    %3129 = vmatpush.bf16.msra.mxu0 0
    %3130 = vmatpush.bf16.msra.mxu0 0
    %3131 = vmatpush.bf16.msra.mxu0 0
    %3132 = vmatpush.bf16.msra.mxu0 0
    %3133 = vmatpush.bf16.msra.mxu0 0
    %3134 = vmatpush.bf16.msra.mxu0 0
    %3135 = vmatpush.bf16.msra.mxu0 0
    %3136 = vmatpush.bf16.msra.mxu0 %v1003
    %3137 = vmatmul.bf16.gmra.mxu0 %v3114
    %v3138 = vpop.f32.mrf.mxu0
    %v3139 = vadd.f32 %v3126, %v3138
    %v3140 = vpop.f32.mrf.mxu0
    %3141 = vdwg.mxu0
    %3142 = vmatpush.bf16.msra.mxu0 %v1002
    %3143 = vmatpush.bf16.msra.mxu0 %v1000
    %3144 = vmatpush.bf16.msra.mxu0 %v998
    %3145 = vmatpush.bf16.msra.mxu0 %v996
    %3146 = vmatpush.bf16.msra.mxu0 %v994
    %3147 = vmatpush.bf16.msra.mxu0 %v992
    %3148 = vmatpush.bf16.msra.mxu0 %v990
    %3149 = vmatpush.bf16.msra.mxu0 %v988
    %3150 = vmatmul.bf16.gmra.mxu0 %v3110
    %v3151 = vpop.f32.mrf.mxu0
    %v3152 = vadd.f32 0.0, %v3151
    %v3153 = vpop.f32.mrf.mxu0
    %3154 = vdwg.mxu0
    %3155 = vmatpush.bf16.msra.mxu0 0
    %3156 = vmatpush.bf16.msra.mxu0 0
    %3157 = vmatpush.bf16.msra.mxu0 0
    %3158 = vmatpush.bf16.msra.mxu0 0
    %3159 = vmatpush.bf16.msra.mxu0 0
    %3160 = vmatpush.bf16.msra.mxu0 0
    %3161 = vmatpush.bf16.msra.mxu0 0
    %3162 = vmatpush.bf16.msra.mxu0 %v1004
    %3163 = vmatmul.bf16.gmra.mxu0 %v3114
    %v3164 = vpop.f32.mrf.mxu0
    %v3165 = vadd.f32 %v3152, %v3164
    %v3166 = vpop.f32.mrf.mxu0
    %3167 = vdwg.mxu0
    %v3168 = vadd.f32 %v3104, %v3139
    %v3169 = vadd.f32 %v3105, %v3165
    %v3170 = vld [vmem:[%s0 + $0xb0] sm:$0xff]
    %v3172 = vunpack.c.l.b16 %v3170
    %v3173 = vunpack.c.h.b16 %v3170
    %v3174 = vpack.c.b16 %v3172, %v3172
    %v3175 = vpack.c.b16 %v3173, %v3173
    %v3178 = vsel %vm181, %v3175, 0
    %3180 = vmatpush.bf16.msra.mxu0 %v1174
    %3181 = vmatpush.bf16.msra.mxu0 %v1172
    %3182 = vmatpush.bf16.msra.mxu0 %v1170
    %3183 = vmatpush.bf16.msra.mxu0 %v1168
    %3184 = vmatpush.bf16.msra.mxu0 %v1166
    %3185 = vmatpush.bf16.msra.mxu0 %v1164
    %3186 = vmatpush.bf16.msra.mxu0 %v1162
    %3187 = vmatpush.bf16.msra.mxu0 %v1160
    %3188 = vmatmul.bf16.gmra.mxu0 %v3174
    %v3189 = vpop.f32.mrf.mxu0
    %v3190 = vadd.f32 0.0, %v3189
    %v3191 = vpop.f32.mrf.mxu0
    %3192 = vdwg.mxu0
    %3193 = vmatpush.bf16.msra.mxu0 0
    %3194 = vmatpush.bf16.msra.mxu0 0
    %3195 = vmatpush.bf16.msra.mxu0 0
    %3196 = vmatpush.bf16.msra.mxu0 0
    %3197 = vmatpush.bf16.msra.mxu0 0
    %3198 = vmatpush.bf16.msra.mxu0 0
    %3199 = vmatpush.bf16.msra.mxu0 0
    %3200 = vmatpush.bf16.msra.mxu0 %v1176
    %3201 = vmatmul.bf16.gmra.mxu0 %v3178
    %v3202 = vpop.f32.mrf.mxu0
    %v3203 = vadd.f32 %v3190, %v3202
    %v3204 = vpop.f32.mrf.mxu0
    %3205 = vdwg.mxu0
    %3206 = vmatpush.bf16.msra.mxu0 %v1175
    %3207 = vmatpush.bf16.msra.mxu0 %v1173
    %3208 = vmatpush.bf16.msra.mxu0 %v1171
    %3209 = vmatpush.bf16.msra.mxu0 %v1169
    %3210 = vmatpush.bf16.msra.mxu0 %v1167
    %3211 = vmatpush.bf16.msra.mxu0 %v1165
    %3212 = vmatpush.bf16.msra.mxu0 %v1163
    %3213 = vmatpush.bf16.msra.mxu0 %v1161
    %3214 = vmatmul.bf16.gmra.mxu0 %v3174
    %v3215 = vpop.f32.mrf.mxu0
    %v3216 = vadd.f32 0.0, %v3215
    %v3217 = vpop.f32.mrf.mxu0
    %3218 = vdwg.mxu0
    %3219 = vmatpush.bf16.msra.mxu0 0
    %3220 = vmatpush.bf16.msra.mxu0 0
    %3221 = vmatpush.bf16.msra.mxu0 0
    %3222 = vmatpush.bf16.msra.mxu0 0
    %3223 = vmatpush.bf16.msra.mxu0 0
    %3224 = vmatpush.bf16.msra.mxu0 0
    %3225 = vmatpush.bf16.msra.mxu0 0
    %3226 = vmatpush.bf16.msra.mxu0 %v1177
    %3227 = vmatmul.bf16.gmra.mxu0 %v3178
    %v3228 = vpop.f32.mrf.mxu0
    %v3229 = vadd.f32 %v3216, %v3228
    %v3230 = vpop.f32.mrf.mxu0
    %3231 = vdwg.mxu0
    %v3232 = vadd.f32 %v3168, %v3203
    %v3233 = vadd.f32 %v3169, %v3229
    %v3234 = vld [vmem:[%s0 + $0xb8] sm:$0xff]
    %v3236 = vunpack.c.l.b16 %v3234
    %v3237 = vunpack.c.h.b16 %v3234
    %v3238 = vpack.c.b16 %v3236, %v3236
    %v3239 = vpack.c.b16 %v3237, %v3237
    %v3242 = vsel %vm181, %v3239, 0
    %3244 = vmatpush.bf16.msra.mxu0 %v1347
    %3245 = vmatpush.bf16.msra.mxu0 %v1345
    %3246 = vmatpush.bf16.msra.mxu0 %v1343
    %3247 = vmatpush.bf16.msra.mxu0 %v1341
    %3248 = vmatpush.bf16.msra.mxu0 %v1339
    %3249 = vmatpush.bf16.msra.mxu0 %v1337
    %3250 = vmatpush.bf16.msra.mxu0 %v1335
    %3251 = vmatpush.bf16.msra.mxu0 %v1333
    %3252 = vmatmul.bf16.gmra.mxu0 %v3238
    %v3253 = vpop.f32.mrf.mxu0
    %v3254 = vadd.f32 0.0, %v3253
    %v3255 = vpop.f32.mrf.mxu0
    %3256 = vdwg.mxu0
    %3257 = vmatpush.bf16.msra.mxu0 0
    %3258 = vmatpush.bf16.msra.mxu0 0
    %3259 = vmatpush.bf16.msra.mxu0 0
    %3260 = vmatpush.bf16.msra.mxu0 0
    %3261 = vmatpush.bf16.msra.mxu0 0
    %3262 = vmatpush.bf16.msra.mxu0 0
    %3263 = vmatpush.bf16.msra.mxu0 0
    %3264 = vmatpush.bf16.msra.mxu0 %v1349
    %3265 = vmatmul.bf16.gmra.mxu0 %v3242
    %v3266 = vpop.f32.mrf.mxu0
    %v3267 = vadd.f32 %v3254, %v3266
    %v3268 = vpop.f32.mrf.mxu0
    %3269 = vdwg.mxu0
    %3270 = vmatpush.bf16.msra.mxu0 %v1348
    %3271 = vmatpush.bf16.msra.mxu0 %v1346
    %3272 = vmatpush.bf16.msra.mxu0 %v1344
    %3273 = vmatpush.bf16.msra.mxu0 %v1342
    %3274 = vmatpush.bf16.msra.mxu0 %v1340
    %3275 = vmatpush.bf16.msra.mxu0 %v1338
    %3276 = vmatpush.bf16.msra.mxu0 %v1336
    %3277 = vmatpush.bf16.msra.mxu0 %v1334
    %3278 = vmatmul.bf16.gmra.mxu0 %v3238
    %v3279 = vpop.f32.mrf.mxu0
    %v3280 = vadd.f32 0.0, %v3279
    %v3281 = vpop.f32.mrf.mxu0
    %3282 = vdwg.mxu0
    %3283 = vmatpush.bf16.msra.mxu0 0
    %3284 = vmatpush.bf16.msra.mxu0 0
    %3285 = vmatpush.bf16.msra.mxu0 0
    %3286 = vmatpush.bf16.msra.mxu0 0
    %3287 = vmatpush.bf16.msra.mxu0 0
    %3288 = vmatpush.bf16.msra.mxu0 0
    %3289 = vmatpush.bf16.msra.mxu0 0
    %3290 = vmatpush.bf16.msra.mxu0 %v1350
    %3291 = vmatmul.bf16.gmra.mxu0 %v3242
    %v3292 = vpop.f32.mrf.mxu0
    %v3293 = vadd.f32 %v3280, %v3292
    %v3294 = vpop.f32.mrf.mxu0
    %3295 = vdwg.mxu0
    %v3296 = vadd.f32 %v3232, %v3267
    %v3297 = vadd.f32 %v3233, %v3293
    %3298 = vmatpush.bf16.msra.mxu0 %v159
    %3299 = vmatpush.bf16.msra.mxu0 %v157
    %3300 = vmatpush.bf16.msra.mxu0 %v155
    %3301 = vmatpush.bf16.msra.mxu0 %v153
    %3302 = vmatpush.bf16.msra.mxu0 %v151
    %3303 = vmatpush.bf16.msra.mxu0 %v149
    %3304 = vmatpush.bf16.msra.mxu0 %v147
    %3305 = vmatpush.bf16.msra.mxu0 %v145
    %3306 = vmatmul.bf16.gmra.mxu0 %v3110
    %v3307 = vpop.f32.mrf.mxu0
    %v3308 = vadd.f32 0.0, %v3307
    %v3309 = vpop.f32.mrf.mxu0
    %3310 = vdwg.mxu0
    %3311 = vmatpush.bf16.msra.mxu0 0
    %3312 = vmatpush.bf16.msra.mxu0 0
    %3313 = vmatpush.bf16.msra.mxu0 0
    %3314 = vmatpush.bf16.msra.mxu0 0
    %3315 = vmatpush.bf16.msra.mxu0 0
    %3316 = vmatpush.bf16.msra.mxu0 0
    %3317 = vmatpush.bf16.msra.mxu0 0
    %3318 = vmatpush.bf16.msra.mxu0 %v161
    %3319 = vmatmul.bf16.gmra.mxu0 %v3114
    %v3320 = vpop.f32.mrf.mxu0
    %v3321 = vadd.f32 %v3308, %v3320
    %v3322 = vpop.f32.mrf.mxu0
    %3323 = vdwg.mxu0
    %3324 = vmatpush.bf16.msra.mxu0 %v160
    %3325 = vmatpush.bf16.msra.mxu0 %v158
    %3326 = vmatpush.bf16.msra.mxu0 %v156
    %3327 = vmatpush.bf16.msra.mxu0 %v154
    %3328 = vmatpush.bf16.msra.mxu0 %v152
    %3329 = vmatpush.bf16.msra.mxu0 %v150
    %3330 = vmatpush.bf16.msra.mxu0 %v148
    %3331 = vmatpush.bf16.msra.mxu0 %v146
    %3332 = vmatmul.bf16.gmra.mxu0 %v3110
    %v3333 = vpop.f32.mrf.mxu0
    %v3334 = vadd.f32 0.0, %v3333
    %v3335 = vpop.f32.mrf.mxu0
    %3336 = vdwg.mxu0
    %3337 = vmatpush.bf16.msra.mxu0 0
    %3338 = vmatpush.bf16.msra.mxu0 0
    %3339 = vmatpush.bf16.msra.mxu0 0
    %3340 = vmatpush.bf16.msra.mxu0 0
    %3341 = vmatpush.bf16.msra.mxu0 0
    %3342 = vmatpush.bf16.msra.mxu0 0
    %3343 = vmatpush.bf16.msra.mxu0 0
    %3344 = vmatpush.bf16.msra.mxu0 %v162
    %3345 = vmatmul.bf16.gmra.mxu0 %v3114
    %v3346 = vpop.f32.mrf.mxu0
    %v3347 = vadd.f32 %v3334, %v3346
    %v3348 = vpop.f32.mrf.mxu0
    %3349 = vdwg.mxu0
    %3350 = vmatpush.bf16.msra.mxu0 %v311
    %3351 = vmatpush.bf16.msra.mxu0 %v309
    %3352 = vmatpush.bf16.msra.mxu0 %v307
    %3353 = vmatpush.bf16.msra.mxu0 %v305
    %3354 = vmatpush.bf16.msra.mxu0 %v303
    %3355 = vmatpush.bf16.msra.mxu0 %v301
    %3356 = vmatpush.bf16.msra.mxu0 %v299
    %3357 = vmatpush.bf16.msra.mxu0 %v297
    %3358 = vmatmul.bf16.gmra.mxu0 %v3046
    %v3359 = vpop.f32.mrf.mxu0
    %v3360 = vadd.f32 %v3321, %v3359
    %v3361 = vpop.f32.mrf.mxu0
    %3362 = vdwg.mxu0
    %3363 = vmatpush.bf16.msra.mxu0 0
    %3364 = vmatpush.bf16.msra.mxu0 0
    %3365 = vmatpush.bf16.msra.mxu0 0
    %3366 = vmatpush.bf16.msra.mxu0 0
    %3367 = vmatpush.bf16.msra.mxu0 0
    %3368 = vmatpush.bf16.msra.mxu0 0
    %3369 = vmatpush.bf16.msra.mxu0 0
    %3370 = vmatpush.bf16.msra.mxu0 %v313
    %3371 = vmatmul.bf16.gmra.mxu0 %v3050
    %v3372 = vpop.f32.mrf.mxu0
    %v3373 = vadd.f32 %v3360, %v3372
    %v3374 = vpop.f32.mrf.mxu0
    %3375 = vdwg.mxu0
    %3376 = vmatpush.bf16.msra.mxu0 %v312
    %3377 = vmatpush.bf16.msra.mxu0 %v310
    %3378 = vmatpush.bf16.msra.mxu0 %v308
    %3379 = vmatpush.bf16.msra.mxu0 %v306
    %3380 = vmatpush.bf16.msra.mxu0 %v304
    %3381 = vmatpush.bf16.msra.mxu0 %v302
    %3382 = vmatpush.bf16.msra.mxu0 %v300
    %3383 = vmatpush.bf16.msra.mxu0 %v298
    %3384 = vmatmul.bf16.gmra.mxu0 %v3046
    %v3385 = vpop.f32.mrf.mxu0
    %v3386 = vadd.f32 %v3347, %v3385
    %v3387 = vpop.f32.mrf.mxu0
    %3388 = vdwg.mxu0
    %3389 = vmatpush.bf16.msra.mxu0 0
    %3390 = vmatpush.bf16.msra.mxu0 0
    %3391 = vmatpush.bf16.msra.mxu0 0
    %3392 = vmatpush.bf16.msra.mxu0 0
    %3393 = vmatpush.bf16.msra.mxu0 0
    %3394 = vmatpush.bf16.msra.mxu0 0
    %3395 = vmatpush.bf16.msra.mxu0 0
    %3396 = vmatpush.bf16.msra.mxu0 %v314
    %3397 = vmatmul.bf16.gmra.mxu0 %v3050
    %v3398 = vpop.f32.mrf.mxu0
    %v3399 = vadd.f32 %v3386, %v3398
    %v3400 = vpop.f32.mrf.mxu0
    %3401 = vdwg.mxu0
    %3402 = vmatpush.bf16.msra.mxu0 %v482
    %3403 = vmatpush.bf16.msra.mxu0 %v480
    %3404 = vmatpush.bf16.msra.mxu0 %v478
    %3405 = vmatpush.bf16.msra.mxu0 %v476
    %3406 = vmatpush.bf16.msra.mxu0 %v474
    %3407 = vmatpush.bf16.msra.mxu0 %v472
    %3408 = vmatpush.bf16.msra.mxu0 %v470
    %3409 = vmatpush.bf16.msra.mxu0 %v468
    %3410 = vmatmul.bf16.gmra.mxu0 %v3174
    %v3411 = vpop.f32.mrf.mxu0
    %v3412 = vadd.f32 0.0, %v3411
    %v3413 = vpop.f32.mrf.mxu0
    %3414 = vdwg.mxu0
    %3415 = vmatpush.bf16.msra.mxu0 0
    %3416 = vmatpush.bf16.msra.mxu0 0
    %3417 = vmatpush.bf16.msra.mxu0 0
    %3418 = vmatpush.bf16.msra.mxu0 0
    %3419 = vmatpush.bf16.msra.mxu0 0
    %3420 = vmatpush.bf16.msra.mxu0 0
    %3421 = vmatpush.bf16.msra.mxu0 0
    %3422 = vmatpush.bf16.msra.mxu0 %v484
    %3423 = vmatmul.bf16.gmra.mxu0 %v3178
    %v3424 = vpop.f32.mrf.mxu0
    %v3425 = vadd.f32 %v3412, %v3424
    %v3426 = vpop.f32.mrf.mxu0
    %3427 = vdwg.mxu0
    %3428 = vmatpush.bf16.msra.mxu0 %v483
    %3429 = vmatpush.bf16.msra.mxu0 %v481
    %3430 = vmatpush.bf16.msra.mxu0 %v479
    %3431 = vmatpush.bf16.msra.mxu0 %v477
    %3432 = vmatpush.bf16.msra.mxu0 %v475
    %3433 = vmatpush.bf16.msra.mxu0 %v473
    %3434 = vmatpush.bf16.msra.mxu0 %v471
    %3435 = vmatpush.bf16.msra.mxu0 %v469
    %3436 = vmatmul.bf16.gmra.mxu0 %v3174
    %v3437 = vpop.f32.mrf.mxu0
    %v3438 = vadd.f32 0.0, %v3437
    %v3439 = vpop.f32.mrf.mxu0
    %3440 = vdwg.mxu0
    %3441 = vmatpush.bf16.msra.mxu0 0
    %3442 = vmatpush.bf16.msra.mxu0 0
    %3443 = vmatpush.bf16.msra.mxu0 0
    %3444 = vmatpush.bf16.msra.mxu0 0
    %3445 = vmatpush.bf16.msra.mxu0 0
    %3446 = vmatpush.bf16.msra.mxu0 0
    %3447 = vmatpush.bf16.msra.mxu0 0
    %3448 = vmatpush.bf16.msra.mxu0 %v485
    %3449 = vmatmul.bf16.gmra.mxu0 %v3178
    %v3450 = vpop.f32.mrf.mxu0
    %v3451 = vadd.f32 %v3438, %v3450
    %v3452 = vpop.f32.mrf.mxu0
    %3453 = vdwg.mxu0
    %v3454 = vadd.f32 %v3373, %v3425
    %v3455 = vadd.f32 %v3399, %v3451
    %3456 = vmatpush.bf16.msra.mxu0 %v655
    %3457 = vmatpush.bf16.msra.mxu0 %v653
    %3458 = vmatpush.bf16.msra.mxu0 %v651
    %3459 = vmatpush.bf16.msra.mxu0 %v649
    %3460 = vmatpush.bf16.msra.mxu0 %v647
    %3461 = vmatpush.bf16.msra.mxu0 %v645
    %3462 = vmatpush.bf16.msra.mxu0 %v643
    %3463 = vmatpush.bf16.msra.mxu0 %v641
    %3464 = vmatmul.bf16.gmra.mxu0 %v3238
    %v3465 = vpop.f32.mrf.mxu0
    %v3466 = vadd.f32 0.0, %v3465
    %v3467 = vpop.f32.mrf.mxu0
    %3468 = vdwg.mxu0
    %3469 = vmatpush.bf16.msra.mxu0 0
    %3470 = vmatpush.bf16.msra.mxu0 0
    %3471 = vmatpush.bf16.msra.mxu0 0
    %3472 = vmatpush.bf16.msra.mxu0 0
    %3473 = vmatpush.bf16.msra.mxu0 0
    %3474 = vmatpush.bf16.msra.mxu0 0
    %3475 = vmatpush.bf16.msra.mxu0 0
    %3476 = vmatpush.bf16.msra.mxu0 %v657
    %3477 = vmatmul.bf16.gmra.mxu0 %v3242
    %v3478 = vpop.f32.mrf.mxu0
    %v3479 = vadd.f32 %v3466, %v3478
    %v3480 = vpop.f32.mrf.mxu0
    %3481 = vdwg.mxu0
    %3482 = vmatpush.bf16.msra.mxu0 %v656
    %3483 = vmatpush.bf16.msra.mxu0 %v654
    %3484 = vmatpush.bf16.msra.mxu0 %v652
    %3485 = vmatpush.bf16.msra.mxu0 %v650
    %3486 = vmatpush.bf16.msra.mxu0 %v648
    %3487 = vmatpush.bf16.msra.mxu0 %v646
    %3488 = vmatpush.bf16.msra.mxu0 %v644
    %3489 = vmatpush.bf16.msra.mxu0 %v642
    %3490 = vmatmul.bf16.gmra.mxu0 %v3238
    %v3491 = vpop.f32.mrf.mxu0
    %v3492 = vadd.f32 0.0, %v3491
    %v3493 = vpop.f32.mrf.mxu0
    %3494 = vdwg.mxu0
    %3495 = vmatpush.bf16.msra.mxu0 0
    %3496 = vmatpush.bf16.msra.mxu0 0
    %3497 = vmatpush.bf16.msra.mxu0 0
    %3498 = vmatpush.bf16.msra.mxu0 0
    %3499 = vmatpush.bf16.msra.mxu0 0
    %3500 = vmatpush.bf16.msra.mxu0 0
    %3501 = vmatpush.bf16.msra.mxu0 0
    %3502 = vmatpush.bf16.msra.mxu0 %v658
    %3503 = vmatmul.bf16.gmra.mxu0 %v3242
    %v3504 = vpop.f32.mrf.mxu0
    %v3505 = vadd.f32 %v3492, %v3504
    %v3506 = vpop.f32.mrf.mxu0
    %3507 = vdwg.mxu0
    %v3508 = vadd.f32 %v3454, %v3479
    %v3509 = vadd.f32 %v3455, %v3505
    %v3510 = vld [vmem:[%s0 + $0xc0] sm:$0xff]
    %v3512 = vunpack.c.l.b16 %v3510
    %v3513 = vunpack.c.h.b16 %v3510
    %v3514 = vpack.c.b16 %v3512, %v3512
    %v3515 = vpack.c.b16 %v3513, %v3513
    %v3518 = vsel %vm181, %v3515, 0
    %3520 = vmatpush.bf16.msra.mxu0 %v828
    %3521 = vmatpush.bf16.msra.mxu0 %v826
    %3522 = vmatpush.bf16.msra.mxu0 %v824
    %3523 = vmatpush.bf16.msra.mxu0 %v822
    %3524 = vmatpush.bf16.msra.mxu0 %v820
    %3525 = vmatpush.bf16.msra.mxu0 %v818
    %3526 = vmatpush.bf16.msra.mxu0 %v816
    %3527 = vmatpush.bf16.msra.mxu0 %v814
    %3528 = vmatmul.bf16.gmra.mxu0 %v3514
    %v3529 = vpop.f32.mrf.mxu0
    %v3530 = vadd.f32 0.0, %v3529
    %v3531 = vpop.f32.mrf.mxu0
    %3532 = vdwg.mxu0
    %3533 = vmatpush.bf16.msra.mxu0 0
    %3534 = vmatpush.bf16.msra.mxu0 0
    %3535 = vmatpush.bf16.msra.mxu0 0
    %3536 = vmatpush.bf16.msra.mxu0 0
    %3537 = vmatpush.bf16.msra.mxu0 0
    %3538 = vmatpush.bf16.msra.mxu0 0
    %3539 = vmatpush.bf16.msra.mxu0 0
    %3540 = vmatpush.bf16.msra.mxu0 %v830
    %3541 = vmatmul.bf16.gmra.mxu0 %v3518
    %v3542 = vpop.f32.mrf.mxu0
    %v3543 = vadd.f32 %v3530, %v3542
    %v3544 = vpop.f32.mrf.mxu0
    %3545 = vdwg.mxu0
    %3546 = vmatpush.bf16.msra.mxu0 %v829
    %3547 = vmatpush.bf16.msra.mxu0 %v827
    %3548 = vmatpush.bf16.msra.mxu0 %v825
    %3549 = vmatpush.bf16.msra.mxu0 %v823
    %3550 = vmatpush.bf16.msra.mxu0 %v821
    %3551 = vmatpush.bf16.msra.mxu0 %v819
    %3552 = vmatpush.bf16.msra.mxu0 %v817
    %3553 = vmatpush.bf16.msra.mxu0 %v815
    %3554 = vmatmul.bf16.gmra.mxu0 %v3514
    %v3555 = vpop.f32.mrf.mxu0
    %v3556 = vadd.f32 0.0, %v3555
    %v3557 = vpop.f32.mrf.mxu0
    %3558 = vdwg.mxu0
    %3559 = vmatpush.bf16.msra.mxu0 0
    %3560 = vmatpush.bf16.msra.mxu0 0
    %3561 = vmatpush.bf16.msra.mxu0 0
    %3562 = vmatpush.bf16.msra.mxu0 0
    %3563 = vmatpush.bf16.msra.mxu0 0
    %3564 = vmatpush.bf16.msra.mxu0 0
    %3565 = vmatpush.bf16.msra.mxu0 0
    %3566 = vmatpush.bf16.msra.mxu0 %v831
    %3567 = vmatmul.bf16.gmra.mxu0 %v3518
    %v3568 = vpop.f32.mrf.mxu0
    %v3569 = vadd.f32 %v3556, %v3568
    %v3570 = vpop.f32.mrf.mxu0
    %3571 = vdwg.mxu0
    %v3572 = vadd.f32 %v3508, %v3543
    %v3573 = vadd.f32 %v3509, %v3569
    %v3574 = vld [vmem:[%s0 + $0xc8] sm:$0xff]
    %v3576 = vunpack.c.l.b16 %v3574
    %v3577 = vunpack.c.h.b16 %v3574
    %v3578 = vpack.c.b16 %v3576, %v3576
    %v3579 = vpack.c.b16 %v3577, %v3577
    %v3582 = vsel %vm181, %v3579, 0
    %3584 = vmatpush.bf16.msra.mxu0 %v1001
    %3585 = vmatpush.bf16.msra.mxu0 %v999
    %3586 = vmatpush.bf16.msra.mxu0 %v997
    %3587 = vmatpush.bf16.msra.mxu0 %v995
    %3588 = vmatpush.bf16.msra.mxu0 %v993
    %3589 = vmatpush.bf16.msra.mxu0 %v991
    %3590 = vmatpush.bf16.msra.mxu0 %v989
    %3591 = vmatpush.bf16.msra.mxu0 %v987
    %3592 = vmatmul.bf16.gmra.mxu0 %v3578
    %v3593 = vpop.f32.mrf.mxu0
    %v3594 = vadd.f32 0.0, %v3593
    %v3595 = vpop.f32.mrf.mxu0
    %3596 = vdwg.mxu0
    %3597 = vmatpush.bf16.msra.mxu0 0
    %3598 = vmatpush.bf16.msra.mxu0 0
    %3599 = vmatpush.bf16.msra.mxu0 0
    %3600 = vmatpush.bf16.msra.mxu0 0
    %3601 = vmatpush.bf16.msra.mxu0 0
    %3602 = vmatpush.bf16.msra.mxu0 0
    %3603 = vmatpush.bf16.msra.mxu0 0
    %3604 = vmatpush.bf16.msra.mxu0 %v1003
    %3605 = vmatmul.bf16.gmra.mxu0 %v3582
    %v3606 = vpop.f32.mrf.mxu0
    %v3607 = vadd.f32 %v3594, %v3606
    %v3608 = vpop.f32.mrf.mxu0
    %3609 = vdwg.mxu0
    %3610 = vmatpush.bf16.msra.mxu0 %v1002
    %3611 = vmatpush.bf16.msra.mxu0 %v1000
    %3612 = vmatpush.bf16.msra.mxu0 %v998
    %3613 = vmatpush.bf16.msra.mxu0 %v996
    %3614 = vmatpush.bf16.msra.mxu0 %v994
    %3615 = vmatpush.bf16.msra.mxu0 %v992
    %3616 = vmatpush.bf16.msra.mxu0 %v990
    %3617 = vmatpush.bf16.msra.mxu0 %v988
    %3618 = vmatmul.bf16.gmra.mxu0 %v3578
    %v3619 = vpop.f32.mrf.mxu0
    %v3620 = vadd.f32 0.0, %v3619
    %v3621 = vpop.f32.mrf.mxu0
    %3622 = vdwg.mxu0
    %3623 = vmatpush.bf16.msra.mxu0 0
    %3624 = vmatpush.bf16.msra.mxu0 0
    %3625 = vmatpush.bf16.msra.mxu0 0
    %3626 = vmatpush.bf16.msra.mxu0 0
    %3627 = vmatpush.bf16.msra.mxu0 0
    %3628 = vmatpush.bf16.msra.mxu0 0
    %3629 = vmatpush.bf16.msra.mxu0 0
    %3630 = vmatpush.bf16.msra.mxu0 %v1004
    %3631 = vmatmul.bf16.gmra.mxu0 %v3582
    %v3632 = vpop.f32.mrf.mxu0
    %v3633 = vadd.f32 %v3620, %v3632
    %v3634 = vpop.f32.mrf.mxu0
    %3635 = vdwg.mxu0
    %v3636 = vadd.f32 %v3572, %v3607
    %v3637 = vadd.f32 %v3573, %v3633
    %v3638 = vld [vmem:[%s0 + $0xd0] sm:$0xff]
    %v3640 = vunpack.c.l.b16 %v3638
    %v3641 = vunpack.c.h.b16 %v3638
    %v3642 = vpack.c.b16 %v3640, %v3640
    %v3643 = vpack.c.b16 %v3641, %v3641
    %v3646 = vsel %vm181, %v3643, 0
    %3648 = vmatpush.bf16.msra.mxu0 %v1174
    %3649 = vmatpush.bf16.msra.mxu0 %v1172
    %3650 = vmatpush.bf16.msra.mxu0 %v1170
    %3651 = vmatpush.bf16.msra.mxu0 %v1168
    %3652 = vmatpush.bf16.msra.mxu0 %v1166
    %3653 = vmatpush.bf16.msra.mxu0 %v1164
    %3654 = vmatpush.bf16.msra.mxu0 %v1162
    %3655 = vmatpush.bf16.msra.mxu0 %v1160
    %3656 = vmatmul.bf16.gmra.mxu0 %v3642
    %v3657 = vpop.f32.mrf.mxu0
    %v3658 = vadd.f32 0.0, %v3657
    %v3659 = vpop.f32.mrf.mxu0
    %3660 = vdwg.mxu0
    %3661 = vmatpush.bf16.msra.mxu0 0
    %3662 = vmatpush.bf16.msra.mxu0 0
    %3663 = vmatpush.bf16.msra.mxu0 0
    %3664 = vmatpush.bf16.msra.mxu0 0
    %3665 = vmatpush.bf16.msra.mxu0 0
    %3666 = vmatpush.bf16.msra.mxu0 0
    %3667 = vmatpush.bf16.msra.mxu0 0
    %3668 = vmatpush.bf16.msra.mxu0 %v1176
    %3669 = vmatmul.bf16.gmra.mxu0 %v3646
    %v3670 = vpop.f32.mrf.mxu0
    %v3671 = vadd.f32 %v3658, %v3670
    %v3672 = vpop.f32.mrf.mxu0
    %3673 = vdwg.mxu0
    %3674 = vmatpush.bf16.msra.mxu0 %v1175
    %3675 = vmatpush.bf16.msra.mxu0 %v1173
    %3676 = vmatpush.bf16.msra.mxu0 %v1171
    %3677 = vmatpush.bf16.msra.mxu0 %v1169
    %3678 = vmatpush.bf16.msra.mxu0 %v1167
    %3679 = vmatpush.bf16.msra.mxu0 %v1165
    %3680 = vmatpush.bf16.msra.mxu0 %v1163
    %3681 = vmatpush.bf16.msra.mxu0 %v1161
    %3682 = vmatmul.bf16.gmra.mxu0 %v3642
    %v3683 = vpop.f32.mrf.mxu0
    %v3684 = vadd.f32 0.0, %v3683
    %v3685 = vpop.f32.mrf.mxu0
    %3686 = vdwg.mxu0
    %3687 = vmatpush.bf16.msra.mxu0 0
    %3688 = vmatpush.bf16.msra.mxu0 0
    %3689 = vmatpush.bf16.msra.mxu0 0
    %3690 = vmatpush.bf16.msra.mxu0 0
    %3691 = vmatpush.bf16.msra.mxu0 0
    %3692 = vmatpush.bf16.msra.mxu0 0
    %3693 = vmatpush.bf16.msra.mxu0 0
    %3694 = vmatpush.bf16.msra.mxu0 %v1177
    %3695 = vmatmul.bf16.gmra.mxu0 %v3646
    %v3696 = vpop.f32.mrf.mxu0
    %v3697 = vadd.f32 %v3684, %v3696
    %v3698 = vpop.f32.mrf.mxu0
    %3699 = vdwg.mxu0
    %v3700 = vadd.f32 %v3636, %v3671
    %v3701 = vadd.f32 %v3637, %v3697
    %v3702 = vld [vmem:[%s0 + $0xd8] sm:$0xff]
    %v3704 = vunpack.c.l.b16 %v3702
    %v3705 = vunpack.c.h.b16 %v3702
    %v3706 = vpack.c.b16 %v3704, %v3704
    %v3707 = vpack.c.b16 %v3705, %v3705
    %v3710 = vsel %vm181, %v3707, 0
    %3712 = vmatpush.bf16.msra.mxu0 %v1347
    %3713 = vmatpush.bf16.msra.mxu0 %v1345
    %3714 = vmatpush.bf16.msra.mxu0 %v1343
    %3715 = vmatpush.bf16.msra.mxu0 %v1341
    %3716 = vmatpush.bf16.msra.mxu0 %v1339
    %3717 = vmatpush.bf16.msra.mxu0 %v1337
    %3718 = vmatpush.bf16.msra.mxu0 %v1335
    %3719 = vmatpush.bf16.msra.mxu0 %v1333
    %3720 = vmatmul.bf16.gmra.mxu0 %v3706
    %v3721 = vpop.f32.mrf.mxu0
    %v3722 = vadd.f32 0.0, %v3721
    %v3723 = vpop.f32.mrf.mxu0
    %3724 = vdwg.mxu0
    %3725 = vmatpush.bf16.msra.mxu0 0
    %3726 = vmatpush.bf16.msra.mxu0 0
    %3727 = vmatpush.bf16.msra.mxu0 0
    %3728 = vmatpush.bf16.msra.mxu0 0
    %3729 = vmatpush.bf16.msra.mxu0 0
    %3730 = vmatpush.bf16.msra.mxu0 0
    %3731 = vmatpush.bf16.msra.mxu0 0
    %3732 = vmatpush.bf16.msra.mxu0 %v1349
    %3733 = vmatmul.bf16.gmra.mxu0 %v3710
    %v3734 = vpop.f32.mrf.mxu0
    %v3735 = vadd.f32 %v3722, %v3734
    %v3736 = vpop.f32.mrf.mxu0
    %3737 = vdwg.mxu0
    %3738 = vmatpush.bf16.msra.mxu0 %v1348
    %3739 = vmatpush.bf16.msra.mxu0 %v1346
    %3740 = vmatpush.bf16.msra.mxu0 %v1344
    %3741 = vmatpush.bf16.msra.mxu0 %v1342
    %3742 = vmatpush.bf16.msra.mxu0 %v1340
    %3743 = vmatpush.bf16.msra.mxu0 %v1338
    %3744 = vmatpush.bf16.msra.mxu0 %v1336
    %3745 = vmatpush.bf16.msra.mxu0 %v1334
    %3746 = vmatmul.bf16.gmra.mxu0 %v3706
    %v3747 = vpop.f32.mrf.mxu0
    %v3748 = vadd.f32 0.0, %v3747
    %v3749 = vpop.f32.mrf.mxu0
    %3750 = vdwg.mxu0
    %3751 = vmatpush.bf16.msra.mxu0 0
    %3752 = vmatpush.bf16.msra.mxu0 0
    %3753 = vmatpush.bf16.msra.mxu0 0
    %3754 = vmatpush.bf16.msra.mxu0 0
    %3755 = vmatpush.bf16.msra.mxu0 0
    %3756 = vmatpush.bf16.msra.mxu0 0
    %3757 = vmatpush.bf16.msra.mxu0 0
    %3758 = vmatpush.bf16.msra.mxu0 %v1350
    %3759 = vmatmul.bf16.gmra.mxu0 %v3710
    %v3760 = vpop.f32.mrf.mxu0
    %v3761 = vadd.f32 %v3748, %v3760
    %v3762 = vpop.f32.mrf.mxu0
    %3763 = vdwg.mxu0
    %v3764 = vadd.f32 %v3700, %v3735
    %v3765 = vadd.f32 %v3701, %v3761
    %3766 = vmatpush.bf16.msra.mxu0 %v159
    %3767 = vmatpush.bf16.msra.mxu0 %v157
    %3768 = vmatpush.bf16.msra.mxu0 %v155
    %3769 = vmatpush.bf16.msra.mxu0 %v153
    %3770 = vmatpush.bf16.msra.mxu0 %v151
    %3771 = vmatpush.bf16.msra.mxu0 %v149
    %3772 = vmatpush.bf16.msra.mxu0 %v147
    %3773 = vmatpush.bf16.msra.mxu0 %v145
    %3774 = vmatmul.bf16.gmra.mxu0 %v3578
    %v3775 = vpop.f32.mrf.mxu0
    %v3776 = vadd.f32 0.0, %v3775
    %v3777 = vpop.f32.mrf.mxu0
    %3778 = vdwg.mxu0
    %3779 = vmatpush.bf16.msra.mxu0 0
    %3780 = vmatpush.bf16.msra.mxu0 0
    %3781 = vmatpush.bf16.msra.mxu0 0
    %3782 = vmatpush.bf16.msra.mxu0 0
    %3783 = vmatpush.bf16.msra.mxu0 0
    %3784 = vmatpush.bf16.msra.mxu0 0
    %3785 = vmatpush.bf16.msra.mxu0 0
    %3786 = vmatpush.bf16.msra.mxu0 %v161
    %3787 = vmatmul.bf16.gmra.mxu0 %v3582
    %v3788 = vpop.f32.mrf.mxu0
    %v3789 = vadd.f32 %v3776, %v3788
    %v3790 = vpop.f32.mrf.mxu0
    %3791 = vdwg.mxu0
    %3792 = vmatpush.bf16.msra.mxu0 %v160
    %3793 = vmatpush.bf16.msra.mxu0 %v158
    %3794 = vmatpush.bf16.msra.mxu0 %v156
    %3795 = vmatpush.bf16.msra.mxu0 %v154
    %3796 = vmatpush.bf16.msra.mxu0 %v152
    %3797 = vmatpush.bf16.msra.mxu0 %v150
    %3798 = vmatpush.bf16.msra.mxu0 %v148
    %3799 = vmatpush.bf16.msra.mxu0 %v146
    %3800 = vmatmul.bf16.gmra.mxu0 %v3578
    %v3801 = vpop.f32.mrf.mxu0
    %v3802 = vadd.f32 0.0, %v3801
    %v3803 = vpop.f32.mrf.mxu0
    %3804 = vdwg.mxu0
    %3805 = vmatpush.bf16.msra.mxu0 0
    %3806 = vmatpush.bf16.msra.mxu0 0
    %3807 = vmatpush.bf16.msra.mxu0 0
    %3808 = vmatpush.bf16.msra.mxu0 0
    %3809 = vmatpush.bf16.msra.mxu0 0
    %3810 = vmatpush.bf16.msra.mxu0 0
    %3811 = vmatpush.bf16.msra.mxu0 0
    %3812 = vmatpush.bf16.msra.mxu0 %v162
    %3813 = vmatmul.bf16.gmra.mxu0 %v3582
    %v3814 = vpop.f32.mrf.mxu0
    %v3815 = vadd.f32 %v3802, %v3814
    %v3816 = vpop.f32.mrf.mxu0
    %3817 = vdwg.mxu0
    %3818 = vmatpush.bf16.msra.mxu0 %v311
    %3819 = vmatpush.bf16.msra.mxu0 %v309
    %3820 = vmatpush.bf16.msra.mxu0 %v307
    %3821 = vmatpush.bf16.msra.mxu0 %v305
    %3822 = vmatpush.bf16.msra.mxu0 %v303
    %3823 = vmatpush.bf16.msra.mxu0 %v301
    %3824 = vmatpush.bf16.msra.mxu0 %v299
    %3825 = vmatpush.bf16.msra.mxu0 %v297
    %3826 = vmatmul.bf16.gmra.mxu0 %v3514
    %v3827 = vpop.f32.mrf.mxu0
    %v3828 = vadd.f32 %v3789, %v3827
    %v3829 = vpop.f32.mrf.mxu0
    %3830 = vdwg.mxu0
    %3831 = vmatpush.bf16.msra.mxu0 0
    %3832 = vmatpush.bf16.msra.mxu0 0
    %3833 = vmatpush.bf16.msra.mxu0 0
    %3834 = vmatpush.bf16.msra.mxu0 0
    %3835 = vmatpush.bf16.msra.mxu0 0
    %3836 = vmatpush.bf16.msra.mxu0 0
    %3837 = vmatpush.bf16.msra.mxu0 0
    %3838 = vmatpush.bf16.msra.mxu0 %v313
    %3839 = vmatmul.bf16.gmra.mxu0 %v3518
    %v3840 = vpop.f32.mrf.mxu0
    %v3841 = vadd.f32 %v3828, %v3840
    %v3842 = vpop.f32.mrf.mxu0
    %3843 = vdwg.mxu0
    %3844 = vmatpush.bf16.msra.mxu0 %v312
    %3845 = vmatpush.bf16.msra.mxu0 %v310
    %3846 = vmatpush.bf16.msra.mxu0 %v308
    %3847 = vmatpush.bf16.msra.mxu0 %v306
    %3848 = vmatpush.bf16.msra.mxu0 %v304
    %3849 = vmatpush.bf16.msra.mxu0 %v302
    %3850 = vmatpush.bf16.msra.mxu0 %v300
    %3851 = vmatpush.bf16.msra.mxu0 %v298
    %3852 = vmatmul.bf16.gmra.mxu0 %v3514
    %v3853 = vpop.f32.mrf.mxu0
    %v3854 = vadd.f32 %v3815, %v3853
    %v3855 = vpop.f32.mrf.mxu0
    %3856 = vdwg.mxu0
    %3857 = vmatpush.bf16.msra.mxu0 0
    %3858 = vmatpush.bf16.msra.mxu0 0
    %3859 = vmatpush.bf16.msra.mxu0 0
    %3860 = vmatpush.bf16.msra.mxu0 0
    %3861 = vmatpush.bf16.msra.mxu0 0
    %3862 = vmatpush.bf16.msra.mxu0 0
    %3863 = vmatpush.bf16.msra.mxu0 0
    %3864 = vmatpush.bf16.msra.mxu0 %v314
    %3865 = vmatmul.bf16.gmra.mxu0 %v3518
    %v3866 = vpop.f32.mrf.mxu0
    %v3867 = vadd.f32 %v3854, %v3866
    %v3868 = vpop.f32.mrf.mxu0
    %3869 = vdwg.mxu0
    %3870 = vmatpush.bf16.msra.mxu0 %v482
    %3871 = vmatpush.bf16.msra.mxu0 %v480
    %3872 = vmatpush.bf16.msra.mxu0 %v478
    %3873 = vmatpush.bf16.msra.mxu0 %v476
    %3874 = vmatpush.bf16.msra.mxu0 %v474
    %3875 = vmatpush.bf16.msra.mxu0 %v472
    %3876 = vmatpush.bf16.msra.mxu0 %v470
    %3877 = vmatpush.bf16.msra.mxu0 %v468
    %3878 = vmatmul.bf16.gmra.mxu0 %v3642
    %v3879 = vpop.f32.mrf.mxu0
    %v3880 = vadd.f32 0.0, %v3879
    %v3881 = vpop.f32.mrf.mxu0
    %3882 = vdwg.mxu0
    %3883 = vmatpush.bf16.msra.mxu0 0
    %3884 = vmatpush.bf16.msra.mxu0 0
    %3885 = vmatpush.bf16.msra.mxu0 0
    %3886 = vmatpush.bf16.msra.mxu0 0
    %3887 = vmatpush.bf16.msra.mxu0 0
    %3888 = vmatpush.bf16.msra.mxu0 0
    %3889 = vmatpush.bf16.msra.mxu0 0
    %3890 = vmatpush.bf16.msra.mxu0 %v484
    %3891 = vmatmul.bf16.gmra.mxu0 %v3646
    %v3892 = vpop.f32.mrf.mxu0
    %v3893 = vadd.f32 %v3880, %v3892
    %v3894 = vpop.f32.mrf.mxu0
    %3895 = vdwg.mxu0
    %3896 = vmatpush.bf16.msra.mxu0 %v483
    %3897 = vmatpush.bf16.msra.mxu0 %v481
    %3898 = vmatpush.bf16.msra.mxu0 %v479
    %3899 = vmatpush.bf16.msra.mxu0 %v477
    %3900 = vmatpush.bf16.msra.mxu0 %v475
    %3901 = vmatpush.bf16.msra.mxu0 %v473
    %3902 = vmatpush.bf16.msra.mxu0 %v471
    %3903 = vmatpush.bf16.msra.mxu0 %v469
    %3904 = vmatmul.bf16.gmra.mxu0 %v3642
    %v3905 = vpop.f32.mrf.mxu0
    %v3906 = vadd.f32 0.0, %v3905
    %v3907 = vpop.f32.mrf.mxu0
    %3908 = vdwg.mxu0
    %3909 = vmatpush.bf16.msra.mxu0 0
    %3910 = vmatpush.bf16.msra.mxu0 0
    %3911 = vmatpush.bf16.msra.mxu0 0
    %3912 = vmatpush.bf16.msra.mxu0 0
    %3913 = vmatpush.bf16.msra.mxu0 0
    %3914 = vmatpush.bf16.msra.mxu0 0
    %3915 = vmatpush.bf16.msra.mxu0 0
    %3916 = vmatpush.bf16.msra.mxu0 %v485
    %3917 = vmatmul.bf16.gmra.mxu0 %v3646
    %v3918 = vpop.f32.mrf.mxu0
    %v3919 = vadd.f32 %v3906, %v3918
    %v3920 = vpop.f32.mrf.mxu0
    %3921 = vdwg.mxu0
    %v3922 = vadd.f32 %v3841, %v3893
    %v3923 = vadd.f32 %v3867, %v3919
    %3924 = vmatpush.bf16.msra.mxu0 %v655
    %3925 = vmatpush.bf16.msra.mxu0 %v653
    %3926 = vmatpush.bf16.msra.mxu0 %v651
    %3927 = vmatpush.bf16.msra.mxu0 %v649
    %3928 = vmatpush.bf16.msra.mxu0 %v647
    %3929 = vmatpush.bf16.msra.mxu0 %v645
    %3930 = vmatpush.bf16.msra.mxu0 %v643
    %3931 = vmatpush.bf16.msra.mxu0 %v641
    %3932 = vmatmul.bf16.gmra.mxu0 %v3706
    %v3933 = vpop.f32.mrf.mxu0
    %v3934 = vadd.f32 0.0, %v3933
    %v3935 = vpop.f32.mrf.mxu0
    %3936 = vdwg.mxu0
    %3937 = vmatpush.bf16.msra.mxu0 0
    %3938 = vmatpush.bf16.msra.mxu0 0
    %3939 = vmatpush.bf16.msra.mxu0 0
    %3940 = vmatpush.bf16.msra.mxu0 0
    %3941 = vmatpush.bf16.msra.mxu0 0
    %3942 = vmatpush.bf16.msra.mxu0 0
    %3943 = vmatpush.bf16.msra.mxu0 0
    %3944 = vmatpush.bf16.msra.mxu0 %v657
    %3945 = vmatmul.bf16.gmra.mxu0 %v3710
    %v3946 = vpop.f32.mrf.mxu0
    %v3947 = vadd.f32 %v3934, %v3946
    %v3948 = vpop.f32.mrf.mxu0
    %3949 = vdwg.mxu0
    %3950 = vmatpush.bf16.msra.mxu0 %v656
    %3951 = vmatpush.bf16.msra.mxu0 %v654
    %3952 = vmatpush.bf16.msra.mxu0 %v652
    %3953 = vmatpush.bf16.msra.mxu0 %v650
    %3954 = vmatpush.bf16.msra.mxu0 %v648
    %3955 = vmatpush.bf16.msra.mxu0 %v646
    %3956 = vmatpush.bf16.msra.mxu0 %v644
    %3957 = vmatpush.bf16.msra.mxu0 %v642
    %3958 = vmatmul.bf16.gmra.mxu0 %v3706
    %v3959 = vpop.f32.mrf.mxu0
    %v3960 = vadd.f32 0.0, %v3959
    %v3961 = vpop.f32.mrf.mxu0
    %3962 = vdwg.mxu0
    %3963 = vmatpush.bf16.msra.mxu0 0
    %3964 = vmatpush.bf16.msra.mxu0 0
    %3965 = vmatpush.bf16.msra.mxu0 0
    %3966 = vmatpush.bf16.msra.mxu0 0
    %3967 = vmatpush.bf16.msra.mxu0 0
    %3968 = vmatpush.bf16.msra.mxu0 0
    %3969 = vmatpush.bf16.msra.mxu0 0
    %3970 = vmatpush.bf16.msra.mxu0 %v658
    %3971 = vmatmul.bf16.gmra.mxu0 %v3710
    %v3972 = vpop.f32.mrf.mxu0
    %v3973 = vadd.f32 %v3960, %v3972
    %v3974 = vpop.f32.mrf.mxu0
    %3975 = vdwg.mxu0
    %v3976 = vadd.f32 %v3922, %v3947
    %v3977 = vadd.f32 %v3923, %v3973
    %v3978 = vld [vmem:[%s0 + $0xe0] sm:$0xff]
    %v3980 = vunpack.c.l.b16 %v3978
    %v3981 = vunpack.c.h.b16 %v3978
    %v3982 = vpack.c.b16 %v3980, %v3980
    %v3983 = vpack.c.b16 %v3981, %v3981
    %v3986 = vsel %vm181, %v3983, 0
    %3988 = vmatpush.bf16.msra.mxu0 %v828
    %3989 = vmatpush.bf16.msra.mxu0 %v826
    %3990 = vmatpush.bf16.msra.mxu0 %v824
    %3991 = vmatpush.bf16.msra.mxu0 %v822
    %3992 = vmatpush.bf16.msra.mxu0 %v820
    %3993 = vmatpush.bf16.msra.mxu0 %v818
    %3994 = vmatpush.bf16.msra.mxu0 %v816
    %3995 = vmatpush.bf16.msra.mxu0 %v814
    %3996 = vmatmul.bf16.gmra.mxu0 %v3982
    %v3997 = vpop.f32.mrf.mxu0
    %v3998 = vadd.f32 0.0, %v3997
    %v3999 = vpop.f32.mrf.mxu0
    %4000 = vdwg.mxu0
    %4001 = vmatpush.bf16.msra.mxu0 0
    %4002 = vmatpush.bf16.msra.mxu0 0
    %4003 = vmatpush.bf16.msra.mxu0 0
    %4004 = vmatpush.bf16.msra.mxu0 0
    %4005 = vmatpush.bf16.msra.mxu0 0
    %4006 = vmatpush.bf16.msra.mxu0 0
    %4007 = vmatpush.bf16.msra.mxu0 0
    %4008 = vmatpush.bf16.msra.mxu0 %v830
    %4009 = vmatmul.bf16.gmra.mxu0 %v3986
    %v4010 = vpop.f32.mrf.mxu0
    %v4011 = vadd.f32 %v3998, %v4010
    %v4012 = vpop.f32.mrf.mxu0
    %4013 = vdwg.mxu0
    %4014 = vmatpush.bf16.msra.mxu0 %v829
    %4015 = vmatpush.bf16.msra.mxu0 %v827
    %4016 = vmatpush.bf16.msra.mxu0 %v825
    %4017 = vmatpush.bf16.msra.mxu0 %v823
    %4018 = vmatpush.bf16.msra.mxu0 %v821
    %4019 = vmatpush.bf16.msra.mxu0 %v819
    %4020 = vmatpush.bf16.msra.mxu0 %v817
    %4021 = vmatpush.bf16.msra.mxu0 %v815
    %4022 = vmatmul.bf16.gmra.mxu0 %v3982
    %v4023 = vpop.f32.mrf.mxu0
    %v4024 = vadd.f32 0.0, %v4023
    %v4025 = vpop.f32.mrf.mxu0
    %4026 = vdwg.mxu0
    %4027 = vmatpush.bf16.msra.mxu0 0
    %4028 = vmatpush.bf16.msra.mxu0 0
    %4029 = vmatpush.bf16.msra.mxu0 0
    %4030 = vmatpush.bf16.msra.mxu0 0
    %4031 = vmatpush.bf16.msra.mxu0 0
    %4032 = vmatpush.bf16.msra.mxu0 0
    %4033 = vmatpush.bf16.msra.mxu0 0
    %4034 = vmatpush.bf16.msra.mxu0 %v831
    %4035 = vmatmul.bf16.gmra.mxu0 %v3986
    %v4036 = vpop.f32.mrf.mxu0
    %v4037 = vadd.f32 %v4024, %v4036
    %v4038 = vpop.f32.mrf.mxu0
    %4039 = vdwg.mxu0
    %v4040 = vadd.f32 %v3976, %v4011
    %v4041 = vadd.f32 %v3977, %v4037
    %v4042 = vld [vmem:[%s0 + $0xe8] sm:$0xff]
    %v4044 = vunpack.c.l.b16 %v4042
    %v4045 = vunpack.c.h.b16 %v4042
    %v4046 = vpack.c.b16 %v4044, %v4044
    %v4047 = vpack.c.b16 %v4045, %v4045
    %v4050 = vsel %vm181, %v4047, 0
    %4052 = vmatpush.bf16.msra.mxu0 %v1001
    %4053 = vmatpush.bf16.msra.mxu0 %v999
    %4054 = vmatpush.bf16.msra.mxu0 %v997
    %4055 = vmatpush.bf16.msra.mxu0 %v995
    %4056 = vmatpush.bf16.msra.mxu0 %v993
    %4057 = vmatpush.bf16.msra.mxu0 %v991
    %4058 = vmatpush.bf16.msra.mxu0 %v989
    %4059 = vmatpush.bf16.msra.mxu0 %v987
    %4060 = vmatmul.bf16.gmra.mxu0 %v4046
    %v4061 = vpop.f32.mrf.mxu0
    %v4062 = vadd.f32 0.0, %v4061
    %v4063 = vpop.f32.mrf.mxu0
    %4064 = vdwg.mxu0
    %4065 = vmatpush.bf16.msra.mxu0 0
    %4066 = vmatpush.bf16.msra.mxu0 0
    %4067 = vmatpush.bf16.msra.mxu0 0
    %4068 = vmatpush.bf16.msra.mxu0 0
    %4069 = vmatpush.bf16.msra.mxu0 0
    %4070 = vmatpush.bf16.msra.mxu0 0
    %4071 = vmatpush.bf16.msra.mxu0 0
    %4072 = vmatpush.bf16.msra.mxu0 %v1003
    %4073 = vmatmul.bf16.gmra.mxu0 %v4050
    %v4074 = vpop.f32.mrf.mxu0
    %v4075 = vadd.f32 %v4062, %v4074
    %v4076 = vpop.f32.mrf.mxu0
    %4077 = vdwg.mxu0
    %4078 = vmatpush.bf16.msra.mxu0 %v1002
    %4079 = vmatpush.bf16.msra.mxu0 %v1000
    %4080 = vmatpush.bf16.msra.mxu0 %v998
    %4081 = vmatpush.bf16.msra.mxu0 %v996
    %4082 = vmatpush.bf16.msra.mxu0 %v994
    %4083 = vmatpush.bf16.msra.mxu0 %v992
    %4084 = vmatpush.bf16.msra.mxu0 %v990
    %4085 = vmatpush.bf16.msra.mxu0 %v988
    %4086 = vmatmul.bf16.gmra.mxu0 %v4046
    %v4087 = vpop.f32.mrf.mxu0
    %v4088 = vadd.f32 0.0, %v4087
    %v4089 = vpop.f32.mrf.mxu0
    %4090 = vdwg.mxu0
    %4091 = vmatpush.bf16.msra.mxu0 0
    %4092 = vmatpush.bf16.msra.mxu0 0
    %4093 = vmatpush.bf16.msra.mxu0 0
    %4094 = vmatpush.bf16.msra.mxu0 0
    %4095 = vmatpush.bf16.msra.mxu0 0
    %4096 = vmatpush.bf16.msra.mxu0 0
    %4097 = vmatpush.bf16.msra.mxu0 0
    %4098 = vmatpush.bf16.msra.mxu0 %v1004
    %4099 = vmatmul.bf16.gmra.mxu0 %v4050
    %v4100 = vpop.f32.mrf.mxu0
    %v4101 = vadd.f32 %v4088, %v4100
    %v4102 = vpop.f32.mrf.mxu0
    %4103 = vdwg.mxu0
    %v4104 = vadd.f32 %v4040, %v4075
    %v4105 = vadd.f32 %v4041, %v4101
    %v4106 = vld [vmem:[%s0 + $0xf0] sm:$0xff]
    %v4108 = vunpack.c.l.b16 %v4106
    %v4109 = vunpack.c.h.b16 %v4106
    %v4110 = vpack.c.b16 %v4108, %v4108
    %v4111 = vpack.c.b16 %v4109, %v4109
    %v4114 = vsel %vm181, %v4111, 0
    %4116 = vmatpush.bf16.msra.mxu0 %v1174
    %4117 = vmatpush.bf16.msra.mxu0 %v1172
    %4118 = vmatpush.bf16.msra.mxu0 %v1170
    %4119 = vmatpush.bf16.msra.mxu0 %v1168
    %4120 = vmatpush.bf16.msra.mxu0 %v1166
    %4121 = vmatpush.bf16.msra.mxu0 %v1164
    %4122 = vmatpush.bf16.msra.mxu0 %v1162
    %4123 = vmatpush.bf16.msra.mxu0 %v1160
    %4124 = vmatmul.bf16.gmra.mxu0 %v4110
    %v4125 = vpop.f32.mrf.mxu0
    %v4126 = vadd.f32 0.0, %v4125
    %v4127 = vpop.f32.mrf.mxu0
    %4128 = vdwg.mxu0
    %4129 = vmatpush.bf16.msra.mxu0 0
    %4130 = vmatpush.bf16.msra.mxu0 0
    %4131 = vmatpush.bf16.msra.mxu0 0
    %4132 = vmatpush.bf16.msra.mxu0 0
    %4133 = vmatpush.bf16.msra.mxu0 0
    %4134 = vmatpush.bf16.msra.mxu0 0
    %4135 = vmatpush.bf16.msra.mxu0 0
    %4136 = vmatpush.bf16.msra.mxu0 %v1176
    %4137 = vmatmul.bf16.gmra.mxu0 %v4114
    %v4138 = vpop.f32.mrf.mxu0
    %v4139 = vadd.f32 %v4126, %v4138
    %v4140 = vpop.f32.mrf.mxu0
    %4141 = vdwg.mxu0
    %4142 = vmatpush.bf16.msra.mxu0 %v1175
    %4143 = vmatpush.bf16.msra.mxu0 %v1173
    %4144 = vmatpush.bf16.msra.mxu0 %v1171
    %4145 = vmatpush.bf16.msra.mxu0 %v1169
    %4146 = vmatpush.bf16.msra.mxu0 %v1167
    %4147 = vmatpush.bf16.msra.mxu0 %v1165
    %4148 = vmatpush.bf16.msra.mxu0 %v1163
    %4149 = vmatpush.bf16.msra.mxu0 %v1161
    %4150 = vmatmul.bf16.gmra.mxu0 %v4110
    %v4151 = vpop.f32.mrf.mxu0
    %v4152 = vadd.f32 0.0, %v4151
    %v4153 = vpop.f32.mrf.mxu0
    %4154 = vdwg.mxu0
    %4155 = vmatpush.bf16.msra.mxu0 0
    %4156 = vmatpush.bf16.msra.mxu0 0
    %4157 = vmatpush.bf16.msra.mxu0 0
    %4158 = vmatpush.bf16.msra.mxu0 0
    %4159 = vmatpush.bf16.msra.mxu0 0
    %4160 = vmatpush.bf16.msra.mxu0 0
    %4161 = vmatpush.bf16.msra.mxu0 0
    %4162 = vmatpush.bf16.msra.mxu0 %v1177
    %4163 = vmatmul.bf16.gmra.mxu0 %v4114
    %v4164 = vpop.f32.mrf.mxu0
    %v4165 = vadd.f32 %v4152, %v4164
    %v4166 = vpop.f32.mrf.mxu0
    %4167 = vdwg.mxu0
    %v4168 = vadd.f32 %v4104, %v4139
    %v4169 = vadd.f32 %v4105, %v4165
    %v4170 = vld [vmem:[%s0 + $0xf8] sm:$0xff]
    %v4172 = vunpack.c.l.b16 %v4170
    %v4173 = vunpack.c.h.b16 %v4170
    %v4174 = vpack.c.b16 %v4172, %v4172
    %v4175 = vpack.c.b16 %v4173, %v4173
    %v4178 = vsel %vm181, %v4175, 0
    %4180 = vmatpush.bf16.msra.mxu0 %v1347
    %4181 = vmatpush.bf16.msra.mxu0 %v1345
    %4182 = vmatpush.bf16.msra.mxu0 %v1343
    %4183 = vmatpush.bf16.msra.mxu0 %v1341
    %4184 = vmatpush.bf16.msra.mxu0 %v1339
    %4185 = vmatpush.bf16.msra.mxu0 %v1337
    %4186 = vmatpush.bf16.msra.mxu0 %v1335
    %4187 = vmatpush.bf16.msra.mxu0 %v1333
    %4188 = vmatmul.bf16.gmra.mxu0 %v4174
    %v4189 = vpop.f32.mrf.mxu0
    %v4190 = vadd.f32 0.0, %v4189
    %v4191 = vpop.f32.mrf.mxu0
    %4192 = vdwg.mxu0
    %4193 = vmatpush.bf16.msra.mxu0 0
    %4194 = vmatpush.bf16.msra.mxu0 0
    %4195 = vmatpush.bf16.msra.mxu0 0
    %4196 = vmatpush.bf16.msra.mxu0 0
    %4197 = vmatpush.bf16.msra.mxu0 0
    %4198 = vmatpush.bf16.msra.mxu0 0
    %4199 = vmatpush.bf16.msra.mxu0 0
    %4200 = vmatpush.bf16.msra.mxu0 %v1349
    %4201 = vmatmul.bf16.gmra.mxu0 %v4178
    %v4202 = vpop.f32.mrf.mxu0
    %v4203 = vadd.f32 %v4190, %v4202
    %v4204 = vpop.f32.mrf.mxu0
    %4205 = vdwg.mxu0
    %4206 = vmatpush.bf16.msra.mxu0 %v1348
    %4207 = vmatpush.bf16.msra.mxu0 %v1346
    %4208 = vmatpush.bf16.msra.mxu0 %v1344
    %4209 = vmatpush.bf16.msra.mxu0 %v1342
    %4210 = vmatpush.bf16.msra.mxu0 %v1340
    %4211 = vmatpush.bf16.msra.mxu0 %v1338
    %4212 = vmatpush.bf16.msra.mxu0 %v1336
    %4213 = vmatpush.bf16.msra.mxu0 %v1334
    %4214 = vmatmul.bf16.gmra.mxu0 %v4174
    %v4215 = vpop.f32.mrf.mxu0
    %v4216 = vadd.f32 0.0, %v4215
    %v4217 = vpop.f32.mrf.mxu0
    %4218 = vdwg.mxu0
    %4219 = vmatpush.bf16.msra.mxu0 0
    %4220 = vmatpush.bf16.msra.mxu0 0
    %4221 = vmatpush.bf16.msra.mxu0 0
    %4222 = vmatpush.bf16.msra.mxu0 0
    %4223 = vmatpush.bf16.msra.mxu0 0
    %4224 = vmatpush.bf16.msra.mxu0 0
    %4225 = vmatpush.bf16.msra.mxu0 0
    %4226 = vmatpush.bf16.msra.mxu0 %v1350
    %4227 = vmatmul.bf16.gmra.mxu0 %v4178
    %v4228 = vpop.f32.mrf.mxu0
    %v4229 = vadd.f32 %v4216, %v4228
    %v4230 = vpop.f32.mrf.mxu0
    %4231 = vdwg.mxu0
    %v4232 = vadd.f32 %v4168, %v4203
    %v4233 = vadd.f32 %v4169, %v4229
    %4234 = vmatpush.bf16.msra.mxu0 %v159
    %4235 = vmatpush.bf16.msra.mxu0 %v157
    %4236 = vmatpush.bf16.msra.mxu0 %v155
    %4237 = vmatpush.bf16.msra.mxu0 %v153
    %4238 = vmatpush.bf16.msra.mxu0 %v151
    %4239 = vmatpush.bf16.msra.mxu0 %v149
    %4240 = vmatpush.bf16.msra.mxu0 %v147
    %4241 = vmatpush.bf16.msra.mxu0 %v145
    %4242 = vmatmul.bf16.gmra.mxu0 %v4046
    %v4243 = vpop.f32.mrf.mxu0
    %v4244 = vadd.f32 0.0, %v4243
    %v4245 = vpop.f32.mrf.mxu0
    %4246 = vdwg.mxu0
    %4247 = vmatpush.bf16.msra.mxu0 0
    %4248 = vmatpush.bf16.msra.mxu0 0
    %4249 = vmatpush.bf16.msra.mxu0 0
    %4250 = vmatpush.bf16.msra.mxu0 0
    %4251 = vmatpush.bf16.msra.mxu0 0
    %4252 = vmatpush.bf16.msra.mxu0 0
    %4253 = vmatpush.bf16.msra.mxu0 0
    %4254 = vmatpush.bf16.msra.mxu0 %v161
    %4255 = vmatmul.bf16.gmra.mxu0 %v4050
    %v4256 = vpop.f32.mrf.mxu0
    %v4257 = vadd.f32 %v4244, %v4256
    %v4258 = vpop.f32.mrf.mxu0
    %4259 = vdwg.mxu0
    %4260 = vmatpush.bf16.msra.mxu0 %v160
    %4261 = vmatpush.bf16.msra.mxu0 %v158
    %4262 = vmatpush.bf16.msra.mxu0 %v156
    %4263 = vmatpush.bf16.msra.mxu0 %v154
    %4264 = vmatpush.bf16.msra.mxu0 %v152
    %4265 = vmatpush.bf16.msra.mxu0 %v150
    %4266 = vmatpush.bf16.msra.mxu0 %v148
    %4267 = vmatpush.bf16.msra.mxu0 %v146
    %4268 = vmatmul.bf16.gmra.mxu0 %v4046
    %v4269 = vpop.f32.mrf.mxu0
    %v4270 = vadd.f32 0.0, %v4269
    %v4271 = vpop.f32.mrf.mxu0
    %4272 = vdwg.mxu0
    %4273 = vmatpush.bf16.msra.mxu0 0
    %4274 = vmatpush.bf16.msra.mxu0 0
    %4275 = vmatpush.bf16.msra.mxu0 0
    %4276 = vmatpush.bf16.msra.mxu0 0
    %4277 = vmatpush.bf16.msra.mxu0 0
    %4278 = vmatpush.bf16.msra.mxu0 0
    %4279 = vmatpush.bf16.msra.mxu0 0
    %4280 = vmatpush.bf16.msra.mxu0 %v162
    %4281 = vmatmul.bf16.gmra.mxu0 %v4050
    %v4282 = vpop.f32.mrf.mxu0
    %v4283 = vadd.f32 %v4270, %v4282
    %v4284 = vpop.f32.mrf.mxu0
    %4285 = vdwg.mxu0
    %4286 = vmatpush.bf16.msra.mxu0 %v311
    %4287 = vmatpush.bf16.msra.mxu0 %v309
    %4288 = vmatpush.bf16.msra.mxu0 %v307
    %4289 = vmatpush.bf16.msra.mxu0 %v305
    %4290 = vmatpush.bf16.msra.mxu0 %v303
    %4291 = vmatpush.bf16.msra.mxu0 %v301
    %4292 = vmatpush.bf16.msra.mxu0 %v299
    %4293 = vmatpush.bf16.msra.mxu0 %v297
    %4294 = vmatmul.bf16.gmra.mxu0 %v3982
    %v4295 = vpop.f32.mrf.mxu0
    %v4296 = vadd.f32 %v4257, %v4295
    %v4297 = vpop.f32.mrf.mxu0
    %4298 = vdwg.mxu0
    %4299 = vmatpush.bf16.msra.mxu0 0
    %4300 = vmatpush.bf16.msra.mxu0 0
    %4301 = vmatpush.bf16.msra.mxu0 0
    %4302 = vmatpush.bf16.msra.mxu0 0
    %4303 = vmatpush.bf16.msra.mxu0 0
    %4304 = vmatpush.bf16.msra.mxu0 0
    %4305 = vmatpush.bf16.msra.mxu0 0
    %4306 = vmatpush.bf16.msra.mxu0 %v313
    %4307 = vmatmul.bf16.gmra.mxu0 %v3986
    %v4308 = vpop.f32.mrf.mxu0
    %v4309 = vadd.f32 %v4296, %v4308
    %v4310 = vpop.f32.mrf.mxu0
    %4311 = vdwg.mxu0
    %4312 = vmatpush.bf16.msra.mxu0 %v312
    %4313 = vmatpush.bf16.msra.mxu0 %v310
    %4314 = vmatpush.bf16.msra.mxu0 %v308
    %4315 = vmatpush.bf16.msra.mxu0 %v306
    %4316 = vmatpush.bf16.msra.mxu0 %v304
    %4317 = vmatpush.bf16.msra.mxu0 %v302
    %4318 = vmatpush.bf16.msra.mxu0 %v300
    %4319 = vmatpush.bf16.msra.mxu0 %v298
    %4320 = vmatmul.bf16.gmra.mxu0 %v3982
    %v4321 = vpop.f32.mrf.mxu0
    %v4322 = vadd.f32 %v4283, %v4321
    %v4323 = vpop.f32.mrf.mxu0
    %4324 = vdwg.mxu0
    %4325 = vmatpush.bf16.msra.mxu0 0
    %4326 = vmatpush.bf16.msra.mxu0 0
    %4327 = vmatpush.bf16.msra.mxu0 0
    %4328 = vmatpush.bf16.msra.mxu0 0
    %4329 = vmatpush.bf16.msra.mxu0 0
    %4330 = vmatpush.bf16.msra.mxu0 0
    %4331 = vmatpush.bf16.msra.mxu0 0
    %4332 = vmatpush.bf16.msra.mxu0 %v314
    %4333 = vmatmul.bf16.gmra.mxu0 %v3986
    %v4334 = vpop.f32.mrf.mxu0
    %v4335 = vadd.f32 %v4322, %v4334
    %v4336 = vpop.f32.mrf.mxu0
    %4337 = vdwg.mxu0
    %4338 = vmatpush.bf16.msra.mxu0 %v482
    %4339 = vmatpush.bf16.msra.mxu0 %v480
    %4340 = vmatpush.bf16.msra.mxu0 %v478
    %4341 = vmatpush.bf16.msra.mxu0 %v476
    %4342 = vmatpush.bf16.msra.mxu0 %v474
    %4343 = vmatpush.bf16.msra.mxu0 %v472
    %4344 = vmatpush.bf16.msra.mxu0 %v470
    %4345 = vmatpush.bf16.msra.mxu0 %v468
    %4346 = vmatmul.bf16.gmra.mxu0 %v4110
    %v4347 = vpop.f32.mrf.mxu0
    %v4348 = vadd.f32 0.0, %v4347
    %v4349 = vpop.f32.mrf.mxu0
    %4350 = vdwg.mxu0
    %4351 = vmatpush.bf16.msra.mxu0 0
    %4352 = vmatpush.bf16.msra.mxu0 0
    %4353 = vmatpush.bf16.msra.mxu0 0
    %4354 = vmatpush.bf16.msra.mxu0 0
    %4355 = vmatpush.bf16.msra.mxu0 0
    %4356 = vmatpush.bf16.msra.mxu0 0
    %4357 = vmatpush.bf16.msra.mxu0 0
    %4358 = vmatpush.bf16.msra.mxu0 %v484
    %4359 = vmatmul.bf16.gmra.mxu0 %v4114
    %v4360 = vpop.f32.mrf.mxu0
    %v4361 = vadd.f32 %v4348, %v4360
    %v4362 = vpop.f32.mrf.mxu0
    %4363 = vdwg.mxu0
    %4364 = vmatpush.bf16.msra.mxu0 %v483
    %4365 = vmatpush.bf16.msra.mxu0 %v481
    %4366 = vmatpush.bf16.msra.mxu0 %v479
    %4367 = vmatpush.bf16.msra.mxu0 %v477
    %4368 = vmatpush.bf16.msra.mxu0 %v475
    %4369 = vmatpush.bf16.msra.mxu0 %v473
    %4370 = vmatpush.bf16.msra.mxu0 %v471
    %4371 = vmatpush.bf16.msra.mxu0 %v469
    %4372 = vmatmul.bf16.gmra.mxu0 %v4110
    %v4373 = vpop.f32.mrf.mxu0
    %v4374 = vadd.f32 0.0, %v4373
    %v4375 = vpop.f32.mrf.mxu0
    %4376 = vdwg.mxu0
    %4377 = vmatpush.bf16.msra.mxu0 0
    %4378 = vmatpush.bf16.msra.mxu0 0
    %4379 = vmatpush.bf16.msra.mxu0 0
    %4380 = vmatpush.bf16.msra.mxu0 0
    %4381 = vmatpush.bf16.msra.mxu0 0
    %4382 = vmatpush.bf16.msra.mxu0 0
    %4383 = vmatpush.bf16.msra.mxu0 0
    %4384 = vmatpush.bf16.msra.mxu0 %v485
    %4385 = vmatmul.bf16.gmra.mxu0 %v4114
    %v4386 = vpop.f32.mrf.mxu0
    %v4387 = vadd.f32 %v4374, %v4386
    %v4388 = vpop.f32.mrf.mxu0
    %4389 = vdwg.mxu0
    %v4390 = vadd.f32 %v4309, %v4361
    %v4391 = vadd.f32 %v4335, %v4387
    %4392 = vmatpush.bf16.msra.mxu0 %v655
    %4393 = vmatpush.bf16.msra.mxu0 %v653
    %4394 = vmatpush.bf16.msra.mxu0 %v651
    %4395 = vmatpush.bf16.msra.mxu0 %v649
    %4396 = vmatpush.bf16.msra.mxu0 %v647
    %4397 = vmatpush.bf16.msra.mxu0 %v645
    %4398 = vmatpush.bf16.msra.mxu0 %v643
    %4399 = vmatpush.bf16.msra.mxu0 %v641
    %4400 = vmatmul.bf16.gmra.mxu0 %v4174
    %v4401 = vpop.f32.mrf.mxu0
    %v4402 = vadd.f32 0.0, %v4401
    %v4403 = vpop.f32.mrf.mxu0
    %4404 = vdwg.mxu0
    %4405 = vmatpush.bf16.msra.mxu0 0
    %4406 = vmatpush.bf16.msra.mxu0 0
    %4407 = vmatpush.bf16.msra.mxu0 0
    %4408 = vmatpush.bf16.msra.mxu0 0
    %4409 = vmatpush.bf16.msra.mxu0 0
    %4410 = vmatpush.bf16.msra.mxu0 0
    %4411 = vmatpush.bf16.msra.mxu0 0
    %4412 = vmatpush.bf16.msra.mxu0 %v657
    %4413 = vmatmul.bf16.gmra.mxu0 %v4178
    %v4414 = vpop.f32.mrf.mxu0
    %v4415 = vadd.f32 %v4402, %v4414
    %v4416 = vpop.f32.mrf.mxu0
    %4417 = vdwg.mxu0
    %4418 = vmatpush.bf16.msra.mxu0 %v656
    %4419 = vmatpush.bf16.msra.mxu0 %v654
    %4420 = vmatpush.bf16.msra.mxu0 %v652
    %4421 = vmatpush.bf16.msra.mxu0 %v650
    %4422 = vmatpush.bf16.msra.mxu0 %v648
    %4423 = vmatpush.bf16.msra.mxu0 %v646
    %4424 = vmatpush.bf16.msra.mxu0 %v644
    %4425 = vmatpush.bf16.msra.mxu0 %v642
    %4426 = vmatmul.bf16.gmra.mxu0 %v4174
    %v4427 = vpop.f32.mrf.mxu0
    %v4428 = vadd.f32 0.0, %v4427
    %v4429 = vpop.f32.mrf.mxu0
    %4430 = vdwg.mxu0
    %4431 = vmatpush.bf16.msra.mxu0 0
    %4432 = vmatpush.bf16.msra.mxu0 0
    %4433 = vmatpush.bf16.msra.mxu0 0
    %4434 = vmatpush.bf16.msra.mxu0 0
    %4435 = vmatpush.bf16.msra.mxu0 0
    %4436 = vmatpush.bf16.msra.mxu0 0
    %4437 = vmatpush.bf16.msra.mxu0 0
    %4438 = vmatpush.bf16.msra.mxu0 %v658
    %4439 = vmatmul.bf16.gmra.mxu0 %v4178
    %v4440 = vpop.f32.mrf.mxu0
    %v4441 = vadd.f32 %v4428, %v4440
    %v4442 = vpop.f32.mrf.mxu0
    %4443 = vdwg.mxu0
    %v4444 = vadd.f32 %v4390, %v4415
    %v4445 = vadd.f32 %v4391, %v4441
    %v4446 = vld [vmem:[%s0 + $0x100] sm:$0xff]
    %v4448 = vunpack.c.l.b16 %v4446
    %v4449 = vunpack.c.h.b16 %v4446
    %v4450 = vpack.c.b16 %v4448, %v4448
    %v4451 = vpack.c.b16 %v4449, %v4449
    %v4454 = vsel %vm181, %v4451, 0
    %4456 = vmatpush.bf16.msra.mxu0 %v828
    %4457 = vmatpush.bf16.msra.mxu0 %v826
    %4458 = vmatpush.bf16.msra.mxu0 %v824
    %4459 = vmatpush.bf16.msra.mxu0 %v822
    %4460 = vmatpush.bf16.msra.mxu0 %v820
    %4461 = vmatpush.bf16.msra.mxu0 %v818
    %4462 = vmatpush.bf16.msra.mxu0 %v816
    %4463 = vmatpush.bf16.msra.mxu0 %v814
    %4464 = vmatmul.bf16.gmra.mxu0 %v4450
    %v4465 = vpop.f32.mrf.mxu0
    %v4466 = vadd.f32 0.0, %v4465
    %v4467 = vpop.f32.mrf.mxu0
    %4468 = vdwg.mxu0
    %4469 = vmatpush.bf16.msra.mxu0 0
    %4470 = vmatpush.bf16.msra.mxu0 0
    %4471 = vmatpush.bf16.msra.mxu0 0
    %4472 = vmatpush.bf16.msra.mxu0 0
    %4473 = vmatpush.bf16.msra.mxu0 0
    %4474 = vmatpush.bf16.msra.mxu0 0
    %4475 = vmatpush.bf16.msra.mxu0 0
    %4476 = vmatpush.bf16.msra.mxu0 %v830
    %4477 = vmatmul.bf16.gmra.mxu0 %v4454
    %v4478 = vpop.f32.mrf.mxu0
    %v4479 = vadd.f32 %v4466, %v4478
    %v4480 = vpop.f32.mrf.mxu0
    %4481 = vdwg.mxu0
    %4482 = vmatpush.bf16.msra.mxu0 %v829
    %4483 = vmatpush.bf16.msra.mxu0 %v827
    %4484 = vmatpush.bf16.msra.mxu0 %v825
    %4485 = vmatpush.bf16.msra.mxu0 %v823
    %4486 = vmatpush.bf16.msra.mxu0 %v821
    %4487 = vmatpush.bf16.msra.mxu0 %v819
    %4488 = vmatpush.bf16.msra.mxu0 %v817
    %4489 = vmatpush.bf16.msra.mxu0 %v815
    %4490 = vmatmul.bf16.gmra.mxu0 %v4450
    %v4491 = vpop.f32.mrf.mxu0
    %v4492 = vadd.f32 0.0, %v4491
    %v4493 = vpop.f32.mrf.mxu0
    %4494 = vdwg.mxu0
    %4495 = vmatpush.bf16.msra.mxu0 0
    %4496 = vmatpush.bf16.msra.mxu0 0
    %4497 = vmatpush.bf16.msra.mxu0 0
    %4498 = vmatpush.bf16.msra.mxu0 0
    %4499 = vmatpush.bf16.msra.mxu0 0
    %4500 = vmatpush.bf16.msra.mxu0 0
    %4501 = vmatpush.bf16.msra.mxu0 0
    %4502 = vmatpush.bf16.msra.mxu0 %v831
    %4503 = vmatmul.bf16.gmra.mxu0 %v4454
    %v4504 = vpop.f32.mrf.mxu0
    %v4505 = vadd.f32 %v4492, %v4504
    %v4506 = vpop.f32.mrf.mxu0
    %4507 = vdwg.mxu0
    %v4508 = vadd.f32 %v4444, %v4479
    %v4509 = vadd.f32 %v4445, %v4505
    %v4510 = vld [vmem:[%s0 + $0x108] sm:$0xff]
    %v4512 = vunpack.c.l.b16 %v4510
    %v4513 = vunpack.c.h.b16 %v4510
    %v4514 = vpack.c.b16 %v4512, %v4512
    %v4515 = vpack.c.b16 %v4513, %v4513
    %v4518 = vsel %vm181, %v4515, 0
    %4520 = vmatpush.bf16.msra.mxu0 %v1001
    %4521 = vmatpush.bf16.msra.mxu0 %v999
    %4522 = vmatpush.bf16.msra.mxu0 %v997
    %4523 = vmatpush.bf16.msra.mxu0 %v995
    %4524 = vmatpush.bf16.msra.mxu0 %v993
    %4525 = vmatpush.bf16.msra.mxu0 %v991
    %4526 = vmatpush.bf16.msra.mxu0 %v989
    %4527 = vmatpush.bf16.msra.mxu0 %v987
    %4528 = vmatmul.bf16.gmra.mxu0 %v4514
    %v4529 = vpop.f32.mrf.mxu0
    %v4530 = vadd.f32 0.0, %v4529
    %v4531 = vpop.f32.mrf.mxu0
    %4532 = vdwg.mxu0
    %4533 = vmatpush.bf16.msra.mxu0 0
    %4534 = vmatpush.bf16.msra.mxu0 0
    %4535 = vmatpush.bf16.msra.mxu0 0
    %4536 = vmatpush.bf16.msra.mxu0 0
    %4537 = vmatpush.bf16.msra.mxu0 0
    %4538 = vmatpush.bf16.msra.mxu0 0
    %4539 = vmatpush.bf16.msra.mxu0 0
    %4540 = vmatpush.bf16.msra.mxu0 %v1003
    %4541 = vmatmul.bf16.gmra.mxu0 %v4518
    %v4542 = vpop.f32.mrf.mxu0
    %v4543 = vadd.f32 %v4530, %v4542
    %v4544 = vpop.f32.mrf.mxu0
    %4545 = vdwg.mxu0
    %4546 = vmatpush.bf16.msra.mxu0 %v1002
    %4547 = vmatpush.bf16.msra.mxu0 %v1000
    %4548 = vmatpush.bf16.msra.mxu0 %v998
    %4549 = vmatpush.bf16.msra.mxu0 %v996
    %4550 = vmatpush.bf16.msra.mxu0 %v994
    %4551 = vmatpush.bf16.msra.mxu0 %v992
    %4552 = vmatpush.bf16.msra.mxu0 %v990
    %4553 = vmatpush.bf16.msra.mxu0 %v988
    %4554 = vmatmul.bf16.gmra.mxu0 %v4514
    %v4555 = vpop.f32.mrf.mxu0
    %v4556 = vadd.f32 0.0, %v4555
    %v4557 = vpop.f32.mrf.mxu0
    %4558 = vdwg.mxu0
    %4559 = vmatpush.bf16.msra.mxu0 0
    %4560 = vmatpush.bf16.msra.mxu0 0
    %4561 = vmatpush.bf16.msra.mxu0 0
    %4562 = vmatpush.bf16.msra.mxu0 0
    %4563 = vmatpush.bf16.msra.mxu0 0
    %4564 = vmatpush.bf16.msra.mxu0 0
    %4565 = vmatpush.bf16.msra.mxu0 0
    %4566 = vmatpush.bf16.msra.mxu0 %v1004
    %4567 = vmatmul.bf16.gmra.mxu0 %v4518
    %v4568 = vpop.f32.mrf.mxu0
    %v4569 = vadd.f32 %v4556, %v4568
    %v4570 = vpop.f32.mrf.mxu0
    %4571 = vdwg.mxu0
    %v4572 = vadd.f32 %v4508, %v4543
    %v4573 = vadd.f32 %v4509, %v4569
    %v4574 = vld [vmem:[%s0 + $0x110] sm:$0xff]
    %v4576 = vunpack.c.l.b16 %v4574
    %v4577 = vunpack.c.h.b16 %v4574
    %v4578 = vpack.c.b16 %v4576, %v4576
    %v4579 = vpack.c.b16 %v4577, %v4577
    %v4582 = vsel %vm181, %v4579, 0
    %4584 = vmatpush.bf16.msra.mxu0 %v1174
    %4585 = vmatpush.bf16.msra.mxu0 %v1172
    %4586 = vmatpush.bf16.msra.mxu0 %v1170
    %4587 = vmatpush.bf16.msra.mxu0 %v1168
    %4588 = vmatpush.bf16.msra.mxu0 %v1166
    %4589 = vmatpush.bf16.msra.mxu0 %v1164
    %4590 = vmatpush.bf16.msra.mxu0 %v1162
    %4591 = vmatpush.bf16.msra.mxu0 %v1160
    %4592 = vmatmul.bf16.gmra.mxu0 %v4578
    %v4593 = vpop.f32.mrf.mxu0
    %v4594 = vadd.f32 0.0, %v4593
    %v4595 = vpop.f32.mrf.mxu0
    %4596 = vdwg.mxu0
    %4597 = vmatpush.bf16.msra.mxu0 0
    %4598 = vmatpush.bf16.msra.mxu0 0
    %4599 = vmatpush.bf16.msra.mxu0 0
    %4600 = vmatpush.bf16.msra.mxu0 0
    %4601 = vmatpush.bf16.msra.mxu0 0
    %4602 = vmatpush.bf16.msra.mxu0 0
    %4603 = vmatpush.bf16.msra.mxu0 0
    %4604 = vmatpush.bf16.msra.mxu0 %v1176
    %4605 = vmatmul.bf16.gmra.mxu0 %v4582
    %v4606 = vpop.f32.mrf.mxu0
    %v4607 = vadd.f32 %v4594, %v4606
    %v4608 = vpop.f32.mrf.mxu0
    %4609 = vdwg.mxu0
    %4610 = vmatpush.bf16.msra.mxu0 %v1175
    %4611 = vmatpush.bf16.msra.mxu0 %v1173
    %4612 = vmatpush.bf16.msra.mxu0 %v1171
    %4613 = vmatpush.bf16.msra.mxu0 %v1169
    %4614 = vmatpush.bf16.msra.mxu0 %v1167
    %4615 = vmatpush.bf16.msra.mxu0 %v1165
    %4616 = vmatpush.bf16.msra.mxu0 %v1163
    %4617 = vmatpush.bf16.msra.mxu0 %v1161
    %4618 = vmatmul.bf16.gmra.mxu0 %v4578
    %v4619 = vpop.f32.mrf.mxu0
    %v4620 = vadd.f32 0.0, %v4619
    %v4621 = vpop.f32.mrf.mxu0
    %4622 = vdwg.mxu0
    %4623 = vmatpush.bf16.msra.mxu0 0
    %4624 = vmatpush.bf16.msra.mxu0 0
    %4625 = vmatpush.bf16.msra.mxu0 0
    %4626 = vmatpush.bf16.msra.mxu0 0
    %4627 = vmatpush.bf16.msra.mxu0 0
    %4628 = vmatpush.bf16.msra.mxu0 0
    %4629 = vmatpush.bf16.msra.mxu0 0
    %4630 = vmatpush.bf16.msra.mxu0 %v1177
    %4631 = vmatmul.bf16.gmra.mxu0 %v4582
    %v4632 = vpop.f32.mrf.mxu0
    %v4633 = vadd.f32 %v4620, %v4632
    %v4634 = vpop.f32.mrf.mxu0
    %4635 = vdwg.mxu0
    %v4636 = vadd.f32 %v4572, %v4607
    %v4637 = vadd.f32 %v4573, %v4633
    %v4638 = vld [vmem:[%s0 + $0x118] sm:$0xff]
    %v4640 = vunpack.c.l.b16 %v4638
    %v4641 = vunpack.c.h.b16 %v4638
    %v4642 = vpack.c.b16 %v4640, %v4640
    %v4643 = vpack.c.b16 %v4641, %v4641
    %v4646 = vsel %vm181, %v4643, 0
    %4648 = vmatpush.bf16.msra.mxu0 %v1347
    %4649 = vmatpush.bf16.msra.mxu0 %v1345
    %4650 = vmatpush.bf16.msra.mxu0 %v1343
    %4651 = vmatpush.bf16.msra.mxu0 %v1341
    %4652 = vmatpush.bf16.msra.mxu0 %v1339
    %4653 = vmatpush.bf16.msra.mxu0 %v1337
    %4654 = vmatpush.bf16.msra.mxu0 %v1335
    %4655 = vmatpush.bf16.msra.mxu0 %v1333
    %4656 = vmatmul.bf16.gmra.mxu0 %v4642
    %v4657 = vpop.f32.mrf.mxu0
    %v4658 = vadd.f32 0.0, %v4657
    %v4659 = vpop.f32.mrf.mxu0
    %4660 = vdwg.mxu0
    %4661 = vmatpush.bf16.msra.mxu0 0
    %4662 = vmatpush.bf16.msra.mxu0 0
    %4663 = vmatpush.bf16.msra.mxu0 0
    %4664 = vmatpush.bf16.msra.mxu0 0
    %4665 = vmatpush.bf16.msra.mxu0 0
    %4666 = vmatpush.bf16.msra.mxu0 0
    %4667 = vmatpush.bf16.msra.mxu0 0
    %4668 = vmatpush.bf16.msra.mxu0 %v1349
    %4669 = vmatmul.bf16.gmra.mxu0 %v4646
    %v4670 = vpop.f32.mrf.mxu0
    %v4671 = vadd.f32 %v4658, %v4670
    %v4672 = vpop.f32.mrf.mxu0
    %4673 = vdwg.mxu0
    %4674 = vmatpush.bf16.msra.mxu0 %v1348
    %4675 = vmatpush.bf16.msra.mxu0 %v1346
    %4676 = vmatpush.bf16.msra.mxu0 %v1344
    %4677 = vmatpush.bf16.msra.mxu0 %v1342
    %4678 = vmatpush.bf16.msra.mxu0 %v1340
    %4679 = vmatpush.bf16.msra.mxu0 %v1338
    %4680 = vmatpush.bf16.msra.mxu0 %v1336
    %4681 = vmatpush.bf16.msra.mxu0 %v1334
    %4682 = vmatmul.bf16.gmra.mxu0 %v4642
    %v4683 = vpop.f32.mrf.mxu0
    %v4684 = vadd.f32 0.0, %v4683
    %v4685 = vpop.f32.mrf.mxu0
    %4686 = vdwg.mxu0
    %4687 = vmatpush.bf16.msra.mxu0 0
    %4688 = vmatpush.bf16.msra.mxu0 0
    %4689 = vmatpush.bf16.msra.mxu0 0
    %4690 = vmatpush.bf16.msra.mxu0 0
    %4691 = vmatpush.bf16.msra.mxu0 0
    %4692 = vmatpush.bf16.msra.mxu0 0
    %4693 = vmatpush.bf16.msra.mxu0 0
    %4694 = vmatpush.bf16.msra.mxu0 %v1350
    %4695 = vmatmul.bf16.gmra.mxu0 %v4646
    %v4696 = vpop.f32.mrf.mxu0
    %v4697 = vadd.f32 %v4684, %v4696
    %v4698 = vpop.f32.mrf.mxu0
    %4699 = vdwg.mxu0
    %v4700 = vadd.f32 %v4636, %v4671
    %v4701 = vadd.f32 %v4637, %v4697
    %v4702 = vadd.f32 %v1424, %v1892
    %v4703 = vadd.f32 %v4702, %v2360
    %v4704 = vadd.f32 %v4703, %v2828
    %v4705 = vadd.f32 %v4704, %v3296
    %v4706 = vadd.f32 %v4705, %v3764
    %v4707 = vadd.f32 %v4706, %v4232
    %v4708 = vadd.f32 %v4707, %v4700
    %v4709 = vrot.slane %v4708, 4
    %v4710 = vadd.f32 %v4708, %v4709
    %v4711 = vrot.slane %v4710, 2
    %v4712 = vadd.f32 %v4710, %v4711
    %v4713 = vrot.slane %v4712, 1
    %v4714 = vadd.f32 %v4712, %v4713
    %v4715 = vadd.f32 %v1425, %v1893
    %v4716 = vadd.f32 %v4715, %v2361
    %v4717 = vadd.f32 %v4716, %v2829
    %v4718 = vadd.f32 %v4717, %v3297
    %v4719 = vadd.f32 %v4718, %v3765
    %v4720 = vadd.f32 %v4719, %v4233
    %v4721 = vadd.f32 %v4720, %v4701
    %v4722 = vrot.slane %v4721, 4
    %v4723 = vadd.f32 %v4721, %v4722
    %v4724 = vrot.slane %v4723, 2
    %v4725 = vadd.f32 %v4723, %v4724
    %v4726 = vrot.slane %v4725, 1
    %v4727 = vadd.f32 %v4725, %v4726
    %v4728 = vmul.f32 %v1424, %v1424
    %v4729 = vmul.f32 %v1425, %v1425
    %v4730 = vmul.f32 %v1892, %v1892
    %v4731 = vmul.f32 %v1893, %v1893
    %v4732 = vmul.f32 %v2360, %v2360
    %v4733 = vmul.f32 %v2361, %v2361
    %v4734 = vmul.f32 %v2828, %v2828
    %v4735 = vmul.f32 %v2829, %v2829
    %v4736 = vmul.f32 %v3296, %v3296
    %v4737 = vmul.f32 %v3297, %v3297
    %v4738 = vmul.f32 %v3764, %v3764
    %v4739 = vmul.f32 %v3765, %v3765
    %v4740 = vmul.f32 %v4232, %v4232
    %v4741 = vmul.f32 %v4233, %v4233
    %v4742 = vmul.f32 %v4700, %v4700
    %v4743 = vmul.f32 %v4701, %v4701
    %v4744 = vadd.f32 %v4728, %v4730
    %v4745 = vadd.f32 %v4744, %v4732
    %v4746 = vadd.f32 %v4745, %v4734
    %v4747 = vadd.f32 %v4746, %v4736
    %v4748 = vadd.f32 %v4747, %v4738
    %v4749 = vadd.f32 %v4748, %v4740
    %v4750 = vadd.f32 %v4749, %v4742
    %v4751 = vrot.slane %v4750, 4
    %v4752 = vadd.f32 %v4750, %v4751
    %v4753 = vrot.slane %v4752, 2
    %v4754 = vadd.f32 %v4752, %v4753
    %v4755 = vrot.slane %v4754, 1
    %v4756 = vadd.f32 %v4754, %v4755
    %v4757 = vadd.f32 %v4729, %v4731
    %v4758 = vadd.f32 %v4757, %v4733
    %v4759 = vadd.f32 %v4758, %v4735
    %v4760 = vadd.f32 %v4759, %v4737
    %v4761 = vadd.f32 %v4760, %v4739
    %v4762 = vadd.f32 %v4761, %v4741
    %v4763 = vadd.f32 %v4762, %v4743
    %v4764 = vrot.slane %v4763, 4
    %v4765 = vadd.f32 %v4763, %v4764
    %v4766 = vrot.slane %v4765, 2
    %v4767 = vadd.f32 %v4765, %v4766
    %v4768 = vrot.slane %v4767, 1
    %v4769 = vadd.f32 %v4767, %v4768
    %4771 = vrot.lane.b32.xlu0 %v4714, 96
    %v4772 = vpop.permute.xlu0 %4771
    %v4774 = vadd.f32 %v4714, %v4772
    %4776 = vrot.lane.b32.xlu0 %v4756, 96
    %v4777 = vpop.permute.xlu0 %4776
    %v4779 = vadd.f32 %v4756, %v4777
    %4780 = vrot.lane.b32.xlu0 %v4714, 64
    %v4781 = vpop.permute.xlu0 %4780
    %v4783 = vadd.f32 %v4774, %v4781
    %4784 = vrot.lane.b32.xlu0 %v4756, 64
    %v4785 = vpop.permute.xlu0 %4784
    %v4787 = vadd.f32 %v4779, %v4785
    %4788 = vrot.lane.b32.xlu0 %v4714, 32
    %v4789 = vpop.permute.xlu0 %4788
    %v4791 = vadd.f32 %v4783, %v4789
    %4792 = vrot.lane.b32.xlu0 %v4756, 32
    %v4793 = vpop.permute.xlu0 %4792
    %v4795 = vadd.f32 %v4787, %v4793
    %v4796 = vadd.f32 %v4791, %v4727
    %v4797 = vadd.f32 %v4795, %v4769
    %4799 = vrot.lane.b32.xlu0 %v4727, 96
    %v4800 = vpop.permute.xlu0 %4799
    %v4802 = vadd.f32 %v4796, %v4800
    %4804 = vrot.lane.b32.xlu0 %v4769, 96
    %v4805 = vpop.permute.xlu0 %4804
    %v4807 = vadd.f32 %v4797, %v4805
    %4808 = vrot.lane.b32.xlu0 %v4727, 64
    %v4809 = vpop.permute.xlu0 %4808
    %v4811 = vadd.f32 %v4802, %v4809
    %4812 = vrot.lane.b32.xlu0 %v4769, 64
    %v4813 = vpop.permute.xlu0 %4812
    %v4815 = vadd.f32 %v4807, %v4813
    %4816 = vrot.lane.b32.xlu0 %v4727, 32
    %v4817 = vpop.permute.xlu0 %4816
    %v4819 = vadd.f32 %v4811, %v4817
    %4820 = vrot.lane.b32.xlu0 %v4769, 32
    %v4821 = vpop.permute.xlu0 %4820
    %v4823 = vadd.f32 %v4815, %v4821
    %v4824 = vmul.f32 %v4819, 0.001953125
    %v4825 = vmul.f32 %v4823, 0.001953125
    %v4826 = vmul.f32 %v4824, %v4824
    %v4827 = vsub.f32 %v4825, %v4826
    %v4828 = vld [vmem:[%s5] sm:$0x1]
    %v4829 = vadd.f32 %v4827, 1e-05
    %v4830 = vrsqrt.pop %v4829
    %v4831 = vmul.f32 %v4830, %v4829
    %v4832 = vmul.f32 %v4831, %v4830
    %v4833 = vmul.f32 0.5, %v4832
    %v4834 = vsub.f32 1.5, %v4833
    %v4835 = vmul.f32 %v4830, %v4834
    %vm4836 = vweird.f32 %v4829
    %vm4837 = vweird.f32 %v4830
    %vm4838 = vmor %vm4836, %vm4837
    %v4839 = vsel %vm4838, %v4830, %v4835
    %v4840 = vmul.f32 %v4828, %v4839
    %v4841 = vld [vmem:[%s6] sm:$0x1]
    %v4842 = vmul.f32 %v4824, %v4840
    %v4843 = vsub.f32 %v4841, %v4842
    %v4845 = vperm.slane %v4840, 0
    %4846 = vrot.lane.b32.xlu0 %v4845, 32
    %v4847 = vpop.permute.xlu0 %4846
    %4849 = vrot.lane.b32.xlu0 %v4845, 64
    %v4850 = vpop.permute.xlu0 %4849
    %4852 = vrot.lane.b32.xlu0 %v4845, 96
    %v4853 = vpop.permute.xlu0 %4852
    %vm4855 = vcmask 261120
    %v4856 = vsel %vm4855, %v4840, %v4847
    %vm4857 = vcmask 523264
    %v4858 = vsel %vm4857, %v4856, %v4850
    %vm4859 = vcmask 785408
    %v4860 = vsel %vm4859, %v4858, %v4853
    %v4862 = vperm.slane %v4843, 0
    %4863 = vrot.lane.b32.xlu0 %v4862, 32
    %v4864 = vpop.permute.xlu0 %4863
    %4866 = vrot.lane.b32.xlu0 %v4862, 64
    %v4867 = vpop.permute.xlu0 %4866
    %4869 = vrot.lane.b32.xlu0 %v4862, 96
    %v4870 = vpop.permute.xlu0 %4869
    %v4872 = vsel %vm4855, %v4843, %v4864
    %v4873 = vsel %vm4857, %v4872, %v4867
    %v4874 = vsel %vm4859, %v4873, %v4870
    %v4875 = vperm.slane %v4860, 0
    %v4876 = vmul.f32 %v1424, %v4875
    %v4877 = vmul.f32 %v1425, %v4875
    %v4878 = vmul.f32 %v1892, %v4875
    %v4879 = vmul.f32 %v1893, %v4875
    %v4880 = vmul.f32 %v2360, %v4875
    %v4881 = vmul.f32 %v2361, %v4875
    %v4882 = vmul.f32 %v2828, %v4875
    %v4883 = vmul.f32 %v2829, %v4875
    %v4884 = vmul.f32 %v3296, %v4875
    %v4885 = vmul.f32 %v3297, %v4875
    %v4886 = vmul.f32 %v3764, %v4875
    %v4887 = vmul.f32 %v3765, %v4875
    %v4888 = vmul.f32 %v4232, %v4875
    %v4889 = vmul.f32 %v4233, %v4875
    %v4890 = vmul.f32 %v4700, %v4875
    %v4891 = vmul.f32 %v4701, %v4875
    %v4892 = vperm.slane %v4874, 0
    %v4893 = vadd.f32 %v4876, %v4892
    %v4894 = vadd.f32 %v4877, %v4892
    %v4895 = vadd.f32 %v4878, %v4892
    %v4896 = vadd.f32 %v4879, %v4892
    %v4897 = vadd.f32 %v4880, %v4892
    %v4898 = vadd.f32 %v4881, %v4892
    %v4899 = vadd.f32 %v4882, %v4892
    %v4900 = vadd.f32 %v4883, %v4892
    %v4901 = vadd.f32 %v4884, %v4892
    %v4902 = vadd.f32 %v4885, %v4892
    %v4903 = vadd.f32 %v4886, %v4892
    %v4904 = vadd.f32 %v4887, %v4892
    %v4905 = vadd.f32 %v4888, %v4892
    %v4906 = vadd.f32 %v4889, %v4892
    %v4907 = vadd.f32 %v4890, %v4892
    %v4908 = vadd.f32 %v4891, %v4892
    %v4909 = vmax.f32 %v4893, 0.0
    %v4910 = vmax.f32 %v4894, 0.0
    %v4911 = vmax.f32 %v4895, 0.0
    %v4912 = vmax.f32 %v4896, 0.0
    %v4913 = vmax.f32 %v4897, 0.0
    %v4914 = vmax.f32 %v4898, 0.0
    %v4915 = vmax.f32 %v4899, 0.0
    %v4916 = vmax.f32 %v4900, 0.0
    %v4917 = vmax.f32 %v4901, 0.0
    %v4918 = vmax.f32 %v4902, 0.0
    %v4919 = vmax.f32 %v4903, 0.0
    %v4920 = vmax.f32 %v4904, 0.0
    %v4921 = vmax.f32 %v4905, 0.0
    %v4922 = vmax.f32 %v4906, 0.0
    %v4923 = vmax.f32 %v4907, 0.0
    %v4924 = vmax.f32 %v4908, 0.0
    %v4925 = vpack.c.bf16 %v4910, %v4909
    %v4926 = vpack.c.bf16 %v4912, %v4911
    %v4927 = vpack.c.bf16 %v4914, %v4913
    %v4928 = vpack.c.bf16 %v4916, %v4915
    %v4929 = vpack.c.bf16 %v4918, %v4917
    %v4930 = vpack.c.bf16 %v4920, %v4919
    %v4931 = vpack.c.bf16 %v4922, %v4921
    %v4932 = vpack.c.bf16 %v4924, %v4923
    %4933 = vst [vmem:[#allocation2] sm:$0xff] %v4925
    %4934 = vst [vmem:[#allocation2 + $0x8] sm:$0xff] %v4926
    %4935 = vst [vmem:[#allocation2 + $0x10] sm:$0xff] %v4927
    %4936 = vst [vmem:[#allocation2 + $0x18] sm:$0xff] %v4928
    %4937 = vst [vmem:[#allocation2 + $0x20] sm:$0xff] %v4929
    %4938 = vst [vmem:[#allocation2 + $0x28] sm:$0xff] %v4930
    %4939 = vst [vmem:[#allocation2 + $0x30] sm:$0xff] %v4931
    %4940 = vst [vmem:[#allocation2 + $0x38] sm:$0xff] %v4932
    %v4941 = vld [vmem:[#allocation2] sm:$0xff]
    %v4942 = vld [vmem:[%s2] sm:$0xff]
    %v4943 = vld [vmem:[%s2 + $0x8] sm:$0xff]
    %v4944 = vld [vmem:[%s2 + $0x10] sm:$0xff]
    %v4945 = vld [vmem:[%s2 + $0x18] sm:$0xff]
    %v4946 = vld [vmem:[%s2 + $0x20] sm:$0xff]
    %v4947 = vld [vmem:[%s2 + $0x28] sm:$0xff]
    %v4948 = vld [vmem:[%s2 + $0x30] sm:$0xff]
    %v4949 = vld [vmem:[%s2 + $0x38] sm:$0xff]
    %v4950 = vld [vmem:[%s2 + $0x40] sm:$0xff]
    %v4951 = vld [vmem:[%s2 + $0x48] sm:$0xff]
    %v4952 = vld [vmem:[%s2 + $0x50] sm:$0xff]
    %v4953 = vld [vmem:[%s2 + $0x58] sm:$0xff]
    %v4954 = vld [vmem:[%s2 + $0x60] sm:$0xff]
    %v4955 = vld [vmem:[%s2 + $0x68] sm:$0xff]
    %v4956 = vld [vmem:[%s2 + $0x70] sm:$0xff]
    %v4957 = vld [vmem:[%s2 + $0x78] sm:$0xff]
    %v4958 = vld [vmem:[%s2 + $0x80] sm:$0xff]
    %v4959 = vld [vmem:[%s2 + $0x88] sm:$0xff]
    %v4960 = vld [vmem:[%s2 + $0x90] sm:$0xff]
    %v4961 = vld [vmem:[%s2 + $0x98] sm:$0xff]
    %v4962 = vld [vmem:[%s2 + $0xa0] sm:$0xff]
    %v4963 = vld [vmem:[%s2 + $0xa8] sm:$0xff]
    %v4964 = vld [vmem:[%s2 + $0xb0] sm:$0xff]
    %v4965 = vld [vmem:[%s2 + $0xb8] sm:$0xff]
    %v4966 = vld [vmem:[%s2 + $0xc0] sm:$0xff]
    %v4967 = vld [vmem:[%s2 + $0xc8] sm:$0xff]
    %v4968 = vld [vmem:[%s2 + $0xd0] sm:$0xff]
    %v4969 = vld [vmem:[%s2 + $0xd8] sm:$0xff]
    %v4970 = vld [vmem:[%s2 + $0xe0] sm:$0xff]
    %v4971 = vld [vmem:[%s2 + $0xe8] sm:$0xff]
    %v4972 = vld [vmem:[%s2 + $0xf0] sm:$0xff]
    %v4973 = vld [vmem:[%s2 + $0xf8] sm:$0xff]
    %v4974 = vld [vmem:[#allocation2 + $0x8] sm:$0xff]
    %s4975 = scalar_lea.vmem %s2, 256
    %v4976 = vld [vmem:[%s4975] sm:$0xff]
    %v4977 = vld [vmem:[%s4975 + $0x8] sm:$0xff]
    %v4978 = vld [vmem:[%s4975 + $0x10] sm:$0xff]
    %v4979 = vld [vmem:[%s4975 + $0x18] sm:$0xff]
    %v4980 = vld [vmem:[%s4975 + $0x20] sm:$0xff]
    %v4981 = vld [vmem:[%s4975 + $0x28] sm:$0xff]
    %v4982 = vld [vmem:[%s4975 + $0x30] sm:$0xff]
    %v4983 = vld [vmem:[%s4975 + $0x38] sm:$0xff]
    %v4984 = vld [vmem:[%s4975 + $0x40] sm:$0xff]
    %v4985 = vld [vmem:[%s4975 + $0x48] sm:$0xff]
    %v4986 = vld [vmem:[%s4975 + $0x50] sm:$0xff]
    %v4987 = vld [vmem:[%s4975 + $0x58] sm:$0xff]
    %v4988 = vld [vmem:[%s4975 + $0x60] sm:$0xff]
    %v4989 = vld [vmem:[%s4975 + $0x68] sm:$0xff]
    %v4990 = vld [vmem:[%s4975 + $0x70] sm:$0xff]
    %v4991 = vld [vmem:[%s4975 + $0x78] sm:$0xff]
    %v4992 = vld [vmem:[%s4975 + $0x80] sm:$0xff]
    %v4993 = vld [vmem:[%s4975 + $0x88] sm:$0xff]
    %v4994 = vld [vmem:[%s4975 + $0x90] sm:$0xff]
    %v4995 = vld [vmem:[%s4975 + $0x98] sm:$0xff]
    %v4996 = vld [vmem:[%s4975 + $0xa0] sm:$0xff]
    %v4997 = vld [vmem:[%s4975 + $0xa8] sm:$0xff]
    %v4998 = vld [vmem:[%s4975 + $0xb0] sm:$0xff]
    %v4999 = vld [vmem:[%s4975 + $0xb8] sm:$0xff]
    %v5000 = vld [vmem:[%s4975 + $0xc0] sm:$0xff]
    %v5001 = vld [vmem:[%s4975 + $0xc8] sm:$0xff]
    %v5002 = vld [vmem:[%s4975 + $0xd0] sm:$0xff]
    %v5003 = vld [vmem:[%s4975 + $0xd8] sm:$0xff]
    %v5004 = vld [vmem:[%s4975 + $0xe0] sm:$0xff]
    %v5005 = vld [vmem:[%s4975 + $0xe8] sm:$0xff]
    %v5006 = vld [vmem:[%s4975 + $0xf0] sm:$0xff]
    %v5007 = vld [vmem:[%s4975 + $0xf8] sm:$0xff]
    %v5009 = vunpack.c.l.b16 %v4974
    %v5010 = vunpack.c.h.b16 %v4974
    %v5011 = vpack.c.b16 %v5009, %v5009
    %v5012 = vpack.c.b16 %v5010, %v5010
    %v5047 = vunpack.c.l.b16 %v4976
    %v5048 = vunpack.c.h.b16 %v4976
    %v5049 = vunpack.c.l.b16 %v4977
    %v5050 = vunpack.c.h.b16 %v4977
    %v5051 = vunpack.c.l.b16 %v4978
    %v5052 = vunpack.c.h.b16 %v4978
    %v5053 = vunpack.c.l.b16 %v4979
    %v5054 = vunpack.c.h.b16 %v4979
    %v5055 = vunpack.c.l.b16 %v4980
    %v5056 = vunpack.c.h.b16 %v4980
    %v5057 = vunpack.c.l.b16 %v4981
    %v5058 = vunpack.c.h.b16 %v4981
    %v5059 = vunpack.c.l.b16 %v4982
    %v5060 = vunpack.c.h.b16 %v4982
    %v5061 = vunpack.c.l.b16 %v4983
    %v5062 = vunpack.c.h.b16 %v4983
    %v5063 = vunpack.c.l.b16 %v4984
    %v5064 = vunpack.c.h.b16 %v4984
    %v5065 = vunpack.c.l.b16 %v4985
    %v5066 = vunpack.c.h.b16 %v4985
    %v5067 = vunpack.c.l.b16 %v4986
    %v5068 = vunpack.c.h.b16 %v4986
    %v5069 = vunpack.c.l.b16 %v4987
    %v5070 = vunpack.c.h.b16 %v4987
    %v5071 = vunpack.c.l.b16 %v4988
    %v5072 = vunpack.c.h.b16 %v4988
    %v5073 = vunpack.c.l.b16 %v4989
    %v5074 = vunpack.c.h.b16 %v4989
    %v5075 = vunpack.c.l.b16 %v4990
    %v5076 = vunpack.c.h.b16 %v4990
    %v5077 = vunpack.c.l.b16 %v4991
    %v5078 = vunpack.c.h.b16 %v4991
    %v5079 = vunpack.c.l.b16 %v4992
    %v5080 = vunpack.c.h.b16 %v4992
    %v5081 = vunpack.c.l.b16 %v4993
    %v5082 = vunpack.c.h.b16 %v4993
    %v5083 = vunpack.c.l.b16 %v4994
    %v5084 = vunpack.c.h.b16 %v4994
    %v5085 = vunpack.c.l.b16 %v4995
    %v5086 = vunpack.c.h.b16 %v4995
    %v5087 = vunpack.c.l.b16 %v4996
    %v5088 = vunpack.c.h.b16 %v4996
    %v5089 = vunpack.c.l.b16 %v4997
    %v5090 = vunpack.c.h.b16 %v4997
    %v5091 = vunpack.c.l.b16 %v4998
    %v5092 = vunpack.c.h.b16 %v4998
    %v5093 = vunpack.c.l.b16 %v4999
    %v5094 = vunpack.c.h.b16 %v4999
    %v5095 = vunpack.c.l.b16 %v5000
    %v5096 = vunpack.c.h.b16 %v5000
    %v5097 = vunpack.c.l.b16 %v5001
    %v5098 = vunpack.c.h.b16 %v5001
    %v5099 = vunpack.c.l.b16 %v5002
    %v5100 = vunpack.c.h.b16 %v5002
    %v5101 = vunpack.c.l.b16 %v5003
    %v5102 = vunpack.c.h.b16 %v5003
    %v5103 = vunpack.c.l.b16 %v5004
    %v5104 = vunpack.c.h.b16 %v5004
    %v5105 = vunpack.c.l.b16 %v5005
    %v5106 = vunpack.c.h.b16 %v5005
    %v5107 = vunpack.c.l.b16 %v5006
    %v5108 = vunpack.c.h.b16 %v5006
    %v5109 = vunpack.c.l.b16 %v5007
    %v5110 = vunpack.c.h.b16 %v5007
    %v5111 = vpack.c.b16 %v5049, %v5047
    %v5112 = vpack.c.b16 %v5050, %v5048
    %v5113 = vpack.c.b16 %v5053, %v5051
    %v5114 = vpack.c.b16 %v5054, %v5052
    %v5115 = vpack.c.b16 %v5057, %v5055
    %v5116 = vpack.c.b16 %v5058, %v5056
    %v5117 = vpack.c.b16 %v5061, %v5059
    %v5118 = vpack.c.b16 %v5062, %v5060
    %v5119 = vpack.c.b16 %v5065, %v5063
    %v5120 = vpack.c.b16 %v5066, %v5064
    %v5121 = vpack.c.b16 %v5069, %v5067
    %v5122 = vpack.c.b16 %v5070, %v5068
    %v5123 = vpack.c.b16 %v5073, %v5071
    %v5124 = vpack.c.b16 %v5074, %v5072
    %v5125 = vpack.c.b16 %v5077, %v5075
    %v5126 = vpack.c.b16 %v5078, %v5076
    %v5127 = vpack.c.b16 %v5081, %v5079
    %v5128 = vpack.c.b16 %v5082, %v5080
    %v5129 = vpack.c.b16 %v5085, %v5083
    %v5130 = vpack.c.b16 %v5086, %v5084
    %v5131 = vpack.c.b16 %v5089, %v5087
    %v5132 = vpack.c.b16 %v5090, %v5088
    %v5133 = vpack.c.b16 %v5093, %v5091
    %v5134 = vpack.c.b16 %v5094, %v5092
    %v5135 = vpack.c.b16 %v5097, %v5095
    %v5136 = vpack.c.b16 %v5098, %v5096
    %v5137 = vpack.c.b16 %v5101, %v5099
    %v5138 = vpack.c.b16 %v5102, %v5100
    %v5139 = vpack.c.b16 %v5105, %v5103
    %v5140 = vpack.c.b16 %v5106, %v5104
    %v5141 = vpack.c.b16 %v5109, %v5107
    %v5142 = vpack.c.b16 %v5110, %v5108
    %5175 = vmatpush.bf16.msra.mxu0 %v5125
    %5176 = vmatpush.bf16.msra.mxu0 %v5123
    %5177 = vmatpush.bf16.msra.mxu0 %v5121
    %5178 = vmatpush.bf16.msra.mxu0 %v5119
    %5179 = vmatpush.bf16.msra.mxu0 %v5117
    %5180 = vmatpush.bf16.msra.mxu0 %v5115
    %5181 = vmatpush.bf16.msra.mxu0 %v5113
    %5182 = vmatpush.bf16.msra.mxu0 %v5111
    %5183 = vmatmul.bf16.gmra.mxu0 %v5011
    %v5184 = vpop.f32.mrf.mxu0
    %v5185 = vadd.f32 0.0, %v5184
    %v5186 = vpop.f32.mrf.mxu0
    %5187 = vdwg.mxu0
    %5188 = vmatpush.bf16.msra.mxu0 %v5141
    %5189 = vmatpush.bf16.msra.mxu0 %v5139
    %5190 = vmatpush.bf16.msra.mxu0 %v5137
    %5191 = vmatpush.bf16.msra.mxu0 %v5135
    %5192 = vmatpush.bf16.msra.mxu0 %v5133
    %5193 = vmatpush.bf16.msra.mxu0 %v5131
    %5194 = vmatpush.bf16.msra.mxu0 %v5129
    %5195 = vmatpush.bf16.msra.mxu0 %v5127
    %5196 = vmatmul.bf16.gmra.mxu0 %v5012
    %v5197 = vpop.f32.mrf.mxu0
    %v5198 = vadd.f32 %v5185, %v5197
    %v5199 = vpop.f32.mrf.mxu0
    %5200 = vdwg.mxu0
    %5201 = vmatpush.bf16.msra.mxu0 %v5126
    %5202 = vmatpush.bf16.msra.mxu0 %v5124
    %5203 = vmatpush.bf16.msra.mxu0 %v5122
    %5204 = vmatpush.bf16.msra.mxu0 %v5120
    %5205 = vmatpush.bf16.msra.mxu0 %v5118
    %5206 = vmatpush.bf16.msra.mxu0 %v5116
    %5207 = vmatpush.bf16.msra.mxu0 %v5114
    %5208 = vmatpush.bf16.msra.mxu0 %v5112
    %5209 = vmatmul.bf16.gmra.mxu0 %v5011
    %v5210 = vpop.f32.mrf.mxu0
    %v5211 = vadd.f32 0.0, %v5210
    %v5212 = vpop.f32.mrf.mxu0
    %5213 = vdwg.mxu0
    %5214 = vmatpush.bf16.msra.mxu0 %v5142
    %5215 = vmatpush.bf16.msra.mxu0 %v5140
    %5216 = vmatpush.bf16.msra.mxu0 %v5138
    %5217 = vmatpush.bf16.msra.mxu0 %v5136
    %5218 = vmatpush.bf16.msra.mxu0 %v5134
    %5219 = vmatpush.bf16.msra.mxu0 %v5132
    %5220 = vmatpush.bf16.msra.mxu0 %v5130
    %5221 = vmatpush.bf16.msra.mxu0 %v5128
    %5222 = vmatmul.bf16.gmra.mxu0 %v5012
    %v5223 = vpop.f32.mrf.mxu0
    %v5224 = vadd.f32 %v5211, %v5223
    %v5225 = vpop.f32.mrf.mxu0
    %5226 = vdwg.mxu0
    %v5228 = vunpack.c.l.b16 %v4941
    %v5229 = vunpack.c.h.b16 %v4941
    %v5230 = vpack.c.b16 %v5228, %v5228
    %v5231 = vpack.c.b16 %v5229, %v5229
    %v5266 = vunpack.c.l.b16 %v4942
    %v5267 = vunpack.c.h.b16 %v4942
    %v5268 = vunpack.c.l.b16 %v4943
    %v5269 = vunpack.c.h.b16 %v4943
    %v5270 = vunpack.c.l.b16 %v4944
    %v5271 = vunpack.c.h.b16 %v4944
    %v5272 = vunpack.c.l.b16 %v4945
    %v5273 = vunpack.c.h.b16 %v4945
    %v5274 = vunpack.c.l.b16 %v4946
    %v5275 = vunpack.c.h.b16 %v4946
    %v5276 = vunpack.c.l.b16 %v4947
    %v5277 = vunpack.c.h.b16 %v4947
    %v5278 = vunpack.c.l.b16 %v4948
    %v5279 = vunpack.c.h.b16 %v4948
    %v5280 = vunpack.c.l.b16 %v4949
    %v5281 = vunpack.c.h.b16 %v4949
    %v5282 = vunpack.c.l.b16 %v4950
    %v5283 = vunpack.c.h.b16 %v4950
    %v5284 = vunpack.c.l.b16 %v4951
    %v5285 = vunpack.c.h.b16 %v4951
    %v5286 = vunpack.c.l.b16 %v4952
    %v5287 = vunpack.c.h.b16 %v4952
    %v5288 = vunpack.c.l.b16 %v4953
    %v5289 = vunpack.c.h.b16 %v4953
    %v5290 = vunpack.c.l.b16 %v4954
    %v5291 = vunpack.c.h.b16 %v4954
    %v5292 = vunpack.c.l.b16 %v4955
    %v5293 = vunpack.c.h.b16 %v4955
    %v5294 = vunpack.c.l.b16 %v4956
    %v5295 = vunpack.c.h.b16 %v4956
    %v5296 = vunpack.c.l.b16 %v4957
    %v5297 = vunpack.c.h.b16 %v4957
    %v5298 = vunpack.c.l.b16 %v4958
    %v5299 = vunpack.c.h.b16 %v4958
    %v5300 = vunpack.c.l.b16 %v4959
    %v5301 = vunpack.c.h.b16 %v4959
    %v5302 = vunpack.c.l.b16 %v4960
    %v5303 = vunpack.c.h.b16 %v4960
    %v5304 = vunpack.c.l.b16 %v4961
    %v5305 = vunpack.c.h.b16 %v4961
    %v5306 = vunpack.c.l.b16 %v4962
    %v5307 = vunpack.c.h.b16 %v4962
    %v5308 = vunpack.c.l.b16 %v4963
    %v5309 = vunpack.c.h.b16 %v4963
    %v5310 = vunpack.c.l.b16 %v4964
    %v5311 = vunpack.c.h.b16 %v4964
    %v5312 = vunpack.c.l.b16 %v4965
    %v5313 = vunpack.c.h.b16 %v4965
    %v5314 = vunpack.c.l.b16 %v4966
    %v5315 = vunpack.c.h.b16 %v4966
    %v5316 = vunpack.c.l.b16 %v4967
    %v5317 = vunpack.c.h.b16 %v4967
    %v5318 = vunpack.c.l.b16 %v4968
    %v5319 = vunpack.c.h.b16 %v4968
    %v5320 = vunpack.c.l.b16 %v4969
    %v5321 = vunpack.c.h.b16 %v4969
    %v5322 = vunpack.c.l.b16 %v4970
    %v5323 = vunpack.c.h.b16 %v4970
    %v5324 = vunpack.c.l.b16 %v4971
    %v5325 = vunpack.c.h.b16 %v4971
    %v5326 = vunpack.c.l.b16 %v4972
    %v5327 = vunpack.c.h.b16 %v4972
    %v5328 = vunpack.c.l.b16 %v4973
    %v5329 = vunpack.c.h.b16 %v4973
    %v5330 = vpack.c.b16 %v5268, %v5266
    %v5331 = vpack.c.b16 %v5269, %v5267
    %v5332 = vpack.c.b16 %v5272, %v5270
    %v5333 = vpack.c.b16 %v5273, %v5271
    %v5334 = vpack.c.b16 %v5276, %v5274
    %v5335 = vpack.c.b16 %v5277, %v5275
    %v5336 = vpack.c.b16 %v5280, %v5278
    %v5337 = vpack.c.b16 %v5281, %v5279
    %v5338 = vpack.c.b16 %v5284, %v5282
    %v5339 = vpack.c.b16 %v5285, %v5283
    %v5340 = vpack.c.b16 %v5288, %v5286
    %v5341 = vpack.c.b16 %v5289, %v5287
    %v5342 = vpack.c.b16 %v5292, %v5290
    %v5343 = vpack.c.b16 %v5293, %v5291
    %v5344 = vpack.c.b16 %v5296, %v5294
    %v5345 = vpack.c.b16 %v5297, %v5295
    %v5346 = vpack.c.b16 %v5300, %v5298
    %v5347 = vpack.c.b16 %v5301, %v5299
    %v5348 = vpack.c.b16 %v5304, %v5302
    %v5349 = vpack.c.b16 %v5305, %v5303
    %v5350 = vpack.c.b16 %v5308, %v5306
    %v5351 = vpack.c.b16 %v5309, %v5307
    %v5352 = vpack.c.b16 %v5312, %v5310
    %v5353 = vpack.c.b16 %v5313, %v5311
    %v5354 = vpack.c.b16 %v5316, %v5314
    %v5355 = vpack.c.b16 %v5317, %v5315
    %v5356 = vpack.c.b16 %v5320, %v5318
    %v5357 = vpack.c.b16 %v5321, %v5319
    %v5358 = vpack.c.b16 %v5324, %v5322
    %v5359 = vpack.c.b16 %v5325, %v5323
    %v5360 = vpack.c.b16 %v5328, %v5326
    %v5361 = vpack.c.b16 %v5329, %v5327
    %5394 = vmatpush.bf16.msra.mxu0 %v5344
    %5395 = vmatpush.bf16.msra.mxu0 %v5342
    %5396 = vmatpush.bf16.msra.mxu0 %v5340
    %5397 = vmatpush.bf16.msra.mxu0 %v5338
    %5398 = vmatpush.bf16.msra.mxu0 %v5336
    %5399 = vmatpush.bf16.msra.mxu0 %v5334
    %5400 = vmatpush.bf16.msra.mxu0 %v5332
    %5401 = vmatpush.bf16.msra.mxu0 %v5330
    %5402 = vmatmul.bf16.gmra.mxu0 %v5230
    %v5403 = vpop.f32.mrf.mxu0
    %v5404 = vadd.f32 %v5198, %v5403
    %v5405 = vpop.f32.mrf.mxu0
    %5406 = vdwg.mxu0
    %5407 = vmatpush.bf16.msra.mxu0 %v5360
    %5408 = vmatpush.bf16.msra.mxu0 %v5358
    %5409 = vmatpush.bf16.msra.mxu0 %v5356
    %5410 = vmatpush.bf16.msra.mxu0 %v5354
    %5411 = vmatpush.bf16.msra.mxu0 %v5352
    %5412 = vmatpush.bf16.msra.mxu0 %v5350
    %5413 = vmatpush.bf16.msra.mxu0 %v5348
    %5414 = vmatpush.bf16.msra.mxu0 %v5346
    %5415 = vmatmul.bf16.gmra.mxu0 %v5231
    %v5416 = vpop.f32.mrf.mxu0
    %v5417 = vadd.f32 %v5404, %v5416
    %v5418 = vpop.f32.mrf.mxu0
    %5419 = vdwg.mxu0
    %5420 = vmatpush.bf16.msra.mxu0 %v5345
    %5421 = vmatpush.bf16.msra.mxu0 %v5343
    %5422 = vmatpush.bf16.msra.mxu0 %v5341
    %5423 = vmatpush.bf16.msra.mxu0 %v5339
    %5424 = vmatpush.bf16.msra.mxu0 %v5337
    %5425 = vmatpush.bf16.msra.mxu0 %v5335
    %5426 = vmatpush.bf16.msra.mxu0 %v5333
    %5427 = vmatpush.bf16.msra.mxu0 %v5331
    %5428 = vmatmul.bf16.gmra.mxu0 %v5230
    %v5429 = vpop.f32.mrf.mxu0
    %v5430 = vadd.f32 %v5224, %v5429
    %v5431 = vpop.f32.mrf.mxu0
    %5432 = vdwg.mxu0
    %5433 = vmatpush.bf16.msra.mxu0 %v5361
    %5434 = vmatpush.bf16.msra.mxu0 %v5359
    %5435 = vmatpush.bf16.msra.mxu0 %v5357
    %5436 = vmatpush.bf16.msra.mxu0 %v5355
    %5437 = vmatpush.bf16.msra.mxu0 %v5353
    %5438 = vmatpush.bf16.msra.mxu0 %v5351
    %5439 = vmatpush.bf16.msra.mxu0 %v5349
    %5440 = vmatpush.bf16.msra.mxu0 %v5347
    %5441 = vmatmul.bf16.gmra.mxu0 %v5231
    %v5442 = vpop.f32.mrf.mxu0
    %v5443 = vadd.f32 %v5430, %v5442
    %v5444 = vpop.f32.mrf.mxu0
    %5445 = vdwg.mxu0
    %v5446 = vld [vmem:[#allocation2 + $0x10] sm:$0xff]
    %s5447 = scalar_lea.vmem %s2, 512
    %v5448 = vld [vmem:[%s5447] sm:$0xff]
    %v5449 = vld [vmem:[%s5447 + $0x8] sm:$0xff]
    %v5450 = vld [vmem:[%s5447 + $0x10] sm:$0xff]
    %v5451 = vld [vmem:[%s5447 + $0x18] sm:$0xff]
    %v5452 = vld [vmem:[%s5447 + $0x20] sm:$0xff]
    %v5453 = vld [vmem:[%s5447 + $0x28] sm:$0xff]
    %v5454 = vld [vmem:[%s5447 + $0x30] sm:$0xff]
    %v5455 = vld [vmem:[%s5447 + $0x38] sm:$0xff]
    %v5456 = vld [vmem:[%s5447 + $0x40] sm:$0xff]
    %v5457 = vld [vmem:[%s5447 + $0x48] sm:$0xff]
    %v5458 = vld [vmem:[%s5447 + $0x50] sm:$0xff]
    %v5459 = vld [vmem:[%s5447 + $0x58] sm:$0xff]
    %v5460 = vld [vmem:[%s5447 + $0x60] sm:$0xff]
    %v5461 = vld [vmem:[%s5447 + $0x68] sm:$0xff]
    %v5462 = vld [vmem:[%s5447 + $0x70] sm:$0xff]
    %v5463 = vld [vmem:[%s5447 + $0x78] sm:$0xff]
    %v5464 = vld [vmem:[%s5447 + $0x80] sm:$0xff]
    %v5465 = vld [vmem:[%s5447 + $0x88] sm:$0xff]
    %v5466 = vld [vmem:[%s5447 + $0x90] sm:$0xff]
    %v5467 = vld [vmem:[%s5447 + $0x98] sm:$0xff]
    %v5468 = vld [vmem:[%s5447 + $0xa0] sm:$0xff]
    %v5469 = vld [vmem:[%s5447 + $0xa8] sm:$0xff]
    %v5470 = vld [vmem:[%s5447 + $0xb0] sm:$0xff]
    %v5471 = vld [vmem:[%s5447 + $0xb8] sm:$0xff]
    %v5472 = vld [vmem:[%s5447 + $0xc0] sm:$0xff]
    %v5473 = vld [vmem:[%s5447 + $0xc8] sm:$0xff]
    %v5474 = vld [vmem:[%s5447 + $0xd0] sm:$0xff]
    %v5475 = vld [vmem:[%s5447 + $0xd8] sm:$0xff]
    %v5476 = vld [vmem:[%s5447 + $0xe0] sm:$0xff]
    %v5477 = vld [vmem:[%s5447 + $0xe8] sm:$0xff]
    %v5478 = vld [vmem:[%s5447 + $0xf0] sm:$0xff]
    %v5479 = vld [vmem:[%s5447 + $0xf8] sm:$0xff]
    %v5481 = vunpack.c.l.b16 %v5446
    %v5482 = vunpack.c.h.b16 %v5446
    %v5483 = vpack.c.b16 %v5481, %v5481
    %v5484 = vpack.c.b16 %v5482, %v5482
    %v5519 = vunpack.c.l.b16 %v5448
    %v5520 = vunpack.c.h.b16 %v5448
    %v5521 = vunpack.c.l.b16 %v5449
    %v5522 = vunpack.c.h.b16 %v5449
    %v5523 = vunpack.c.l.b16 %v5450
    %v5524 = vunpack.c.h.b16 %v5450
    %v5525 = vunpack.c.l.b16 %v5451
    %v5526 = vunpack.c.h.b16 %v5451
    %v5527 = vunpack.c.l.b16 %v5452
    %v5528 = vunpack.c.h.b16 %v5452
    %v5529 = vunpack.c.l.b16 %v5453
    %v5530 = vunpack.c.h.b16 %v5453
    %v5531 = vunpack.c.l.b16 %v5454
    %v5532 = vunpack.c.h.b16 %v5454
    %v5533 = vunpack.c.l.b16 %v5455
    %v5534 = vunpack.c.h.b16 %v5455
    %v5535 = vunpack.c.l.b16 %v5456
    %v5536 = vunpack.c.h.b16 %v5456
    %v5537 = vunpack.c.l.b16 %v5457
    %v5538 = vunpack.c.h.b16 %v5457
    %v5539 = vunpack.c.l.b16 %v5458
    %v5540 = vunpack.c.h.b16 %v5458
    %v5541 = vunpack.c.l.b16 %v5459
    %v5542 = vunpack.c.h.b16 %v5459
    %v5543 = vunpack.c.l.b16 %v5460
    %v5544 = vunpack.c.h.b16 %v5460
    %v5545 = vunpack.c.l.b16 %v5461
    %v5546 = vunpack.c.h.b16 %v5461
    %v5547 = vunpack.c.l.b16 %v5462
    %v5548 = vunpack.c.h.b16 %v5462
    %v5549 = vunpack.c.l.b16 %v5463
    %v5550 = vunpack.c.h.b16 %v5463
    %v5551 = vunpack.c.l.b16 %v5464
    %v5552 = vunpack.c.h.b16 %v5464
    %v5553 = vunpack.c.l.b16 %v5465
    %v5554 = vunpack.c.h.b16 %v5465
    %v5555 = vunpack.c.l.b16 %v5466
    %v5556 = vunpack.c.h.b16 %v5466
    %v5557 = vunpack.c.l.b16 %v5467
    %v5558 = vunpack.c.h.b16 %v5467
    %v5559 = vunpack.c.l.b16 %v5468
    %v5560 = vunpack.c.h.b16 %v5468
    %v5561 = vunpack.c.l.b16 %v5469
    %v5562 = vunpack.c.h.b16 %v5469
    %v5563 = vunpack.c.l.b16 %v5470
    %v5564 = vunpack.c.h.b16 %v5470
    %v5565 = vunpack.c.l.b16 %v5471
    %v5566 = vunpack.c.h.b16 %v5471
    %v5567 = vunpack.c.l.b16 %v5472
    %v5568 = vunpack.c.h.b16 %v5472
    %v5569 = vunpack.c.l.b16 %v5473
    %v5570 = vunpack.c.h.b16 %v5473
    %v5571 = vunpack.c.l.b16 %v5474
    %v5572 = vunpack.c.h.b16 %v5474
    %v5573 = vunpack.c.l.b16 %v5475
    %v5574 = vunpack.c.h.b16 %v5475
    %v5575 = vunpack.c.l.b16 %v5476
    %v5576 = vunpack.c.h.b16 %v5476
    %v5577 = vunpack.c.l.b16 %v5477
    %v5578 = vunpack.c.h.b16 %v5477
    %v5579 = vunpack.c.l.b16 %v5478
    %v5580 = vunpack.c.h.b16 %v5478
    %v5581 = vunpack.c.l.b16 %v5479
    %v5582 = vunpack.c.h.b16 %v5479
    %v5583 = vpack.c.b16 %v5521, %v5519
    %v5584 = vpack.c.b16 %v5522, %v5520
    %v5585 = vpack.c.b16 %v5525, %v5523
    %v5586 = vpack.c.b16 %v5526, %v5524
    %v5587 = vpack.c.b16 %v5529, %v5527
    %v5588 = vpack.c.b16 %v5530, %v5528
    %v5589 = vpack.c.b16 %v5533, %v5531
    %v5590 = vpack.c.b16 %v5534, %v5532
    %v5591 = vpack.c.b16 %v5537, %v5535
    %v5592 = vpack.c.b16 %v5538, %v5536
    %v5593 = vpack.c.b16 %v5541, %v5539
    %v5594 = vpack.c.b16 %v5542, %v5540
    %v5595 = vpack.c.b16 %v5545, %v5543
    %v5596 = vpack.c.b16 %v5546, %v5544
    %v5597 = vpack.c.b16 %v5549, %v5547
    %v5598 = vpack.c.b16 %v5550, %v5548
    %v5599 = vpack.c.b16 %v5553, %v5551
    %v5600 = vpack.c.b16 %v5554, %v5552
    %v5601 = vpack.c.b16 %v5557, %v5555
    %v5602 = vpack.c.b16 %v5558, %v5556
    %v5603 = vpack.c.b16 %v5561, %v5559
    %v5604 = vpack.c.b16 %v5562, %v5560
    %v5605 = vpack.c.b16 %v5565, %v5563
    %v5606 = vpack.c.b16 %v5566, %v5564
    %v5607 = vpack.c.b16 %v5569, %v5567
    %v5608 = vpack.c.b16 %v5570, %v5568
    %v5609 = vpack.c.b16 %v5573, %v5571
    %v5610 = vpack.c.b16 %v5574, %v5572
    %v5611 = vpack.c.b16 %v5577, %v5575
    %v5612 = vpack.c.b16 %v5578, %v5576
    %v5613 = vpack.c.b16 %v5581, %v5579
    %v5614 = vpack.c.b16 %v5582, %v5580
    %5647 = vmatpush.bf16.msra.mxu0 %v5597
    %5648 = vmatpush.bf16.msra.mxu0 %v5595
    %5649 = vmatpush.bf16.msra.mxu0 %v5593
    %5650 = vmatpush.bf16.msra.mxu0 %v5591
    %5651 = vmatpush.bf16.msra.mxu0 %v5589
    %5652 = vmatpush.bf16.msra.mxu0 %v5587
    %5653 = vmatpush.bf16.msra.mxu0 %v5585
    %5654 = vmatpush.bf16.msra.mxu0 %v5583
    %5655 = vmatmul.bf16.gmra.mxu0 %v5483
    %v5656 = vpop.f32.mrf.mxu0
    %v5657 = vadd.f32 0.0, %v5656
    %v5658 = vpop.f32.mrf.mxu0
    %5659 = vdwg.mxu0
    %5660 = vmatpush.bf16.msra.mxu0 %v5613
    %5661 = vmatpush.bf16.msra.mxu0 %v5611
    %5662 = vmatpush.bf16.msra.mxu0 %v5609
    %5663 = vmatpush.bf16.msra.mxu0 %v5607
    %5664 = vmatpush.bf16.msra.mxu0 %v5605
    %5665 = vmatpush.bf16.msra.mxu0 %v5603
    %5666 = vmatpush.bf16.msra.mxu0 %v5601
    %5667 = vmatpush.bf16.msra.mxu0 %v5599
    %5668 = vmatmul.bf16.gmra.mxu0 %v5484
    %v5669 = vpop.f32.mrf.mxu0
    %v5670 = vadd.f32 %v5657, %v5669
    %v5671 = vpop.f32.mrf.mxu0
    %5672 = vdwg.mxu0
    %5673 = vmatpush.bf16.msra.mxu0 %v5598
    %5674 = vmatpush.bf16.msra.mxu0 %v5596
    %5675 = vmatpush.bf16.msra.mxu0 %v5594
    %5676 = vmatpush.bf16.msra.mxu0 %v5592
    %5677 = vmatpush.bf16.msra.mxu0 %v5590
    %5678 = vmatpush.bf16.msra.mxu0 %v5588
    %5679 = vmatpush.bf16.msra.mxu0 %v5586
    %5680 = vmatpush.bf16.msra.mxu0 %v5584
    %5681 = vmatmul.bf16.gmra.mxu0 %v5483
    %v5682 = vpop.f32.mrf.mxu0
    %v5683 = vadd.f32 0.0, %v5682
    %v5684 = vpop.f32.mrf.mxu0
    %5685 = vdwg.mxu0
    %5686 = vmatpush.bf16.msra.mxu0 %v5614
    %5687 = vmatpush.bf16.msra.mxu0 %v5612
    %5688 = vmatpush.bf16.msra.mxu0 %v5610
    %5689 = vmatpush.bf16.msra.mxu0 %v5608
    %5690 = vmatpush.bf16.msra.mxu0 %v5606
    %5691 = vmatpush.bf16.msra.mxu0 %v5604
    %5692 = vmatpush.bf16.msra.mxu0 %v5602
    %5693 = vmatpush.bf16.msra.mxu0 %v5600
    %5694 = vmatmul.bf16.gmra.mxu0 %v5484
    %v5695 = vpop.f32.mrf.mxu0
    %v5696 = vadd.f32 %v5683, %v5695
    %v5697 = vpop.f32.mrf.mxu0
    %5698 = vdwg.mxu0
    %v5699 = vadd.f32 %v5417, %v5670
    %v5700 = vadd.f32 %v5443, %v5696
    %v5701 = vld [vmem:[#allocation2 + $0x18] sm:$0xff]
    %s5702 = scalar_lea.vmem %s2, 768
    %v5703 = vld [vmem:[%s5702] sm:$0xff]
    %v5704 = vld [vmem:[%s5702 + $0x8] sm:$0xff]
    %v5705 = vld [vmem:[%s5702 + $0x10] sm:$0xff]
    %v5706 = vld [vmem:[%s5702 + $0x18] sm:$0xff]
    %v5707 = vld [vmem:[%s5702 + $0x20] sm:$0xff]
    %v5708 = vld [vmem:[%s5702 + $0x28] sm:$0xff]
    %v5709 = vld [vmem:[%s5702 + $0x30] sm:$0xff]
    %v5710 = vld [vmem:[%s5702 + $0x38] sm:$0xff]
    %v5711 = vld [vmem:[%s5702 + $0x40] sm:$0xff]
    %v5712 = vld [vmem:[%s5702 + $0x48] sm:$0xff]
    %v5713 = vld [vmem:[%s5702 + $0x50] sm:$0xff]
    %v5714 = vld [vmem:[%s5702 + $0x58] sm:$0xff]
    %v5715 = vld [vmem:[%s5702 + $0x60] sm:$0xff]
    %v5716 = vld [vmem:[%s5702 + $0x68] sm:$0xff]
    %v5717 = vld [vmem:[%s5702 + $0x70] sm:$0xff]
    %v5718 = vld [vmem:[%s5702 + $0x78] sm:$0xff]
    %v5719 = vld [vmem:[%s5702 + $0x80] sm:$0xff]
    %v5720 = vld [vmem:[%s5702 + $0x88] sm:$0xff]
    %v5721 = vld [vmem:[%s5702 + $0x90] sm:$0xff]
    %v5722 = vld [vmem:[%s5702 + $0x98] sm:$0xff]
    %v5723 = vld [vmem:[%s5702 + $0xa0] sm:$0xff]
    %v5724 = vld [vmem:[%s5702 + $0xa8] sm:$0xff]
    %v5725 = vld [vmem:[%s5702 + $0xb0] sm:$0xff]
    %v5726 = vld [vmem:[%s5702 + $0xb8] sm:$0xff]
    %v5727 = vld [vmem:[%s5702 + $0xc0] sm:$0xff]
    %v5728 = vld [vmem:[%s5702 + $0xc8] sm:$0xff]
    %v5729 = vld [vmem:[%s5702 + $0xd0] sm:$0xff]
    %v5730 = vld [vmem:[%s5702 + $0xd8] sm:$0xff]
    %v5731 = vld [vmem:[%s5702 + $0xe0] sm:$0xff]
    %v5732 = vld [vmem:[%s5702 + $0xe8] sm:$0xff]
    %v5733 = vld [vmem:[%s5702 + $0xf0] sm:$0xff]
    %v5734 = vld [vmem:[%s5702 + $0xf8] sm:$0xff]
    %v5736 = vunpack.c.l.b16 %v5701
    %v5737 = vunpack.c.h.b16 %v5701
    %v5738 = vpack.c.b16 %v5736, %v5736
    %v5739 = vpack.c.b16 %v5737, %v5737
    %v5774 = vunpack.c.l.b16 %v5703
    %v5775 = vunpack.c.h.b16 %v5703
    %v5776 = vunpack.c.l.b16 %v5704
    %v5777 = vunpack.c.h.b16 %v5704
    %v5778 = vunpack.c.l.b16 %v5705
    %v5779 = vunpack.c.h.b16 %v5705
    %v5780 = vunpack.c.l.b16 %v5706
    %v5781 = vunpack.c.h.b16 %v5706
    %v5782 = vunpack.c.l.b16 %v5707
    %v5783 = vunpack.c.h.b16 %v5707
    %v5784 = vunpack.c.l.b16 %v5708
    %v5785 = vunpack.c.h.b16 %v5708
    %v5786 = vunpack.c.l.b16 %v5709
    %v5787 = vunpack.c.h.b16 %v5709
    %v5788 = vunpack.c.l.b16 %v5710
    %v5789 = vunpack.c.h.b16 %v5710
    %v5790 = vunpack.c.l.b16 %v5711
    %v5791 = vunpack.c.h.b16 %v5711
    %v5792 = vunpack.c.l.b16 %v5712
    %v5793 = vunpack.c.h.b16 %v5712
    %v5794 = vunpack.c.l.b16 %v5713
    %v5795 = vunpack.c.h.b16 %v5713
    %v5796 = vunpack.c.l.b16 %v5714
    %v5797 = vunpack.c.h.b16 %v5714
    %v5798 = vunpack.c.l.b16 %v5715
    %v5799 = vunpack.c.h.b16 %v5715
    %v5800 = vunpack.c.l.b16 %v5716
    %v5801 = vunpack.c.h.b16 %v5716
    %v5802 = vunpack.c.l.b16 %v5717
    %v5803 = vunpack.c.h.b16 %v5717
    %v5804 = vunpack.c.l.b16 %v5718
    %v5805 = vunpack.c.h.b16 %v5718
    %v5806 = vunpack.c.l.b16 %v5719
    %v5807 = vunpack.c.h.b16 %v5719
    %v5808 = vunpack.c.l.b16 %v5720
    %v5809 = vunpack.c.h.b16 %v5720
    %v5810 = vunpack.c.l.b16 %v5721
    %v5811 = vunpack.c.h.b16 %v5721
    %v5812 = vunpack.c.l.b16 %v5722
    %v5813 = vunpack.c.h.b16 %v5722
    %v5814 = vunpack.c.l.b16 %v5723
    %v5815 = vunpack.c.h.b16 %v5723
    %v5816 = vunpack.c.l.b16 %v5724
    %v5817 = vunpack.c.h.b16 %v5724
    %v5818 = vunpack.c.l.b16 %v5725
    %v5819 = vunpack.c.h.b16 %v5725
    %v5820 = vunpack.c.l.b16 %v5726
    %v5821 = vunpack.c.h.b16 %v5726
    %v5822 = vunpack.c.l.b16 %v5727
    %v5823 = vunpack.c.h.b16 %v5727
    %v5824 = vunpack.c.l.b16 %v5728
    %v5825 = vunpack.c.h.b16 %v5728
    %v5826 = vunpack.c.l.b16 %v5729
    %v5827 = vunpack.c.h.b16 %v5729
    %v5828 = vunpack.c.l.b16 %v5730
    %v5829 = vunpack.c.h.b16 %v5730
    %v5830 = vunpack.c.l.b16 %v5731
    %v5831 = vunpack.c.h.b16 %v5731
    %v5832 = vunpack.c.l.b16 %v5732
    %v5833 = vunpack.c.h.b16 %v5732
    %v5834 = vunpack.c.l.b16 %v5733
    %v5835 = vunpack.c.h.b16 %v5733
    %v5836 = vunpack.c.l.b16 %v5734
    %v5837 = vunpack.c.h.b16 %v5734
    %v5838 = vpack.c.b16 %v5776, %v5774
    %v5839 = vpack.c.b16 %v5777, %v5775
    %v5840 = vpack.c.b16 %v5780, %v5778
    %v5841 = vpack.c.b16 %v5781, %v5779
    %v5842 = vpack.c.b16 %v5784, %v5782
    %v5843 = vpack.c.b16 %v5785, %v5783
    %v5844 = vpack.c.b16 %v5788, %v5786
    %v5845 = vpack.c.b16 %v5789, %v5787
    %v5846 = vpack.c.b16 %v5792, %v5790
    %v5847 = vpack.c.b16 %v5793, %v5791
    %v5848 = vpack.c.b16 %v5796, %v5794
    %v5849 = vpack.c.b16 %v5797, %v5795
    %v5850 = vpack.c.b16 %v5800, %v5798
    %v5851 = vpack.c.b16 %v5801, %v5799
    %v5852 = vpack.c.b16 %v5804, %v5802
    %v5853 = vpack.c.b16 %v5805, %v5803
    %v5854 = vpack.c.b16 %v5808, %v5806
    %v5855 = vpack.c.b16 %v5809, %v5807
    %v5856 = vpack.c.b16 %v5812, %v5810
    %v5857 = vpack.c.b16 %v5813, %v5811
    %v5858 = vpack.c.b16 %v5816, %v5814
    %v5859 = vpack.c.b16 %v5817, %v5815
    %v5860 = vpack.c.b16 %v5820, %v5818
    %v5861 = vpack.c.b16 %v5821, %v5819
    %v5862 = vpack.c.b16 %v5824, %v5822
    %v5863 = vpack.c.b16 %v5825, %v5823
    %v5864 = vpack.c.b16 %v5828, %v5826
    %v5865 = vpack.c.b16 %v5829, %v5827
    %v5866 = vpack.c.b16 %v5832, %v5830
    %v5867 = vpack.c.b16 %v5833, %v5831
    %v5868 = vpack.c.b16 %v5836, %v5834
    %v5869 = vpack.c.b16 %v5837, %v5835
    %5902 = vmatpush.bf16.msra.mxu0 %v5852
    %5903 = vmatpush.bf16.msra.mxu0 %v5850
    %5904 = vmatpush.bf16.msra.mxu0 %v5848
    %5905 = vmatpush.bf16.msra.mxu0 %v5846
    %5906 = vmatpush.bf16.msra.mxu0 %v5844
    %5907 = vmatpush.bf16.msra.mxu0 %v5842
    %5908 = vmatpush.bf16.msra.mxu0 %v5840
    %5909 = vmatpush.bf16.msra.mxu0 %v5838
    %5910 = vmatmul.bf16.gmra.mxu0 %v5738
    %v5911 = vpop.f32.mrf.mxu0
    %v5912 = vadd.f32 0.0, %v5911
    %v5913 = vpop.f32.mrf.mxu0
    %5914 = vdwg.mxu0
    %5915 = vmatpush.bf16.msra.mxu0 %v5868
    %5916 = vmatpush.bf16.msra.mxu0 %v5866
    %5917 = vmatpush.bf16.msra.mxu0 %v5864
    %5918 = vmatpush.bf16.msra.mxu0 %v5862
    %5919 = vmatpush.bf16.msra.mxu0 %v5860
    %5920 = vmatpush.bf16.msra.mxu0 %v5858
    %5921 = vmatpush.bf16.msra.mxu0 %v5856
    %5922 = vmatpush.bf16.msra.mxu0 %v5854
    %5923 = vmatmul.bf16.gmra.mxu0 %v5739
    %v5924 = vpop.f32.mrf.mxu0
    %v5925 = vadd.f32 %v5912, %v5924
    %v5926 = vpop.f32.mrf.mxu0
    %5927 = vdwg.mxu0
    %5928 = vmatpush.bf16.msra.mxu0 %v5853
    %5929 = vmatpush.bf16.msra.mxu0 %v5851
    %5930 = vmatpush.bf16.msra.mxu0 %v5849
    %5931 = vmatpush.bf16.msra.mxu0 %v5847
    %5932 = vmatpush.bf16.msra.mxu0 %v5845
    %5933 = vmatpush.bf16.msra.mxu0 %v5843
    %5934 = vmatpush.bf16.msra.mxu0 %v5841
    %5935 = vmatpush.bf16.msra.mxu0 %v5839
    %5936 = vmatmul.bf16.gmra.mxu0 %v5738
    %v5937 = vpop.f32.mrf.mxu0
    %v5938 = vadd.f32 0.0, %v5937
    %v5939 = vpop.f32.mrf.mxu0
    %5940 = vdwg.mxu0
    %5941 = vmatpush.bf16.msra.mxu0 %v5869
    %5942 = vmatpush.bf16.msra.mxu0 %v5867
    %5943 = vmatpush.bf16.msra.mxu0 %v5865
    %5944 = vmatpush.bf16.msra.mxu0 %v5863
    %5945 = vmatpush.bf16.msra.mxu0 %v5861
    %5946 = vmatpush.bf16.msra.mxu0 %v5859
    %5947 = vmatpush.bf16.msra.mxu0 %v5857
    %5948 = vmatpush.bf16.msra.mxu0 %v5855
    %5949 = vmatmul.bf16.gmra.mxu0 %v5739
    %v5950 = vpop.f32.mrf.mxu0
    %v5951 = vadd.f32 %v5938, %v5950
    %v5952 = vpop.f32.mrf.mxu0
    %5953 = vdwg.mxu0
    %v5954 = vadd.f32 %v5699, %v5925
    %v5955 = vadd.f32 %v5700, %v5951
    %5956 = vmatpush.bf16.msra.mxu0 %v5125
    %5957 = vmatpush.bf16.msra.mxu0 %v5123
    %5958 = vmatpush.bf16.msra.mxu0 %v5121
    %5959 = vmatpush.bf16.msra.mxu0 %v5119
    %5960 = vmatpush.bf16.msra.mxu0 %v5117
    %5961 = vmatpush.bf16.msra.mxu0 %v5115
    %5962 = vmatpush.bf16.msra.mxu0 %v5113
    %5963 = vmatpush.bf16.msra.mxu0 %v5111
    %5964 = vmatmul.bf16.gmra.mxu0 %v5738
    %v5965 = vpop.f32.mrf.mxu0
    %v5966 = vadd.f32 0.0, %v5965
    %v5967 = vpop.f32.mrf.mxu0
    %5968 = vdwg.mxu0
    %5969 = vmatpush.bf16.msra.mxu0 %v5141
    %5970 = vmatpush.bf16.msra.mxu0 %v5139
    %5971 = vmatpush.bf16.msra.mxu0 %v5137
    %5972 = vmatpush.bf16.msra.mxu0 %v5135
    %5973 = vmatpush.bf16.msra.mxu0 %v5133
    %5974 = vmatpush.bf16.msra.mxu0 %v5131
    %5975 = vmatpush.bf16.msra.mxu0 %v5129
    %5976 = vmatpush.bf16.msra.mxu0 %v5127
    %5977 = vmatmul.bf16.gmra.mxu0 %v5739
    %v5978 = vpop.f32.mrf.mxu0
    %v5979 = vadd.f32 %v5966, %v5978
    %v5980 = vpop.f32.mrf.mxu0
    %5981 = vdwg.mxu0
    %5982 = vmatpush.bf16.msra.mxu0 %v5126
    %5983 = vmatpush.bf16.msra.mxu0 %v5124
    %5984 = vmatpush.bf16.msra.mxu0 %v5122
    %5985 = vmatpush.bf16.msra.mxu0 %v5120
    %5986 = vmatpush.bf16.msra.mxu0 %v5118
    %5987 = vmatpush.bf16.msra.mxu0 %v5116
    %5988 = vmatpush.bf16.msra.mxu0 %v5114
    %5989 = vmatpush.bf16.msra.mxu0 %v5112
    %5990 = vmatmul.bf16.gmra.mxu0 %v5738
    %v5991 = vpop.f32.mrf.mxu0
    %v5992 = vadd.f32 0.0, %v5991
    %v5993 = vpop.f32.mrf.mxu0
    %5994 = vdwg.mxu0
    %5995 = vmatpush.bf16.msra.mxu0 %v5142
    %5996 = vmatpush.bf16.msra.mxu0 %v5140
    %5997 = vmatpush.bf16.msra.mxu0 %v5138
    %5998 = vmatpush.bf16.msra.mxu0 %v5136
    %5999 = vmatpush.bf16.msra.mxu0 %v5134
    %6000 = vmatpush.bf16.msra.mxu0 %v5132
    %6001 = vmatpush.bf16.msra.mxu0 %v5130
    %6002 = vmatpush.bf16.msra.mxu0 %v5128
    %6003 = vmatmul.bf16.gmra.mxu0 %v5739
    %v6004 = vpop.f32.mrf.mxu0
    %v6005 = vadd.f32 %v5992, %v6004
    %v6006 = vpop.f32.mrf.mxu0
    %6007 = vdwg.mxu0
    %6008 = vmatpush.bf16.msra.mxu0 %v5344
    %6009 = vmatpush.bf16.msra.mxu0 %v5342
    %6010 = vmatpush.bf16.msra.mxu0 %v5340
    %6011 = vmatpush.bf16.msra.mxu0 %v5338
    %6012 = vmatpush.bf16.msra.mxu0 %v5336
    %6013 = vmatpush.bf16.msra.mxu0 %v5334
    %6014 = vmatpush.bf16.msra.mxu0 %v5332
    %6015 = vmatpush.bf16.msra.mxu0 %v5330
    %6016 = vmatmul.bf16.gmra.mxu0 %v5483
    %v6017 = vpop.f32.mrf.mxu0
    %v6018 = vadd.f32 %v5979, %v6017
    %v6019 = vpop.f32.mrf.mxu0
    %6020 = vdwg.mxu0
    %6021 = vmatpush.bf16.msra.mxu0 %v5360
    %6022 = vmatpush.bf16.msra.mxu0 %v5358
    %6023 = vmatpush.bf16.msra.mxu0 %v5356
    %6024 = vmatpush.bf16.msra.mxu0 %v5354
    %6025 = vmatpush.bf16.msra.mxu0 %v5352
    %6026 = vmatpush.bf16.msra.mxu0 %v5350
    %6027 = vmatpush.bf16.msra.mxu0 %v5348
    %6028 = vmatpush.bf16.msra.mxu0 %v5346
    %6029 = vmatmul.bf16.gmra.mxu0 %v5484
    %v6030 = vpop.f32.mrf.mxu0
    %v6031 = vadd.f32 %v6018, %v6030
    %v6032 = vpop.f32.mrf.mxu0
    %6033 = vdwg.mxu0
    %6034 = vmatpush.bf16.msra.mxu0 %v5345
    %6035 = vmatpush.bf16.msra.mxu0 %v5343
    %6036 = vmatpush.bf16.msra.mxu0 %v5341
    %6037 = vmatpush.bf16.msra.mxu0 %v5339
    %6038 = vmatpush.bf16.msra.mxu0 %v5337
    %6039 = vmatpush.bf16.msra.mxu0 %v5335
    %6040 = vmatpush.bf16.msra.mxu0 %v5333
    %6041 = vmatpush.bf16.msra.mxu0 %v5331
    %6042 = vmatmul.bf16.gmra.mxu0 %v5483
    %v6043 = vpop.f32.mrf.mxu0
    %v6044 = vadd.f32 %v6005, %v6043
    %v6045 = vpop.f32.mrf.mxu0
    %6046 = vdwg.mxu0
    %6047 = vmatpush.bf16.msra.mxu0 %v5361
    %6048 = vmatpush.bf16.msra.mxu0 %v5359
    %6049 = vmatpush.bf16.msra.mxu0 %v5357
    %6050 = vmatpush.bf16.msra.mxu0 %v5355
    %6051 = vmatpush.bf16.msra.mxu0 %v5353
    %6052 = vmatpush.bf16.msra.mxu0 %v5351
    %6053 = vmatpush.bf16.msra.mxu0 %v5349
    %6054 = vmatpush.bf16.msra.mxu0 %v5347
    %6055 = vmatmul.bf16.gmra.mxu0 %v5484
    %v6056 = vpop.f32.mrf.mxu0
    %v6057 = vadd.f32 %v6044, %v6056
    %v6058 = vpop.f32.mrf.mxu0
    %6059 = vdwg.mxu0
    %v6060 = vld [vmem:[#allocation2 + $0x20] sm:$0xff]
    %v6062 = vunpack.c.l.b16 %v6060
    %v6063 = vunpack.c.h.b16 %v6060
    %v6064 = vpack.c.b16 %v6062, %v6062
    %v6065 = vpack.c.b16 %v6063, %v6063
    %6068 = vmatpush.bf16.msra.mxu0 %v5597
    %6069 = vmatpush.bf16.msra.mxu0 %v5595
    %6070 = vmatpush.bf16.msra.mxu0 %v5593
    %6071 = vmatpush.bf16.msra.mxu0 %v5591
    %6072 = vmatpush.bf16.msra.mxu0 %v5589
    %6073 = vmatpush.bf16.msra.mxu0 %v5587
    %6074 = vmatpush.bf16.msra.mxu0 %v5585
    %6075 = vmatpush.bf16.msra.mxu0 %v5583
    %6076 = vmatmul.bf16.gmra.mxu0 %v6064
    %v6077 = vpop.f32.mrf.mxu0
    %v6078 = vadd.f32 0.0, %v6077
    %v6079 = vpop.f32.mrf.mxu0
    %6080 = vdwg.mxu0
    %6081 = vmatpush.bf16.msra.mxu0 %v5613
    %6082 = vmatpush.bf16.msra.mxu0 %v5611
    %6083 = vmatpush.bf16.msra.mxu0 %v5609
    %6084 = vmatpush.bf16.msra.mxu0 %v5607
    %6085 = vmatpush.bf16.msra.mxu0 %v5605
    %6086 = vmatpush.bf16.msra.mxu0 %v5603
    %6087 = vmatpush.bf16.msra.mxu0 %v5601
    %6088 = vmatpush.bf16.msra.mxu0 %v5599
    %6089 = vmatmul.bf16.gmra.mxu0 %v6065
    %v6090 = vpop.f32.mrf.mxu0
    %v6091 = vadd.f32 %v6078, %v6090
    %v6092 = vpop.f32.mrf.mxu0
    %6093 = vdwg.mxu0
    %6094 = vmatpush.bf16.msra.mxu0 %v5598
    %6095 = vmatpush.bf16.msra.mxu0 %v5596
    %6096 = vmatpush.bf16.msra.mxu0 %v5594
    %6097 = vmatpush.bf16.msra.mxu0 %v5592
    %6098 = vmatpush.bf16.msra.mxu0 %v5590
    %6099 = vmatpush.bf16.msra.mxu0 %v5588
    %6100 = vmatpush.bf16.msra.mxu0 %v5586
    %6101 = vmatpush.bf16.msra.mxu0 %v5584
    %6102 = vmatmul.bf16.gmra.mxu0 %v6064
    %v6103 = vpop.f32.mrf.mxu0
    %v6104 = vadd.f32 0.0, %v6103
    %v6105 = vpop.f32.mrf.mxu0
    %6106 = vdwg.mxu0
    %6107 = vmatpush.bf16.msra.mxu0 %v5614
    %6108 = vmatpush.bf16.msra.mxu0 %v5612
    %6109 = vmatpush.bf16.msra.mxu0 %v5610
    %6110 = vmatpush.bf16.msra.mxu0 %v5608
    %6111 = vmatpush.bf16.msra.mxu0 %v5606
    %6112 = vmatpush.bf16.msra.mxu0 %v5604
    %6113 = vmatpush.bf16.msra.mxu0 %v5602
    %6114 = vmatpush.bf16.msra.mxu0 %v5600
    %6115 = vmatmul.bf16.gmra.mxu0 %v6065
    %v6116 = vpop.f32.mrf.mxu0
    %v6117 = vadd.f32 %v6104, %v6116
    %v6118 = vpop.f32.mrf.mxu0
    %6119 = vdwg.mxu0
    %v6120 = vadd.f32 %v6031, %v6091
    %v6121 = vadd.f32 %v6057, %v6117
    %v6122 = vld [vmem:[#allocation2 + $0x28] sm:$0xff]
    %v6124 = vunpack.c.l.b16 %v6122
    %v6125 = vunpack.c.h.b16 %v6122
    %v6126 = vpack.c.b16 %v6124, %v6124
    %v6127 = vpack.c.b16 %v6125, %v6125
    %6130 = vmatpush.bf16.msra.mxu0 %v5852
    %6131 = vmatpush.bf16.msra.mxu0 %v5850
    %6132 = vmatpush.bf16.msra.mxu0 %v5848
    %6133 = vmatpush.bf16.msra.mxu0 %v5846
    %6134 = vmatpush.bf16.msra.mxu0 %v5844
    %6135 = vmatpush.bf16.msra.mxu0 %v5842
    %6136 = vmatpush.bf16.msra.mxu0 %v5840
    %6137 = vmatpush.bf16.msra.mxu0 %v5838
    %6138 = vmatmul.bf16.gmra.mxu0 %v6126
    %v6139 = vpop.f32.mrf.mxu0
    %v6140 = vadd.f32 0.0, %v6139
    %v6141 = vpop.f32.mrf.mxu0
    %6142 = vdwg.mxu0
    %6143 = vmatpush.bf16.msra.mxu0 %v5868
    %6144 = vmatpush.bf16.msra.mxu0 %v5866
    %6145 = vmatpush.bf16.msra.mxu0 %v5864
    %6146 = vmatpush.bf16.msra.mxu0 %v5862
    %6147 = vmatpush.bf16.msra.mxu0 %v5860
    %6148 = vmatpush.bf16.msra.mxu0 %v5858
    %6149 = vmatpush.bf16.msra.mxu0 %v5856
    %6150 = vmatpush.bf16.msra.mxu0 %v5854
    %6151 = vmatmul.bf16.gmra.mxu0 %v6127
    %v6152 = vpop.f32.mrf.mxu0
    %v6153 = vadd.f32 %v6140, %v6152
    %v6154 = vpop.f32.mrf.mxu0
    %6155 = vdwg.mxu0
    %6156 = vmatpush.bf16.msra.mxu0 %v5853
    %6157 = vmatpush.bf16.msra.mxu0 %v5851
    %6158 = vmatpush.bf16.msra.mxu0 %v5849
    %6159 = vmatpush.bf16.msra.mxu0 %v5847
    %6160 = vmatpush.bf16.msra.mxu0 %v5845
    %6161 = vmatpush.bf16.msra.mxu0 %v5843
    %6162 = vmatpush.bf16.msra.mxu0 %v5841
    %6163 = vmatpush.bf16.msra.mxu0 %v5839
    %6164 = vmatmul.bf16.gmra.mxu0 %v6126
    %v6165 = vpop.f32.mrf.mxu0
    %v6166 = vadd.f32 0.0, %v6165
    %v6167 = vpop.f32.mrf.mxu0
    %6168 = vdwg.mxu0
    %6169 = vmatpush.bf16.msra.mxu0 %v5869
    %6170 = vmatpush.bf16.msra.mxu0 %v5867
    %6171 = vmatpush.bf16.msra.mxu0 %v5865
    %6172 = vmatpush.bf16.msra.mxu0 %v5863
    %6173 = vmatpush.bf16.msra.mxu0 %v5861
    %6174 = vmatpush.bf16.msra.mxu0 %v5859
    %6175 = vmatpush.bf16.msra.mxu0 %v5857
    %6176 = vmatpush.bf16.msra.mxu0 %v5855
    %6177 = vmatmul.bf16.gmra.mxu0 %v6127
    %v6178 = vpop.f32.mrf.mxu0
    %v6179 = vadd.f32 %v6166, %v6178
    %v6180 = vpop.f32.mrf.mxu0
    %6181 = vdwg.mxu0
    %v6182 = vadd.f32 %v6120, %v6153
    %v6183 = vadd.f32 %v6121, %v6179
    %6184 = vmatpush.bf16.msra.mxu0 %v5125
    %6185 = vmatpush.bf16.msra.mxu0 %v5123
    %6186 = vmatpush.bf16.msra.mxu0 %v5121
    %6187 = vmatpush.bf16.msra.mxu0 %v5119
    %6188 = vmatpush.bf16.msra.mxu0 %v5117
    %6189 = vmatpush.bf16.msra.mxu0 %v5115
    %6190 = vmatpush.bf16.msra.mxu0 %v5113
    %6191 = vmatpush.bf16.msra.mxu0 %v5111
    %6192 = vmatmul.bf16.gmra.mxu0 %v6126
    %v6193 = vpop.f32.mrf.mxu0
    %v6194 = vadd.f32 0.0, %v6193
    %v6195 = vpop.f32.mrf.mxu0
    %6196 = vdwg.mxu0
    %6197 = vmatpush.bf16.msra.mxu0 %v5141
    %6198 = vmatpush.bf16.msra.mxu0 %v5139
    %6199 = vmatpush.bf16.msra.mxu0 %v5137
    %6200 = vmatpush.bf16.msra.mxu0 %v5135
    %6201 = vmatpush.bf16.msra.mxu0 %v5133
    %6202 = vmatpush.bf16.msra.mxu0 %v5131
    %6203 = vmatpush.bf16.msra.mxu0 %v5129
    %6204 = vmatpush.bf16.msra.mxu0 %v5127
    %6205 = vmatmul.bf16.gmra.mxu0 %v6127
    %v6206 = vpop.f32.mrf.mxu0
    %v6207 = vadd.f32 %v6194, %v6206
    %v6208 = vpop.f32.mrf.mxu0
    %6209 = vdwg.mxu0
    %6210 = vmatpush.bf16.msra.mxu0 %v5126
    %6211 = vmatpush.bf16.msra.mxu0 %v5124
    %6212 = vmatpush.bf16.msra.mxu0 %v5122
    %6213 = vmatpush.bf16.msra.mxu0 %v5120
    %6214 = vmatpush.bf16.msra.mxu0 %v5118
    %6215 = vmatpush.bf16.msra.mxu0 %v5116
    %6216 = vmatpush.bf16.msra.mxu0 %v5114
    %6217 = vmatpush.bf16.msra.mxu0 %v5112
    %6218 = vmatmul.bf16.gmra.mxu0 %v6126
    %v6219 = vpop.f32.mrf.mxu0
    %v6220 = vadd.f32 0.0, %v6219
    %v6221 = vpop.f32.mrf.mxu0
    %6222 = vdwg.mxu0
    %6223 = vmatpush.bf16.msra.mxu0 %v5142
    %6224 = vmatpush.bf16.msra.mxu0 %v5140
    %6225 = vmatpush.bf16.msra.mxu0 %v5138
    %6226 = vmatpush.bf16.msra.mxu0 %v5136
    %6227 = vmatpush.bf16.msra.mxu0 %v5134
    %6228 = vmatpush.bf16.msra.mxu0 %v5132
    %6229 = vmatpush.bf16.msra.mxu0 %v5130
    %6230 = vmatpush.bf16.msra.mxu0 %v5128
    %6231 = vmatmul.bf16.gmra.mxu0 %v6127
    %v6232 = vpop.f32.mrf.mxu0
    %v6233 = vadd.f32 %v6220, %v6232
    %v6234 = vpop.f32.mrf.mxu0
    %6235 = vdwg.mxu0
    %6236 = vmatpush.bf16.msra.mxu0 %v5344
    %6237 = vmatpush.bf16.msra.mxu0 %v5342
    %6238 = vmatpush.bf16.msra.mxu0 %v5340
    %6239 = vmatpush.bf16.msra.mxu0 %v5338
    %6240 = vmatpush.bf16.msra.mxu0 %v5336
    %6241 = vmatpush.bf16.msra.mxu0 %v5334
    %6242 = vmatpush.bf16.msra.mxu0 %v5332
    %6243 = vmatpush.bf16.msra.mxu0 %v5330
    %6244 = vmatmul.bf16.gmra.mxu0 %v6064
    %v6245 = vpop.f32.mrf.mxu0
    %v6246 = vadd.f32 %v6207, %v6245
    %v6247 = vpop.f32.mrf.mxu0
    %6248 = vdwg.mxu0
    %6249 = vmatpush.bf16.msra.mxu0 %v5360
    %6250 = vmatpush.bf16.msra.mxu0 %v5358
    %6251 = vmatpush.bf16.msra.mxu0 %v5356
    %6252 = vmatpush.bf16.msra.mxu0 %v5354
    %6253 = vmatpush.bf16.msra.mxu0 %v5352
    %6254 = vmatpush.bf16.msra.mxu0 %v5350
    %6255 = vmatpush.bf16.msra.mxu0 %v5348
    %6256 = vmatpush.bf16.msra.mxu0 %v5346
    %6257 = vmatmul.bf16.gmra.mxu0 %v6065
    %v6258 = vpop.f32.mrf.mxu0
    %v6259 = vadd.f32 %v6246, %v6258
    %v6260 = vpop.f32.mrf.mxu0
    %6261 = vdwg.mxu0
    %6262 = vmatpush.bf16.msra.mxu0 %v5345
    %6263 = vmatpush.bf16.msra.mxu0 %v5343
    %6264 = vmatpush.bf16.msra.mxu0 %v5341
    %6265 = vmatpush.bf16.msra.mxu0 %v5339
    %6266 = vmatpush.bf16.msra.mxu0 %v5337
    %6267 = vmatpush.bf16.msra.mxu0 %v5335
    %6268 = vmatpush.bf16.msra.mxu0 %v5333
    %6269 = vmatpush.bf16.msra.mxu0 %v5331
    %6270 = vmatmul.bf16.gmra.mxu0 %v6064
    %v6271 = vpop.f32.mrf.mxu0
    %v6272 = vadd.f32 %v6233, %v6271
    %v6273 = vpop.f32.mrf.mxu0
    %6274 = vdwg.mxu0
    %6275 = vmatpush.bf16.msra.mxu0 %v5361
    %6276 = vmatpush.bf16.msra.mxu0 %v5359
    %6277 = vmatpush.bf16.msra.mxu0 %v5357
    %6278 = vmatpush.bf16.msra.mxu0 %v5355
    %6279 = vmatpush.bf16.msra.mxu0 %v5353
    %6280 = vmatpush.bf16.msra.mxu0 %v5351
    %6281 = vmatpush.bf16.msra.mxu0 %v5349
    %6282 = vmatpush.bf16.msra.mxu0 %v5347
    %6283 = vmatmul.bf16.gmra.mxu0 %v6065
    %v6284 = vpop.f32.mrf.mxu0
    %v6285 = vadd.f32 %v6272, %v6284
    %v6286 = vpop.f32.mrf.mxu0
    %6287 = vdwg.mxu0
    %v6288 = vld [vmem:[#allocation2 + $0x30] sm:$0xff]
    %v6290 = vunpack.c.l.b16 %v6288
    %v6291 = vunpack.c.h.b16 %v6288
    %v6292 = vpack.c.b16 %v6290, %v6290
    %v6293 = vpack.c.b16 %v6291, %v6291
    %6296 = vmatpush.bf16.msra.mxu0 %v5597
    %6297 = vmatpush.bf16.msra.mxu0 %v5595
    %6298 = vmatpush.bf16.msra.mxu0 %v5593
    %6299 = vmatpush.bf16.msra.mxu0 %v5591
    %6300 = vmatpush.bf16.msra.mxu0 %v5589
    %6301 = vmatpush.bf16.msra.mxu0 %v5587
    %6302 = vmatpush.bf16.msra.mxu0 %v5585
    %6303 = vmatpush.bf16.msra.mxu0 %v5583
    %6304 = vmatmul.bf16.gmra.mxu0 %v6292
    %v6305 = vpop.f32.mrf.mxu0
    %v6306 = vadd.f32 0.0, %v6305
    %v6307 = vpop.f32.mrf.mxu0
    %6308 = vdwg.mxu0
    %6309 = vmatpush.bf16.msra.mxu0 %v5613
    %6310 = vmatpush.bf16.msra.mxu0 %v5611
    %6311 = vmatpush.bf16.msra.mxu0 %v5609
    %6312 = vmatpush.bf16.msra.mxu0 %v5607
    %6313 = vmatpush.bf16.msra.mxu0 %v5605
    %6314 = vmatpush.bf16.msra.mxu0 %v5603
    %6315 = vmatpush.bf16.msra.mxu0 %v5601
    %6316 = vmatpush.bf16.msra.mxu0 %v5599
    %6317 = vmatmul.bf16.gmra.mxu0 %v6293
    %v6318 = vpop.f32.mrf.mxu0
    %v6319 = vadd.f32 %v6306, %v6318
    %v6320 = vpop.f32.mrf.mxu0
    %6321 = vdwg.mxu0
    %6322 = vmatpush.bf16.msra.mxu0 %v5598
    %6323 = vmatpush.bf16.msra.mxu0 %v5596
    %6324 = vmatpush.bf16.msra.mxu0 %v5594
    %6325 = vmatpush.bf16.msra.mxu0 %v5592
    %6326 = vmatpush.bf16.msra.mxu0 %v5590
    %6327 = vmatpush.bf16.msra.mxu0 %v5588
    %6328 = vmatpush.bf16.msra.mxu0 %v5586
    %6329 = vmatpush.bf16.msra.mxu0 %v5584
    %6330 = vmatmul.bf16.gmra.mxu0 %v6292
    %v6331 = vpop.f32.mrf.mxu0
    %v6332 = vadd.f32 0.0, %v6331
    %v6333 = vpop.f32.mrf.mxu0
    %6334 = vdwg.mxu0
    %6335 = vmatpush.bf16.msra.mxu0 %v5614
    %6336 = vmatpush.bf16.msra.mxu0 %v5612
    %6337 = vmatpush.bf16.msra.mxu0 %v5610
    %6338 = vmatpush.bf16.msra.mxu0 %v5608
    %6339 = vmatpush.bf16.msra.mxu0 %v5606
    %6340 = vmatpush.bf16.msra.mxu0 %v5604
    %6341 = vmatpush.bf16.msra.mxu0 %v5602
    %6342 = vmatpush.bf16.msra.mxu0 %v5600
    %6343 = vmatmul.bf16.gmra.mxu0 %v6293
    %v6344 = vpop.f32.mrf.mxu0
    %v6345 = vadd.f32 %v6332, %v6344
    %v6346 = vpop.f32.mrf.mxu0
    %6347 = vdwg.mxu0
    %v6348 = vadd.f32 %v6259, %v6319
    %v6349 = vadd.f32 %v6285, %v6345
    %v6350 = vld [vmem:[#allocation2 + $0x38] sm:$0xff]
    %v6352 = vunpack.c.l.b16 %v6350
    %v6353 = vunpack.c.h.b16 %v6350
    %v6354 = vpack.c.b16 %v6352, %v6352
    %v6355 = vpack.c.b16 %v6353, %v6353
    %6358 = vmatpush.bf16.msra.mxu0 %v5852
    %6359 = vmatpush.bf16.msra.mxu0 %v5850
    %6360 = vmatpush.bf16.msra.mxu0 %v5848
    %6361 = vmatpush.bf16.msra.mxu0 %v5846
    %6362 = vmatpush.bf16.msra.mxu0 %v5844
    %6363 = vmatpush.bf16.msra.mxu0 %v5842
    %6364 = vmatpush.bf16.msra.mxu0 %v5840
    %6365 = vmatpush.bf16.msra.mxu0 %v5838
    %6366 = vmatmul.bf16.gmra.mxu0 %v6354
    %v6367 = vpop.f32.mrf.mxu0
    %v6368 = vadd.f32 0.0, %v6367
    %v6369 = vpop.f32.mrf.mxu0
    %6370 = vdwg.mxu0
    %6371 = vmatpush.bf16.msra.mxu0 %v5868
    %6372 = vmatpush.bf16.msra.mxu0 %v5866
    %6373 = vmatpush.bf16.msra.mxu0 %v5864
    %6374 = vmatpush.bf16.msra.mxu0 %v5862
    %6375 = vmatpush.bf16.msra.mxu0 %v5860
    %6376 = vmatpush.bf16.msra.mxu0 %v5858
    %6377 = vmatpush.bf16.msra.mxu0 %v5856
    %6378 = vmatpush.bf16.msra.mxu0 %v5854
    %6379 = vmatmul.bf16.gmra.mxu0 %v6355
    %v6380 = vpop.f32.mrf.mxu0
    %v6381 = vadd.f32 %v6368, %v6380
    %v6382 = vpop.f32.mrf.mxu0
    %6383 = vdwg.mxu0
    %6384 = vmatpush.bf16.msra.mxu0 %v5853
    %6385 = vmatpush.bf16.msra.mxu0 %v5851
    %6386 = vmatpush.bf16.msra.mxu0 %v5849
    %6387 = vmatpush.bf16.msra.mxu0 %v5847
    %6388 = vmatpush.bf16.msra.mxu0 %v5845
    %6389 = vmatpush.bf16.msra.mxu0 %v5843
    %6390 = vmatpush.bf16.msra.mxu0 %v5841
    %6391 = vmatpush.bf16.msra.mxu0 %v5839
    %6392 = vmatmul.bf16.gmra.mxu0 %v6354
    %v6393 = vpop.f32.mrf.mxu0
    %v6394 = vadd.f32 0.0, %v6393
    %v6395 = vpop.f32.mrf.mxu0
    %6396 = vdwg.mxu0
    %6397 = vmatpush.bf16.msra.mxu0 %v5869
    %6398 = vmatpush.bf16.msra.mxu0 %v5867
    %6399 = vmatpush.bf16.msra.mxu0 %v5865
    %6400 = vmatpush.bf16.msra.mxu0 %v5863
    %6401 = vmatpush.bf16.msra.mxu0 %v5861
    %6402 = vmatpush.bf16.msra.mxu0 %v5859
    %6403 = vmatpush.bf16.msra.mxu0 %v5857
    %6404 = vmatpush.bf16.msra.mxu0 %v5855
    %6405 = vmatmul.bf16.gmra.mxu0 %v6355
    %v6406 = vpop.f32.mrf.mxu0
    %v6407 = vadd.f32 %v6394, %v6406
    %v6408 = vpop.f32.mrf.mxu0
    %6409 = vdwg.mxu0
    %v6410 = vadd.f32 %v6348, %v6381
    %v6411 = vadd.f32 %v6349, %v6407
    %v6412 = vadd.f32 %v5954, %v6182
    %v6413 = vadd.f32 %v6412, %v6410
    %v6414 = vrot.slane %v6413, 4
    %v6415 = vadd.f32 %v6413, %v6414
    %v6416 = vrot.slane %v6415, 2
    %v6417 = vadd.f32 %v6415, %v6416
    %v6418 = vrot.slane %v6417, 1
    %v6419 = vadd.f32 %v6417, %v6418
    %v6420 = vsel %vm4857, %v5955, 0.0
    %v6421 = vsel %vm4857, %v6183, 0.0
    %v6422 = vadd.f32 %v6420, %v6421
    %v6423 = vsel %vm4857, %v6411, 0.0
    %v6424 = vadd.f32 %v6422, %v6423
    %v6425 = vrot.slane %v6424, 4
    %v6426 = vadd.f32 %v6424, %v6425
    %v6427 = vrot.slane %v6426, 2
    %v6428 = vadd.f32 %v6426, %v6427
    %v6429 = vrot.slane %v6428, 1
    %v6430 = vadd.f32 %v6428, %v6429
    %v6431 = vmul.f32 %v5954, %v5954
    %v6432 = vmul.f32 %v5955, %v5955
    %v6433 = vmul.f32 %v6182, %v6182
    %v6434 = vmul.f32 %v6183, %v6183
    %v6435 = vmul.f32 %v6410, %v6410
    %v6436 = vmul.f32 %v6411, %v6411
    %v6437 = vadd.f32 %v6431, %v6433
    %v6438 = vadd.f32 %v6437, %v6435
    %v6439 = vrot.slane %v6438, 4
    %v6440 = vadd.f32 %v6438, %v6439
    %v6441 = vrot.slane %v6440, 2
    %v6442 = vadd.f32 %v6440, %v6441
    %v6443 = vrot.slane %v6442, 1
    %v6444 = vadd.f32 %v6442, %v6443
    %v6445 = vsel %vm4857, %v6432, 0.0
    %v6446 = vsel %vm4857, %v6434, 0.0
    %v6447 = vadd.f32 %v6445, %v6446
    %v6448 = vsel %vm4857, %v6436, 0.0
    %v6449 = vadd.f32 %v6447, %v6448
    %v6450 = vrot.slane %v6449, 4
    %v6451 = vadd.f32 %v6449, %v6450
    %v6452 = vrot.slane %v6451, 2
    %v6453 = vadd.f32 %v6451, %v6452
    %v6454 = vrot.slane %v6453, 1
    %v6455 = vadd.f32 %v6453, %v6454
    %6457 = vrot.lane.b32.xlu0 %v6419, 64
    %v6458 = vpop.permute.xlu0 %6457
    %v6460 = vadd.f32 %v6419, %v6458
    %6462 = vrot.lane.b32.xlu0 %v6444, 64
    %v6463 = vpop.permute.xlu0 %6462
    %v6465 = vadd.f32 %v6444, %v6463
    %v6466 = vadd.f32 %v6460, %v6430
    %v6467 = vadd.f32 %v6465, %v6455
    %v6468 = vmul.f32 %v6466, 0.013888889
    %v6469 = vmul.f32 %v6467, 0.013888889
    %v6470 = vmul.f32 %v6468, %v6468
    %v6471 = vsub.f32 %v6469, %v6470
    %v6472 = vld [vmem:[%s7] sm:$0x1]
    %v6473 = vadd.f32 %v6471, 1e-05
    %v6474 = vrsqrt.pop %v6473
    %v6475 = vmul.f32 %v6474, %v6473
    %v6476 = vmul.f32 %v6475, %v6474
    %v6477 = vmul.f32 0.5, %v6476
    %v6478 = vsub.f32 1.5, %v6477
    %v6479 = vmul.f32 %v6474, %v6478
    %vm6480 = vweird.f32 %v6473
    %vm6481 = vweird.f32 %v6474
    %vm6482 = vmor %vm6480, %vm6481
    %v6483 = vsel %vm6482, %v6474, %v6479
    %v6484 = vmul.f32 %v6472, %v6483
    %v6485 = vld [vmem:[%s8] sm:$0x1]
    %v6486 = vmul.f32 %v6468, %v6484
    %v6487 = vsub.f32 %v6485, %v6486
    %v6489 = vperm.slane %v6484, 0
    %6490 = vrot.lane.b32.xlu0 %v6489, 64
    %v6491 = vpop.permute.xlu0 %6490
    %v6493 = vsel %vm4857, %v6484, %v6491
    %v6495 = vperm.slane %v6487, 0
    %6496 = vrot.lane.b32.xlu0 %v6495, 64
    %v6497 = vpop.permute.xlu0 %6496
    %v6499 = vsel %vm4857, %v6487, %v6497
    %v6500 = vperm.slane %v6493, 0
    %v6501 = vperm.slane %v6484, 0
    %v6502 = vmul.f32 %v5954, %v6500
    %v6503 = vmul.f32 %v5955, %v6501
    %v6504 = vmul.f32 %v6182, %v6500
    %v6505 = vmul.f32 %v6183, %v6501
    %v6506 = vmul.f32 %v6410, %v6500
    %v6507 = vmul.f32 %v6411, %v6501
    %v6508 = vperm.slane %v6499, 0
    %v6509 = vperm.slane %v6487, 0
    %v6510 = vadd.f32 %v6502, %v6508
    %v6511 = vadd.f32 %v6503, %v6509
    %v6512 = vadd.f32 %v6504, %v6508
    %v6513 = vadd.f32 %v6505, %v6509
    %v6514 = vadd.f32 %v6506, %v6508
    %v6515 = vadd.f32 %v6507, %v6509
    %v6516 = vmax.f32 %v6510, 0.0
    %v6517 = vmax.f32 %v6511, 0.0
    %v6518 = vmax.f32 %v6512, 0.0
    %v6519 = vmax.f32 %v6513, 0.0
    %v6520 = vmax.f32 %v6514, 0.0
    %v6521 = vmax.f32 %v6515, 0.0
    %v6522 = vpack.c.bf16 %v6517, %v6516
    %v6523 = vpack.c.bf16 %v6519, %v6518
    %v6524 = vpack.c.bf16 %v6521, %v6520
    %vm6525 = vcmask 1043456
    %vm6526 = vcmask 523268
    %vm6527 = vmor %vm6526, %vm6525
    %6528 = vst.msk [vmem:[#allocation3] sm:$0xff] %vm6527, %v6522
    %6529 = vst.msk [vmem:[#allocation3 + $0x8] sm:$0xff] %vm6527, %v6523
    %6530 = vst.msk [vmem:[#allocation3 + $0x10] sm:$0xff] %vm6527, %v6524
    %v6531 = vld [vmem:[#allocation3] sm:$0xff]
    %v6532 = vld [vmem:[%s3] sm:$0xf]
    %v6533 = vld [vmem:[%s3 + $0x4] sm:$0xf]
    %v6534 = vld [vmem:[%s3 + $0x8] sm:$0xf]
    %v6535 = vld [vmem:[%s3 + $0xc] sm:$0xf]
    %v6536 = vld [vmem:[%s3 + $0x10] sm:$0xf]
    %v6537 = vld [vmem:[%s3 + $0x14] sm:$0xf]
    %v6538 = vld [vmem:[%s3 + $0x18] sm:$0xf]
    %v6539 = vld [vmem:[%s3 + $0x1c] sm:$0xf]
    %v6540 = vld [vmem:[%s3 + $0x20] sm:$0xf]
    %v6541 = vld [vmem:[%s3 + $0x24] sm:$0xf]
    %v6542 = vld [vmem:[%s3 + $0x28] sm:$0xf]
    %v6543 = vld [vmem:[%s3 + $0x2c] sm:$0xf]
    %v6544 = vld [vmem:[%s3 + $0x30] sm:$0xf]
    %v6545 = vld [vmem:[%s3 + $0x34] sm:$0xf]
    %v6546 = vld [vmem:[%s3 + $0x38] sm:$0xf]
    %v6547 = vld [vmem:[%s3 + $0x3c] sm:$0xf]
    %v6548 = vld [vmem:[%s3 + $0x40] sm:$0xf]
    %v6549 = vld [vmem:[%s3 + $0x44] sm:$0xf]
    %v6550 = vld [vmem:[%s3 + $0x48] sm:$0xf]
    %v6551 = vld [vmem:[%s3 + $0x4c] sm:$0xf]
    %v6552 = vld [vmem:[%s3 + $0x50] sm:$0xf]
    %v6553 = vld [vmem:[%s3 + $0x54] sm:$0xf]
    %v6554 = vld [vmem:[%s3 + $0x58] sm:$0xf]
    %v6555 = vld [vmem:[%s3 + $0x5c] sm:$0xf]
    %v6556 = vld [vmem:[#allocation3 + $0x8] sm:$0xff]
    %s6557 = scalar_lea.vmem %s3, 96
    %v6558 = vld [vmem:[%s6557] sm:$0xf]
    %v6559 = vld [vmem:[%s6557 + $0x4] sm:$0xf]
    %v6560 = vld [vmem:[%s6557 + $0x8] sm:$0xf]
    %v6561 = vld [vmem:[%s6557 + $0xc] sm:$0xf]
    %v6562 = vld [vmem:[%s6557 + $0x10] sm:$0xf]
    %v6563 = vld [vmem:[%s6557 + $0x14] sm:$0xf]
    %v6564 = vld [vmem:[%s6557 + $0x18] sm:$0xf]
    %v6565 = vld [vmem:[%s6557 + $0x1c] sm:$0xf]
    %v6566 = vld [vmem:[%s6557 + $0x20] sm:$0xf]
    %v6567 = vld [vmem:[%s6557 + $0x24] sm:$0xf]
    %v6568 = vld [vmem:[%s6557 + $0x28] sm:$0xf]
    %v6569 = vld [vmem:[%s6557 + $0x2c] sm:$0xf]
    %v6570 = vld [vmem:[%s6557 + $0x30] sm:$0xf]
    %v6571 = vld [vmem:[%s6557 + $0x34] sm:$0xf]
    %v6572 = vld [vmem:[%s6557 + $0x38] sm:$0xf]
    %v6573 = vld [vmem:[%s6557 + $0x3c] sm:$0xf]
    %v6574 = vld [vmem:[%s6557 + $0x40] sm:$0xf]
    %v6575 = vld [vmem:[%s6557 + $0x44] sm:$0xf]
    %v6576 = vld [vmem:[%s6557 + $0x48] sm:$0xf]
    %v6577 = vld [vmem:[%s6557 + $0x4c] sm:$0xf]
    %v6578 = vld [vmem:[%s6557 + $0x50] sm:$0xf]
    %v6579 = vld [vmem:[%s6557 + $0x54] sm:$0xf]
    %v6580 = vld [vmem:[%s6557 + $0x58] sm:$0xf]
    %v6581 = vld [vmem:[%s6557 + $0x5c] sm:$0xf]
    %v6583 = vunpack.c.l.b16 %v6556
    %v6584 = vunpack.c.h.b16 %v6556
    %v6585 = vpack.c.b16 %v6583, %v6583
    %v6586 = vpack.c.b16 %v6584, %v6584
    %v6612 = vunpack.c.l.b16 %v6558
    %v6613 = vunpack.c.l.b16 %v6559
    %v6614 = vunpack.c.l.b16 %v6560
    %v6615 = vunpack.c.l.b16 %v6561
    %v6616 = vunpack.c.l.b16 %v6562
    %v6617 = vunpack.c.l.b16 %v6563
    %v6618 = vunpack.c.l.b16 %v6564
    %v6619 = vunpack.c.l.b16 %v6565
    %v6620 = vunpack.c.l.b16 %v6566
    %v6621 = vunpack.c.l.b16 %v6567
    %v6622 = vunpack.c.l.b16 %v6568
    %v6623 = vunpack.c.l.b16 %v6569
    %v6624 = vunpack.c.l.b16 %v6570
    %v6625 = vunpack.c.l.b16 %v6571
    %v6626 = vunpack.c.l.b16 %v6572
    %v6627 = vunpack.c.l.b16 %v6573
    %v6628 = vunpack.c.l.b16 %v6574
    %v6629 = vunpack.c.l.b16 %v6575
    %v6630 = vunpack.c.l.b16 %v6576
    %v6631 = vunpack.c.l.b16 %v6577
    %v6632 = vunpack.c.l.b16 %v6578
    %v6633 = vunpack.c.l.b16 %v6579
    %v6634 = vunpack.c.l.b16 %v6580
    %v6635 = vunpack.c.l.b16 %v6581
    %v6636 = vpack.c.b16 %v6613, %v6612
    %v6637 = vpack.c.b16 %v6615, %v6614
    %v6638 = vpack.c.b16 %v6617, %v6616
    %v6639 = vpack.c.b16 %v6619, %v6618
    %v6640 = vpack.c.b16 %v6621, %v6620
    %v6641 = vpack.c.b16 %v6623, %v6622
    %v6642 = vpack.c.b16 %v6625, %v6624
    %v6643 = vpack.c.b16 %v6627, %v6626
    %v6644 = vpack.c.b16 %v6629, %v6628
    %v6645 = vpack.c.b16 %v6631, %v6630
    %v6646 = vpack.c.b16 %v6633, %v6632
    %v6647 = vpack.c.b16 %v6635, %v6634
    %v6661 = vsel %vm4857, %v6586, 0
    %6663 = vmatpush.bf16.msra.mxu0 %v6643
    %6664 = vmatpush.bf16.msra.mxu0 %v6642
    %6665 = vmatpush.bf16.msra.mxu0 %v6641
    %6666 = vmatpush.bf16.msra.mxu0 %v6640
    %6667 = vmatpush.bf16.msra.mxu0 %v6639
    %6668 = vmatpush.bf16.msra.mxu0 %v6638
    %6669 = vmatpush.bf16.msra.mxu0 %v6637
    %6670 = vmatpush.bf16.msra.mxu0 %v6636
    %6671 = vmatmul.bf16.gmra.mxu0 %v6585
    %v6672 = vpop.f32.mrf.mxu0
    %v6673 = vadd.f32 0.0, %v6672
    %v6674 = vpop.f32.mrf.mxu0
    %6675 = vdwg.mxu0
    %6676 = vmatpush.bf16.msra.mxu0 0
    %6677 = vmatpush.bf16.msra.mxu0 0
    %6678 = vmatpush.bf16.msra.mxu0 0
    %6679 = vmatpush.bf16.msra.mxu0 0
    %6680 = vmatpush.bf16.msra.mxu0 %v6647
    %6681 = vmatpush.bf16.msra.mxu0 %v6646
    %6682 = vmatpush.bf16.msra.mxu0 %v6645
    %6683 = vmatpush.bf16.msra.mxu0 %v6644
    %6684 = vmatmul.bf16.gmra.mxu0 %v6661
    %v6685 = vpop.f32.mrf.mxu0
    %v6686 = vadd.f32 %v6673, %v6685
    %v6687 = vpop.f32.mrf.mxu0
    %6688 = vdwg.mxu0
    %v6690 = vunpack.c.l.b16 %v6531
    %v6691 = vunpack.c.h.b16 %v6531
    %v6692 = vpack.c.b16 %v6690, %v6690
    %v6693 = vpack.c.b16 %v6691, %v6691
    %v6719 = vunpack.c.l.b16 %v6532
    %v6720 = vunpack.c.l.b16 %v6533
    %v6721 = vunpack.c.l.b16 %v6534
    %v6722 = vunpack.c.l.b16 %v6535
    %v6723 = vunpack.c.l.b16 %v6536
    %v6724 = vunpack.c.l.b16 %v6537
    %v6725 = vunpack.c.l.b16 %v6538
    %v6726 = vunpack.c.l.b16 %v6539
    %v6727 = vunpack.c.l.b16 %v6540
    %v6728 = vunpack.c.l.b16 %v6541
    %v6729 = vunpack.c.l.b16 %v6542
    %v6730 = vunpack.c.l.b16 %v6543
    %v6731 = vunpack.c.l.b16 %v6544
    %v6732 = vunpack.c.l.b16 %v6545
    %v6733 = vunpack.c.l.b16 %v6546
    %v6734 = vunpack.c.l.b16 %v6547
    %v6735 = vunpack.c.l.b16 %v6548
    %v6736 = vunpack.c.l.b16 %v6549
    %v6737 = vunpack.c.l.b16 %v6550
    %v6738 = vunpack.c.l.b16 %v6551
    %v6739 = vunpack.c.l.b16 %v6552
    %v6740 = vunpack.c.l.b16 %v6553
    %v6741 = vunpack.c.l.b16 %v6554
    %v6742 = vunpack.c.l.b16 %v6555
    %v6743 = vpack.c.b16 %v6720, %v6719
    %v6744 = vpack.c.b16 %v6722, %v6721
    %v6745 = vpack.c.b16 %v6724, %v6723
    %v6746 = vpack.c.b16 %v6726, %v6725
    %v6747 = vpack.c.b16 %v6728, %v6727
    %v6748 = vpack.c.b16 %v6730, %v6729
    %v6749 = vpack.c.b16 %v6732, %v6731
    %v6750 = vpack.c.b16 %v6734, %v6733
    %v6751 = vpack.c.b16 %v6736, %v6735
    %v6752 = vpack.c.b16 %v6738, %v6737
    %v6753 = vpack.c.b16 %v6740, %v6739
    %v6754 = vpack.c.b16 %v6742, %v6741
    %v6768 = vsel %vm4857, %v6693, 0
    %6770 = vmatpush.bf16.msra.mxu0 %v6750
    %6771 = vmatpush.bf16.msra.mxu0 %v6749
    %6772 = vmatpush.bf16.msra.mxu0 %v6748
    %6773 = vmatpush.bf16.msra.mxu0 %v6747
    %6774 = vmatpush.bf16.msra.mxu0 %v6746
    %6775 = vmatpush.bf16.msra.mxu0 %v6745
    %6776 = vmatpush.bf16.msra.mxu0 %v6744
    %6777 = vmatpush.bf16.msra.mxu0 %v6743
    %6778 = vmatmul.bf16.gmra.mxu0 %v6692
    %v6779 = vpop.f32.mrf.mxu0
    %v6780 = vadd.f32 %v6686, %v6779
    %v6781 = vpop.f32.mrf.mxu0
    %6782 = vdwg.mxu0
    %6783 = vmatpush.bf16.msra.mxu0 0
    %6784 = vmatpush.bf16.msra.mxu0 0
    %6785 = vmatpush.bf16.msra.mxu0 0
    %6786 = vmatpush.bf16.msra.mxu0 0
    %6787 = vmatpush.bf16.msra.mxu0 %v6754
    %6788 = vmatpush.bf16.msra.mxu0 %v6753
    %6789 = vmatpush.bf16.msra.mxu0 %v6752
    %6790 = vmatpush.bf16.msra.mxu0 %v6751
    %6791 = vmatmul.bf16.gmra.mxu0 %v6768
    %v6792 = vpop.f32.mrf.mxu0
    %v6793 = vadd.f32 %v6780, %v6792
    %v6794 = vpop.f32.mrf.mxu0
    %6795 = vdwg.mxu0
    %v6796 = vld [vmem:[#allocation3 + $0x10] sm:$0xff]
    %s6797 = scalar_lea.vmem %s3, 192
    %v6798 = vld [vmem:[%s6797] sm:$0xf]
    %v6799 = vld [vmem:[%s6797 + $0x4] sm:$0xf]
    %v6800 = vld [vmem:[%s6797 + $0x8] sm:$0xf]
    %v6801 = vld [vmem:[%s6797 + $0xc] sm:$0xf]
    %v6802 = vld [vmem:[%s6797 + $0x10] sm:$0xf]
    %v6803 = vld [vmem:[%s6797 + $0x14] sm:$0xf]
    %v6804 = vld [vmem:[%s6797 + $0x18] sm:$0xf]
    %v6805 = vld [vmem:[%s6797 + $0x1c] sm:$0xf]
    %v6806 = vld [vmem:[%s6797 + $0x20] sm:$0xf]
    %v6807 = vld [vmem:[%s6797 + $0x24] sm:$0xf]
    %v6808 = vld [vmem:[%s6797 + $0x28] sm:$0xf]
    %v6809 = vld [vmem:[%s6797 + $0x2c] sm:$0xf]
    %v6810 = vld [vmem:[%s6797 + $0x30] sm:$0xf]
    %v6811 = vld [vmem:[%s6797 + $0x34] sm:$0xf]
    %v6812 = vld [vmem:[%s6797 + $0x38] sm:$0xf]
    %v6813 = vld [vmem:[%s6797 + $0x3c] sm:$0xf]
    %v6814 = vld [vmem:[%s6797 + $0x40] sm:$0xf]
    %v6815 = vld [vmem:[%s6797 + $0x44] sm:$0xf]
    %v6816 = vld [vmem:[%s6797 + $0x48] sm:$0xf]
    %v6817 = vld [vmem:[%s6797 + $0x4c] sm:$0xf]
    %v6818 = vld [vmem:[%s6797 + $0x50] sm:$0xf]
    %v6819 = vld [vmem:[%s6797 + $0x54] sm:$0xf]
    %v6820 = vld [vmem:[%s6797 + $0x58] sm:$0xf]
    %v6821 = vld [vmem:[%s6797 + $0x5c] sm:$0xf]
    %v6823 = vunpack.c.l.b16 %v6796
    %v6824 = vunpack.c.h.b16 %v6796
    %v6825 = vpack.c.b16 %v6823, %v6823
    %v6826 = vpack.c.b16 %v6824, %v6824
    %v6852 = vunpack.c.l.b16 %v6798
    %v6853 = vunpack.c.l.b16 %v6799
    %v6854 = vunpack.c.l.b16 %v6800
    %v6855 = vunpack.c.l.b16 %v6801
    %v6856 = vunpack.c.l.b16 %v6802
    %v6857 = vunpack.c.l.b16 %v6803
    %v6858 = vunpack.c.l.b16 %v6804
    %v6859 = vunpack.c.l.b16 %v6805
    %v6860 = vunpack.c.l.b16 %v6806
    %v6861 = vunpack.c.l.b16 %v6807
    %v6862 = vunpack.c.l.b16 %v6808
    %v6863 = vunpack.c.l.b16 %v6809
    %v6864 = vunpack.c.l.b16 %v6810
    %v6865 = vunpack.c.l.b16 %v6811
    %v6866 = vunpack.c.l.b16 %v6812
    %v6867 = vunpack.c.l.b16 %v6813
    %v6868 = vunpack.c.l.b16 %v6814
    %v6869 = vunpack.c.l.b16 %v6815
    %v6870 = vunpack.c.l.b16 %v6816
    %v6871 = vunpack.c.l.b16 %v6817
    %v6872 = vunpack.c.l.b16 %v6818
    %v6873 = vunpack.c.l.b16 %v6819
    %v6874 = vunpack.c.l.b16 %v6820
    %v6875 = vunpack.c.l.b16 %v6821
    %v6876 = vpack.c.b16 %v6853, %v6852
    %v6877 = vpack.c.b16 %v6855, %v6854
    %v6878 = vpack.c.b16 %v6857, %v6856
    %v6879 = vpack.c.b16 %v6859, %v6858
    %v6880 = vpack.c.b16 %v6861, %v6860
    %v6881 = vpack.c.b16 %v6863, %v6862
    %v6882 = vpack.c.b16 %v6865, %v6864
    %v6883 = vpack.c.b16 %v6867, %v6866
    %v6884 = vpack.c.b16 %v6869, %v6868
    %v6885 = vpack.c.b16 %v6871, %v6870
    %v6886 = vpack.c.b16 %v6873, %v6872
    %v6887 = vpack.c.b16 %v6875, %v6874
    %v6901 = vsel %vm4857, %v6826, 0
    %6903 = vmatpush.bf16.msra.mxu0 %v6883
    %6904 = vmatpush.bf16.msra.mxu0 %v6882
    %6905 = vmatpush.bf16.msra.mxu0 %v6881
    %6906 = vmatpush.bf16.msra.mxu0 %v6880
    %6907 = vmatpush.bf16.msra.mxu0 %v6879
    %6908 = vmatpush.bf16.msra.mxu0 %v6878
    %6909 = vmatpush.bf16.msra.mxu0 %v6877
    %6910 = vmatpush.bf16.msra.mxu0 %v6876
    %6911 = vmatmul.bf16.gmra.mxu0 %v6825
    %v6912 = vpop.f32.mrf.mxu0
    %v6913 = vadd.f32 0.0, %v6912
    %v6914 = vpop.f32.mrf.mxu0
    %6915 = vdwg.mxu0
    %6916 = vmatpush.bf16.msra.mxu0 0
    %6917 = vmatpush.bf16.msra.mxu0 0
    %6918 = vmatpush.bf16.msra.mxu0 0
    %6919 = vmatpush.bf16.msra.mxu0 0
    %6920 = vmatpush.bf16.msra.mxu0 %v6887
    %6921 = vmatpush.bf16.msra.mxu0 %v6886
    %6922 = vmatpush.bf16.msra.mxu0 %v6885
    %6923 = vmatpush.bf16.msra.mxu0 %v6884
    %6924 = vmatmul.bf16.gmra.mxu0 %v6901
    %v6925 = vpop.f32.mrf.mxu0
    %v6926 = vadd.f32 %v6913, %v6925
    %v6927 = vpop.f32.mrf.mxu0
    %6928 = vdwg.mxu0
    %v6929 = vadd.f32 %v6793, %v6926
    %v6930 = vrot.slane %v6929, 4
    %v6931 = vadd.f32 %v6929, %v6930
    %v6932 = vrot.slane %v6931, 2
    %v6933 = vadd.f32 %v6931, %v6932
    %v6934 = vrot.slane %v6933, 1
    %v6935 = vadd.f32 %v6933, %v6934
    %v6936 = vmul.f32 %v6929, %v6929
    %v6937 = vrot.slane %v6936, 4
    %v6938 = vadd.f32 %v6936, %v6937
    %v6939 = vrot.slane %v6938, 2
    %v6940 = vadd.f32 %v6938, %v6939
    %v6941 = vrot.slane %v6940, 1
    %v6942 = vadd.f32 %v6940, %v6941
    %v6943 = vmul.f32 %v6935, 0.125
    %v6944 = vmul.f32 %v6942, 0.125
    %v6945 = vmul.f32 %v6943, %v6943
    %v6946 = vsub.f32 %v6944, %v6945
    %v6947 = vld [vmem:[%s9] sm:$0x1]
    %v6948 = vadd.f32 %v6946, 1e-05
    %v6949 = vrsqrt.pop %v6948
    %v6950 = vmul.f32 %v6949, %v6948
    %v6951 = vmul.f32 %v6950, %v6949
    %v6952 = vmul.f32 0.5, %v6951
    %v6953 = vsub.f32 1.5, %v6952
    %v6954 = vmul.f32 %v6949, %v6953
    %vm6955 = vweird.f32 %v6948
    %vm6956 = vweird.f32 %v6949
    %vm6957 = vmor %vm6955, %vm6956
    %v6958 = vsel %vm6957, %v6949, %v6954
    %v6959 = vmul.f32 %v6947, %v6958
    %v6960 = vld [vmem:[%s10] sm:$0x1]
    %v6961 = vmul.f32 %v6943, %v6959
    %v6962 = vsub.f32 %v6960, %v6961
    %v6964 = vperm.slane %v6959, 0
    %v6966 = vmul.f32 %v6929, %v6964
    %v6968 = vperm.slane %v6962, 0
    %v6970 = vadd.f32 %v6966, %v6968
    %v6971 = vmax.f32 %v6970, 0.0
    %v6972 = vpack.c.bf16 %v6971, %v6971
    %6973 = vst [vmem:[#allocation4] sm:$0xf] %v6972
    %v6974 = vld [vmem:[#allocation4] sm:$0xf]
    %v6975 = vld [vmem:[%s4] sm:$0xf]
    %v6976 = vld [vmem:[%s4 + $0x4] sm:$0xf]
    %v6977 = vld [vmem:[%s4 + $0x8] sm:$0xf]
    %v6978 = vld [vmem:[%s4 + $0xc] sm:$0xf]
    %v6979 = vld [vmem:[%s4 + $0x10] sm:$0xf]
    %v6980 = vld [vmem:[%s4 + $0x14] sm:$0xf]
    %v6981 = vld [vmem:[%s4 + $0x18] sm:$0xf]
    %v6982 = vld [vmem:[%s4 + $0x1c] sm:$0xf]
    %v6983 = vld [vmem:[%s4 + $0x20] sm:$0xf]
    %v6984 = vld [vmem:[%s4 + $0x24] sm:$0xf]
    %v6985 = vld [vmem:[%s4 + $0x28] sm:$0xf]
    %v6986 = vld [vmem:[%s4 + $0x2c] sm:$0xf]
    %v6987 = vld [vmem:[%s4 + $0x30] sm:$0xf]
    %v6988 = vld [vmem:[%s4 + $0x34] sm:$0xf]
    %v6989 = vld [vmem:[%s4 + $0x38] sm:$0xf]
    %v6990 = vld [vmem:[%s4 + $0x3c] sm:$0xf]
    %v7007 = vunpack.c.l.b16 %v6975
    %v7008 = vunpack.c.l.b16 %v6976
    %v7009 = vunpack.c.l.b16 %v6977
    %v7010 = vunpack.c.l.b16 %v6978
    %v7011 = vunpack.c.l.b16 %v6979
    %v7012 = vunpack.c.l.b16 %v6980
    %v7013 = vunpack.c.l.b16 %v6981
    %v7014 = vunpack.c.l.b16 %v6982
    %v7015 = vunpack.c.l.b16 %v6983
    %v7016 = vunpack.c.l.b16 %v6984
    %v7017 = vunpack.c.l.b16 %v6985
    %v7018 = vunpack.c.l.b16 %v6986
    %v7019 = vunpack.c.l.b16 %v6987
    %v7020 = vunpack.c.l.b16 %v6988
    %v7021 = vunpack.c.l.b16 %v6989
    %v7022 = vunpack.c.l.b16 %v6990
    %v7023 = vpack.c.b16 %v7008, %v7007
    %v7024 = vpack.c.b16 %v7010, %v7009
    %v7025 = vpack.c.b16 %v7012, %v7011
    %v7026 = vpack.c.b16 %v7014, %v7013
    %v7027 = vpack.c.b16 %v7016, %v7015
    %v7028 = vpack.c.b16 %v7018, %v7017
    %v7029 = vpack.c.b16 %v7020, %v7019
    %v7030 = vpack.c.b16 %v7022, %v7021
    %7039 = vmatpush.bf16.msra.mxu0 %v7030
    %7040 = vmatpush.bf16.msra.mxu0 %v7029
    %7041 = vmatpush.bf16.msra.mxu0 %v7028
    %7042 = vmatpush.bf16.msra.mxu0 %v7027
    %7043 = vmatpush.bf16.msra.mxu0 %v7026
    %7044 = vmatpush.bf16.msra.mxu0 %v7025
    %7045 = vmatpush.bf16.msra.mxu0 %v7024
    %7046 = vmatpush.bf16.msra.mxu0 %v7023
    %7047 = vmatmul.bf16.gmra.mxu0 %v6974
    %v7048 = vpop.f32.mrf.mxu0
    %v7049 = vadd.f32 0.0, %v7048
    %v7050 = vpop.f32.mrf.mxu0
    %7051 = vdwg.mxu0
    %v7052 = vsel %vm4857, %v7049, 0.0
    %v7053 = vrot.slane %v7052, 4
    %v7054 = vadd.f32 %v7052, %v7053
    %v7055 = vrot.slane %v7054, 2
    %v7056 = vadd.f32 %v7054, %v7055
    %v7057 = vrot.slane %v7056, 1
    %v7058 = vadd.f32 %v7056, %v7057
    %v7059 = vmul.f32 %v7049, %v7049
    %v7060 = vsel %vm4857, %v7059, 0.0
    %v7061 = vrot.slane %v7060, 4
    %v7062 = vadd.f32 %v7060, %v7061
    %v7063 = vrot.slane %v7062, 2
    %v7064 = vadd.f32 %v7062, %v7063
    %v7065 = vrot.slane %v7064, 1
    %v7066 = vadd.f32 %v7064, %v7065
    %v7067 = vmul.f32 %v7058, 0.125
    %v7068 = vmul.f32 %v7066, 0.125
    %v7069 = vmul.f32 %v7067, %v7067
    %v7070 = vsub.f32 %v7068, %v7069
    %v7071 = vld [vmem:[%s11] sm:$0x1]
    %v7072 = vadd.f32 %v7070, 1e-05
    %v7073 = vrsqrt.pop %v7072
    %v7074 = vmul.f32 %v7073, %v7072
    %v7075 = vmul.f32 %v7074, %v7073
    %v7076 = vmul.f32 0.5, %v7075
    %v7077 = vsub.f32 1.5, %v7076
    %v7078 = vmul.f32 %v7073, %v7077
    %vm7079 = vweird.f32 %v7072
    %vm7080 = vweird.f32 %v7073
    %vm7081 = vmor %vm7079, %vm7080
    %v7082 = vsel %vm7081, %v7073, %v7078
    %v7083 = vmul.f32 %v7071, %v7082
    %v7084 = vld [vmem:[%s12] sm:$0x1]
    %v7085 = vmul.f32 %v7067, %v7083
    %v7086 = vsub.f32 %v7084, %v7085
    %v7088 = vperm.slane %v7083, 0
    %v7090 = vmul.f32 %v7049, %v7088
    %v7092 = vperm.slane %v7086, 0
    %v7094 = vadd.f32 %v7090, %v7092
    %v7095 = vmax.f32 %v7094, 0.0
    %7096 = vst.msk [vmem:[#allocation5] sm:$0xff] %vm4857, %v7095
    // Predicated region
    $region54: #{tpu_custom_call.1} parent=1 // pred_check
      _
    $region55: #{tpu_custom_call.1} parent=1 // pred_check_branch
      %7098 = sbr.rel (0) target = $region57
    $region56: #{tpu_custom_call.1} parent=1 // pred_region
      %7100 = vsyncadd [#allocation6], 0
      %s7102 = sshll.u32 [#allocation5], 4
      %s7103 = int_to_ptr.vmem [resolvable:$true] %s7102
      %s7104 = sshll.u32 %s13, 4
      %s7105 = int_to_ptr.hbm [resolvable:$true] %s7104
      %7107 = dma.vmem_to_hbm [thread:$0]  %s7103, 128, %s7105, [#allocation6]
    $region57: #{tpu_custom_call.1} parent=1 // pred_fallthru
      _
    // Predicated region
    $region58: #{tpu_custom_call.1} parent=1 // pred_check
      _
    $region59: #{tpu_custom_call.1} parent=1 // pred_check_branch
      %7109 = sbr.rel (0) target = $region61
    $region60: #{tpu_custom_call.1} parent=1 // pred_region
      %7111 = dma.done [#allocation6], 128
    $region61: #{tpu_custom_call.1} parent=1 // pred_fallthru
      _
    %7112 = vsyncpa [#allocation6], 1

</llo_original>
